<compile_context>
chip_gen: v6e
topology: v6e:2x2x1
jax: 0.10.0
libtpu: 0.0.40
codegen_flags: <defaults>
</compile_context>

<pallas_src>
import jax
import jax.numpy as jnp
from jax.experimental import pallas as pl
from jax.experimental.pallas import tpu as pltpu

# ---- model dimensions (defaults of the PyTorch module) ----
D_V = 50            # d_v (atom feature dim)
MPNN_H = 300        # mpnn_hidden_dim (logical)
MPNN_OUT = 300      # mpnn_output_dim (logical)
MPNN_PAD = 384      # zero-padded hidden/output dim (multiple of 128)
N_RDKIT = 7         # all 7 rdkit features selected (default ones tensor)
EMB_HID = 512       # molecule_embedding_hidden_dim
EMB_DIM = 256       # embedding_dim
GNN_HID = 256       # gnn_hidden_dim
GNN_OUT = 128       # gnn_output_dim
N_HEADS = 4         # gnn_num_heads
HEAD_DIM = GNN_HID // N_HEADS     # 64
FNN_SHARED = 128    # multitask_fnn_shared_layer_dim
FNN_HID = 128       # multitask_fnn_hidden_dim
N_BITS = 2048       # n_bits
N_TASKS = 2         # TODO(synk): number of task heads unknown; using 2 (e.g. IV, Tg)

F32 = jnp.float32
BF16 = jnp.bfloat16
VMEM_SPEC = pl.BlockSpec(memory_space=pltpu.MemorySpace.VMEM)
ANY_SPEC = pl.BlockSpec(memory_space=pl.ANY)     # stays in HBM; DMA'd manually

# ---- packed-bias layout: one DMA for all bias rows, 128-aligned segments ----
def _pad128(n):
    return ((n + 127) // 128) * 128

_BIAS_SEGS = (("bi", MPNN_PAD), ("bh1", MPNN_PAD), ("bh2", MPNN_PAD), ("bo", MPNN_PAD),
              ("be1", EMB_HID), ("be2", EMB_DIM), ("bs", FNN_SHARED),
              ("b1", N_TASKS * FNN_HID), ("b2", N_TASKS))
BIAS_OFF = {}
_off = 0
for _name, _n in _BIAS_SEGS:
    BIAS_OFF[_name] = _off
    _off += _pad128(_n)
BIAS_TOTAL = _off


# -----------------------------------------------------------------------------
# Single fused kernel: ShapMPNN (atom MLP + mean readout) -> molecule embedding
# MLP -> 2-layer GAT over the polymer graph (block-diagonal adjacency handles
# all polymers at once) -> mean over monomers -> multitask FNN.
# -----------------------------------------------------------------------------
def _fused_forward_kernel(
        atoms_ref, rdkit_ref, adj_ref, morgan_ref, extra_ref,
        wi_ref, wh1_ref, wh2_ref, wo_ref, we1a_ref, we1b_ref, we2_ref,
        w1_ref, gatvec_ref, w2cat_ref, a2_ref,
        wse_ref, wsx_ref, w1s_ref, w1m_hbm_ref, w2bd_ref, bias_ref,
        out_ref,
        w1m_vmem, w1m_sem):
    # Kick off the biggest weight DMA (Morgan FNN weight, ~1 MiB bf16) right away;
    # it is only consumed in Stage 4, so it overlaps Stages 1-3.
    w1m_copy = pltpu.make_async_copy(w1m_hbm_ref, w1m_vmem, w1m_sem)
    w1m_copy.start()

    n_atom_rows = atoms_ref.shape[0]
    n_mol = rdkit_ref.shape[0]
    n_poly = morgan_ref.shape[0]
    atoms_per_mol = n_atom_rows // n_mol      # static
    mono_per_poly = n_mol // n_poly           # static
    neg = jnp.float32(-1e9)

    def bias(name, n):
        off = BIAS_OFF[name]                  # static, 128-aligned
        return bias_ref[:, off:off + n]

    def relu(x):
        return jnp.maximum(x, 0.0)

    def elu(x):
        # exp(min(x,0)) avoids inf in the discarded branch (autodiff-safe)
        return jnp.where(x > 0, x, jnp.exp(jnp.minimum(x, 0.0)) - 1.0)

    def dot(a, b):
        return jnp.dot(a, b, preferred_element_type=F32)

    # ---- Stage 1: ShapMPNN approximation (atom MLP, depth 3, ReLU) ----
    # TODO(synk): ShapMPNN source unavailable; approximated as atom-wise MLP +
    # mean readout. Hidden dims zero-padded 300 -> 384; padded lanes stay 0.
    h = relu(dot(atoms_ref[...], wi_ref[...]) + bias("bi", MPNN_PAD))
    h = relu(dot(h, wh1_ref[...]) + bias("bh1", MPNN_PAD))
    h = relu(dot(h, wh2_ref[...]) + bias("bh2", MPNN_PAD))
    # segment mean over contiguous atom rows (sublane split; no pooling matmul)
    pooled = jnp.mean(h.reshape(n_mol, atoms_per_mol, MPNN_PAD), axis=1)
    mpnn_out = relu(dot(pooled, wo_ref[...]) + bias("bo", MPNN_PAD))

    # ---- Stage 2: molecule embedding MLP on concat(mpnn_out, rdkit) ----
    # (concat expressed as split matmul to avoid minor-dim concatenation)
    e = relu(dot(mpnn_out, we1a_ref[...]) + dot(rdkit_ref[...], we1b_ref[...])
             + bias("be1", EMB_HID))
    node = relu(dot(e, we2_ref[...]) + bias("be2", EMB_DIM))   # (n_mol, EMB_DIM)

    # ---- Stage 3: 2-layer GAT, all polymers at once (block-diag adjacency) ----
    mask = adj_ref[...] > 0.0                                  # hoisted; reused by both layers
    h_all = dot(node, w1_ref[...])                             # (n_mol, GNN_HID), head-concat
    uv = dot(h_all, gatvec_ref[...])                           # (n_mol, 2*N_HEADS): [u | v]
    u = uv[:, :N_HEADS]                                        # (n_mol, N_HEADS)
    vt = uv[:, N_HEADS:].T                                     # (N_HEADS, n_mol), one tiny transpose

    # all-head attention logits / softmax batched as one (N_HEADS*n_mol, n_mol) chain
    e_stack = jnp.concatenate(
        [u[:, k:k + 1] + vt[k:k + 1, :] for k in range(N_HEADS)], axis=0)
    mask_stack = jnp.concatenate([mask] * N_HEADS, axis=0)
    e_stack = jnp.where(e_stack > 0, e_stack, 0.2 * e_stack)   # LeakyReLU(0.2)
    e_stack = jnp.where(mask_stack, e_stack, neg)
    e_stack = e_stack - jnp.max(e_stack, axis=-1, keepdims=True)
    p_stack = jnp.exp(e_stack)
    att = p_stack / jnp.sum(p_stack, axis=-1, keepdims=True)   # (N_HEADS*n_mol, n_mol)

    # per-head attention-weighted values, lane-concatenated; one ELU + one W2 dot
    o_heads = [dot(att[k * n_mol:(k + 1) * n_mol, :],
                   h_all[:, k * HEAD_DIM:(k + 1) * HEAD_DIM]) for k in range(N_HEADS)]
    o_all = elu(jnp.concatenate(o_heads, axis=1))              # (n_mol, GNN_HID)
    g = dot(o_all, w2cat_ref[...])                             # (n_mol, GNN_OUT)

    # output GAT layer (single head), packed src/dst columns -> one dot
    uv2 = dot(g, a2_ref[...])                                  # (n_mol, 2)
    e2 = uv2[:, 0:1] + uv2[:, 1:2].T
    e2 = jnp.where(e2 > 0, e2, 0.2 * e2)
    e2 = jnp.where(mask, e2, neg)
    e2 = e2 - jnp.max(e2, axis=-1, keepdims=True)
    p2 = jnp.exp(e2)
    att2 = p2 / jnp.sum(p2, axis=-1, keepdims=True)
    o2 = elu(dot(att2, g))                                     # (n_mol, GNN_OUT)
    # mean over monomer nodes per polymer (sublane split, no pooling matmul)
    polymer_emb = jnp.mean(o2.reshape(n_poly, mono_per_poly, GNN_OUT), axis=1)

    # ---- Stage 4: ShapMorganPolymerMultiTaskFNN (task heads fused) ----
    shared = relu(dot(polymer_emb, wse_ref[...]) + dot(extra_ref[...], wsx_ref[...])
                  + bias("bs", FNN_SHARED))                    # (n_poly, FNN_SHARED)
    w1m_copy.wait()                                            # Morgan weight now resident
    hf = relu(dot(shared, w1s_ref[...])
              + dot(morgan_ref[...].astype(BF16), w1m_vmem[...])   # 0/1 morgan exact in bf16
              + bias("b1", N_TASKS * FNN_HID))                 # (n_poly, N_TASKS*FNN_HID)
    # block-diagonal per-task output projection -> single full-row store
    out_ref[...] = dot(hf, w2bd_ref[...]) + bias("b2", N_TASKS)


# -----------------------------------------------------------------------------
# Host wrapper (mirrors PolymerGNNNoMPNNsSystem.forward, single launch)
# -----------------------------------------------------------------------------
def polymer_gnn_forward(batch, params):
    n_poly = batch["morgan"].shape[0]
    em, ga, fn = params["embed"], params["gat"], params["fnn"]
    args_specs = [
        (batch["atoms_flat"], VMEM_SPEC), (batch["rdkit"], VMEM_SPEC),
        (batch["adj_bd"], VMEM_SPEC), (batch["morgan"], VMEM_SPEC),
        (batch["extra"], VMEM_SPEC),
        (em["wi"], VMEM_SPEC), (em["wh1"], VMEM_SPEC), (em["wh2"], VMEM_SPEC),
        (em["wo"], VMEM_SPEC), (em["we1a"], VMEM_SPEC), (em["we1b"], VMEM_SPEC),
        (em["we2"], VMEM_SPEC),
        (ga["w1_all"], VMEM_SPEC), (ga["att_vecs"], VMEM_SPEC),
        (ga["w2_cat"], VMEM_SPEC), (ga["a2"], VMEM_SPEC),
        (fn["ws_e"], VMEM_SPEC), (fn["ws_x"], VMEM_SPEC), (fn["w1s_all"], VMEM_SPEC),
        (fn["w1m_all"], ANY_SPEC),          # stays in HBM; copied in-kernel (overlapped)
        (fn["w2_bd"], VMEM_SPEC), (params["bias_pack"], VMEM_SPEC),
    ]
    args = [a for a, _ in args_specs]
    in_specs = [s for _, s in args_specs]
    # TODO(synk): for production batch sizes add a 1-D "parallel" grid over polymer
    # tiles (weights with constant index_map) so v7x's second TensorCore is used;
    # skipped here because the toy batch (2 polymers) fits a single tile.
    return pl.pallas_call(
        _fused_forward_kernel,
        out_shape=jax.ShapeDtypeStruct((n_poly, N_TASKS), F32),
        in_specs=in_specs,
        out_specs=VMEM_SPEC,
        scratch_shapes=[
            pltpu.VMEM((N_BITS, N_TASKS * FNN_HID), BF16),   # Morgan weight landing buffer
            pltpu.SemaphoreType.DMA,
        ],
        compiler_params=pltpu.CompilerParams(vmem_limit_bytes=8 * 1024 * 1024),
    )(*args)


# -----------------------------------------------------------------------------
# Deterministic parameter initialization (synthetic weights) with host-side
# fusion / padding into MXU- and DMA-friendly layouts.
# -----------------------------------------------------------------------------
def _dense(key, fan_in, fan_out):
    return jax.random.normal(key, (fan_in, fan_out), F32) / jnp.sqrt(F32(fan_in))


def _pad2(w, rows, cols):
    return jnp.pad(w, ((0, rows - w.shape[0]), (0, cols - w.shape[1])))


def _block_diag_cols(vecs):
    """(H, D) per-head/task vectors -> block-diagonal (H*D, H) column stack."""
    h, d = vecs.shape
    out = jnp.zeros((h * d, h), F32)
    for k in range(h):
        out = out.at[k * d:(k + 1) * d, k].set(vecs[k])
    return out


def init_params(key):
    ks = jax.random.split(key, 24)
    embed = {
        # large weights zero-padded 300->384 and stored bf16 (halves dominant DMA)
        "wi": _pad2(_dense(ks[0], D_V, MPNN_H), D_V, MPNN_PAD),                      # f32, tiny
        "wh1": _pad2(_dense(ks[1], MPNN_H, MPNN_H), MPNN_PAD, MPNN_PAD).astype(BF16),
        "wh2": _pad2(_dense(ks[2], MPNN_H, MPNN_H), MPNN_PAD, MPNN_PAD).astype(BF16),
        "wo": _pad2(_dense(ks[3], MPNN_H, MPNN_OUT), MPNN_PAD, MPNN_PAD).astype(BF16),
        "we1a": _pad2(_dense(ks[4], MPNN_OUT, EMB_HID), MPNN_PAD, EMB_HID).astype(BF16),
        "we1b": _dense(ks[5], N_RDKIT, EMB_HID),                                     # f32, tiny
        "we2": _dense(ks[6], EMB_HID, EMB_DIM).astype(BF16),
    }
    # GAT: per-head params, fused host-side into MXU-friendly stacks
    w1_heads = jax.random.normal(ks[7], (N_HEADS, EMB_DIM, HEAD_DIM), F32) / jnp.sqrt(F32(EMB_DIM))
    a_src_h = jax.random.normal(ks[8], (N_HEADS, HEAD_DIM), F32) / jnp.sqrt(F32(HEAD_DIM))
    a_dst_h = jax.random.normal(ks[9], (N_HEADS, HEAD_DIM), F32) / jnp.sqrt(F32(HEAD_DIM))
    w2_heads = jax.random.normal(ks[10], (N_HEADS, HEAD_DIM, GNN_OUT), F32) / jnp.sqrt(F32(GNN_HID))
    gat = {
        # head-concat weight: one (EMB_DIM, GNN_HID) matmul instead of 4 small ones
        "w1_all": jnp.concatenate([w1_heads[k] for k in range(N_HEADS)], axis=1).astype(BF16),
        # a_src / a_dst block-diagonal stacks packed into one (GNN_HID, 2*N_HEADS) array
        "att_vecs": jnp.concatenate(
            [_block_diag_cols(a_src_h), _block_diag_cols(a_dst_h)], axis=1),
        # per-head W2 blocks row-concatenated: one (GNN_HID, GNN_OUT) dot
        "w2_cat": jnp.concatenate([w2_heads[k] for k in range(N_HEADS)], axis=0),
        # layer-2 attention src/dst columns packed into one (GNN_OUT, 2) array
        "a2": jnp.concatenate(
            [jax.random.normal(ks[11], (GNN_OUT, 1), F32),
             jax.random.normal(ks[12], (GNN_OUT, 1), F32)], axis=1) / jnp.sqrt(F32(GNN_OUT)),
    }
    # Multitask FNN: per-task params, fused host-side
    w1s_t = jax.random.normal(ks[15], (N_TASKS, FNN_SHARED, FNN_HID), F32) / jnp.sqrt(F32(FNN_SHARED + N_BITS))
    w1m_t = jax.random.normal(ks[16], (N_TASKS, N_BITS, FNN_HID), F32) / jnp.sqrt(F32(FNN_SHARED + N_BITS))
    w2_t = jax.random.normal(ks[17], (N_TASKS, FNN_HID), F32) / jnp.sqrt(F32(FNN_HID))
    fnn = {
        "ws_e": _dense(ks[13], GNN_OUT, FNN_SHARED),
        "ws_x": _dense(ks[14], 2, FNN_SHARED),
        "w1s_all": jnp.concatenate([w1s_t[t] for t in range(N_TASKS)], axis=1).astype(BF16),
        # Largest weight (2048 x T*FNN_HID); bf16 + overlapped with Stages 1-3.
        # TODO(synk): an int8 variant would further halve bytes on v5e/v6e, but the
        # v7x MXU has no integer path (fp8 only), so bf16 is the portable choice.
        "w1m_all": jnp.concatenate([w1m_t[t] for t in range(N_TASKS)], axis=1).astype(BF16),
        "w2_bd": _block_diag_cols(w2_t),                                              # (T*FNN_HID, T)
    }
    # all bias rows packed into a single (1, BIAS_TOTAL) array (one prologue DMA);
    # biases are zero-initialized, matching the previous synthetic init.
    bias_pack = jnp.zeros((1, BIAS_TOTAL), F32)
    return {"embed": embed, "gat": gat, "fnn": fnn, "bias_pack": bias_pack}


if __name__ == "__main__":
    key = jax.random.PRNGKey(0)
    k_atoms, k_rdkit, k_morgan, k_extra, k_params = jax.random.split(key, 5)

    P, M, A = 2, 8, 8          # polymers, monomers per polymer, atoms per monomer
    n_mol = P * M

    # per-atom features; atoms of molecule n are rows n*A .. n*A+A-1
    atoms_flat = jax.random.normal(k_atoms, (n_mol * A, D_V), F32)       # (128, 50)
    rdkit = jax.random.normal(k_rdkit, (n_mol, N_RDKIT), F32)            # (16, 7)

    # ring adjacency over monomers with self loops, block-diagonal over polymers
    idx = jnp.arange(M)
    diff = jnp.abs(idx[:, None] - idx[None, :])
    ring = ((diff <= 1) | (diff == (M - 1))).astype(F32)                 # (8, 8), incl. self loops
    adj_bd = jnp.kron(jnp.eye(P, dtype=F32), ring)                       # (16, 16) block-diagonal

    morgan = jax.random.bernoulli(k_morgan, 0.1, (P, N_BITS)).astype(F32)  # (2, 2048)
    extra = jax.random.normal(k_extra, (P, 2), F32)                      # (2, 2)

    params = init_params(k_params)
    batch = {"atoms_flat": atoms_flat, "rdkit": rdkit, "adj_bd": adj_bd,
             "morgan": morgan, "extra": extra}

    preds = polymer_gnn_forward(batch, params)
    jax.block_until_ready(preds)
    assert preds.shape == (P, N_TASKS) and preds.dtype == jnp.float32
    print("KERNEL_OK")
</pallas_src>

<mosaic_0001>
module attributes {stable_mosaic.version = 11 : i64} {
  func.func @_fused_forward_kernel(%arg0: memref<128x50xf32, #tpu.memory_space<vmem>>, %arg1: memref<16x7xf32, #tpu.memory_space<vmem>>, %arg2: memref<16x16xf32, #tpu.memory_space<vmem>>, %arg3: memref<2x2048xf32, #tpu.memory_space<vmem>>, %arg4: memref<2x2xf32, #tpu.memory_space<vmem>>, %arg5: memref<50x384xf32, #tpu.memory_space<vmem>>, %arg6: memref<384x384xbf16, #tpu.memory_space<vmem>>, %arg7: memref<384x384xbf16, #tpu.memory_space<vmem>>, %arg8: memref<384x384xbf16, #tpu.memory_space<vmem>>, %arg9: memref<384x512xbf16, #tpu.memory_space<vmem>>, %arg10: memref<7x512xf32, #tpu.memory_space<vmem>>, %arg11: memref<512x256xbf16, #tpu.memory_space<vmem>>, %arg12: memref<256x256xbf16, #tpu.memory_space<vmem>>, %arg13: memref<256x8xf32, #tpu.memory_space<vmem>>, %arg14: memref<256x128xf32, #tpu.memory_space<vmem>>, %arg15: memref<128x2xf32, #tpu.memory_space<vmem>>, %arg16: memref<128x128xf32, #tpu.memory_space<vmem>>, %arg17: memref<2x128xf32, #tpu.memory_space<vmem>>, %arg18: memref<128x256xbf16, #tpu.memory_space<vmem>>, %arg19: memref<2048x256xbf16, #tpu.memory_space<any>>, %arg20: memref<256x2xf32, #tpu.memory_space<vmem>>, %arg21: memref<1x2816xf32, #tpu.memory_space<vmem>>, %arg22: memref<2x2xf32, #tpu.memory_space<vmem>>, %arg23: memref<2048x256xbf16, #tpu.memory_space<vmem>>, %arg24: memref<!tpu.dma_semaphore, #tpu.memory_space<semaphore_mem>>) attributes {dimension_semantics = [], scalar_prefetch = 0 : i64, scratch_operands = 2 : i64, tpu.core_type = #tpu.core_type<tc>} {
    tpu.enqueue_dma source(%arg19 : memref<2048x256xbf16, #tpu.memory_space<any>>) target(%arg23 : memref<2048x256xbf16, #tpu.memory_space<vmem>>) target_semaphore(%arg24 : memref<!tpu.dma_semaphore, #tpu.memory_space<semaphore_mem>>)
    %c0 = arith.constant 0 : index
    %c0_0 = arith.constant 0 : index
    %0 = vector.load %arg0[%c0, %c0_0] : memref<128x50xf32, #tpu.memory_space<vmem>>, vector<128x50xf32>
    %c0_1 = arith.constant 0 : index
    %c0_2 = arith.constant 0 : index
    %1 = vector.load %arg5[%c0_1, %c0_2] : memref<50x384xf32, #tpu.memory_space<vmem>>, vector<50x384xf32>
    %cst = arith.constant dense<0.000000e+00> : vector<128x384xf32>
    %2 = tpu.matmul %0, %1, %cst {dimension_numbers = #tpu.dot_dimension_numbers<[1], [0], [0], [1], [0, 0, 1, 1], [], []>} : vector<128x50xf32>, vector<50x384xf32>, vector<128x384xf32> -> vector<128x384xf32>
    %c0_3 = arith.constant 0 : index
    %c0_4 = arith.constant 0 : index
    %3 = vector.load %arg21[%c0_3, %c0_4] : memref<1x2816xf32, #tpu.memory_space<vmem>>, vector<1x384xf32>
    %4 = vector.broadcast %3 : vector<1x384xf32> to vector<128x384xf32>
    %5 = arith.addf %2, %4 : vector<128x384xf32>
    %cst_5 = arith.constant 0.000000e+00 : f32
    %6 = vector.broadcast %cst_5 : f32 to vector<128x384xf32>
    %7 = arith.maximumf %5, %6 : vector<128x384xf32>
    %c0_6 = arith.constant 0 : index
    %c0_7 = arith.constant 0 : index
    %8 = vector.load %arg6[%c0_6, %c0_7] : memref<384x384xbf16, #tpu.memory_space<vmem>>, vector<384x384xbf16>
    %cst_8 = arith.constant dense<0.000000e+00> : vector<128x384xf32>
    %9 = tpu.matmul %7, %8, %cst_8 {dimension_numbers = #tpu.dot_dimension_numbers<[1], [0], [0], [1], [0, 0, 1, 1], [], []>} : vector<128x384xf32>, vector<384x384xbf16>, vector<128x384xf32> -> vector<128x384xf32>
    %c0_9 = arith.constant 0 : index
    %c384 = arith.constant 384 : index
    %10 = vector.load %arg21[%c0_9, %c384] : memref<1x2816xf32, #tpu.memory_space<vmem>>, vector<1x384xf32>
    %11 = vector.broadcast %10 : vector<1x384xf32> to vector<128x384xf32>
    %12 = arith.addf %9, %11 : vector<128x384xf32>
    %cst_10 = arith.constant 0.000000e+00 : f32
    %13 = vector.broadcast %cst_10 : f32 to vector<128x384xf32>
    %14 = arith.maximumf %12, %13 : vector<128x384xf32>
    %c0_11 = arith.constant 0 : index
    %c0_12 = arith.constant 0 : index
    %15 = vector.load %arg7[%c0_11, %c0_12] : memref<384x384xbf16, #tpu.memory_space<vmem>>, vector<384x384xbf16>
    %cst_13 = arith.constant dense<0.000000e+00> : vector<128x384xf32>
    %16 = tpu.matmul %14, %15, %cst_13 {dimension_numbers = #tpu.dot_dimension_numbers<[1], [0], [0], [1], [0, 0, 1, 1], [], []>} : vector<128x384xf32>, vector<384x384xbf16>, vector<128x384xf32> -> vector<128x384xf32>
    %c0_14 = arith.constant 0 : index
    %c768 = arith.constant 768 : index
    %17 = vector.load %arg21[%c0_14, %c768] : memref<1x2816xf32, #tpu.memory_space<vmem>>, vector<1x384xf32>
    %18 = vector.broadcast %17 : vector<1x384xf32> to vector<128x384xf32>
    %19 = arith.addf %16, %18 : vector<128x384xf32>
    %cst_15 = arith.constant 0.000000e+00 : f32
    %20 = vector.broadcast %cst_15 : f32 to vector<128x384xf32>
    %21 = arith.maximumf %19, %20 : vector<128x384xf32>
    %22 = vector.shape_cast %21 : vector<128x384xf32> to vector<16x8x384xf32>
    %cst_16 = arith.constant dense<0.000000e+00> : vector<16x384xf32>
    %23 = vector.multi_reduction <add>, %22, %cst_16 [1] : vector<16x8x384xf32> to vector<16x384xf32>
    %cst_17 = arith.constant 8.000000e+00 : f32
    %24 = vector.broadcast %cst_17 : f32 to vector<16x384xf32>
    %25 = arith.divf %23, %24 : vector<16x384xf32>
    %c0_18 = arith.constant 0 : index
    %c0_19 = arith.constant 0 : index
    %26 = vector.load %arg8[%c0_18, %c0_19] : memref<384x384xbf16, #tpu.memory_space<vmem>>, vector<384x384xbf16>
    %cst_20 = arith.constant dense<0.000000e+00> : vector<16x384xf32>
    %27 = tpu.matmul %25, %26, %cst_20 {dimension_numbers = #tpu.dot_dimension_numbers<[1], [0], [0], [1], [0, 0, 1, 1], [], []>} : vector<16x384xf32>, vector<384x384xbf16>, vector<16x384xf32> -> vector<16x384xf32>
    %c0_21 = arith.constant 0 : index
    %c1152 = arith.constant 1152 : index
    %28 = vector.load %arg21[%c0_21, %c1152] : memref<1x2816xf32, #tpu.memory_space<vmem>>, vector<1x384xf32>
    %29 = vector.broadcast %28 : vector<1x384xf32> to vector<16x384xf32>
    %30 = arith.addf %27, %29 : vector<16x384xf32>
    %cst_22 = arith.constant 0.000000e+00 : f32
    %31 = vector.broadcast %cst_22 : f32 to vector<16x384xf32>
    %32 = arith.maximumf %30, %31 : vector<16x384xf32>
    %c0_23 = arith.constant 0 : index
    %c0_24 = arith.constant 0 : index
    %33 = vector.load %arg9[%c0_23, %c0_24] : memref<384x512xbf16, #tpu.memory_space<vmem>>, vector<384x512xbf16>
    %cst_25 = arith.constant dense<0.000000e+00> : vector<16x512xf32>
    %34 = tpu.matmul %32, %33, %cst_25 {dimension_numbers = #tpu.dot_dimension_numbers<[1], [0], [0], [1], [0, 0, 1, 1], [], []>} : vector<16x384xf32>, vector<384x512xbf16>, vector<16x512xf32> -> vector<16x512xf32>
    %c0_26 = arith.constant 0 : index
    %c0_27 = arith.constant 0 : index
    %35 = vector.load %arg1[%c0_26, %c0_27] : memref<16x7xf32, #tpu.memory_space<vmem>>, vector<16x7xf32>
    %c0_28 = arith.constant 0 : index
    %c0_29 = arith.constant 0 : index
    %36 = vector.load %arg10[%c0_28, %c0_29] : memref<7x512xf32, #tpu.memory_space<vmem>>, vector<7x512xf32>
    %cst_30 = arith.constant dense<0.000000e+00> : vector<16x512xf32>
    %37 = tpu.matmul %35, %36, %cst_30 {dimension_numbers = #tpu.dot_dimension_numbers<[1], [0], [0], [1], [0, 0, 1, 1], [], []>} : vector<16x7xf32>, vector<7x512xf32>, vector<16x512xf32> -> vector<16x512xf32>
    %38 = arith.addf %34, %37 : vector<16x512xf32>
    %c0_31 = arith.constant 0 : index
    %c1536 = arith.constant 1536 : index
    %39 = vector.load %arg21[%c0_31, %c1536] : memref<1x2816xf32, #tpu.memory_space<vmem>>, vector<1x512xf32>
    %40 = vector.broadcast %39 : vector<1x512xf32> to vector<16x512xf32>
    %41 = arith.addf %38, %40 : vector<16x512xf32>
    %cst_32 = arith.constant 0.000000e+00 : f32
    %42 = vector.broadcast %cst_32 : f32 to vector<16x512xf32>
    %43 = arith.maximumf %41, %42 : vector<16x512xf32>
    %c0_33 = arith.constant 0 : index
    %c0_34 = arith.constant 0 : index
    %44 = vector.load %arg11[%c0_33, %c0_34] : memref<512x256xbf16, #tpu.memory_space<vmem>>, vector<512x256xbf16>
    %cst_35 = arith.constant dense<0.000000e+00> : vector<16x256xf32>
    %45 = tpu.matmul %43, %44, %cst_35 {dimension_numbers = #tpu.dot_dimension_numbers<[1], [0], [0], [1], [0, 0, 1, 1], [], []>} : vector<16x512xf32>, vector<512x256xbf16>, vector<16x256xf32> -> vector<16x256xf32>
    %c0_36 = arith.constant 0 : index
    %c2048 = arith.constant 2048 : index
    %46 = vector.load %arg21[%c0_36, %c2048] : memref<1x2816xf32, #tpu.memory_space<vmem>>, vector<1x256xf32>
    %47 = vector.broadcast %46 : vector<1x256xf32> to vector<16x256xf32>
    %48 = arith.addf %45, %47 : vector<16x256xf32>
    %cst_37 = arith.constant 0.000000e+00 : f32
    %49 = vector.broadcast %cst_37 : f32 to vector<16x256xf32>
    %50 = arith.maximumf %48, %49 : vector<16x256xf32>
    %c0_38 = arith.constant 0 : index
    %c0_39 = arith.constant 0 : index
    %51 = vector.load %arg2[%c0_38, %c0_39] : memref<16x16xf32, #tpu.memory_space<vmem>>, vector<16x16xf32>
    %cst_40 = arith.constant 0.000000e+00 : f32
    %52 = vector.broadcast %cst_40 : f32 to vector<16x16xf32>
    %53 = arith.cmpf ogt, %51, %52 : vector<16x16xf32>
    %c0_41 = arith.constant 0 : index
    %c0_42 = arith.constant 0 : index
    %54 = vector.load %arg12[%c0_41, %c0_42] : memref<256x256xbf16, #tpu.memory_space<vmem>>, vector<256x256xbf16>
    %cst_43 = arith.constant dense<0.000000e+00> : vector<16x256xf32>
    %55 = tpu.matmul %50, %54, %cst_43 {dimension_numbers = #tpu.dot_dimension_numbers<[1], [0], [0], [1], [0, 0, 1, 1], [], []>} : vector<16x256xf32>, vector<256x256xbf16>, vector<16x256xf32> -> vector<16x256xf32>
    %c0_44 = arith.constant 0 : index
    %c0_45 = arith.constant 0 : index
    %56 = vector.load %arg13[%c0_44, %c0_45] : memref<256x8xf32, #tpu.memory_space<vmem>>, vector<256x8xf32>
    %cst_46 = arith.constant dense<0.000000e+00> : vector<16x8xf32>
    %57 = tpu.matmul %55, %56, %cst_46 {dimension_numbers = #tpu.dot_dimension_numbers<[1], [0], [0], [1], [0, 0, 1, 1], [], []>} : vector<16x256xf32>, vector<256x8xf32>, vector<16x8xf32> -> vector<16x8xf32>
    %58 = vector.extract_strided_slice %57 {offsets = [0, 0], sizes = [16, 4], strides = [1, 1]} : vector<16x8xf32> to vector<16x4xf32>
    %59 = vector.extract_strided_slice %57 {offsets = [0, 4], sizes = [16, 4], strides = [1, 1]} : vector<16x8xf32> to vector<16x4xf32>
    %60 = tpu.transpose %59, [1, 0] : vector<16x4xf32> -> vector<4x16xf32>
    %61 = vector.extract_strided_slice %58 {offsets = [0, 0], sizes = [16, 1], strides = [1, 1]} : vector<16x4xf32> to vector<16x1xf32>
    %62 = vector.extract_strided_slice %60 {offsets = [0, 0], sizes = [1, 16], strides = [1, 1]} : vector<4x16xf32> to vector<1x16xf32>
    %63 = vector.broadcast %61 : vector<16x1xf32> to vector<16x16xf32>
    %64 = vector.broadcast %62 : vector<1x16xf32> to vector<16x16xf32>
    %65 = arith.addf %63, %64 : vector<16x16xf32>
    %66 = vector.extract_strided_slice %58 {offsets = [0, 1], sizes = [16, 1], strides = [1, 1]} : vector<16x4xf32> to vector<16x1xf32>
    %67 = vector.extract_strided_slice %60 {offsets = [1, 0], sizes = [1, 16], strides = [1, 1]} : vector<4x16xf32> to vector<1x16xf32>
    %68 = vector.broadcast %66 : vector<16x1xf32> to vector<16x16xf32>
    %69 = vector.broadcast %67 : vector<1x16xf32> to vector<16x16xf32>
    %70 = arith.addf %68, %69 : vector<16x16xf32>
    %71 = vector.extract_strided_slice %58 {offsets = [0, 2], sizes = [16, 1], strides = [1, 1]} : vector<16x4xf32> to vector<16x1xf32>
    %72 = vector.extract_strided_slice %60 {offsets = [2, 0], sizes = [1, 16], strides = [1, 1]} : vector<4x16xf32> to vector<1x16xf32>
    %73 = vector.broadcast %71 : vector<16x1xf32> to vector<16x16xf32>
    %74 = vector.broadcast %72 : vector<1x16xf32> to vector<16x16xf32>
    %75 = arith.addf %73, %74 : vector<16x16xf32>
    %76 = vector.extract_strided_slice %58 {offsets = [0, 3], sizes = [16, 1], strides = [1, 1]} : vector<16x4xf32> to vector<16x1xf32>
    %77 = vector.extract_strided_slice %60 {offsets = [3, 0], sizes = [1, 16], strides = [1, 1]} : vector<4x16xf32> to vector<1x16xf32>
    %78 = vector.broadcast %76 : vector<16x1xf32> to vector<16x16xf32>
    %79 = vector.broadcast %77 : vector<1x16xf32> to vector<16x16xf32>
    %80 = arith.addf %78, %79 : vector<16x16xf32>
    %81 = tpu.concatenate %65, %70, %75, %80 in 0 : vector<16x16xf32>, vector<16x16xf32>, vector<16x16xf32>, vector<16x16xf32> -> vector<64x16xf32>
    %82 = tpu.concatenate %53, %53, %53, %53 in 0 : vector<16x16xi1>, vector<16x16xi1>, vector<16x16xi1>, vector<16x16xi1> -> vector<64x16xi1>
    %cst_47 = arith.constant 0.000000e+00 : f32
    %83 = vector.broadcast %cst_47 : f32 to vector<64x16xf32>
    %84 = arith.cmpf ogt, %81, %83 : vector<64x16xf32>
    %cst_48 = arith.constant 2.000000e-01 : f32
    %85 = vector.broadcast %cst_48 : f32 to vector<64x16xf32>
    %86 = arith.mulf %85, %81 : vector<64x16xf32>
    %87 = arith.select %84, %81, %86 : vector<64x16xi1>, vector<64x16xf32>
    %cst_49 = arith.constant -1.000000e+09 : f32
    %88 = vector.broadcast %cst_49 : f32 to vector<64x16xf32>
    %89 = arith.select %82, %87, %88 : vector<64x16xi1>, vector<64x16xf32>
    %cst_50 = arith.constant dense<0xFF800000> : vector<64xf32>
    %90 = vector.multi_reduction <maximumf>, %89, %cst_50 [1] : vector<64x16xf32> to vector<64xf32>
    %91 = vector.shape_cast %90 : vector<64xf32> to vector<64x1xf32>
    %92 = vector.broadcast %91 : vector<64x1xf32> to vector<64x16xf32>
    %93 = arith.subf %89, %92 : vector<64x16xf32>
    %94 = math.exp %93 : vector<64x16xf32>
    %cst_51 = arith.constant dense<0.000000e+00> : vector<64xf32>
    %95 = vector.multi_reduction <add>, %94, %cst_51 [1] : vector<64x16xf32> to vector<64xf32>
    %96 = vector.shape_cast %95 : vector<64xf32> to vector<64x1xf32>
    %97 = vector.broadcast %96 : vector<64x1xf32> to vector<64x16xf32>
    %98 = arith.divf %94, %97 : vector<64x16xf32>
    %99 = vector.extract_strided_slice %98 {offsets = [0, 0], sizes = [16, 16], strides = [1, 1]} : vector<64x16xf32> to vector<16x16xf32>
    %100 = vector.extract_strided_slice %55 {offsets = [0, 0], sizes = [16, 64], strides = [1, 1]} : vector<16x256xf32> to vector<16x64xf32>
    %cst_52 = arith.constant dense<0.000000e+00> : vector<16x64xf32>
    %101 = tpu.matmul %99, %100, %cst_52 {dimension_numbers = #tpu.dot_dimension_numbers<[1], [0], [0], [1], [0, 0, 1, 1], [], []>} : vector<16x16xf32>, vector<16x64xf32>, vector<16x64xf32> -> vector<16x64xf32>
    %102 = vector.extract_strided_slice %98 {offsets = [16, 0], sizes = [16, 16], strides = [1, 1]} : vector<64x16xf32> to vector<16x16xf32>
    %103 = vector.extract_strided_slice %55 {offsets = [0, 64], sizes = [16, 64], strides = [1, 1]} : vector<16x256xf32> to vector<16x64xf32>
    %cst_53 = arith.constant dense<0.000000e+00> : vector<16x64xf32>
    %104 = tpu.matmul %102, %103, %cst_53 {dimension_numbers = #tpu.dot_dimension_numbers<[1], [0], [0], [1], [0, 0, 1, 1], [], []>} : vector<16x16xf32>, vector<16x64xf32>, vector<16x64xf32> -> vector<16x64xf32>
    %105 = vector.extract_strided_slice %98 {offsets = [32, 0], sizes = [16, 16], strides = [1, 1]} : vector<64x16xf32> to vector<16x16xf32>
    %106 = vector.extract_strided_slice %55 {offsets = [0, 128], sizes = [16, 64], strides = [1, 1]} : vector<16x256xf32> to vector<16x64xf32>
    %cst_54 = arith.constant dense<0.000000e+00> : vector<16x64xf32>
    %107 = tpu.matmul %105, %106, %cst_54 {dimension_numbers = #tpu.dot_dimension_numbers<[1], [0], [0], [1], [0, 0, 1, 1], [], []>} : vector<16x16xf32>, vector<16x64xf32>, vector<16x64xf32> -> vector<16x64xf32>
    %108 = vector.extract_strided_slice %98 {offsets = [48, 0], sizes = [16, 16], strides = [1, 1]} : vector<64x16xf32> to vector<16x16xf32>
    %109 = vector.extract_strided_slice %55 {offsets = [0, 192], sizes = [16, 64], strides = [1, 1]} : vector<16x256xf32> to vector<16x64xf32>
    %cst_55 = arith.constant dense<0.000000e+00> : vector<16x64xf32>
    %110 = tpu.matmul %108, %109, %cst_55 {dimension_numbers = #tpu.dot_dimension_numbers<[1], [0], [0], [1], [0, 0, 1, 1], [], []>} : vector<16x16xf32>, vector<16x64xf32>, vector<16x64xf32> -> vector<16x64xf32>
    %111 = tpu.concatenate %101, %104, %107, %110 in 1 : vector<16x64xf32>, vector<16x64xf32>, vector<16x64xf32>, vector<16x64xf32> -> vector<16x256xf32>
    %cst_56 = arith.constant 0.000000e+00 : f32
    %112 = vector.broadcast %cst_56 : f32 to vector<16x256xf32>
    %113 = arith.cmpf ogt, %111, %112 : vector<16x256xf32>
    %cst_57 = arith.constant 0.000000e+00 : f32
    %114 = vector.broadcast %cst_57 : f32 to vector<16x256xf32>
    %115 = arith.minimumf %111, %114 : vector<16x256xf32>
    %116 = math.exp %115 : vector<16x256xf32>
    %cst_58 = arith.constant 1.000000e+00 : f32
    %117 = vector.broadcast %cst_58 : f32 to vector<16x256xf32>
    %118 = arith.subf %116, %117 : vector<16x256xf32>
    %119 = arith.select %113, %111, %118 : vector<16x256xi1>, vector<16x256xf32>
    %c0_59 = arith.constant 0 : index
    %c0_60 = arith.constant 0 : index
    %120 = vector.load %arg14[%c0_59, %c0_60] : memref<256x128xf32, #tpu.memory_space<vmem>>, vector<256x128xf32>
    %cst_61 = arith.constant dense<0.000000e+00> : vector<16x128xf32>
    %121 = tpu.matmul %119, %120, %cst_61 {dimension_numbers = #tpu.dot_dimension_numbers<[1], [0], [0], [1], [0, 0, 1, 1], [], []>} : vector<16x256xf32>, vector<256x128xf32>, vector<16x128xf32> -> vector<16x128xf32>
    %c0_62 = arith.constant 0 : index
    %c0_63 = arith.constant 0 : index
    %122 = vector.load %arg15[%c0_62, %c0_63] : memref<128x2xf32, #tpu.memory_space<vmem>>, vector<128x2xf32>
    %cst_64 = arith.constant dense<0.000000e+00> : vector<16x2xf32>
    %123 = tpu.matmul %121, %122, %cst_64 {dimension_numbers = #tpu.dot_dimension_numbers<[1], [0], [0], [1], [0, 0, 1, 1], [], []>} : vector<16x128xf32>, vector<128x2xf32>, vector<16x2xf32> -> vector<16x2xf32>
    %124 = vector.extract_strided_slice %123 {offsets = [0, 0], sizes = [16, 1], strides = [1, 1]} : vector<16x2xf32> to vector<16x1xf32>
    %125 = vector.extract_strided_slice %123 {offsets = [0, 1], sizes = [16, 1], strides = [1, 1]} : vector<16x2xf32> to vector<16x1xf32>
    %126 = tpu.transpose %125, [1, 0] : vector<16x1xf32> -> vector<1x16xf32>
    %127 = vector.broadcast %124 : vector<16x1xf32> to vector<16x16xf32>
    %128 = vector.broadcast %126 : vector<1x16xf32> to vector<16x16xf32>
    %129 = arith.addf %127, %128 : vector<16x16xf32>
    %cst_65 = arith.constant 0.000000e+00 : f32
    %130 = vector.broadcast %cst_65 : f32 to vector<16x16xf32>
    %131 = arith.cmpf ogt, %129, %130 : vector<16x16xf32>
    %cst_66 = arith.constant 2.000000e-01 : f32
    %132 = vector.broadcast %cst_66 : f32 to vector<16x16xf32>
    %133 = arith.mulf %132, %129 : vector<16x16xf32>
    %134 = arith.select %131, %129, %133 : vector<16x16xi1>, vector<16x16xf32>
    %cst_67 = arith.constant -1.000000e+09 : f32
    %135 = vector.broadcast %cst_67 : f32 to vector<16x16xf32>
    %136 = arith.select %53, %134, %135 : vector<16x16xi1>, vector<16x16xf32>
    %cst_68 = arith.constant dense<0xFF800000> : vector<16xf32>
    %137 = vector.multi_reduction <maximumf>, %136, %cst_68 [1] : vector<16x16xf32> to vector<16xf32>
    %138 = vector.shape_cast %137 : vector<16xf32> to vector<16x1xf32>
    %139 = vector.broadcast %138 : vector<16x1xf32> to vector<16x16xf32>
    %140 = arith.subf %136, %139 : vector<16x16xf32>
    %141 = math.exp %140 : vector<16x16xf32>
    %cst_69 = arith.constant dense<0.000000e+00> : vector<16xf32>
    %142 = vector.multi_reduction <add>, %141, %cst_69 [1] : vector<16x16xf32> to vector<16xf32>
    %143 = vector.shape_cast %142 : vector<16xf32> to vector<16x1xf32>
    %144 = vector.broadcast %143 : vector<16x1xf32> to vector<16x16xf32>
    %145 = arith.divf %141, %144 : vector<16x16xf32>
    %cst_70 = arith.constant dense<0.000000e+00> : vector<16x128xf32>
    %146 = tpu.matmul %145, %121, %cst_70 {dimension_numbers = #tpu.dot_dimension_numbers<[1], [0], [0], [1], [0, 0, 1, 1], [], []>} : vector<16x16xf32>, vector<16x128xf32>, vector<16x128xf32> -> vector<16x128xf32>
    %cst_71 = arith.constant 0.000000e+00 : f32
    %147 = vector.broadcast %cst_71 : f32 to vector<16x128xf32>
    %148 = arith.cmpf ogt, %146, %147 : vector<16x128xf32>
    %cst_72 = arith.constant 0.000000e+00 : f32
    %149 = vector.broadcast %cst_72 : f32 to vector<16x128xf32>
    %150 = arith.minimumf %146, %149 : vector<16x128xf32>
    %151 = math.exp %150 : vector<16x128xf32>
    %cst_73 = arith.constant 1.000000e+00 : f32
    %152 = vector.broadcast %cst_73 : f32 to vector<16x128xf32>
    %153 = arith.subf %151, %152 : vector<16x128xf32>
    %154 = arith.select %148, %146, %153 : vector<16x128xi1>, vector<16x128xf32>
    %155 = vector.shape_cast %154 : vector<16x128xf32> to vector<2x8x128xf32>
    %cst_74 = arith.constant dense<0.000000e+00> : vector<2x128xf32>
    %156 = vector.multi_reduction <add>, %155, %cst_74 [1] : vector<2x8x128xf32> to vector<2x128xf32>
    %cst_75 = arith.constant 8.000000e+00 : f32
    %157 = vector.broadcast %cst_75 : f32 to vector<2x128xf32>
    %158 = arith.divf %156, %157 : vector<2x128xf32>
    %c0_76 = arith.constant 0 : index
    %c0_77 = arith.constant 0 : index
    %159 = vector.load %arg16[%c0_76, %c0_77] : memref<128x128xf32, #tpu.memory_space<vmem>>, vector<128x128xf32>
    %cst_78 = arith.constant dense<0.000000e+00> : vector<2x128xf32>
    %160 = tpu.matmul %158, %159, %cst_78 {dimension_numbers = #tpu.dot_dimension_numbers<[1], [0], [0], [1], [0, 0, 1, 1], [], []>} : vector<2x128xf32>, vector<128x128xf32>, vector<2x128xf32> -> vector<2x128xf32>
    %c0_79 = arith.constant 0 : index
    %c0_80 = arith.constant 0 : index
    %161 = vector.load %arg4[%c0_79, %c0_80] : memref<2x2xf32, #tpu.memory_space<vmem>>, vector<2x2xf32>
    %c0_81 = arith.constant 0 : index
    %c0_82 = arith.constant 0 : index
    %162 = vector.load %arg17[%c0_81, %c0_82] : memref<2x128xf32, #tpu.memory_space<vmem>>, vector<2x128xf32>
    %cst_83 = arith.constant dense<0.000000e+00> : vector<2x128xf32>
    %163 = tpu.matmul %161, %162, %cst_83 {dimension_numbers = #tpu.dot_dimension_numbers<[1], [0], [0], [1], [0, 0, 1, 1], [], []>} : vector<2x2xf32>, vector<2x128xf32>, vector<2x128xf32> -> vector<2x128xf32>
    %164 = arith.addf %160, %163 : vector<2x128xf32>
    %c0_84 = arith.constant 0 : index
    %c2304 = arith.constant 2304 : index
    %165 = vector.load %arg21[%c0_84, %c2304] : memref<1x2816xf32, #tpu.memory_space<vmem>>, vector<1x128xf32>
    %166 = vector.broadcast %165 : vector<1x128xf32> to vector<2x128xf32>
    %167 = arith.addf %164, %166 : vector<2x128xf32>
    %cst_85 = arith.constant 0.000000e+00 : f32
    %168 = vector.broadcast %cst_85 : f32 to vector<2x128xf32>
    %169 = arith.maximumf %167, %168 : vector<2x128xf32>
    tpu.wait_dma2 semaphore(%arg24 : memref<!tpu.dma_semaphore, #tpu.memory_space<semaphore_mem>>) src(%arg19 : memref<2048x256xbf16, #tpu.memory_space<any>>) dst(%arg23 : memref<2048x256xbf16, #tpu.memory_space<vmem>>)
    %c0_86 = arith.constant 0 : index
    %c0_87 = arith.constant 0 : index
    %170 = vector.load %arg18[%c0_86, %c0_87] : memref<128x256xbf16, #tpu.memory_space<vmem>>, vector<128x256xbf16>
    %cst_88 = arith.constant dense<0.000000e+00> : vector<2x256xf32>
    %171 = tpu.matmul %169, %170, %cst_88 {dimension_numbers = #tpu.dot_dimension_numbers<[1], [0], [0], [1], [0, 0, 1, 1], [], []>} : vector<2x128xf32>, vector<128x256xbf16>, vector<2x256xf32> -> vector<2x256xf32>
    %c0_89 = arith.constant 0 : index
    %c0_90 = arith.constant 0 : index
    %172 = vector.load %arg3[%c0_89, %c0_90] : memref<2x2048xf32, #tpu.memory_space<vmem>>, vector<2x2048xf32>
    %173 = arith.truncf %172 : vector<2x2048xf32> to vector<2x2048xbf16>
    %c0_91 = arith.constant 0 : index
    %c0_92 = arith.constant 0 : index
    %174 = vector.load %arg23[%c0_91, %c0_92] : memref<2048x256xbf16, #tpu.memory_space<vmem>>, vector<2048x256xbf16>
    %cst_93 = arith.constant dense<0.000000e+00> : vector<2x256xf32>
    %175 = tpu.matmul %173, %174, %cst_93 {dimension_numbers = #tpu.dot_dimension_numbers<[1], [0], [0], [1], [0, 0, 1, 1], [], []>} : vector<2x2048xbf16>, vector<2048x256xbf16>, vector<2x256xf32> -> vector<2x256xf32>
    %176 = arith.addf %171, %175 : vector<2x256xf32>
    %c0_94 = arith.constant 0 : index
    %c2432 = arith.constant 2432 : index
    %177 = vector.load %arg21[%c0_94, %c2432] : memref<1x2816xf32, #tpu.memory_space<vmem>>, vector<1x256xf32>
    %178 = vector.broadcast %177 : vector<1x256xf32> to vector<2x256xf32>
    %179 = arith.addf %176, %178 : vector<2x256xf32>
    %cst_95 = arith.constant 0.000000e+00 : f32
    %180 = vector.broadcast %cst_95 : f32 to vector<2x256xf32>
    %181 = arith.maximumf %179, %180 : vector<2x256xf32>
    %c0_96 = arith.constant 0 : index
    %c0_97 = arith.constant 0 : index
    %182 = vector.load %arg20[%c0_96, %c0_97] : memref<256x2xf32, #tpu.memory_space<vmem>>, vector<256x2xf32>
    %cst_98 = arith.constant dense<0.000000e+00> : vector<2x2xf32>
    %183 = tpu.matmul %181, %182, %cst_98 {dimension_numbers = #tpu.dot_dimension_numbers<[1], [0], [0], [1], [0, 0, 1, 1], [], []>} : vector<2x256xf32>, vector<256x2xf32>, vector<2x2xf32> -> vector<2x2xf32>
    %c0_99 = arith.constant 0 : index
    %c2688 = arith.constant 2688 : index
    %184 = vector.load %arg21[%c0_99, %c2688] : memref<1x2816xf32, #tpu.memory_space<vmem>>, vector<1x2xf32>
    %185 = vector.broadcast %184 : vector<1x2xf32> to vector<2x2xf32>
    %186 = arith.addf %183, %185 : vector<2x2xf32>
    %c0_100 = arith.constant 0 : index
    %c0_101 = arith.constant 0 : index
    %187 = vector.load %arg22[%c0_100, %c0_101] : memref<2x2xf32, #tpu.memory_space<vmem>>, vector<2x2xf32>
    tpu.vector_store %arg22[%c0_100, %c0_101], %186 {strides = array<i32>} : memref<2x2xf32, #tpu.memory_space<vmem>>, vector<2x2xf32>,
    return
  }
}

</mosaic_0001>

<llo_original>
// kernel: tpu_custom_call.1
$region0: #{tpu_custom_call.1}
  #allocation0 [shape = 'u32[]', space=smem, size = 0x4, offset = 0x4, fixed_abs, tag = 'smem constant byte address 0x4 - core index']
  #allocation1 [shape = 'u32[144,128]{1,0:T(1,128)}', space=vmem, size = 0x12000, scoped, tag = 'internal scratch']
  #allocation2 [shape = 'bf16[2048,256]{1,0:T(8,128)(2,1)}', space=vmem, size = 0x100000, scoped, tag = 'scratch operand']
  #allocation3 [shape = 's32[1]{0}', space=sflag, size = 0x4, scoped, tag = 'scratch operand']
  #allocation28 [shape = 's32[]', space=sflag, size = 0x4, offset = 0, fixed_abs, tag = 'sflag constant byte address 0x0 - dummy sync flag']
  #allocation29 [shape = 's32[]', space=sflag, size = 0x4, offset = 0, fixed_abs, tag = 'sflag constant byte address 0x0 - dummy sync flag']
  #allocation30 [shape = 'u32[]', space=smem, size = 0x4, offset = 0x44, fixed_abs, tag = 'smem constant byte address 0x44 - assertion arg 0']
  #allocation31 [shape = 'u32[]', space=smem, size = 0x4, offset = 0x48, fixed_abs, tag = 'smem constant byte address 0x48 - assertion arg 1']
  %s0 = inlined_call_operand.vmem [shape: f32[128,50], index: 0, kind: input, shape index: {}]
  %s1 = inlined_call_operand.vmem [shape: f32[16,7], index: 1, kind: input, shape index: {}]
  %s2 = inlined_call_operand.hbm [shape: f32[16,16], index: 2, kind: input, shape index: {}]
  %s3 = inlined_call_operand.hbm [shape: f32[2,2048], index: 3, kind: input, shape index: {}]
  %s4 = inlined_call_operand.hbm [shape: f32[2,2], index: 4, kind: input, shape index: {}]
  %s5 = inlined_call_operand.hbm [shape: f32[50,384], index: 5, kind: input, shape index: {}]
  %s6 = inlined_call_operand.hbm [shape: bf16[384,384], index: 6, kind: input, shape index: {}]
  %s7 = inlined_call_operand.hbm [shape: bf16[384,384], index: 7, kind: input, shape index: {}]
  %s8 = inlined_call_operand.hbm [shape: bf16[384,384], index: 8, kind: input, shape index: {}]
  %s9 = inlined_call_operand.vmem [shape: bf16[384,512], index: 9, kind: input, shape index: {}]
  %s10 = inlined_call_operand.hbm [shape: f32[7,512], index: 10, kind: input, shape index: {}]
  %s11 = inlined_call_operand.hbm [shape: bf16[512,256], index: 11, kind: input, shape index: {}]
  %s12 = inlined_call_operand.hbm [shape: bf16[256,256], index: 12, kind: input, shape index: {}]
  %s13 = inlined_call_operand.vmem [shape: f32[256,8], index: 13, kind: input, shape index: {}]
  %s14 = inlined_call_operand.hbm [shape: f32[256,128], index: 14, kind: input, shape index: {}]
  %s15 = inlined_call_operand.vmem [shape: f32[128,2], index: 15, kind: input, shape index: {}]
  %s16 = inlined_call_operand.vmem [shape: f32[128,128], index: 16, kind: input, shape index: {}]
  %s17 = inlined_call_operand.hbm [shape: f32[2,128], index: 17, kind: input, shape index: {}]
  %s18 = inlined_call_operand.hbm [shape: bf16[128,256], index: 18, kind: input, shape index: {}]
  %s19 = inlined_call_operand.hbm [shape: bf16[2048,256], index: 19, kind: input, shape index: {}]
  %s20 = inlined_call_operand.vmem [shape: f32[256,2], index: 20, kind: input, shape index: {}]
  %s21 = inlined_call_operand.hbm [shape: f32[1,2816], index: 21, kind: input, shape index: {}]
  %s22 = inlined_call_operand.hbm [shape: f32[2,2], index: 22, kind: output, shape index: {}]
  %s23 = sld [smem:[#allocation0]]
  $region154: #{tpu_custom_call.1} parent=0
    _
  %s25 = ssub.s32 1, %s23
  %s26 = scalar_select 0, %s25, %s23
  $region1: #{tpu_custom_call.1} parent=0
    #allocation4 [shape = 'u8[8192]{0}', space=vmem, size = 0x2000, scoped, tag = 'input window, operand 2, single buffered']
    #allocation5 [shape = 's32[1]{0}', space=sflag, size = 0x4, scoped, tag = 'scoped memory for tpu_custom_call.1']
    #allocation6 [shape = 's32[1]{0}', space=sflag, size = 0x4, scoped, tag = 'scoped memory for tpu_custom_call.1']
    #allocation7 [shape = 'u8[16384]{0}', space=vmem, size = 0x4000, scoped, tag = 'input window, operand 3, single buffered']
    #allocation8 [shape = 's32[1]{0}', space=sflag, size = 0x4, scoped, tag = 'scoped memory for tpu_custom_call.1']
    #allocation9 [shape = 'u8[1024]{0}', space=vmem, size = 0x400, scoped, tag = 'input window, operand 4, single buffered']
    #allocation10 [shape = 'u8[86016]{0}', space=vmem, size = 0x15000, scoped, tag = 'input window, operand 5, single buffered']
    #allocation11 [shape = 's32[1]{0}', space=sflag, size = 0x4, scoped, tag = 'scoped memory for tpu_custom_call.1']
    #allocation12 [shape = 'u8[294912]{0}', space=vmem, size = 0x48000, scoped, tag = 'input window, operand 6, single buffered']
    #allocation13 [shape = 'u8[294912]{0}', space=vmem, size = 0x48000, scoped, tag = 'input window, operand 7, single buffered']
    #allocation14 [shape = 's32[1]{0}', space=sflag, size = 0x4, scoped, tag = 'scoped memory for tpu_custom_call.1']
    #allocation15 [shape = 'u8[294912]{0}', space=vmem, size = 0x48000, scoped, tag = 'input window, operand 8, single buffered']
    #allocation16 [shape = 'u8[16384]{0}', space=vmem, size = 0x4000, scoped, tag = 'input window, operand 10, single buffered']
    #allocation17 [shape = 's32[1]{0}', space=sflag, size = 0x4, scoped, tag = 'scoped memory for tpu_custom_call.1']
    #allocation18 [shape = 'u8[262144]{0}', space=vmem, size = 0x40000, scoped, tag = 'input window, operand 11, single buffered']
    #allocation19 [shape = 'u8[131072]{0}', space=vmem, size = 0x20000, scoped, tag = 'input window, operand 12, single buffered']
    #allocation20 [shape = 's32[1]{0}', space=sflag, size = 0x4, scoped, tag = 'scoped memory for tpu_custom_call.1']
    #allocation21 [shape = 'u8[131072]{0}', space=vmem, size = 0x20000, scoped, tag = 'input window, operand 14, single buffered']
    #allocation22 [shape = 'u8[1024]{0}', space=vmem, size = 0x400, scoped, tag = 'input window, operand 17, single buffered']
    #allocation23 [shape = 's32[1]{0}', space=sflag, size = 0x4, scoped, tag = 'scoped memory for tpu_custom_call.1']
    #allocation24 [shape = 'u8[65536]{0}', space=vmem, size = 0x10000, scoped, tag = 'input window, operand 18, single buffered']
    #allocation25 [shape = 'u8[11264]{0}', space=vmem, size = 0x2c00, scoped, tag = 'input window, operand 21, single buffered']
    #allocation26 [shape = 's32[1]{0}', space=sflag, size = 0x4, scoped, tag = 'scoped memory for tpu_custom_call.1']
    #allocation27 [shape = 'u8[1024]{0}', space=vmem, size = 0x400, scoped, tag = 'output window, operand 0, single buffered']
    %27 = vsyncpa [#allocation5], 0
    %28 = vsyncpa [#allocation8], 0
    %29 = vsyncpa [#allocation11], 0
    %30 = vsyncpa [#allocation14], 0
    %31 = vsyncpa [#allocation17], 0
    %32 = vsyncpa [#allocation20], 0
    %33 = vsyncpa [#allocation23], 0
    %34 = vsyncpa [#allocation26], 0
    %35 = vsyncpa [#allocation6], 0
    // Predicated region
    $region2: #{tpu_custom_call.1} parent=1 // pred_check
      _
    $region3: #{tpu_custom_call.1} parent=1 // pred_check_branch
      %37 = sbr.rel (0) target = $region5
    $region4: #{tpu_custom_call.1} parent=1 // pred_region
      _
    $region5: #{tpu_custom_call.1} parent=1 // pred_fallthru
      _
    // Predicated region
    $region6: #{tpu_custom_call.1} parent=1 // pred_check
      _
    $region7: #{tpu_custom_call.1} parent=1 // pred_check_branch
      %39 = sbr.rel (0) target = $region9
    $region8: #{tpu_custom_call.1} parent=1 // pred_region
      _
    $region9: #{tpu_custom_call.1} parent=1 // pred_fallthru
      _
    // Predicated region
    $region10: #{tpu_custom_call.1} parent=1 // pred_check
      _
    $region11: #{tpu_custom_call.1} parent=1 // pred_check_branch
      %41 = sbr.rel (0) target = $region13
    $region12: #{tpu_custom_call.1} parent=1 // pred_region
      %s43 = ssub.s32 256, 256
      %44 = vsyncadd [#allocation5], %s43
      %s45 = sshll.u32 [#allocation4], 4
      %s46 = int_to_ptr.vmem [resolvable:$true] %s45
      %51 = dma.hbm_to_vmem [thread:$0]  %s2, 256, %s46, [#allocation5], 128, 128, 8
    $region13: #{tpu_custom_call.1} parent=1 // pred_fallthru
      _
    // Predicated region
    $region14: #{tpu_custom_call.1} parent=1 // pred_check
      _
    $region15: #{tpu_custom_call.1} parent=1 // pred_check_branch
      %53 = sbr.rel (0) target = $region17
    $region16: #{tpu_custom_call.1} parent=1 // pred_region
      %s55 = ssub.s32 512, 512
      %56 = vsyncadd [#allocation8], %s55
      %s58 = sshll.u32 [#allocation7], 4
      %s59 = int_to_ptr.vmem [resolvable:$true] %s58
      %61 = dma.hbm_to_vmem [thread:$0]  %s3, 512, %s59, [#allocation8]
    $region17: #{tpu_custom_call.1} parent=1 // pred_fallthru
      _
    // Predicated region
    $region18: #{tpu_custom_call.1} parent=1 // pred_check
      _
    $region19: #{tpu_custom_call.1} parent=1 // pred_check_branch
      %63 = sbr.rel (0) target = $region21
    $region20: #{tpu_custom_call.1} parent=1 // pred_region
      %s65 = ssub.s32 32, 32
      %66 = vsyncadd [#allocation8], %s65
      %s68 = sshll.u32 [#allocation9], 4
      %s69 = int_to_ptr.vmem [resolvable:$true] %s68
      %71 = dma.hbm_to_vmem [thread:$0]  %s4, 32, %s69, [#allocation8]
    $region21: #{tpu_custom_call.1} parent=1 // pred_fallthru
      _
    // Predicated region
    $region22: #{tpu_custom_call.1} parent=1 // pred_check
      _
    $region23: #{tpu_custom_call.1} parent=1 // pred_check_branch
      %73 = sbr.rel (0) target = $region25
    $region24: #{tpu_custom_call.1} parent=1 // pred_region
      %s75 = ssub.s32 2688, 2688
      %76 = vsyncadd [#allocation11], %s75
      %s77 = sshll.u32 [#allocation10], 4
      %s78 = int_to_ptr.vmem [resolvable:$true] %s77
      %83 = dma.hbm_to_vmem [thread:$0]  %s5, 2688, %s78, [#allocation11], 384, 384, 24
    $region25: #{tpu_custom_call.1} parent=1 // pred_fallthru
      _
    // Predicated region
    $region26: #{tpu_custom_call.1} parent=1 // pred_check
      _
    $region27: #{tpu_custom_call.1} parent=1 // pred_check_branch
      %85 = sbr.rel (0) target = $region29
    $region28: #{tpu_custom_call.1} parent=1 // pred_region
      %s87 = ssub.s32 9216, 9216
      %88 = vsyncadd [#allocation11], %s87
      %s89 = sshll.u32 [#allocation12], 4
      %s90 = int_to_ptr.vmem [resolvable:$true] %s89
      %95 = dma.hbm_to_vmem [thread:$0]  %s6, 9216, %s90, [#allocation11], 192, 192, 12
    $region29: #{tpu_custom_call.1} parent=1 // pred_fallthru
      _
    // Predicated region
    $region30: #{tpu_custom_call.1} parent=1 // pred_check
      _
    $region31: #{tpu_custom_call.1} parent=1 // pred_check_branch
      %97 = sbr.rel (0) target = $region33
    $region32: #{tpu_custom_call.1} parent=1 // pred_region
      %s99 = ssub.s32 9216, 9216
      %100 = vsyncadd [#allocation14], %s99
      %s101 = sshll.u32 [#allocation13], 4
      %s102 = int_to_ptr.vmem [resolvable:$true] %s101
      %107 = dma.hbm_to_vmem [thread:$0]  %s7, 9216, %s102, [#allocation14], 192, 192, 12
    $region33: #{tpu_custom_call.1} parent=1 // pred_fallthru
      _
    // Predicated region
    $region34: #{tpu_custom_call.1} parent=1 // pred_check
      _
    $region35: #{tpu_custom_call.1} parent=1 // pred_check_branch
      %109 = sbr.rel (0) target = $region37
    $region36: #{tpu_custom_call.1} parent=1 // pred_region
      %s111 = ssub.s32 9216, 9216
      %112 = vsyncadd [#allocation14], %s111
      %s113 = sshll.u32 [#allocation15], 4
      %s114 = int_to_ptr.vmem [resolvable:$true] %s113
      %119 = dma.hbm_to_vmem [thread:$0]  %s8, 9216, %s114, [#allocation14], 192, 192, 12
    $region37: #{tpu_custom_call.1} parent=1 // pred_fallthru
      _
    // Predicated region
    $region38: #{tpu_custom_call.1} parent=1 // pred_check
      _
    $region39: #{tpu_custom_call.1} parent=1 // pred_check_branch
      %121 = sbr.rel (0) target = $region41
    $region40: #{tpu_custom_call.1} parent=1 // pred_region
      _
    $region41: #{tpu_custom_call.1} parent=1 // pred_fallthru
      _
    // Predicated region
    $region42: #{tpu_custom_call.1} parent=1 // pred_check
      _
    $region43: #{tpu_custom_call.1} parent=1 // pred_check_branch
      %123 = sbr.rel (0) target = $region45
    $region44: #{tpu_custom_call.1} parent=1 // pred_region
      %s125 = ssub.s32 512, 512
      %126 = vsyncadd [#allocation17], %s125
      %s128 = sshll.u32 [#allocation16], 4
      %s129 = int_to_ptr.vmem [resolvable:$true] %s128
      %131 = dma.hbm_to_vmem [thread:$0]  %s10, 512, %s129, [#allocation17]
    $region45: #{tpu_custom_call.1} parent=1 // pred_fallthru
      _
    // Predicated region
    $region46: #{tpu_custom_call.1} parent=1 // pred_check
      _
    $region47: #{tpu_custom_call.1} parent=1 // pred_check_branch
      %133 = sbr.rel (0) target = $region49
    $region48: #{tpu_custom_call.1} parent=1 // pred_region
      %s135 = ssub.s32 8192, 8192
      %136 = vsyncadd [#allocation17], %s135
      %s137 = sshll.u32 [#allocation18], 4
      %s138 = int_to_ptr.vmem [resolvable:$true] %s137
      %143 = dma.hbm_to_vmem [thread:$0]  %s11, 8192, %s138, [#allocation17], 128, 128, 8
    $region49: #{tpu_custom_call.1} parent=1 // pred_fallthru
      _
    // Predicated region
    $region50: #{tpu_custom_call.1} parent=1 // pred_check
      _
    $region51: #{tpu_custom_call.1} parent=1 // pred_check_branch
      %145 = sbr.rel (0) target = $region53
    $region52: #{tpu_custom_call.1} parent=1 // pred_region
      %s147 = ssub.s32 4096, 4096
      %148 = vsyncadd [#allocation20], %s147
      %s149 = sshll.u32 [#allocation19], 4
      %s150 = int_to_ptr.vmem [resolvable:$true] %s149
      %155 = dma.hbm_to_vmem [thread:$0]  %s12, 4096, %s150, [#allocation20], 128, 128, 8
    $region53: #{tpu_custom_call.1} parent=1 // pred_fallthru
      _
    // Predicated region
    $region54: #{tpu_custom_call.1} parent=1 // pred_check
      _
    $region55: #{tpu_custom_call.1} parent=1 // pred_check_branch
      %157 = sbr.rel (0) target = $region57
    $region56: #{tpu_custom_call.1} parent=1 // pred_region
      _
    $region57: #{tpu_custom_call.1} parent=1 // pred_fallthru
      _
    // Predicated region
    $region58: #{tpu_custom_call.1} parent=1 // pred_check
      _
    $region59: #{tpu_custom_call.1} parent=1 // pred_check_branch
      %159 = sbr.rel (0) target = $region61
    $region60: #{tpu_custom_call.1} parent=1 // pred_region
      %s161 = ssub.s32 4096, 4096
      %162 = vsyncadd [#allocation20], %s161
      %s163 = sshll.u32 [#allocation21], 4
      %s164 = int_to_ptr.vmem [resolvable:$true] %s163
      %169 = dma.hbm_to_vmem [thread:$0]  %s14, 4096, %s164, [#allocation20], 128, 128, 8
    $region61: #{tpu_custom_call.1} parent=1 // pred_fallthru
      _
    // Predicated region
    $region62: #{tpu_custom_call.1} parent=1 // pred_check
      _
    $region63: #{tpu_custom_call.1} parent=1 // pred_check_branch
      %171 = sbr.rel (0) target = $region65
    $region64: #{tpu_custom_call.1} parent=1 // pred_region
      _
    $region65: #{tpu_custom_call.1} parent=1 // pred_fallthru
      _
    // Predicated region
    $region66: #{tpu_custom_call.1} parent=1 // pred_check
      _
    $region67: #{tpu_custom_call.1} parent=1 // pred_check_branch
      %173 = sbr.rel (0) target = $region69
    $region68: #{tpu_custom_call.1} parent=1 // pred_region
      _
    $region69: #{tpu_custom_call.1} parent=1 // pred_fallthru
      _
    // Predicated region
    $region70: #{tpu_custom_call.1} parent=1 // pred_check
      _
    $region71: #{tpu_custom_call.1} parent=1 // pred_check_branch
      %175 = sbr.rel (0) target = $region73
    $region72: #{tpu_custom_call.1} parent=1 // pred_region
      %s177 = ssub.s32 32, 32
      %178 = vsyncadd [#allocation23], %s177
      %s180 = sshll.u32 [#allocation22], 4
      %s181 = int_to_ptr.vmem [resolvable:$true] %s180
      %183 = dma.hbm_to_vmem [thread:$0]  %s17, 32, %s181, [#allocation23]
    $region73: #{tpu_custom_call.1} parent=1 // pred_fallthru
      _
    // Predicated region
    $region74: #{tpu_custom_call.1} parent=1 // pred_check
      _
    $region75: #{tpu_custom_call.1} parent=1 // pred_check_branch
      %185 = sbr.rel (0) target = $region77
    $region76: #{tpu_custom_call.1} parent=1 // pred_region
      %s187 = ssub.s32 2048, 2048
      %188 = vsyncadd [#allocation23], %s187
      %s189 = sshll.u32 [#allocation24], 4
      %s190 = int_to_ptr.vmem [resolvable:$true] %s189
      %195 = dma.hbm_to_vmem [thread:$0]  %s18, 2048, %s190, [#allocation23], 128, 128, 8
    $region77: #{tpu_custom_call.1} parent=1 // pred_fallthru
      _
    // Predicated region
    $region78: #{tpu_custom_call.1} parent=1 // pred_check
      _
    $region79: #{tpu_custom_call.1} parent=1 // pred_check_branch
      %197 = sbr.rel (0) target = $region81
    $region80: #{tpu_custom_call.1} parent=1 // pred_region
      _
    $region81: #{tpu_custom_call.1} parent=1 // pred_fallthru
      _
    // Predicated region
    $region82: #{tpu_custom_call.1} parent=1 // pred_check
      _
    $region83: #{tpu_custom_call.1} parent=1 // pred_check_branch
      %199 = sbr.rel (0) target = $region85
    $region84: #{tpu_custom_call.1} parent=1 // pred_region
      %s201 = ssub.s32 352, 352
      %202 = vsyncadd [#allocation26], %s201
      %s204 = sshll.u32 [#allocation25], 4
      %s205 = int_to_ptr.vmem [resolvable:$true] %s204
      %207 = dma.hbm_to_vmem [thread:$0]  %s21, 352, %s205, [#allocation26]
    $region85: #{tpu_custom_call.1} parent=1 // pred_fallthru
      _
    // Predicated region
    $region86: #{tpu_custom_call.1} parent=1 // pred_check
      _
    $region87: #{tpu_custom_call.1} parent=1 // pred_check_branch
      %209 = sbr.rel (0) target = $region89
    $region88: #{tpu_custom_call.1} parent=1 // pred_region
      %210 = dma.done [#allocation5], 256
    $region89: #{tpu_custom_call.1} parent=1 // pred_fallthru
      _
    // Predicated region
    $region90: #{tpu_custom_call.1} parent=1 // pred_check
      _
    $region91: #{tpu_custom_call.1} parent=1 // pred_check_branch
      %212 = sbr.rel (0) target = $region93
    $region92: #{tpu_custom_call.1} parent=1 // pred_region
      %213 = dma.done [#allocation8], 512
    $region93: #{tpu_custom_call.1} parent=1 // pred_fallthru
      _
    // Predicated region
    $region94: #{tpu_custom_call.1} parent=1 // pred_check
      _
    $region95: #{tpu_custom_call.1} parent=1 // pred_check_branch
      %215 = sbr.rel (0) target = $region97
    $region96: #{tpu_custom_call.1} parent=1 // pred_region
      %216 = dma.done [#allocation8], 32
    $region97: #{tpu_custom_call.1} parent=1 // pred_fallthru
      _
    // Predicated region
    $region98: #{tpu_custom_call.1} parent=1 // pred_check
      _
    $region99: #{tpu_custom_call.1} parent=1 // pred_check_branch
      %218 = sbr.rel (0) target = $region101
    $region100: #{tpu_custom_call.1} parent=1 // pred_region
      %219 = dma.done [#allocation11], 2688
    $region101: #{tpu_custom_call.1} parent=1 // pred_fallthru
      _
    // Predicated region
    $region102: #{tpu_custom_call.1} parent=1 // pred_check
      _
    $region103: #{tpu_custom_call.1} parent=1 // pred_check_branch
      %221 = sbr.rel (0) target = $region105
    $region104: #{tpu_custom_call.1} parent=1 // pred_region
      %222 = dma.done [#allocation11], 9216
    $region105: #{tpu_custom_call.1} parent=1 // pred_fallthru
      _
    // Predicated region
    $region106: #{tpu_custom_call.1} parent=1 // pred_check
      _
    $region107: #{tpu_custom_call.1} parent=1 // pred_check_branch
      %224 = sbr.rel (0) target = $region109
    $region108: #{tpu_custom_call.1} parent=1 // pred_region
      %225 = dma.done [#allocation14], 9216
    $region109: #{tpu_custom_call.1} parent=1 // pred_fallthru
      _
    // Predicated region
    $region110: #{tpu_custom_call.1} parent=1 // pred_check
      _
    $region111: #{tpu_custom_call.1} parent=1 // pred_check_branch
      %227 = sbr.rel (0) target = $region113
    $region112: #{tpu_custom_call.1} parent=1 // pred_region
      %228 = dma.done [#allocation14], 9216
    $region113: #{tpu_custom_call.1} parent=1 // pred_fallthru
      _
    // Predicated region
    $region114: #{tpu_custom_call.1} parent=1 // pred_check
      _
    $region115: #{tpu_custom_call.1} parent=1 // pred_check_branch
      %230 = sbr.rel (0) target = $region117
    $region116: #{tpu_custom_call.1} parent=1 // pred_region
      %231 = dma.done [#allocation17], 512
    $region117: #{tpu_custom_call.1} parent=1 // pred_fallthru
      _
    // Predicated region
    $region118: #{tpu_custom_call.1} parent=1 // pred_check
      _
    $region119: #{tpu_custom_call.1} parent=1 // pred_check_branch
      %233 = sbr.rel (0) target = $region121
    $region120: #{tpu_custom_call.1} parent=1 // pred_region
      %234 = dma.done [#allocation17], 8192
    $region121: #{tpu_custom_call.1} parent=1 // pred_fallthru
      _
    // Predicated region
    $region122: #{tpu_custom_call.1} parent=1 // pred_check
      _
    $region123: #{tpu_custom_call.1} parent=1 // pred_check_branch
      %236 = sbr.rel (0) target = $region125
    $region124: #{tpu_custom_call.1} parent=1 // pred_region
      %237 = dma.done [#allocation20], 4096
    $region125: #{tpu_custom_call.1} parent=1 // pred_fallthru
      _
    // Predicated region
    $region126: #{tpu_custom_call.1} parent=1 // pred_check
      _
    $region127: #{tpu_custom_call.1} parent=1 // pred_check_branch
      %239 = sbr.rel (0) target = $region129
    $region128: #{tpu_custom_call.1} parent=1 // pred_region
      %240 = dma.done [#allocation20], 4096
    $region129: #{tpu_custom_call.1} parent=1 // pred_fallthru
      _
    // Predicated region
    $region130: #{tpu_custom_call.1} parent=1 // pred_check
      _
    $region131: #{tpu_custom_call.1} parent=1 // pred_check_branch
      %242 = sbr.rel (0) target = $region133
    $region132: #{tpu_custom_call.1} parent=1 // pred_region
      %243 = dma.done [#allocation23], 32
    $region133: #{tpu_custom_call.1} parent=1 // pred_fallthru
      _
    // Predicated region
    $region134: #{tpu_custom_call.1} parent=1 // pred_check
      _
    $region135: #{tpu_custom_call.1} parent=1 // pred_check_branch
      %245 = sbr.rel (0) target = $region137
    $region136: #{tpu_custom_call.1} parent=1 // pred_region
      %246 = dma.done [#allocation23], 2048
    $region137: #{tpu_custom_call.1} parent=1 // pred_fallthru
      _
    // Predicated region
    $region138: #{tpu_custom_call.1} parent=1 // pred_check
      _
    $region139: #{tpu_custom_call.1} parent=1 // pred_check_branch
      %248 = sbr.rel (0) target = $region141
    $region140: #{tpu_custom_call.1} parent=1 // pred_region
      %249 = dma.done [#allocation26], 352
    $region141: #{tpu_custom_call.1} parent=1 // pred_fallthru
      _
    // Predicated region
    $region142: #{tpu_custom_call.1} parent=1 // pred_check
      _
    $region143: #{tpu_custom_call.1} parent=1 // pred_check_branch
      %252 = sbr.rel target = $region145
    $region144: #{tpu_custom_call.1} parent=1 // pred_region
      %253 = sst [smem:[#allocation30]] [#allocation29]
      %254 = sst [smem:[#allocation31]] [#allocation28]
    $region145: #{tpu_custom_call.1} parent=1 // pred_fallthru
      _
    %256 = shalt.err (0)
    %s258 = sshll.u32 [#allocation2], 4
    %s259 = int_to_ptr.vmem [resolvable:$true] %s258
    %261 = dma.hbm_to_vmem [thread:$0]  %s19, 32768, %s259, [#allocation3]
    %v262 = vld [vmem:[%s0] sm:$0xff]
    %v263 = vld [vmem:[%s0 + $0x8] sm:$0xff]
    %v264 = vld [vmem:[%s0 + $0x10] sm:$0xff]
    %v265 = vld [vmem:[%s0 + $0x18] sm:$0xff]
    %v266 = vld [vmem:[%s0 + $0x20] sm:$0xff]
    %v267 = vld [vmem:[%s0 + $0x28] sm:$0xff]
    %v268 = vld [vmem:[%s0 + $0x30] sm:$0xff]
    %v269 = vld [vmem:[%s0 + $0x38] sm:$0xff]
    %v270 = vld [vmem:[%s0 + $0x40] sm:$0xff]
    %v271 = vld [vmem:[%s0 + $0x48] sm:$0xff]
    %v272 = vld [vmem:[%s0 + $0x50] sm:$0xff]
    %v273 = vld [vmem:[%s0 + $0x58] sm:$0xff]
    %v274 = vld [vmem:[%s0 + $0x60] sm:$0xff]
    %v275 = vld [vmem:[%s0 + $0x68] sm:$0xff]
    %v276 = vld [vmem:[%s0 + $0x70] sm:$0xff]
    %v277 = vld [vmem:[%s0 + $0x78] sm:$0xff]
    %v278 = vld [vmem:[#allocation10] sm:$0xff]
    %v279 = vld [vmem:[#allocation10 + $0x8] sm:$0xff]
    %v280 = vld [vmem:[#allocation10 + $0x10] sm:$0xff]
    %v281 = vld [vmem:[#allocation10 + $0x18] sm:$0xff]
    %v282 = vld [vmem:[#allocation10 + $0x20] sm:$0xff]
    %v283 = vld [vmem:[#allocation10 + $0x28] sm:$0xff]
    %v284 = vld [vmem:[#allocation10 + $0x30] sm:$0xff]
    %v285 = vld [vmem:[#allocation10 + $0x38] sm:$0xff]
    %v286 = vld [vmem:[#allocation10 + $0x40] sm:$0xff]
    %v287 = vld [vmem:[#allocation10 + $0x48] sm:$0xff]
    %v288 = vld [vmem:[#allocation10 + $0x50] sm:$0xff]
    %v289 = vld [vmem:[#allocation10 + $0x58] sm:$0xff]
    %v290 = vld [vmem:[#allocation10 + $0x60] sm:$0xff]
    %v291 = vld [vmem:[#allocation10 + $0x68] sm:$0xff]
    %v292 = vld [vmem:[#allocation10 + $0x70] sm:$0xff]
    %v293 = vld [vmem:[#allocation10 + $0x78] sm:$0xff]
    %v294 = vld [vmem:[#allocation10 + $0x80] sm:$0xff]
    %v295 = vld [vmem:[#allocation10 + $0x88] sm:$0xff]
    %v296 = vld [vmem:[#allocation10 + $0x90] sm:$0x3]
    %v297 = vld [vmem:[#allocation10 + $0x98] sm:$0x3]
    %v298 = vld [vmem:[#allocation10 + $0xa0] sm:$0x3]
    %v299 = vld [vmem:[#allocation25] sm:$0x7]
    %v301 = vlaneseq
    %v302 = vshrl.u32 %v301, 7
    %v303 = vsub.s32 0, %v302
    %v304 = vrot.slane %v299, %v303
    %v305 = vlaneseq
    %v306 = vshrl.u32 %v305, 7
    %v307 = vsub.s32 1, %v306
    %v308 = vrot.slane %v299, %v307
    %v309 = vlaneseq
    %v310 = vshrl.u32 %v309, 7
    %v311 = vsub.s32 2, %v310
    %v312 = vrot.slane %v299, %v311
    %vm316 = vcmask 408576
    %v318 = vsel %vm316, %v262, 0
    %v321 = vsel %vm316, %v263, 0
    %v324 = vsel %vm316, %v264, 0
    %v327 = vsel %vm316, %v265, 0
    %v330 = vsel %vm316, %v266, 0
    %v333 = vsel %vm316, %v267, 0
    %v336 = vsel %vm316, %v268, 0
    %v339 = vsel %vm316, %v269, 0
    %v342 = vsel %vm316, %v270, 0
    %v345 = vsel %vm316, %v271, 0
    %v348 = vsel %vm316, %v272, 0
    %v351 = vsel %vm316, %v273, 0
    %v354 = vsel %vm316, %v274, 0
    %v357 = vsel %vm316, %v275, 0
    %v360 = vsel %vm316, %v276, 0
    %v363 = vsel %vm316, %v277, 0
    %vm365 = vcmask 1041408
    %v367 = vsel %vm365, %v296, 0
    %v370 = vsel %vm365, %v297, 0
    %v373 = vsel %vm365, %v298, 0
    %375 = vmatprep.subr.mxu0 0.0
    %376 = vmatpush1.msra.mxu0 0.0
    %377 = vmatprep.subr.mxu0 0.0
    %378 = vmatpush1.msra.mxu0 0.0
    %379 = vmatprep.subr.mxu0 0.0
    %380 = vmatpush1.msra.mxu0 0.0
    %381 = vmatprep.subr.mxu0 0.0
    %382 = vmatpush1.msra.mxu0 0.0
    %383 = vmatprep.subr.mxu0 0.0
    %384 = vmatpush1.msra.mxu0 0.0
    %385 = vmatprep.subr.mxu0 0.0
    %386 = vmatpush1.msra.mxu0 0.0
    %387 = vmatprep.subr.mxu0 0.0
    %388 = vmatpush1.msra.mxu0 0.0
    %389 = vmatprep.subr.mxu0 0.0
    %390 = vmatpush1.msra.mxu0 0.0
    %391 = vmatprep.subr.mxu0 0.0
    %392 = vmatpush1.msra.mxu0 0.0
    %393 = vmatprep.subr.mxu0 %v370
    %394 = vmatpush1.msra.mxu0 %v367
    %395 = vmatprep.subr.mxu0 %v294
    %396 = vmatpush1.msra.mxu0 %v293
    %397 = vmatprep.subr.mxu0 %v291
    %398 = vmatpush1.msra.mxu0 %v290
    %399 = vmatprep.subr.mxu0 %v288
    %400 = vmatpush1.msra.mxu0 %v287
    %401 = vmatprep.subr.mxu0 %v285
    %402 = vmatpush1.msra.mxu0 %v284
    %403 = vmatprep.subr.mxu0 %v282
    %404 = vmatpush1.msra.mxu0 %v281
    %405 = vmatprep.subr.mxu0 %v279
    %406 = vmatpush1.msra.mxu0 %v278
    %407 = vmatprep.subr.mxu0 0.0
    %408 = vmatpush2.msra.mxu0 0.0
    %409 = vmatprep.subr.mxu0 0.0
    %410 = vmatpush2.msra.mxu0 0.0
    %411 = vmatprep.subr.mxu0 0.0
    %412 = vmatpush2.msra.mxu0 0.0
    %413 = vmatprep.subr.mxu0 0.0
    %414 = vmatpush2.msra.mxu0 0.0
    %415 = vmatprep.subr.mxu0 0.0
    %416 = vmatpush2.msra.mxu0 0.0
    %417 = vmatprep.subr.mxu0 0.0
    %418 = vmatpush2.msra.mxu0 0.0
    %419 = vmatprep.subr.mxu0 0.0
    %420 = vmatpush2.msra.mxu0 0.0
    %421 = vmatprep.subr.mxu0 0.0
    %422 = vmatpush2.msra.mxu0 0.0
    %423 = vmatprep.subr.mxu0 0.0
    %424 = vmatpush2.msra.mxu0 0.0
    %425 = vmatprep.subr.mxu0 0.0
    %426 = vmatpush2.msra.mxu0 0.0
    %427 = vmatprep.subr.mxu0 0.0
    %428 = vmatpush2.msra.mxu0 0.0
    %429 = vmatprep.subr.mxu0 0.0
    %430 = vmatpush2.msra.mxu0 0.0
    %431 = vmatprep.subr.mxu0 0.0
    %432 = vmatpush2.msra.mxu0 0.0
    %433 = vmatprep.subr.mxu0 0.0
    %434 = vmatpush2.msra.mxu0 0.0
    %435 = vmatprep.subr.mxu0 0.0
    %436 = vmatpush2.msra.mxu0 0.0
    %437 = vmatprep.subr.mxu0 0.0
    %438 = vmatpush2.msra.mxu0 0.0
    %439 = vmatprep.mubr.f32.mxu0 0.0
    %440 = vmatmul.mubr.f32.gmra.mxu0 %v318
    %v441 = vpop.f32.mrf.mxu0
    %v442 = vadd.f32 %v304, %v441
    %v443 = vpop.f32.mrf.mxu0
    %v444 = vadd.f32 %v308, %v443
    %445 = vmatprep.mubr.f32.mxu0 0.0
    %446 = vmatmul.mubr.f32.gmra.mxu0 %v321
    %v447 = vpop.f32.mrf.mxu0
    %v448 = vadd.f32 %v304, %v447
    %v449 = vpop.f32.mrf.mxu0
    %v450 = vadd.f32 %v308, %v449
    %451 = vmatprep.mubr.f32.mxu0 0.0
    %452 = vmatmul.mubr.f32.gmra.mxu0 %v324
    %v453 = vpop.f32.mrf.mxu0
    %v454 = vadd.f32 %v304, %v453
    %v455 = vpop.f32.mrf.mxu0
    %v456 = vadd.f32 %v308, %v455
    %457 = vmatprep.mubr.f32.mxu0 0.0
    %458 = vmatmul.mubr.f32.gmra.mxu0 %v327
    %v459 = vpop.f32.mrf.mxu0
    %v460 = vadd.f32 %v304, %v459
    %v461 = vpop.f32.mrf.mxu0
    %v462 = vadd.f32 %v308, %v461
    %463 = vmatprep.mubr.f32.mxu0 0.0
    %464 = vmatmul.mubr.f32.gmra.mxu0 %v330
    %v465 = vpop.f32.mrf.mxu0
    %v466 = vadd.f32 %v304, %v465
    %v467 = vpop.f32.mrf.mxu0
    %v468 = vadd.f32 %v308, %v467
    %469 = vmatprep.mubr.f32.mxu0 0.0
    %470 = vmatmul.mubr.f32.gmra.mxu0 %v333
    %v471 = vpop.f32.mrf.mxu0
    %v472 = vadd.f32 %v304, %v471
    %v473 = vpop.f32.mrf.mxu0
    %v474 = vadd.f32 %v308, %v473
    %475 = vmatprep.mubr.f32.mxu0 0.0
    %476 = vmatmul.mubr.f32.gmra.mxu0 %v336
    %v477 = vpop.f32.mrf.mxu0
    %v478 = vadd.f32 %v304, %v477
    %v479 = vpop.f32.mrf.mxu0
    %v480 = vadd.f32 %v308, %v479
    %481 = vmatprep.mubr.f32.mxu0 0.0
    %482 = vmatmul.mubr.f32.gmra.mxu0 %v339
    %v483 = vpop.f32.mrf.mxu0
    %v484 = vadd.f32 %v304, %v483
    %v485 = vpop.f32.mrf.mxu0
    %v486 = vadd.f32 %v308, %v485
    %487 = vmatprep.mubr.f32.mxu0 0.0
    %488 = vmatmul.mubr.f32.gmra.mxu0 %v342
    %v489 = vpop.f32.mrf.mxu0
    %v490 = vadd.f32 %v304, %v489
    %v491 = vpop.f32.mrf.mxu0
    %v492 = vadd.f32 %v308, %v491
    %493 = vmatprep.mubr.f32.mxu0 0.0
    %494 = vmatmul.mubr.f32.gmra.mxu0 %v345
    %v495 = vpop.f32.mrf.mxu0
    %v496 = vadd.f32 %v304, %v495
    %v497 = vpop.f32.mrf.mxu0
    %v498 = vadd.f32 %v308, %v497
    %499 = vmatprep.mubr.f32.mxu0 0.0
    %500 = vmatmul.mubr.f32.gmra.mxu0 %v348
    %v501 = vpop.f32.mrf.mxu0
    %v502 = vadd.f32 %v304, %v501
    %v503 = vpop.f32.mrf.mxu0
    %v504 = vadd.f32 %v308, %v503
    %505 = vmatprep.mubr.f32.mxu0 0.0
    %506 = vmatmul.mubr.f32.gmra.mxu0 %v351
    %v507 = vpop.f32.mrf.mxu0
    %v508 = vadd.f32 %v304, %v507
    %v509 = vpop.f32.mrf.mxu0
    %v510 = vadd.f32 %v308, %v509
    %511 = vmatprep.mubr.f32.mxu0 0.0
    %512 = vmatmul.mubr.f32.gmra.mxu0 %v354
    %v513 = vpop.f32.mrf.mxu0
    %v514 = vadd.f32 %v304, %v513
    %v515 = vpop.f32.mrf.mxu0
    %v516 = vadd.f32 %v308, %v515
    %517 = vmatprep.mubr.f32.mxu0 0.0
    %518 = vmatmul.mubr.f32.gmra.mxu0 %v357
    %v519 = vpop.f32.mrf.mxu0
    %v520 = vadd.f32 %v304, %v519
    %v521 = vpop.f32.mrf.mxu0
    %v522 = vadd.f32 %v308, %v521
    %523 = vmatprep.mubr.f32.mxu0 0.0
    %524 = vmatmul.mubr.f32.gmra.mxu0 %v360
    %v525 = vpop.f32.mrf.mxu0
    %v526 = vadd.f32 %v304, %v525
    %v527 = vpop.f32.mrf.mxu0
    %v528 = vadd.f32 %v308, %v527
    %529 = vmatprep.mubr.f32.mxu0 0.0
    %530 = vmatmul.mubr.f32.gmra.mxu0 %v363
    %v531 = vpop.f32.mrf.mxu0
    %v532 = vadd.f32 %v304, %v531
    %v533 = vpop.f32.mrf.mxu0
    %v534 = vadd.f32 %v308, %v533
    %535 = vdwg.mxu0
    %536 = vmatprep.subr.mxu0 0.0
    %537 = vmatpush1.msra.mxu0 0.0
    %538 = vmatprep.subr.mxu0 0.0
    %539 = vmatpush1.msra.mxu0 0.0
    %540 = vmatprep.subr.mxu0 0.0
    %541 = vmatpush1.msra.mxu0 0.0
    %542 = vmatprep.subr.mxu0 0.0
    %543 = vmatpush1.msra.mxu0 0.0
    %544 = vmatprep.subr.mxu0 0.0
    %545 = vmatpush1.msra.mxu0 0.0
    %546 = vmatprep.subr.mxu0 0.0
    %547 = vmatpush1.msra.mxu0 0.0
    %548 = vmatprep.subr.mxu0 0.0
    %549 = vmatpush1.msra.mxu0 0.0
    %550 = vmatprep.subr.mxu0 0.0
    %551 = vmatpush1.msra.mxu0 0.0
    %552 = vmatprep.subr.mxu0 0.0
    %553 = vmatpush1.msra.mxu0 0.0
    %554 = vmatprep.subr.mxu0 0.0
    %555 = vmatpush1.msra.mxu0 %v373
    %556 = vmatprep.subr.mxu0 0.0
    %557 = vmatpush1.msra.mxu0 %v295
    %558 = vmatprep.subr.mxu0 0.0
    %559 = vmatpush1.msra.mxu0 %v292
    %560 = vmatprep.subr.mxu0 0.0
    %561 = vmatpush1.msra.mxu0 %v289
    %562 = vmatprep.subr.mxu0 0.0
    %563 = vmatpush1.msra.mxu0 %v286
    %564 = vmatprep.subr.mxu0 0.0
    %565 = vmatpush1.msra.mxu0 %v283
    %566 = vmatprep.subr.mxu0 0.0
    %567 = vmatpush1.msra.mxu0 %v280
    %568 = vmatprep.subr.mxu0 0.0
    %569 = vmatpush2.msra.mxu0 0.0
    %570 = vmatprep.subr.mxu0 0.0
    %571 = vmatpush2.msra.mxu0 0.0
    %572 = vmatprep.subr.mxu0 0.0
    %573 = vmatpush2.msra.mxu0 0.0
    %574 = vmatprep.subr.mxu0 0.0
    %575 = vmatpush2.msra.mxu0 0.0
    %576 = vmatprep.subr.mxu0 0.0
    %577 = vmatpush2.msra.mxu0 0.0
    %578 = vmatprep.subr.mxu0 0.0
    %579 = vmatpush2.msra.mxu0 0.0
    %580 = vmatprep.subr.mxu0 0.0
    %581 = vmatpush2.msra.mxu0 0.0
    %582 = vmatprep.subr.mxu0 0.0
    %583 = vmatpush2.msra.mxu0 0.0
    %584 = vmatprep.subr.mxu0 0.0
    %585 = vmatpush2.msra.mxu0 0.0
    %586 = vmatprep.subr.mxu0 0.0
    %587 = vmatpush2.msra.mxu0 0.0
    %588 = vmatprep.subr.mxu0 0.0
    %589 = vmatpush2.msra.mxu0 0.0
    %590 = vmatprep.subr.mxu0 0.0
    %591 = vmatpush2.msra.mxu0 0.0
    %592 = vmatprep.subr.mxu0 0.0
    %593 = vmatpush2.msra.mxu0 0.0
    %594 = vmatprep.subr.mxu0 0.0
    %595 = vmatpush2.msra.mxu0 0.0
    %596 = vmatprep.subr.mxu0 0.0
    %597 = vmatpush2.msra.mxu0 0.0
    %598 = vmatprep.subr.mxu0 0.0
    %599 = vmatpush2.msra.mxu0 0.0
    %600 = vmatprep.mubr.f32.mxu0 0.0
    %601 = vmatmul.mubr.f32.gmra.mxu0 %v318
    %v602 = vpop.f32.mrf.mxu0
    %v603 = vadd.f32 %v312, %v602
    %v604 = vpop.f32.mrf.mxu0
    %605 = vmatprep.mubr.f32.mxu0 0.0
    %606 = vmatmul.mubr.f32.gmra.mxu0 %v321
    %v607 = vpop.f32.mrf.mxu0
    %v608 = vadd.f32 %v312, %v607
    %v609 = vpop.f32.mrf.mxu0
    %610 = vmatprep.mubr.f32.mxu0 0.0
    %611 = vmatmul.mubr.f32.gmra.mxu0 %v324
    %v612 = vpop.f32.mrf.mxu0
    %v613 = vadd.f32 %v312, %v612
    %v614 = vpop.f32.mrf.mxu0
    %615 = vmatprep.mubr.f32.mxu0 0.0
    %616 = vmatmul.mubr.f32.gmra.mxu0 %v327
    %v617 = vpop.f32.mrf.mxu0
    %v618 = vadd.f32 %v312, %v617
    %v619 = vpop.f32.mrf.mxu0
    %620 = vmatprep.mubr.f32.mxu0 0.0
    %621 = vmatmul.mubr.f32.gmra.mxu0 %v330
    %v622 = vpop.f32.mrf.mxu0
    %v623 = vadd.f32 %v312, %v622
    %v624 = vpop.f32.mrf.mxu0
    %625 = vmatprep.mubr.f32.mxu0 0.0
    %626 = vmatmul.mubr.f32.gmra.mxu0 %v333
    %v627 = vpop.f32.mrf.mxu0
    %v628 = vadd.f32 %v312, %v627
    %v629 = vpop.f32.mrf.mxu0
    %630 = vmatprep.mubr.f32.mxu0 0.0
    %631 = vmatmul.mubr.f32.gmra.mxu0 %v336
    %v632 = vpop.f32.mrf.mxu0
    %v633 = vadd.f32 %v312, %v632
    %v634 = vpop.f32.mrf.mxu0
    %635 = vmatprep.mubr.f32.mxu0 0.0
    %636 = vmatmul.mubr.f32.gmra.mxu0 %v339
    %v637 = vpop.f32.mrf.mxu0
    %v638 = vadd.f32 %v312, %v637
    %v639 = vpop.f32.mrf.mxu0
    %640 = vmatprep.mubr.f32.mxu0 0.0
    %641 = vmatmul.mubr.f32.gmra.mxu0 %v342
    %v642 = vpop.f32.mrf.mxu0
    %v643 = vadd.f32 %v312, %v642
    %v644 = vpop.f32.mrf.mxu0
    %645 = vmatprep.mubr.f32.mxu0 0.0
    %646 = vmatmul.mubr.f32.gmra.mxu0 %v345
    %v647 = vpop.f32.mrf.mxu0
    %v648 = vadd.f32 %v312, %v647
    %v649 = vpop.f32.mrf.mxu0
    %650 = vmatprep.mubr.f32.mxu0 0.0
    %651 = vmatmul.mubr.f32.gmra.mxu0 %v348
    %v652 = vpop.f32.mrf.mxu0
    %v653 = vadd.f32 %v312, %v652
    %v654 = vpop.f32.mrf.mxu0
    %655 = vmatprep.mubr.f32.mxu0 0.0
    %656 = vmatmul.mubr.f32.gmra.mxu0 %v351
    %v657 = vpop.f32.mrf.mxu0
    %v658 = vadd.f32 %v312, %v657
    %v659 = vpop.f32.mrf.mxu0
    %660 = vmatprep.mubr.f32.mxu0 0.0
    %661 = vmatmul.mubr.f32.gmra.mxu0 %v354
    %v662 = vpop.f32.mrf.mxu0
    %v663 = vadd.f32 %v312, %v662
    %v664 = vpop.f32.mrf.mxu0
    %665 = vmatprep.mubr.f32.mxu0 0.0
    %666 = vmatmul.mubr.f32.gmra.mxu0 %v357
    %v667 = vpop.f32.mrf.mxu0
    %v668 = vadd.f32 %v312, %v667
    %v669 = vpop.f32.mrf.mxu0
    %670 = vmatprep.mubr.f32.mxu0 0.0
    %671 = vmatmul.mubr.f32.gmra.mxu0 %v360
    %v672 = vpop.f32.mrf.mxu0
    %v673 = vadd.f32 %v312, %v672
    %v674 = vpop.f32.mrf.mxu0
    %675 = vmatprep.mubr.f32.mxu0 0.0
    %676 = vmatmul.mubr.f32.gmra.mxu0 %v363
    %v677 = vpop.f32.mrf.mxu0
    %v678 = vadd.f32 %v312, %v677
    %v679 = vpop.f32.mrf.mxu0
    %680 = vdwg.mxu0
    %v681 = vmax.f32 %v442, 0.0
    %v682 = vmax.f32 %v444, 0.0
    %v683 = vmax.f32 %v603, 0.0
    %v684 = vmax.f32 %v448, 0.0
    %v685 = vmax.f32 %v450, 0.0
    %v686 = vmax.f32 %v608, 0.0
    %v687 = vmax.f32 %v454, 0.0
    %v688 = vmax.f32 %v456, 0.0
    %v689 = vmax.f32 %v613, 0.0
    %v690 = vmax.f32 %v460, 0.0
    %v691 = vmax.f32 %v462, 0.0
    %v692 = vmax.f32 %v618, 0.0
    %v693 = vmax.f32 %v466, 0.0
    %v694 = vmax.f32 %v468, 0.0
    %v695 = vmax.f32 %v623, 0.0
    %v696 = vmax.f32 %v472, 0.0
    %v697 = vmax.f32 %v474, 0.0
    %v698 = vmax.f32 %v628, 0.0
    %v699 = vmax.f32 %v478, 0.0
    %v700 = vmax.f32 %v480, 0.0
    %v701 = vmax.f32 %v633, 0.0
    %v702 = vmax.f32 %v484, 0.0
    %v703 = vmax.f32 %v486, 0.0
    %v704 = vmax.f32 %v638, 0.0
    %v705 = vmax.f32 %v490, 0.0
    %v706 = vmax.f32 %v492, 0.0
    %v707 = vmax.f32 %v643, 0.0
    %v708 = vmax.f32 %v496, 0.0
    %v709 = vmax.f32 %v498, 0.0
    %v710 = vmax.f32 %v648, 0.0
    %v711 = vmax.f32 %v502, 0.0
    %v712 = vmax.f32 %v504, 0.0
    %v713 = vmax.f32 %v653, 0.0
    %v714 = vmax.f32 %v508, 0.0
    %v715 = vmax.f32 %v510, 0.0
    %v716 = vmax.f32 %v658, 0.0
    %v717 = vmax.f32 %v514, 0.0
    %v718 = vmax.f32 %v516, 0.0
    %v719 = vmax.f32 %v663, 0.0
    %v720 = vmax.f32 %v520, 0.0
    %v721 = vmax.f32 %v522, 0.0
    %v722 = vmax.f32 %v668, 0.0
    %v723 = vmax.f32 %v526, 0.0
    %v724 = vmax.f32 %v528, 0.0
    %v725 = vmax.f32 %v673, 0.0
    %v726 = vmax.f32 %v532, 0.0
    %v727 = vmax.f32 %v534, 0.0
    %v728 = vmax.f32 %v678, 0.0
    %v729 = vld [vmem:[#allocation12] sm:$0xff]
    %v730 = vld [vmem:[#allocation12 + $0x8] sm:$0xf]
    %v731 = vld [vmem:[#allocation12 + $0xc] sm:$0xff]
    %v732 = vld [vmem:[#allocation12 + $0x14] sm:$0xf]
    %v733 = vld [vmem:[#allocation12 + $0x18] sm:$0xff]
    %v734 = vld [vmem:[#allocation12 + $0x20] sm:$0xf]
    %v735 = vld [vmem:[#allocation12 + $0x24] sm:$0xff]
    %v736 = vld [vmem:[#allocation12 + $0x2c] sm:$0xf]
    %v737 = vld [vmem:[#allocation12 + $0x30] sm:$0xff]
    %v738 = vld [vmem:[#allocation12 + $0x38] sm:$0xf]
    %v739 = vld [vmem:[#allocation12 + $0x3c] sm:$0xff]
    %v740 = vld [vmem:[#allocation12 + $0x44] sm:$0xf]
    %v741 = vld [vmem:[#allocation12 + $0x48] sm:$0xff]
    %v742 = vld [vmem:[#allocation12 + $0x50] sm:$0xf]
    %v743 = vld [vmem:[#allocation12 + $0x54] sm:$0xff]
    %v744 = vld [vmem:[#allocation12 + $0x5c] sm:$0xf]
    %v745 = vld [vmem:[#allocation12 + $0x60] sm:$0xff]
    %v746 = vld [vmem:[#allocation12 + $0x68] sm:$0xf]
    %v747 = vld [vmem:[#allocation12 + $0x6c] sm:$0xff]
    %v748 = vld [vmem:[#allocation12 + $0x74] sm:$0xf]
    %v749 = vld [vmem:[#allocation12 + $0x78] sm:$0xff]
    %v750 = vld [vmem:[#allocation12 + $0x80] sm:$0xf]
    %v751 = vld [vmem:[#allocation12 + $0x84] sm:$0xff]
    %v752 = vld [vmem:[#allocation12 + $0x8c] sm:$0xf]
    %v753 = vld [vmem:[#allocation12 + $0x90] sm:$0xff]
    %v754 = vld [vmem:[#allocation12 + $0x98] sm:$0xf]
    %v755 = vld [vmem:[#allocation12 + $0x9c] sm:$0xff]
    %v756 = vld [vmem:[#allocation12 + $0xa4] sm:$0xf]
    %v757 = vld [vmem:[#allocation12 + $0xa8] sm:$0xff]
    %v758 = vld [vmem:[#allocation12 + $0xb0] sm:$0xf]
    %v759 = vld [vmem:[#allocation12 + $0xb4] sm:$0xff]
    %v760 = vld [vmem:[#allocation12 + $0xbc] sm:$0xf]
    %v761 = vld [vmem:[#allocation12 + $0xc0] sm:$0xff]
    %v762 = vld [vmem:[#allocation12 + $0xc8] sm:$0xf]
    %v763 = vld [vmem:[#allocation12 + $0xcc] sm:$0xff]
    %v764 = vld [vmem:[#allocation12 + $0xd4] sm:$0xf]
    %v765 = vld [vmem:[#allocation12 + $0xd8] sm:$0xff]
    %v766 = vld [vmem:[#allocation12 + $0xe0] sm:$0xf]
    %v767 = vld [vmem:[#allocation12 + $0xe4] sm:$0xff]
    %v768 = vld [vmem:[#allocation12 + $0xec] sm:$0xf]
    %v769 = vld [vmem:[#allocation12 + $0xf0] sm:$0xff]
    %v770 = vld [vmem:[#allocation12 + $0xf8] sm:$0xf]
    %v771 = vld [vmem:[#allocation12 + $0xfc] sm:$0xff]
    %v772 = vld [vmem:[#allocation12 + $0x104] sm:$0xf]
    %v773 = vld [vmem:[#allocation12 + $0x108] sm:$0xff]
    %v774 = vld [vmem:[#allocation12 + $0x110] sm:$0xf]
    %v775 = vld [vmem:[#allocation12 + $0x114] sm:$0xff]
    %v776 = vld [vmem:[#allocation12 + $0x11c] sm:$0xf]
    %v777 = vld [vmem:[#allocation12 + $0x120] sm:$0xff]
    %v778 = vld [vmem:[#allocation12 + $0x128] sm:$0xf]
    %v779 = vld [vmem:[#allocation12 + $0x12c] sm:$0xff]
    %v780 = vld [vmem:[#allocation12 + $0x134] sm:$0xf]
    %v781 = vld [vmem:[#allocation12 + $0x138] sm:$0xff]
    %v782 = vld [vmem:[#allocation12 + $0x140] sm:$0xf]
    %v783 = vld [vmem:[#allocation12 + $0x144] sm:$0xff]
    %v784 = vld [vmem:[#allocation12 + $0x14c] sm:$0xf]
    %v785 = vld [vmem:[#allocation12 + $0x150] sm:$0xff]
    %v786 = vld [vmem:[#allocation12 + $0x158] sm:$0xf]
    %v787 = vld [vmem:[#allocation12 + $0x15c] sm:$0xff]
    %v788 = vld [vmem:[#allocation12 + $0x164] sm:$0xf]
    %v789 = vld [vmem:[#allocation12 + $0x168] sm:$0xff]
    %v790 = vld [vmem:[#allocation12 + $0x170] sm:$0xf]
    %v791 = vld [vmem:[#allocation12 + $0x174] sm:$0xff]
    %v792 = vld [vmem:[#allocation12 + $0x17c] sm:$0xf]
    %v793 = vld [vmem:[#allocation12 + $0x180] sm:$0xff]
    %v794 = vld [vmem:[#allocation12 + $0x188] sm:$0xf]
    %v795 = vld [vmem:[#allocation12 + $0x18c] sm:$0xff]
    %v796 = vld [vmem:[#allocation12 + $0x194] sm:$0xf]
    %v797 = vld [vmem:[#allocation12 + $0x198] sm:$0xff]
    %v798 = vld [vmem:[#allocation12 + $0x1a0] sm:$0xf]
    %v799 = vld [vmem:[#allocation12 + $0x1a4] sm:$0xff]
    %v800 = vld [vmem:[#allocation12 + $0x1ac] sm:$0xf]
    %v801 = vld [vmem:[#allocation12 + $0x1b0] sm:$0xff]
    %v802 = vld [vmem:[#allocation12 + $0x1b8] sm:$0xf]
    %v803 = vld [vmem:[#allocation12 + $0x1bc] sm:$0xff]
    %v804 = vld [vmem:[#allocation12 + $0x1c4] sm:$0xf]
    %v805 = vld [vmem:[#allocation12 + $0x1c8] sm:$0xff]
    %v806 = vld [vmem:[#allocation12 + $0x1d0] sm:$0xf]
    %v807 = vld [vmem:[#allocation12 + $0x1d4] sm:$0xff]
    %v808 = vld [vmem:[#allocation12 + $0x1dc] sm:$0xf]
    %v809 = vld [vmem:[#allocation12 + $0x1e0] sm:$0xff]
    %v810 = vld [vmem:[#allocation12 + $0x1e8] sm:$0xf]
    %v811 = vld [vmem:[#allocation12 + $0x1ec] sm:$0xff]
    %v812 = vld [vmem:[#allocation12 + $0x1f4] sm:$0xf]
    %v813 = vld [vmem:[#allocation12 + $0x1f8] sm:$0xff]
    %v814 = vld [vmem:[#allocation12 + $0x200] sm:$0xf]
    %v815 = vld [vmem:[#allocation12 + $0x204] sm:$0xff]
    %v816 = vld [vmem:[#allocation12 + $0x20c] sm:$0xf]
    %v817 = vld [vmem:[#allocation12 + $0x210] sm:$0xff]
    %v818 = vld [vmem:[#allocation12 + $0x218] sm:$0xf]
    %v819 = vld [vmem:[#allocation12 + $0x21c] sm:$0xff]
    %v820 = vld [vmem:[#allocation12 + $0x224] sm:$0xf]
    %v821 = vld [vmem:[#allocation12 + $0x228] sm:$0xff]
    %v822 = vld [vmem:[#allocation12 + $0x230] sm:$0xf]
    %v823 = vld [vmem:[#allocation12 + $0x234] sm:$0xff]
    %v824 = vld [vmem:[#allocation12 + $0x23c] sm:$0xf]
    %v825 = vld [vmem:[#allocation25 + $0x3] sm:$0x7]
    %v827 = vlaneseq
    %v828 = vshrl.u32 %v827, 7
    %v829 = vsub.s32 0, %v828
    %v830 = vrot.slane %v825, %v829
    %v831 = vlaneseq
    %v832 = vshrl.u32 %v831, 7
    %v833 = vsub.s32 1, %v832
    %v834 = vrot.slane %v825, %v833
    %v835 = vlaneseq
    %v836 = vshrl.u32 %v835, 7
    %v837 = vsub.s32 2, %v836
    %v838 = vrot.slane %v825, %v837
    %v938 = vunpack.c.l.b16 %v729
    %v939 = vunpack.c.h.b16 %v729
    %v940 = vunpack.c.l.b16 %v730
    %v941 = vunpack.c.l.b16 %v731
    %v942 = vunpack.c.h.b16 %v731
    %v943 = vunpack.c.l.b16 %v732
    %v944 = vunpack.c.l.b16 %v733
    %v945 = vunpack.c.h.b16 %v733
    %v946 = vunpack.c.l.b16 %v734
    %v947 = vunpack.c.l.b16 %v735
    %v948 = vunpack.c.h.b16 %v735
    %v949 = vunpack.c.l.b16 %v736
    %v950 = vunpack.c.l.b16 %v737
    %v951 = vunpack.c.h.b16 %v737
    %v952 = vunpack.c.l.b16 %v738
    %v953 = vunpack.c.l.b16 %v739
    %v954 = vunpack.c.h.b16 %v739
    %v955 = vunpack.c.l.b16 %v740
    %v956 = vunpack.c.l.b16 %v741
    %v957 = vunpack.c.h.b16 %v741
    %v958 = vunpack.c.l.b16 %v742
    %v959 = vunpack.c.l.b16 %v743
    %v960 = vunpack.c.h.b16 %v743
    %v961 = vunpack.c.l.b16 %v744
    %v962 = vunpack.c.l.b16 %v745
    %v963 = vunpack.c.h.b16 %v745
    %v964 = vunpack.c.l.b16 %v746
    %v965 = vunpack.c.l.b16 %v747
    %v966 = vunpack.c.h.b16 %v747
    %v967 = vunpack.c.l.b16 %v748
    %v968 = vunpack.c.l.b16 %v749
    %v969 = vunpack.c.h.b16 %v749
    %v970 = vunpack.c.l.b16 %v750
    %v971 = vunpack.c.l.b16 %v751
    %v972 = vunpack.c.h.b16 %v751
    %v973 = vunpack.c.l.b16 %v752
    %v974 = vunpack.c.l.b16 %v753
    %v975 = vunpack.c.h.b16 %v753
    %v976 = vunpack.c.l.b16 %v754
    %v977 = vunpack.c.l.b16 %v755
    %v978 = vunpack.c.h.b16 %v755
    %v979 = vunpack.c.l.b16 %v756
    %v980 = vunpack.c.l.b16 %v757
    %v981 = vunpack.c.h.b16 %v757
    %v982 = vunpack.c.l.b16 %v758
    %v983 = vunpack.c.l.b16 %v759
    %v984 = vunpack.c.h.b16 %v759
    %v985 = vunpack.c.l.b16 %v760
    %v986 = vunpack.c.l.b16 %v761
    %v987 = vunpack.c.h.b16 %v761
    %v988 = vunpack.c.l.b16 %v762
    %v989 = vunpack.c.l.b16 %v763
    %v990 = vunpack.c.h.b16 %v763
    %v991 = vunpack.c.l.b16 %v764
    %v992 = vunpack.c.l.b16 %v765
    %v993 = vunpack.c.h.b16 %v765
    %v994 = vunpack.c.l.b16 %v766
    %v995 = vunpack.c.l.b16 %v767
    %v996 = vunpack.c.h.b16 %v767
    %v997 = vunpack.c.l.b16 %v768
    %v998 = vunpack.c.l.b16 %v769
    %v999 = vunpack.c.h.b16 %v769
    %v1000 = vunpack.c.l.b16 %v770
    %v1001 = vunpack.c.l.b16 %v771
    %v1002 = vunpack.c.h.b16 %v771
    %v1003 = vunpack.c.l.b16 %v772
    %v1004 = vunpack.c.l.b16 %v773
    %v1005 = vunpack.c.h.b16 %v773
    %v1006 = vunpack.c.l.b16 %v774
    %v1007 = vunpack.c.l.b16 %v775
    %v1008 = vunpack.c.h.b16 %v775
    %v1009 = vunpack.c.l.b16 %v776
    %v1010 = vunpack.c.l.b16 %v777
    %v1011 = vunpack.c.h.b16 %v777
    %v1012 = vunpack.c.l.b16 %v778
    %v1013 = vunpack.c.l.b16 %v779
    %v1014 = vunpack.c.h.b16 %v779
    %v1015 = vunpack.c.l.b16 %v780
    %v1016 = vunpack.c.l.b16 %v781
    %v1017 = vunpack.c.h.b16 %v781
    %v1018 = vunpack.c.l.b16 %v782
    %v1019 = vunpack.c.l.b16 %v783
    %v1020 = vunpack.c.h.b16 %v783
    %v1021 = vunpack.c.l.b16 %v784
    %v1022 = vunpack.c.l.b16 %v785
    %v1023 = vunpack.c.h.b16 %v785
    %v1024 = vunpack.c.l.b16 %v786
    %v1025 = vunpack.c.l.b16 %v787
    %v1026 = vunpack.c.h.b16 %v787
    %v1027 = vunpack.c.l.b16 %v788
    %v1028 = vunpack.c.l.b16 %v789
    %v1029 = vunpack.c.h.b16 %v789
    %v1030 = vunpack.c.l.b16 %v790
    %v1031 = vunpack.c.l.b16 %v791
    %v1032 = vunpack.c.h.b16 %v791
    %v1033 = vunpack.c.l.b16 %v792
    %v1034 = vunpack.c.l.b16 %v793
    %v1035 = vunpack.c.h.b16 %v793
    %v1036 = vunpack.c.l.b16 %v794
    %v1037 = vunpack.c.l.b16 %v795
    %v1038 = vunpack.c.h.b16 %v795
    %v1039 = vunpack.c.l.b16 %v796
    %v1040 = vunpack.c.l.b16 %v797
    %v1041 = vunpack.c.h.b16 %v797
    %v1042 = vunpack.c.l.b16 %v798
    %v1043 = vunpack.c.l.b16 %v799
    %v1044 = vunpack.c.h.b16 %v799
    %v1045 = vunpack.c.l.b16 %v800
    %v1046 = vunpack.c.l.b16 %v801
    %v1047 = vunpack.c.h.b16 %v801
    %v1048 = vunpack.c.l.b16 %v802
    %v1049 = vunpack.c.l.b16 %v803
    %v1050 = vunpack.c.h.b16 %v803
    %v1051 = vunpack.c.l.b16 %v804
    %v1052 = vunpack.c.l.b16 %v805
    %v1053 = vunpack.c.h.b16 %v805
    %v1054 = vunpack.c.l.b16 %v806
    %v1055 = vunpack.c.l.b16 %v807
    %v1056 = vunpack.c.h.b16 %v807
    %v1057 = vunpack.c.l.b16 %v808
    %v1058 = vunpack.c.l.b16 %v809
    %v1059 = vunpack.c.h.b16 %v809
    %v1060 = vunpack.c.l.b16 %v810
    %v1061 = vunpack.c.l.b16 %v811
    %v1062 = vunpack.c.h.b16 %v811
    %v1063 = vunpack.c.l.b16 %v812
    %v1064 = vunpack.c.l.b16 %v813
    %v1065 = vunpack.c.h.b16 %v813
    %v1066 = vunpack.c.l.b16 %v814
    %v1067 = vunpack.c.l.b16 %v815
    %v1068 = vunpack.c.h.b16 %v815
    %v1069 = vunpack.c.l.b16 %v816
    %v1070 = vunpack.c.l.b16 %v817
    %v1071 = vunpack.c.h.b16 %v817
    %v1072 = vunpack.c.l.b16 %v818
    %v1073 = vunpack.c.l.b16 %v819
    %v1074 = vunpack.c.h.b16 %v819
    %v1075 = vunpack.c.l.b16 %v820
    %v1076 = vunpack.c.l.b16 %v821
    %v1077 = vunpack.c.h.b16 %v821
    %v1078 = vunpack.c.l.b16 %v822
    %v1079 = vunpack.c.l.b16 %v823
    %v1080 = vunpack.c.h.b16 %v823
    %v1081 = vunpack.c.l.b16 %v824
    %v1082 = vpack.c.b16 %v941, %v938
    %v1083 = vpack.c.b16 %v942, %v939
    %v1084 = vpack.c.b16 %v943, %v940
    %v1085 = vpack.c.b16 %v947, %v944
    %v1086 = vpack.c.b16 %v948, %v945
    %v1087 = vpack.c.b16 %v949, %v946
    %v1088 = vpack.c.b16 %v953, %v950
    %v1089 = vpack.c.b16 %v954, %v951
    %v1090 = vpack.c.b16 %v955, %v952
    %v1091 = vpack.c.b16 %v959, %v956
    %v1092 = vpack.c.b16 %v960, %v957
    %v1093 = vpack.c.b16 %v961, %v958
    %v1094 = vpack.c.b16 %v965, %v962
    %v1095 = vpack.c.b16 %v966, %v963
    %v1096 = vpack.c.b16 %v967, %v964
    %v1097 = vpack.c.b16 %v971, %v968
    %v1098 = vpack.c.b16 %v972, %v969
    %v1099 = vpack.c.b16 %v973, %v970
    %v1100 = vpack.c.b16 %v977, %v974
    %v1101 = vpack.c.b16 %v978, %v975
    %v1102 = vpack.c.b16 %v979, %v976
    %v1103 = vpack.c.b16 %v983, %v980
    %v1104 = vpack.c.b16 %v984, %v981
    %v1105 = vpack.c.b16 %v985, %v982
    %v1106 = vpack.c.b16 %v989, %v986
    %v1107 = vpack.c.b16 %v990, %v987
    %v1108 = vpack.c.b16 %v991, %v988
    %v1109 = vpack.c.b16 %v995, %v992
    %v1110 = vpack.c.b16 %v996, %v993
    %v1111 = vpack.c.b16 %v997, %v994
    %v1112 = vpack.c.b16 %v1001, %v998
    %v1113 = vpack.c.b16 %v1002, %v999
    %v1114 = vpack.c.b16 %v1003, %v1000
    %v1115 = vpack.c.b16 %v1007, %v1004
    %v1116 = vpack.c.b16 %v1008, %v1005
    %v1117 = vpack.c.b16 %v1009, %v1006
    %v1118 = vpack.c.b16 %v1013, %v1010
    %v1119 = vpack.c.b16 %v1014, %v1011
    %v1120 = vpack.c.b16 %v1015, %v1012
    %v1121 = vpack.c.b16 %v1019, %v1016
    %v1122 = vpack.c.b16 %v1020, %v1017
    %v1123 = vpack.c.b16 %v1021, %v1018
    %v1124 = vpack.c.b16 %v1025, %v1022
    %v1125 = vpack.c.b16 %v1026, %v1023
    %v1126 = vpack.c.b16 %v1027, %v1024
    %v1127 = vpack.c.b16 %v1031, %v1028
    %v1128 = vpack.c.b16 %v1032, %v1029
    %v1129 = vpack.c.b16 %v1033, %v1030
    %v1130 = vpack.c.b16 %v1037, %v1034
    %v1131 = vpack.c.b16 %v1038, %v1035
    %v1132 = vpack.c.b16 %v1039, %v1036
    %v1133 = vpack.c.b16 %v1043, %v1040
    %v1134 = vpack.c.b16 %v1044, %v1041
    %v1135 = vpack.c.b16 %v1045, %v1042
    %v1136 = vpack.c.b16 %v1049, %v1046
    %v1137 = vpack.c.b16 %v1050, %v1047
    %v1138 = vpack.c.b16 %v1051, %v1048
    %v1139 = vpack.c.b16 %v1055, %v1052
    %v1140 = vpack.c.b16 %v1056, %v1053
    %v1141 = vpack.c.b16 %v1057, %v1054
    %v1142 = vpack.c.b16 %v1061, %v1058
    %v1143 = vpack.c.b16 %v1062, %v1059
    %v1144 = vpack.c.b16 %v1063, %v1060
    %v1145 = vpack.c.b16 %v1067, %v1064
    %v1146 = vpack.c.b16 %v1068, %v1065
    %v1147 = vpack.c.b16 %v1069, %v1066
    %v1148 = vpack.c.b16 %v1073, %v1070
    %v1149 = vpack.c.b16 %v1074, %v1071
    %v1150 = vpack.c.b16 %v1075, %v1072
    %v1151 = vpack.c.b16 %v1079, %v1076
    %v1152 = vpack.c.b16 %v1080, %v1077
    %v1153 = vpack.c.b16 %v1081, %v1078
    %1226 = vmatprep.subr.bf16.mxu0 %v1104
    %1227 = vmatpush1.bf16.msra.mxu0 %v1103
    %1228 = vmatprep.subr.bf16.mxu0 %v1101
    %1229 = vmatpush1.bf16.msra.mxu0 %v1100
    %1230 = vmatprep.subr.bf16.mxu0 %v1098
    %1231 = vmatpush1.bf16.msra.mxu0 %v1097
    %1232 = vmatprep.subr.bf16.mxu0 %v1095
    %1233 = vmatpush1.bf16.msra.mxu0 %v1094
    %1234 = vmatprep.subr.bf16.mxu0 %v1092
    %1235 = vmatpush1.bf16.msra.mxu0 %v1091
    %1236 = vmatprep.subr.bf16.mxu0 %v1089
    %1237 = vmatpush1.bf16.msra.mxu0 %v1088
    %1238 = vmatprep.subr.bf16.mxu0 %v1086
    %1239 = vmatpush1.bf16.msra.mxu0 %v1085
    %1240 = vmatprep.subr.bf16.mxu0 %v1083
    %1241 = vmatpush1.bf16.msra.mxu0 %v1082
    %1242 = vmatprep.subr.bf16.mxu0 %v1128
    %1243 = vmatpush2.bf16.msra.mxu0 %v1127
    %1244 = vmatprep.subr.bf16.mxu0 %v1125
    %1245 = vmatpush2.bf16.msra.mxu0 %v1124
    %1246 = vmatprep.subr.bf16.mxu0 %v1122
    %1247 = vmatpush2.bf16.msra.mxu0 %v1121
    %1248 = vmatprep.subr.bf16.mxu0 %v1119
    %1249 = vmatpush2.bf16.msra.mxu0 %v1118
    %1250 = vmatprep.subr.bf16.mxu0 %v1116
    %1251 = vmatpush2.bf16.msra.mxu0 %v1115
    %1252 = vmatprep.subr.bf16.mxu0 %v1113
    %1253 = vmatpush2.bf16.msra.mxu0 %v1112
    %1254 = vmatprep.subr.bf16.mxu0 %v1110
    %1255 = vmatpush2.bf16.msra.mxu0 %v1109
    %1256 = vmatprep.subr.bf16.mxu0 %v1107
    %1257 = vmatpush2.bf16.msra.mxu0 %v1106
    %1258 = vmatprep.mubr.f32.mxu0 %v682
    %1259 = vmatmul.mubr.f32.gmra.mxu0 %v681
    %v1260 = vpop.f32.mrf.mxu0
    %v1261 = vadd.f32 %v830, %v1260
    %v1262 = vpop.f32.mrf.mxu0
    %v1263 = vadd.f32 %v834, %v1262
    %1264 = vmatprep.mubr.f32.mxu0 %v685
    %1265 = vmatmul.mubr.f32.gmra.mxu0 %v684
    %v1266 = vpop.f32.mrf.mxu0
    %v1267 = vadd.f32 %v830, %v1266
    %v1268 = vpop.f32.mrf.mxu0
    %v1269 = vadd.f32 %v834, %v1268
    %1270 = vmatprep.mubr.f32.mxu0 %v688
    %1271 = vmatmul.mubr.f32.gmra.mxu0 %v687
    %v1272 = vpop.f32.mrf.mxu0
    %v1273 = vadd.f32 %v830, %v1272
    %v1274 = vpop.f32.mrf.mxu0
    %v1275 = vadd.f32 %v834, %v1274
    %1276 = vmatprep.mubr.f32.mxu0 %v691
    %1277 = vmatmul.mubr.f32.gmra.mxu0 %v690
    %v1278 = vpop.f32.mrf.mxu0
    %v1279 = vadd.f32 %v830, %v1278
    %v1280 = vpop.f32.mrf.mxu0
    %v1281 = vadd.f32 %v834, %v1280
    %1282 = vmatprep.mubr.f32.mxu0 %v694
    %1283 = vmatmul.mubr.f32.gmra.mxu0 %v693
    %v1284 = vpop.f32.mrf.mxu0
    %v1285 = vadd.f32 %v830, %v1284
    %v1286 = vpop.f32.mrf.mxu0
    %v1287 = vadd.f32 %v834, %v1286
    %1288 = vmatprep.mubr.f32.mxu0 %v697
    %1289 = vmatmul.mubr.f32.gmra.mxu0 %v696
    %v1290 = vpop.f32.mrf.mxu0
    %v1291 = vadd.f32 %v830, %v1290
    %v1292 = vpop.f32.mrf.mxu0
    %v1293 = vadd.f32 %v834, %v1292
    %1294 = vmatprep.mubr.f32.mxu0 %v700
    %1295 = vmatmul.mubr.f32.gmra.mxu0 %v699
    %v1296 = vpop.f32.mrf.mxu0
    %v1297 = vadd.f32 %v830, %v1296
    %v1298 = vpop.f32.mrf.mxu0
    %v1299 = vadd.f32 %v834, %v1298
    %1300 = vmatprep.mubr.f32.mxu0 %v703
    %1301 = vmatmul.mubr.f32.gmra.mxu0 %v702
    %v1302 = vpop.f32.mrf.mxu0
    %v1303 = vadd.f32 %v830, %v1302
    %v1304 = vpop.f32.mrf.mxu0
    %v1305 = vadd.f32 %v834, %v1304
    %1306 = vmatprep.mubr.f32.mxu0 %v706
    %1307 = vmatmul.mubr.f32.gmra.mxu0 %v705
    %v1308 = vpop.f32.mrf.mxu0
    %v1309 = vadd.f32 %v830, %v1308
    %v1310 = vpop.f32.mrf.mxu0
    %v1311 = vadd.f32 %v834, %v1310
    %1312 = vmatprep.mubr.f32.mxu0 %v709
    %1313 = vmatmul.mubr.f32.gmra.mxu0 %v708
    %v1314 = vpop.f32.mrf.mxu0
    %v1315 = vadd.f32 %v830, %v1314
    %v1316 = vpop.f32.mrf.mxu0
    %v1317 = vadd.f32 %v834, %v1316
    %1318 = vmatprep.mubr.f32.mxu0 %v712
    %1319 = vmatmul.mubr.f32.gmra.mxu0 %v711
    %v1320 = vpop.f32.mrf.mxu0
    %v1321 = vadd.f32 %v830, %v1320
    %v1322 = vpop.f32.mrf.mxu0
    %v1323 = vadd.f32 %v834, %v1322
    %1324 = vmatprep.mubr.f32.mxu0 %v715
    %1325 = vmatmul.mubr.f32.gmra.mxu0 %v714
    %v1326 = vpop.f32.mrf.mxu0
    %v1327 = vadd.f32 %v830, %v1326
    %v1328 = vpop.f32.mrf.mxu0
    %v1329 = vadd.f32 %v834, %v1328
    %1330 = vmatprep.mubr.f32.mxu0 %v718
    %1331 = vmatmul.mubr.f32.gmra.mxu0 %v717
    %v1332 = vpop.f32.mrf.mxu0
    %v1333 = vadd.f32 %v830, %v1332
    %v1334 = vpop.f32.mrf.mxu0
    %v1335 = vadd.f32 %v834, %v1334
    %1336 = vmatprep.mubr.f32.mxu0 %v721
    %1337 = vmatmul.mubr.f32.gmra.mxu0 %v720
    %v1338 = vpop.f32.mrf.mxu0
    %v1339 = vadd.f32 %v830, %v1338
    %v1340 = vpop.f32.mrf.mxu0
    %v1341 = vadd.f32 %v834, %v1340
    %1342 = vmatprep.mubr.f32.mxu0 %v724
    %1343 = vmatmul.mubr.f32.gmra.mxu0 %v723
    %v1344 = vpop.f32.mrf.mxu0
    %v1345 = vadd.f32 %v830, %v1344
    %v1346 = vpop.f32.mrf.mxu0
    %v1347 = vadd.f32 %v834, %v1346
    %1348 = vmatprep.mubr.f32.mxu0 %v727
    %1349 = vmatmul.mubr.f32.gmra.mxu0 %v726
    %v1350 = vpop.f32.mrf.mxu0
    %v1351 = vadd.f32 %v830, %v1350
    %v1352 = vpop.f32.mrf.mxu0
    %v1353 = vadd.f32 %v834, %v1352
    %1354 = vdwg.mxu0
    %1355 = vmatprep.subr.bf16.mxu0 %v1152
    %1356 = vmatpush1.bf16.msra.mxu0 %v1151
    %1357 = vmatprep.subr.bf16.mxu0 %v1149
    %1358 = vmatpush1.bf16.msra.mxu0 %v1148
    %1359 = vmatprep.subr.bf16.mxu0 %v1146
    %1360 = vmatpush1.bf16.msra.mxu0 %v1145
    %1361 = vmatprep.subr.bf16.mxu0 %v1143
    %1362 = vmatpush1.bf16.msra.mxu0 %v1142
    %1363 = vmatprep.subr.bf16.mxu0 %v1140
    %1364 = vmatpush1.bf16.msra.mxu0 %v1139
    %1365 = vmatprep.subr.bf16.mxu0 %v1137
    %1366 = vmatpush1.bf16.msra.mxu0 %v1136
    %1367 = vmatprep.subr.bf16.mxu0 %v1134
    %1368 = vmatpush1.bf16.msra.mxu0 %v1133
    %1369 = vmatprep.subr.bf16.mxu0 %v1131
    %1370 = vmatpush1.bf16.msra.mxu0 %v1130
    %1371 = vmatprep.subr.bf16.mxu0 0
    %1372 = vmatpush2.bf16.msra.mxu0 0
    %1373 = vmatprep.subr.bf16.mxu0 0
    %1374 = vmatpush2.bf16.msra.mxu0 0
    %1375 = vmatprep.subr.bf16.mxu0 0
    %1376 = vmatpush2.bf16.msra.mxu0 0
    %1377 = vmatprep.subr.bf16.mxu0 0
    %1378 = vmatpush2.bf16.msra.mxu0 0
    %1379 = vmatprep.subr.bf16.mxu0 0
    %1380 = vmatpush2.bf16.msra.mxu0 0
    %1381 = vmatprep.subr.bf16.mxu0 0
    %1382 = vmatpush2.bf16.msra.mxu0 0
    %1383 = vmatprep.subr.bf16.mxu0 0
    %1384 = vmatpush2.bf16.msra.mxu0 0
    %1385 = vmatprep.subr.bf16.mxu0 0
    %1386 = vmatpush2.bf16.msra.mxu0 0
    %1387 = vmatprep.mubr.f32.mxu0 0.0
    %1388 = vmatmul.mubr.f32.gmra.mxu0 %v683
    %v1389 = vpop.f32.mrf.mxu0
    %v1390 = vadd.f32 %v1261, %v1389
    %v1391 = vpop.f32.mrf.mxu0
    %v1392 = vadd.f32 %v1263, %v1391
    %1393 = vmatprep.mubr.f32.mxu0 0.0
    %1394 = vmatmul.mubr.f32.gmra.mxu0 %v686
    %v1395 = vpop.f32.mrf.mxu0
    %v1396 = vadd.f32 %v1267, %v1395
    %v1397 = vpop.f32.mrf.mxu0
    %v1398 = vadd.f32 %v1269, %v1397
    %1399 = vmatprep.mubr.f32.mxu0 0.0
    %1400 = vmatmul.mubr.f32.gmra.mxu0 %v689
    %v1401 = vpop.f32.mrf.mxu0
    %v1402 = vadd.f32 %v1273, %v1401
    %v1403 = vpop.f32.mrf.mxu0
    %v1404 = vadd.f32 %v1275, %v1403
    %1405 = vmatprep.mubr.f32.mxu0 0.0
    %1406 = vmatmul.mubr.f32.gmra.mxu0 %v692
    %v1407 = vpop.f32.mrf.mxu0
    %v1408 = vadd.f32 %v1279, %v1407
    %v1409 = vpop.f32.mrf.mxu0
    %v1410 = vadd.f32 %v1281, %v1409
    %1411 = vmatprep.mubr.f32.mxu0 0.0
    %1412 = vmatmul.mubr.f32.gmra.mxu0 %v695
    %v1413 = vpop.f32.mrf.mxu0
    %v1414 = vadd.f32 %v1285, %v1413
    %v1415 = vpop.f32.mrf.mxu0
    %v1416 = vadd.f32 %v1287, %v1415
    %1417 = vmatprep.mubr.f32.mxu0 0.0
    %1418 = vmatmul.mubr.f32.gmra.mxu0 %v698
    %v1419 = vpop.f32.mrf.mxu0
    %v1420 = vadd.f32 %v1291, %v1419
    %v1421 = vpop.f32.mrf.mxu0
    %v1422 = vadd.f32 %v1293, %v1421
    %1423 = vmatprep.mubr.f32.mxu0 0.0
    %1424 = vmatmul.mubr.f32.gmra.mxu0 %v701
    %v1425 = vpop.f32.mrf.mxu0
    %v1426 = vadd.f32 %v1297, %v1425
    %v1427 = vpop.f32.mrf.mxu0
    %v1428 = vadd.f32 %v1299, %v1427
    %1429 = vmatprep.mubr.f32.mxu0 0.0
    %1430 = vmatmul.mubr.f32.gmra.mxu0 %v704
    %v1431 = vpop.f32.mrf.mxu0
    %v1432 = vadd.f32 %v1303, %v1431
    %v1433 = vpop.f32.mrf.mxu0
    %v1434 = vadd.f32 %v1305, %v1433
    %1435 = vmatprep.mubr.f32.mxu0 0.0
    %1436 = vmatmul.mubr.f32.gmra.mxu0 %v707
    %v1437 = vpop.f32.mrf.mxu0
    %v1438 = vadd.f32 %v1309, %v1437
    %v1439 = vpop.f32.mrf.mxu0
    %v1440 = vadd.f32 %v1311, %v1439
    %1441 = vmatprep.mubr.f32.mxu0 0.0
    %1442 = vmatmul.mubr.f32.gmra.mxu0 %v710
    %v1443 = vpop.f32.mrf.mxu0
    %v1444 = vadd.f32 %v1315, %v1443
    %v1445 = vpop.f32.mrf.mxu0
    %v1446 = vadd.f32 %v1317, %v1445
    %1447 = vmatprep.mubr.f32.mxu0 0.0
    %1448 = vmatmul.mubr.f32.gmra.mxu0 %v713
    %v1449 = vpop.f32.mrf.mxu0
    %v1450 = vadd.f32 %v1321, %v1449
    %v1451 = vpop.f32.mrf.mxu0
    %v1452 = vadd.f32 %v1323, %v1451
    %1453 = vmatprep.mubr.f32.mxu0 0.0
    %1454 = vmatmul.mubr.f32.gmra.mxu0 %v716
    %v1455 = vpop.f32.mrf.mxu0
    %v1456 = vadd.f32 %v1327, %v1455
    %v1457 = vpop.f32.mrf.mxu0
    %v1458 = vadd.f32 %v1329, %v1457
    %1459 = vmatprep.mubr.f32.mxu0 0.0
    %1460 = vmatmul.mubr.f32.gmra.mxu0 %v719
    %v1461 = vpop.f32.mrf.mxu0
    %v1462 = vadd.f32 %v1333, %v1461
    %v1463 = vpop.f32.mrf.mxu0
    %v1464 = vadd.f32 %v1335, %v1463
    %1465 = vmatprep.mubr.f32.mxu0 0.0
    %1466 = vmatmul.mubr.f32.gmra.mxu0 %v722
    %v1467 = vpop.f32.mrf.mxu0
    %v1468 = vadd.f32 %v1339, %v1467
    %v1469 = vpop.f32.mrf.mxu0
    %v1470 = vadd.f32 %v1341, %v1469
    %1471 = vmatprep.mubr.f32.mxu0 0.0
    %1472 = vmatmul.mubr.f32.gmra.mxu0 %v725
    %v1473 = vpop.f32.mrf.mxu0
    %v1474 = vadd.f32 %v1345, %v1473
    %v1475 = vpop.f32.mrf.mxu0
    %v1476 = vadd.f32 %v1347, %v1475
    %1477 = vmatprep.mubr.f32.mxu0 0.0
    %1478 = vmatmul.mubr.f32.gmra.mxu0 %v728
    %v1479 = vpop.f32.mrf.mxu0
    %v1480 = vadd.f32 %v1351, %v1479
    %v1481 = vpop.f32.mrf.mxu0
    %v1482 = vadd.f32 %v1353, %v1481
    %1483 = vdwg.mxu0
    %1484 = vmatprep.subr.bf16.mxu0 0
    %1485 = vmatpush1.bf16.msra.mxu0 %v1105
    %1486 = vmatprep.subr.bf16.mxu0 0
    %1487 = vmatpush1.bf16.msra.mxu0 %v1102
    %1488 = vmatprep.subr.bf16.mxu0 0
    %1489 = vmatpush1.bf16.msra.mxu0 %v1099
    %1490 = vmatprep.subr.bf16.mxu0 0
    %1491 = vmatpush1.bf16.msra.mxu0 %v1096
    %1492 = vmatprep.subr.bf16.mxu0 0
    %1493 = vmatpush1.bf16.msra.mxu0 %v1093
    %1494 = vmatprep.subr.bf16.mxu0 0
    %1495 = vmatpush1.bf16.msra.mxu0 %v1090
    %1496 = vmatprep.subr.bf16.mxu0 0
    %1497 = vmatpush1.bf16.msra.mxu0 %v1087
    %1498 = vmatprep.subr.bf16.mxu0 0
    %1499 = vmatpush1.bf16.msra.mxu0 %v1084
    %1500 = vmatprep.subr.bf16.mxu0 0
    %1501 = vmatpush2.bf16.msra.mxu0 %v1129
    %1502 = vmatprep.subr.bf16.mxu0 0
    %1503 = vmatpush2.bf16.msra.mxu0 %v1126
    %1504 = vmatprep.subr.bf16.mxu0 0
    %1505 = vmatpush2.bf16.msra.mxu0 %v1123
    %1506 = vmatprep.subr.bf16.mxu0 0
    %1507 = vmatpush2.bf16.msra.mxu0 %v1120
    %1508 = vmatprep.subr.bf16.mxu0 0
    %1509 = vmatpush2.bf16.msra.mxu0 %v1117
    %1510 = vmatprep.subr.bf16.mxu0 0
    %1511 = vmatpush2.bf16.msra.mxu0 %v1114
    %1512 = vmatprep.subr.bf16.mxu0 0
    %1513 = vmatpush2.bf16.msra.mxu0 %v1111
    %1514 = vmatprep.subr.bf16.mxu0 0
    %1515 = vmatpush2.bf16.msra.mxu0 %v1108
    %1516 = vmatprep.mubr.f32.mxu0 %v682
    %1517 = vmatmul.mubr.f32.gmra.mxu0 %v681
    %v1518 = vpop.f32.mrf.mxu0
    %v1519 = vadd.f32 %v838, %v1518
    %v1520 = vpop.f32.mrf.mxu0
    %1521 = vmatprep.mubr.f32.mxu0 %v685
    %1522 = vmatmul.mubr.f32.gmra.mxu0 %v684
    %v1523 = vpop.f32.mrf.mxu0
    %v1524 = vadd.f32 %v838, %v1523
    %v1525 = vpop.f32.mrf.mxu0
    %1526 = vmatprep.mubr.f32.mxu0 %v688
    %1527 = vmatmul.mubr.f32.gmra.mxu0 %v687
    %v1528 = vpop.f32.mrf.mxu0
    %v1529 = vadd.f32 %v838, %v1528
    %v1530 = vpop.f32.mrf.mxu0
    %1531 = vmatprep.mubr.f32.mxu0 %v691
    %1532 = vmatmul.mubr.f32.gmra.mxu0 %v690
    %v1533 = vpop.f32.mrf.mxu0
    %v1534 = vadd.f32 %v838, %v1533
    %v1535 = vpop.f32.mrf.mxu0
    %1536 = vmatprep.mubr.f32.mxu0 %v694
    %1537 = vmatmul.mubr.f32.gmra.mxu0 %v693
    %v1538 = vpop.f32.mrf.mxu0
    %v1539 = vadd.f32 %v838, %v1538
    %v1540 = vpop.f32.mrf.mxu0
    %1541 = vmatprep.mubr.f32.mxu0 %v697
    %1542 = vmatmul.mubr.f32.gmra.mxu0 %v696
    %v1543 = vpop.f32.mrf.mxu0
    %v1544 = vadd.f32 %v838, %v1543
    %v1545 = vpop.f32.mrf.mxu0
    %1546 = vmatprep.mubr.f32.mxu0 %v700
    %1547 = vmatmul.mubr.f32.gmra.mxu0 %v699
    %v1548 = vpop.f32.mrf.mxu0
    %v1549 = vadd.f32 %v838, %v1548
    %v1550 = vpop.f32.mrf.mxu0
    %1551 = vmatprep.mubr.f32.mxu0 %v703
    %1552 = vmatmul.mubr.f32.gmra.mxu0 %v702
    %v1553 = vpop.f32.mrf.mxu0
    %v1554 = vadd.f32 %v838, %v1553
    %v1555 = vpop.f32.mrf.mxu0
    %1556 = vmatprep.mubr.f32.mxu0 %v706
    %1557 = vmatmul.mubr.f32.gmra.mxu0 %v705
    %v1558 = vpop.f32.mrf.mxu0
    %v1559 = vadd.f32 %v838, %v1558
    %v1560 = vpop.f32.mrf.mxu0
    %1561 = vmatprep.mubr.f32.mxu0 %v709
    %1562 = vmatmul.mubr.f32.gmra.mxu0 %v708
    %v1563 = vpop.f32.mrf.mxu0
    %v1564 = vadd.f32 %v838, %v1563
    %v1565 = vpop.f32.mrf.mxu0
    %1566 = vmatprep.mubr.f32.mxu0 %v712
    %1567 = vmatmul.mubr.f32.gmra.mxu0 %v711
    %v1568 = vpop.f32.mrf.mxu0
    %v1569 = vadd.f32 %v838, %v1568
    %v1570 = vpop.f32.mrf.mxu0
    %1571 = vmatprep.mubr.f32.mxu0 %v715
    %1572 = vmatmul.mubr.f32.gmra.mxu0 %v714
    %v1573 = vpop.f32.mrf.mxu0
    %v1574 = vadd.f32 %v838, %v1573
    %v1575 = vpop.f32.mrf.mxu0
    %1576 = vmatprep.mubr.f32.mxu0 %v718
    %1577 = vmatmul.mubr.f32.gmra.mxu0 %v717
    %v1578 = vpop.f32.mrf.mxu0
    %v1579 = vadd.f32 %v838, %v1578
    %v1580 = vpop.f32.mrf.mxu0
    %1581 = vmatprep.mubr.f32.mxu0 %v721
    %1582 = vmatmul.mubr.f32.gmra.mxu0 %v720
    %v1583 = vpop.f32.mrf.mxu0
    %v1584 = vadd.f32 %v838, %v1583
    %v1585 = vpop.f32.mrf.mxu0
    %1586 = vmatprep.mubr.f32.mxu0 %v724
    %1587 = vmatmul.mubr.f32.gmra.mxu0 %v723
    %v1588 = vpop.f32.mrf.mxu0
    %v1589 = vadd.f32 %v838, %v1588
    %v1590 = vpop.f32.mrf.mxu0
    %1591 = vmatprep.mubr.f32.mxu0 %v727
    %1592 = vmatmul.mubr.f32.gmra.mxu0 %v726
    %v1593 = vpop.f32.mrf.mxu0
    %v1594 = vadd.f32 %v838, %v1593
    %v1595 = vpop.f32.mrf.mxu0
    %1596 = vdwg.mxu0
    %1597 = vmatprep.subr.bf16.mxu0 0
    %1598 = vmatpush1.bf16.msra.mxu0 %v1153
    %1599 = vmatprep.subr.bf16.mxu0 0
    %1600 = vmatpush1.bf16.msra.mxu0 %v1150
    %1601 = vmatprep.subr.bf16.mxu0 0
    %1602 = vmatpush1.bf16.msra.mxu0 %v1147
    %1603 = vmatprep.subr.bf16.mxu0 0
    %1604 = vmatpush1.bf16.msra.mxu0 %v1144
    %1605 = vmatprep.subr.bf16.mxu0 0
    %1606 = vmatpush1.bf16.msra.mxu0 %v1141
    %1607 = vmatprep.subr.bf16.mxu0 0
    %1608 = vmatpush1.bf16.msra.mxu0 %v1138
    %1609 = vmatprep.subr.bf16.mxu0 0
    %1610 = vmatpush1.bf16.msra.mxu0 %v1135
    %1611 = vmatprep.subr.bf16.mxu0 0
    %1612 = vmatpush1.bf16.msra.mxu0 %v1132
    %1613 = vmatprep.subr.bf16.mxu0 0
    %1614 = vmatpush2.bf16.msra.mxu0 0
    %1615 = vmatprep.subr.bf16.mxu0 0
    %1616 = vmatpush2.bf16.msra.mxu0 0
    %1617 = vmatprep.subr.bf16.mxu0 0
    %1618 = vmatpush2.bf16.msra.mxu0 0
    %1619 = vmatprep.subr.bf16.mxu0 0
    %1620 = vmatpush2.bf16.msra.mxu0 0
    %1621 = vmatprep.subr.bf16.mxu0 0
    %1622 = vmatpush2.bf16.msra.mxu0 0
    %1623 = vmatprep.subr.bf16.mxu0 0
    %1624 = vmatpush2.bf16.msra.mxu0 0
    %1625 = vmatprep.subr.bf16.mxu0 0
    %1626 = vmatpush2.bf16.msra.mxu0 0
    %1627 = vmatprep.subr.bf16.mxu0 0
    %1628 = vmatpush2.bf16.msra.mxu0 0
    %1629 = vmatprep.mubr.f32.mxu0 0.0
    %1630 = vmatmul.mubr.f32.gmra.mxu0 %v683
    %v1631 = vpop.f32.mrf.mxu0
    %v1632 = vadd.f32 %v1519, %v1631
    %v1633 = vpop.f32.mrf.mxu0
    %1634 = vmatprep.mubr.f32.mxu0 0.0
    %1635 = vmatmul.mubr.f32.gmra.mxu0 %v686
    %v1636 = vpop.f32.mrf.mxu0
    %v1637 = vadd.f32 %v1524, %v1636
    %v1638 = vpop.f32.mrf.mxu0
    %1639 = vmatprep.mubr.f32.mxu0 0.0
    %1640 = vmatmul.mubr.f32.gmra.mxu0 %v689
    %v1641 = vpop.f32.mrf.mxu0
    %v1642 = vadd.f32 %v1529, %v1641
    %v1643 = vpop.f32.mrf.mxu0
    %1644 = vmatprep.mubr.f32.mxu0 0.0
    %1645 = vmatmul.mubr.f32.gmra.mxu0 %v692
    %v1646 = vpop.f32.mrf.mxu0
    %v1647 = vadd.f32 %v1534, %v1646
    %v1648 = vpop.f32.mrf.mxu0
    %1649 = vmatprep.mubr.f32.mxu0 0.0
    %1650 = vmatmul.mubr.f32.gmra.mxu0 %v695
    %v1651 = vpop.f32.mrf.mxu0
    %v1652 = vadd.f32 %v1539, %v1651
    %v1653 = vpop.f32.mrf.mxu0
    %1654 = vmatprep.mubr.f32.mxu0 0.0
    %1655 = vmatmul.mubr.f32.gmra.mxu0 %v698
    %v1656 = vpop.f32.mrf.mxu0
    %v1657 = vadd.f32 %v1544, %v1656
    %v1658 = vpop.f32.mrf.mxu0
    %1659 = vmatprep.mubr.f32.mxu0 0.0
    %1660 = vmatmul.mubr.f32.gmra.mxu0 %v701
    %v1661 = vpop.f32.mrf.mxu0
    %v1662 = vadd.f32 %v1549, %v1661
    %v1663 = vpop.f32.mrf.mxu0
    %1664 = vmatprep.mubr.f32.mxu0 0.0
    %1665 = vmatmul.mubr.f32.gmra.mxu0 %v704
    %v1666 = vpop.f32.mrf.mxu0
    %v1667 = vadd.f32 %v1554, %v1666
    %v1668 = vpop.f32.mrf.mxu0
    %1669 = vmatprep.mubr.f32.mxu0 0.0
    %1670 = vmatmul.mubr.f32.gmra.mxu0 %v707
    %v1671 = vpop.f32.mrf.mxu0
    %v1672 = vadd.f32 %v1559, %v1671
    %v1673 = vpop.f32.mrf.mxu0
    %1674 = vmatprep.mubr.f32.mxu0 0.0
    %1675 = vmatmul.mubr.f32.gmra.mxu0 %v710
    %v1676 = vpop.f32.mrf.mxu0
    %v1677 = vadd.f32 %v1564, %v1676
    %v1678 = vpop.f32.mrf.mxu0
    %1679 = vmatprep.mubr.f32.mxu0 0.0
    %1680 = vmatmul.mubr.f32.gmra.mxu0 %v713
    %v1681 = vpop.f32.mrf.mxu0
    %v1682 = vadd.f32 %v1569, %v1681
    %v1683 = vpop.f32.mrf.mxu0
    %1684 = vmatprep.mubr.f32.mxu0 0.0
    %1685 = vmatmul.mubr.f32.gmra.mxu0 %v716
    %v1686 = vpop.f32.mrf.mxu0
    %v1687 = vadd.f32 %v1574, %v1686
    %v1688 = vpop.f32.mrf.mxu0
    %1689 = vmatprep.mubr.f32.mxu0 0.0
    %1690 = vmatmul.mubr.f32.gmra.mxu0 %v719
    %v1691 = vpop.f32.mrf.mxu0
    %v1692 = vadd.f32 %v1579, %v1691
    %v1693 = vpop.f32.mrf.mxu0
    %1694 = vmatprep.mubr.f32.mxu0 0.0
    %1695 = vmatmul.mubr.f32.gmra.mxu0 %v722
    %v1696 = vpop.f32.mrf.mxu0
    %v1697 = vadd.f32 %v1584, %v1696
    %v1698 = vpop.f32.mrf.mxu0
    %1699 = vmatprep.mubr.f32.mxu0 0.0
    %1700 = vmatmul.mubr.f32.gmra.mxu0 %v725
    %v1701 = vpop.f32.mrf.mxu0
    %v1702 = vadd.f32 %v1589, %v1701
    %v1703 = vpop.f32.mrf.mxu0
    %1704 = vmatprep.mubr.f32.mxu0 0.0
    %1705 = vmatmul.mubr.f32.gmra.mxu0 %v728
    %v1706 = vpop.f32.mrf.mxu0
    %v1707 = vadd.f32 %v1594, %v1706
    %v1708 = vpop.f32.mrf.mxu0
    %1709 = vdwg.mxu0
    %v1710 = vmax.f32 %v1390, 0.0
    %v1711 = vmax.f32 %v1392, 0.0
    %v1712 = vmax.f32 %v1632, 0.0
    %v1713 = vmax.f32 %v1396, 0.0
    %v1714 = vmax.f32 %v1398, 0.0
    %v1715 = vmax.f32 %v1637, 0.0
    %v1716 = vmax.f32 %v1402, 0.0
    %v1717 = vmax.f32 %v1404, 0.0
    %v1718 = vmax.f32 %v1642, 0.0
    %v1719 = vmax.f32 %v1408, 0.0
    %v1720 = vmax.f32 %v1410, 0.0
    %v1721 = vmax.f32 %v1647, 0.0
    %v1722 = vmax.f32 %v1414, 0.0
    %v1723 = vmax.f32 %v1416, 0.0
    %v1724 = vmax.f32 %v1652, 0.0
    %v1725 = vmax.f32 %v1420, 0.0
    %v1726 = vmax.f32 %v1422, 0.0
    %v1727 = vmax.f32 %v1657, 0.0
    %v1728 = vmax.f32 %v1426, 0.0
    %v1729 = vmax.f32 %v1428, 0.0
    %v1730 = vmax.f32 %v1662, 0.0
    %v1731 = vmax.f32 %v1432, 0.0
    %v1732 = vmax.f32 %v1434, 0.0
    %v1733 = vmax.f32 %v1667, 0.0
    %v1734 = vmax.f32 %v1438, 0.0
    %v1735 = vmax.f32 %v1440, 0.0
    %v1736 = vmax.f32 %v1672, 0.0
    %v1737 = vmax.f32 %v1444, 0.0
    %v1738 = vmax.f32 %v1446, 0.0
    %v1739 = vmax.f32 %v1677, 0.0
    %v1740 = vmax.f32 %v1450, 0.0
    %v1741 = vmax.f32 %v1452, 0.0
    %v1742 = vmax.f32 %v1682, 0.0
    %v1743 = vmax.f32 %v1456, 0.0
    %v1744 = vmax.f32 %v1458, 0.0
    %v1745 = vmax.f32 %v1687, 0.0
    %v1746 = vmax.f32 %v1462, 0.0
    %v1747 = vmax.f32 %v1464, 0.0
    %v1748 = vmax.f32 %v1692, 0.0
    %v1749 = vmax.f32 %v1468, 0.0
    %v1750 = vmax.f32 %v1470, 0.0
    %v1751 = vmax.f32 %v1697, 0.0
    %v1752 = vmax.f32 %v1474, 0.0
    %v1753 = vmax.f32 %v1476, 0.0
    %v1754 = vmax.f32 %v1702, 0.0
    %v1755 = vmax.f32 %v1480, 0.0
    %v1756 = vmax.f32 %v1482, 0.0
    %v1757 = vmax.f32 %v1707, 0.0
    %v1758 = vld [vmem:[#allocation13] sm:$0xff]
    %v1759 = vld [vmem:[#allocation13 + $0x8] sm:$0xf]
    %v1760 = vld [vmem:[#allocation13 + $0xc] sm:$0xff]
    %v1761 = vld [vmem:[#allocation13 + $0x14] sm:$0xf]
    %v1762 = vld [vmem:[#allocation13 + $0x18] sm:$0xff]
    %v1763 = vld [vmem:[#allocation13 + $0x20] sm:$0xf]
    %v1764 = vld [vmem:[#allocation13 + $0x24] sm:$0xff]
    %v1765 = vld [vmem:[#allocation13 + $0x2c] sm:$0xf]
    %v1766 = vld [vmem:[#allocation13 + $0x30] sm:$0xff]
    %v1767 = vld [vmem:[#allocation13 + $0x38] sm:$0xf]
    %v1768 = vld [vmem:[#allocation13 + $0x3c] sm:$0xff]
    %v1769 = vld [vmem:[#allocation13 + $0x44] sm:$0xf]
    %v1770 = vld [vmem:[#allocation13 + $0x48] sm:$0xff]
    %v1771 = vld [vmem:[#allocation13 + $0x50] sm:$0xf]
    %v1772 = vld [vmem:[#allocation13 + $0x54] sm:$0xff]
    %v1773 = vld [vmem:[#allocation13 + $0x5c] sm:$0xf]
    %v1774 = vld [vmem:[#allocation13 + $0x60] sm:$0xff]
    %v1775 = vld [vmem:[#allocation13 + $0x68] sm:$0xf]
    %v1776 = vld [vmem:[#allocation13 + $0x6c] sm:$0xff]
    %v1777 = vld [vmem:[#allocation13 + $0x74] sm:$0xf]
    %v1778 = vld [vmem:[#allocation13 + $0x78] sm:$0xff]
    %v1779 = vld [vmem:[#allocation13 + $0x80] sm:$0xf]
    %v1780 = vld [vmem:[#allocation13 + $0x84] sm:$0xff]
    %v1781 = vld [vmem:[#allocation13 + $0x8c] sm:$0xf]
    %v1782 = vld [vmem:[#allocation13 + $0x90] sm:$0xff]
    %v1783 = vld [vmem:[#allocation13 + $0x98] sm:$0xf]
    %v1784 = vld [vmem:[#allocation13 + $0x9c] sm:$0xff]
    %v1785 = vld [vmem:[#allocation13 + $0xa4] sm:$0xf]
    %v1786 = vld [vmem:[#allocation13 + $0xa8] sm:$0xff]
    %v1787 = vld [vmem:[#allocation13 + $0xb0] sm:$0xf]
    %v1788 = vld [vmem:[#allocation13 + $0xb4] sm:$0xff]
    %v1789 = vld [vmem:[#allocation13 + $0xbc] sm:$0xf]
    %v1790 = vld [vmem:[#allocation13 + $0xc0] sm:$0xff]
    %v1791 = vld [vmem:[#allocation13 + $0xc8] sm:$0xf]
    %v1792 = vld [vmem:[#allocation13 + $0xcc] sm:$0xff]
    %v1793 = vld [vmem:[#allocation13 + $0xd4] sm:$0xf]
    %v1794 = vld [vmem:[#allocation13 + $0xd8] sm:$0xff]
    %v1795 = vld [vmem:[#allocation13 + $0xe0] sm:$0xf]
    %v1796 = vld [vmem:[#allocation13 + $0xe4] sm:$0xff]
    %v1797 = vld [vmem:[#allocation13 + $0xec] sm:$0xf]
    %v1798 = vld [vmem:[#allocation13 + $0xf0] sm:$0xff]
    %v1799 = vld [vmem:[#allocation13 + $0xf8] sm:$0xf]
    %v1800 = vld [vmem:[#allocation13 + $0xfc] sm:$0xff]
    %v1801 = vld [vmem:[#allocation13 + $0x104] sm:$0xf]
    %v1802 = vld [vmem:[#allocation13 + $0x108] sm:$0xff]
    %v1803 = vld [vmem:[#allocation13 + $0x110] sm:$0xf]
    %v1804 = vld [vmem:[#allocation13 + $0x114] sm:$0xff]
    %v1805 = vld [vmem:[#allocation13 + $0x11c] sm:$0xf]
    %v1806 = vld [vmem:[#allocation13 + $0x120] sm:$0xff]
    %v1807 = vld [vmem:[#allocation13 + $0x128] sm:$0xf]
    %v1808 = vld [vmem:[#allocation13 + $0x12c] sm:$0xff]
    %v1809 = vld [vmem:[#allocation13 + $0x134] sm:$0xf]
    %v1810 = vld [vmem:[#allocation13 + $0x138] sm:$0xff]
    %v1811 = vld [vmem:[#allocation13 + $0x140] sm:$0xf]
    %v1812 = vld [vmem:[#allocation13 + $0x144] sm:$0xff]
    %v1813 = vld [vmem:[#allocation13 + $0x14c] sm:$0xf]
    %v1814 = vld [vmem:[#allocation13 + $0x150] sm:$0xff]
    %v1815 = vld [vmem:[#allocation13 + $0x158] sm:$0xf]
    %v1816 = vld [vmem:[#allocation13 + $0x15c] sm:$0xff]
    %v1817 = vld [vmem:[#allocation13 + $0x164] sm:$0xf]
    %v1818 = vld [vmem:[#allocation13 + $0x168] sm:$0xff]
    %v1819 = vld [vmem:[#allocation13 + $0x170] sm:$0xf]
    %v1820 = vld [vmem:[#allocation13 + $0x174] sm:$0xff]
    %v1821 = vld [vmem:[#allocation13 + $0x17c] sm:$0xf]
    %v1822 = vld [vmem:[#allocation13 + $0x180] sm:$0xff]
    %v1823 = vld [vmem:[#allocation13 + $0x188] sm:$0xf]
    %v1824 = vld [vmem:[#allocation13 + $0x18c] sm:$0xff]
    %v1825 = vld [vmem:[#allocation13 + $0x194] sm:$0xf]
    %v1826 = vld [vmem:[#allocation13 + $0x198] sm:$0xff]
    %v1827 = vld [vmem:[#allocation13 + $0x1a0] sm:$0xf]
    %v1828 = vld [vmem:[#allocation13 + $0x1a4] sm:$0xff]
    %v1829 = vld [vmem:[#allocation13 + $0x1ac] sm:$0xf]
    %v1830 = vld [vmem:[#allocation13 + $0x1b0] sm:$0xff]
    %v1831 = vld [vmem:[#allocation13 + $0x1b8] sm:$0xf]
    %v1832 = vld [vmem:[#allocation13 + $0x1bc] sm:$0xff]
    %v1833 = vld [vmem:[#allocation13 + $0x1c4] sm:$0xf]
    %v1834 = vld [vmem:[#allocation13 + $0x1c8] sm:$0xff]
    %v1835 = vld [vmem:[#allocation13 + $0x1d0] sm:$0xf]
    %v1836 = vld [vmem:[#allocation13 + $0x1d4] sm:$0xff]
    %v1837 = vld [vmem:[#allocation13 + $0x1dc] sm:$0xf]
    %v1838 = vld [vmem:[#allocation13 + $0x1e0] sm:$0xff]
    %v1839 = vld [vmem:[#allocation13 + $0x1e8] sm:$0xf]
    %v1840 = vld [vmem:[#allocation13 + $0x1ec] sm:$0xff]
    %v1841 = vld [vmem:[#allocation13 + $0x1f4] sm:$0xf]
    %v1842 = vld [vmem:[#allocation13 + $0x1f8] sm:$0xff]
    %v1843 = vld [vmem:[#allocation13 + $0x200] sm:$0xf]
    %v1844 = vld [vmem:[#allocation13 + $0x204] sm:$0xff]
    %v1845 = vld [vmem:[#allocation13 + $0x20c] sm:$0xf]
    %v1846 = vld [vmem:[#allocation13 + $0x210] sm:$0xff]
    %v1847 = vld [vmem:[#allocation13 + $0x218] sm:$0xf]
    %v1848 = vld [vmem:[#allocation13 + $0x21c] sm:$0xff]
    %v1849 = vld [vmem:[#allocation13 + $0x224] sm:$0xf]
    %v1850 = vld [vmem:[#allocation13 + $0x228] sm:$0xff]
    %v1851 = vld [vmem:[#allocation13 + $0x230] sm:$0xf]
    %v1852 = vld [vmem:[#allocation13 + $0x234] sm:$0xff]
    %v1853 = vld [vmem:[#allocation13 + $0x23c] sm:$0xf]
    %v1854 = vld [vmem:[#allocation25 + $0x6] sm:$0x7]
    %v1856 = vlaneseq
    %v1857 = vshrl.u32 %v1856, 7
    %v1858 = vsub.s32 0, %v1857
    %v1859 = vrot.slane %v1854, %v1858
    %v1860 = vlaneseq
    %v1861 = vshrl.u32 %v1860, 7
    %v1862 = vsub.s32 1, %v1861
    %v1863 = vrot.slane %v1854, %v1862
    %v1864 = vlaneseq
    %v1865 = vshrl.u32 %v1864, 7
    %v1866 = vsub.s32 2, %v1865
    %v1867 = vrot.slane %v1854, %v1866
    %v1967 = vunpack.c.l.b16 %v1758
    %v1968 = vunpack.c.h.b16 %v1758
    %v1969 = vunpack.c.l.b16 %v1759
    %v1970 = vunpack.c.l.b16 %v1760
    %v1971 = vunpack.c.h.b16 %v1760
    %v1972 = vunpack.c.l.b16 %v1761
    %v1973 = vunpack.c.l.b16 %v1762
    %v1974 = vunpack.c.h.b16 %v1762
    %v1975 = vunpack.c.l.b16 %v1763
    %v1976 = vunpack.c.l.b16 %v1764
    %v1977 = vunpack.c.h.b16 %v1764
    %v1978 = vunpack.c.l.b16 %v1765
    %v1979 = vunpack.c.l.b16 %v1766
    %v1980 = vunpack.c.h.b16 %v1766
    %v1981 = vunpack.c.l.b16 %v1767
    %v1982 = vunpack.c.l.b16 %v1768
    %v1983 = vunpack.c.h.b16 %v1768
    %v1984 = vunpack.c.l.b16 %v1769
    %v1985 = vunpack.c.l.b16 %v1770
    %v1986 = vunpack.c.h.b16 %v1770
    %v1987 = vunpack.c.l.b16 %v1771
    %v1988 = vunpack.c.l.b16 %v1772
    %v1989 = vunpack.c.h.b16 %v1772
    %v1990 = vunpack.c.l.b16 %v1773
    %v1991 = vunpack.c.l.b16 %v1774
    %v1992 = vunpack.c.h.b16 %v1774
    %v1993 = vunpack.c.l.b16 %v1775
    %v1994 = vunpack.c.l.b16 %v1776
    %v1995 = vunpack.c.h.b16 %v1776
    %v1996 = vunpack.c.l.b16 %v1777
    %v1997 = vunpack.c.l.b16 %v1778
    %v1998 = vunpack.c.h.b16 %v1778
    %v1999 = vunpack.c.l.b16 %v1779
    %v2000 = vunpack.c.l.b16 %v1780
    %v2001 = vunpack.c.h.b16 %v1780
    %v2002 = vunpack.c.l.b16 %v1781
    %v2003 = vunpack.c.l.b16 %v1782
    %v2004 = vunpack.c.h.b16 %v1782
    %v2005 = vunpack.c.l.b16 %v1783
    %v2006 = vunpack.c.l.b16 %v1784
    %v2007 = vunpack.c.h.b16 %v1784
    %v2008 = vunpack.c.l.b16 %v1785
    %v2009 = vunpack.c.l.b16 %v1786
    %v2010 = vunpack.c.h.b16 %v1786
    %v2011 = vunpack.c.l.b16 %v1787
    %v2012 = vunpack.c.l.b16 %v1788
    %v2013 = vunpack.c.h.b16 %v1788
    %v2014 = vunpack.c.l.b16 %v1789
    %v2015 = vunpack.c.l.b16 %v1790
    %v2016 = vunpack.c.h.b16 %v1790
    %v2017 = vunpack.c.l.b16 %v1791
    %v2018 = vunpack.c.l.b16 %v1792
    %v2019 = vunpack.c.h.b16 %v1792
    %v2020 = vunpack.c.l.b16 %v1793
    %v2021 = vunpack.c.l.b16 %v1794
    %v2022 = vunpack.c.h.b16 %v1794
    %v2023 = vunpack.c.l.b16 %v1795
    %v2024 = vunpack.c.l.b16 %v1796
    %v2025 = vunpack.c.h.b16 %v1796
    %v2026 = vunpack.c.l.b16 %v1797
    %v2027 = vunpack.c.l.b16 %v1798
    %v2028 = vunpack.c.h.b16 %v1798
    %v2029 = vunpack.c.l.b16 %v1799
    %v2030 = vunpack.c.l.b16 %v1800
    %v2031 = vunpack.c.h.b16 %v1800
    %v2032 = vunpack.c.l.b16 %v1801
    %v2033 = vunpack.c.l.b16 %v1802
    %v2034 = vunpack.c.h.b16 %v1802
    %v2035 = vunpack.c.l.b16 %v1803
    %v2036 = vunpack.c.l.b16 %v1804
    %v2037 = vunpack.c.h.b16 %v1804
    %v2038 = vunpack.c.l.b16 %v1805
    %v2039 = vunpack.c.l.b16 %v1806
    %v2040 = vunpack.c.h.b16 %v1806
    %v2041 = vunpack.c.l.b16 %v1807
    %v2042 = vunpack.c.l.b16 %v1808
    %v2043 = vunpack.c.h.b16 %v1808
    %v2044 = vunpack.c.l.b16 %v1809
    %v2045 = vunpack.c.l.b16 %v1810
    %v2046 = vunpack.c.h.b16 %v1810
    %v2047 = vunpack.c.l.b16 %v1811
    %v2048 = vunpack.c.l.b16 %v1812
    %v2049 = vunpack.c.h.b16 %v1812
    %v2050 = vunpack.c.l.b16 %v1813
    %v2051 = vunpack.c.l.b16 %v1814
    %v2052 = vunpack.c.h.b16 %v1814
    %v2053 = vunpack.c.l.b16 %v1815
    %v2054 = vunpack.c.l.b16 %v1816
    %v2055 = vunpack.c.h.b16 %v1816
    %v2056 = vunpack.c.l.b16 %v1817
    %v2057 = vunpack.c.l.b16 %v1818
    %v2058 = vunpack.c.h.b16 %v1818
    %v2059 = vunpack.c.l.b16 %v1819
    %v2060 = vunpack.c.l.b16 %v1820
    %v2061 = vunpack.c.h.b16 %v1820
    %v2062 = vunpack.c.l.b16 %v1821
    %v2063 = vunpack.c.l.b16 %v1822
    %v2064 = vunpack.c.h.b16 %v1822
    %v2065 = vunpack.c.l.b16 %v1823
    %v2066 = vunpack.c.l.b16 %v1824
    %v2067 = vunpack.c.h.b16 %v1824
    %v2068 = vunpack.c.l.b16 %v1825
    %v2069 = vunpack.c.l.b16 %v1826
    %v2070 = vunpack.c.h.b16 %v1826
    %v2071 = vunpack.c.l.b16 %v1827
    %v2072 = vunpack.c.l.b16 %v1828
    %v2073 = vunpack.c.h.b16 %v1828
    %v2074 = vunpack.c.l.b16 %v1829
    %v2075 = vunpack.c.l.b16 %v1830
    %v2076 = vunpack.c.h.b16 %v1830
    %v2077 = vunpack.c.l.b16 %v1831
    %v2078 = vunpack.c.l.b16 %v1832
    %v2079 = vunpack.c.h.b16 %v1832
    %v2080 = vunpack.c.l.b16 %v1833
    %v2081 = vunpack.c.l.b16 %v1834
    %v2082 = vunpack.c.h.b16 %v1834
    %v2083 = vunpack.c.l.b16 %v1835
    %v2084 = vunpack.c.l.b16 %v1836
    %v2085 = vunpack.c.h.b16 %v1836
    %v2086 = vunpack.c.l.b16 %v1837
    %v2087 = vunpack.c.l.b16 %v1838
    %v2088 = vunpack.c.h.b16 %v1838
    %v2089 = vunpack.c.l.b16 %v1839
    %v2090 = vunpack.c.l.b16 %v1840
    %v2091 = vunpack.c.h.b16 %v1840
    %v2092 = vunpack.c.l.b16 %v1841
    %v2093 = vunpack.c.l.b16 %v1842
    %v2094 = vunpack.c.h.b16 %v1842
    %v2095 = vunpack.c.l.b16 %v1843
    %v2096 = vunpack.c.l.b16 %v1844
    %v2097 = vunpack.c.h.b16 %v1844
    %v2098 = vunpack.c.l.b16 %v1845
    %v2099 = vunpack.c.l.b16 %v1846
    %v2100 = vunpack.c.h.b16 %v1846
    %v2101 = vunpack.c.l.b16 %v1847
    %v2102 = vunpack.c.l.b16 %v1848
    %v2103 = vunpack.c.h.b16 %v1848
    %v2104 = vunpack.c.l.b16 %v1849
    %v2105 = vunpack.c.l.b16 %v1850
    %v2106 = vunpack.c.h.b16 %v1850
    %v2107 = vunpack.c.l.b16 %v1851
    %v2108 = vunpack.c.l.b16 %v1852
    %v2109 = vunpack.c.h.b16 %v1852
    %v2110 = vunpack.c.l.b16 %v1853
    %v2111 = vpack.c.b16 %v1970, %v1967
    %v2112 = vpack.c.b16 %v1971, %v1968
    %v2113 = vpack.c.b16 %v1972, %v1969
    %v2114 = vpack.c.b16 %v1976, %v1973
    %v2115 = vpack.c.b16 %v1977, %v1974
    %v2116 = vpack.c.b16 %v1978, %v1975
    %v2117 = vpack.c.b16 %v1982, %v1979
    %v2118 = vpack.c.b16 %v1983, %v1980
    %v2119 = vpack.c.b16 %v1984, %v1981
    %v2120 = vpack.c.b16 %v1988, %v1985
    %v2121 = vpack.c.b16 %v1989, %v1986
    %v2122 = vpack.c.b16 %v1990, %v1987
    %v2123 = vpack.c.b16 %v1994, %v1991
    %v2124 = vpack.c.b16 %v1995, %v1992
    %v2125 = vpack.c.b16 %v1996, %v1993
    %v2126 = vpack.c.b16 %v2000, %v1997
    %v2127 = vpack.c.b16 %v2001, %v1998
    %v2128 = vpack.c.b16 %v2002, %v1999
    %v2129 = vpack.c.b16 %v2006, %v2003
    %v2130 = vpack.c.b16 %v2007, %v2004
    %v2131 = vpack.c.b16 %v2008, %v2005
    %v2132 = vpack.c.b16 %v2012, %v2009
    %v2133 = vpack.c.b16 %v2013, %v2010
    %v2134 = vpack.c.b16 %v2014, %v2011
    %v2135 = vpack.c.b16 %v2018, %v2015
    %v2136 = vpack.c.b16 %v2019, %v2016
    %v2137 = vpack.c.b16 %v2020, %v2017
    %v2138 = vpack.c.b16 %v2024, %v2021
    %v2139 = vpack.c.b16 %v2025, %v2022
    %v2140 = vpack.c.b16 %v2026, %v2023
    %v2141 = vpack.c.b16 %v2030, %v2027
    %v2142 = vpack.c.b16 %v2031, %v2028
    %v2143 = vpack.c.b16 %v2032, %v2029
    %v2144 = vpack.c.b16 %v2036, %v2033
    %v2145 = vpack.c.b16 %v2037, %v2034
    %v2146 = vpack.c.b16 %v2038, %v2035
    %v2147 = vpack.c.b16 %v2042, %v2039
    %v2148 = vpack.c.b16 %v2043, %v2040
    %v2149 = vpack.c.b16 %v2044, %v2041
    %v2150 = vpack.c.b16 %v2048, %v2045
    %v2151 = vpack.c.b16 %v2049, %v2046
    %v2152 = vpack.c.b16 %v2050, %v2047
    %v2153 = vpack.c.b16 %v2054, %v2051
    %v2154 = vpack.c.b16 %v2055, %v2052
    %v2155 = vpack.c.b16 %v2056, %v2053
    %v2156 = vpack.c.b16 %v2060, %v2057
    %v2157 = vpack.c.b16 %v2061, %v2058
    %v2158 = vpack.c.b16 %v2062, %v2059
    %v2159 = vpack.c.b16 %v2066, %v2063
    %v2160 = vpack.c.b16 %v2067, %v2064
    %v2161 = vpack.c.b16 %v2068, %v2065
    %v2162 = vpack.c.b16 %v2072, %v2069
    %v2163 = vpack.c.b16 %v2073, %v2070
    %v2164 = vpack.c.b16 %v2074, %v2071
    %v2165 = vpack.c.b16 %v2078, %v2075
    %v2166 = vpack.c.b16 %v2079, %v2076
    %v2167 = vpack.c.b16 %v2080, %v2077
    %v2168 = vpack.c.b16 %v2084, %v2081
    %v2169 = vpack.c.b16 %v2085, %v2082
    %v2170 = vpack.c.b16 %v2086, %v2083
    %v2171 = vpack.c.b16 %v2090, %v2087
    %v2172 = vpack.c.b16 %v2091, %v2088
    %v2173 = vpack.c.b16 %v2092, %v2089
    %v2174 = vpack.c.b16 %v2096, %v2093
    %v2175 = vpack.c.b16 %v2097, %v2094
    %v2176 = vpack.c.b16 %v2098, %v2095
    %v2177 = vpack.c.b16 %v2102, %v2099
    %v2178 = vpack.c.b16 %v2103, %v2100
    %v2179 = vpack.c.b16 %v2104, %v2101
    %v2180 = vpack.c.b16 %v2108, %v2105
    %v2181 = vpack.c.b16 %v2109, %v2106
    %v2182 = vpack.c.b16 %v2110, %v2107
    %2255 = vmatprep.subr.bf16.mxu0 %v2133
    %2256 = vmatpush1.bf16.msra.mxu0 %v2132
    %2257 = vmatprep.subr.bf16.mxu0 %v2130
    %2258 = vmatpush1.bf16.msra.mxu0 %v2129
    %2259 = vmatprep.subr.bf16.mxu0 %v2127
    %2260 = vmatpush1.bf16.msra.mxu0 %v2126
    %2261 = vmatprep.subr.bf16.mxu0 %v2124
    %2262 = vmatpush1.bf16.msra.mxu0 %v2123
    %2263 = vmatprep.subr.bf16.mxu0 %v2121
    %2264 = vmatpush1.bf16.msra.mxu0 %v2120
    %2265 = vmatprep.subr.bf16.mxu0 %v2118
    %2266 = vmatpush1.bf16.msra.mxu0 %v2117
    %2267 = vmatprep.subr.bf16.mxu0 %v2115
    %2268 = vmatpush1.bf16.msra.mxu0 %v2114
    %2269 = vmatprep.subr.bf16.mxu0 %v2112
    %2270 = vmatpush1.bf16.msra.mxu0 %v2111
    %2271 = vmatprep.subr.bf16.mxu0 %v2157
    %2272 = vmatpush2.bf16.msra.mxu0 %v2156
    %2273 = vmatprep.subr.bf16.mxu0 %v2154
    %2274 = vmatpush2.bf16.msra.mxu0 %v2153
    %2275 = vmatprep.subr.bf16.mxu0 %v2151
    %2276 = vmatpush2.bf16.msra.mxu0 %v2150
    %2277 = vmatprep.subr.bf16.mxu0 %v2148
    %2278 = vmatpush2.bf16.msra.mxu0 %v2147
    %2279 = vmatprep.subr.bf16.mxu0 %v2145
    %2280 = vmatpush2.bf16.msra.mxu0 %v2144
    %2281 = vmatprep.subr.bf16.mxu0 %v2142
    %2282 = vmatpush2.bf16.msra.mxu0 %v2141
    %2283 = vmatprep.subr.bf16.mxu0 %v2139
    %2284 = vmatpush2.bf16.msra.mxu0 %v2138
    %2285 = vmatprep.subr.bf16.mxu0 %v2136
    %2286 = vmatpush2.bf16.msra.mxu0 %v2135
    %2287 = vmatprep.mubr.f32.mxu0 %v1711
    %2288 = vmatmul.mubr.f32.gmra.mxu0 %v1710
    %v2289 = vpop.f32.mrf.mxu0
    %v2290 = vadd.f32 %v1859, %v2289
    %v2291 = vpop.f32.mrf.mxu0
    %v2292 = vadd.f32 %v1863, %v2291
    %2293 = vmatprep.mubr.f32.mxu0 %v1714
    %2294 = vmatmul.mubr.f32.gmra.mxu0 %v1713
    %v2295 = vpop.f32.mrf.mxu0
    %v2296 = vadd.f32 %v1859, %v2295
    %v2297 = vpop.f32.mrf.mxu0
    %v2298 = vadd.f32 %v1863, %v2297
    %2299 = vmatprep.mubr.f32.mxu0 %v1717
    %2300 = vmatmul.mubr.f32.gmra.mxu0 %v1716
    %v2301 = vpop.f32.mrf.mxu0
    %v2302 = vadd.f32 %v1859, %v2301
    %v2303 = vpop.f32.mrf.mxu0
    %v2304 = vadd.f32 %v1863, %v2303
    %2305 = vmatprep.mubr.f32.mxu0 %v1720
    %2306 = vmatmul.mubr.f32.gmra.mxu0 %v1719
    %v2307 = vpop.f32.mrf.mxu0
    %v2308 = vadd.f32 %v1859, %v2307
    %v2309 = vpop.f32.mrf.mxu0
    %v2310 = vadd.f32 %v1863, %v2309
    %2311 = vmatprep.mubr.f32.mxu0 %v1723
    %2312 = vmatmul.mubr.f32.gmra.mxu0 %v1722
    %v2313 = vpop.f32.mrf.mxu0
    %v2314 = vadd.f32 %v1859, %v2313
    %v2315 = vpop.f32.mrf.mxu0
    %v2316 = vadd.f32 %v1863, %v2315
    %2317 = vmatprep.mubr.f32.mxu0 %v1726
    %2318 = vmatmul.mubr.f32.gmra.mxu0 %v1725
    %v2319 = vpop.f32.mrf.mxu0
    %v2320 = vadd.f32 %v1859, %v2319
    %v2321 = vpop.f32.mrf.mxu0
    %v2322 = vadd.f32 %v1863, %v2321
    %2323 = vmatprep.mubr.f32.mxu0 %v1729
    %2324 = vmatmul.mubr.f32.gmra.mxu0 %v1728
    %v2325 = vpop.f32.mrf.mxu0
    %v2326 = vadd.f32 %v1859, %v2325
    %v2327 = vpop.f32.mrf.mxu0
    %v2328 = vadd.f32 %v1863, %v2327
    %2329 = vmatprep.mubr.f32.mxu0 %v1732
    %2330 = vmatmul.mubr.f32.gmra.mxu0 %v1731
    %v2331 = vpop.f32.mrf.mxu0
    %v2332 = vadd.f32 %v1859, %v2331
    %v2333 = vpop.f32.mrf.mxu0
    %v2334 = vadd.f32 %v1863, %v2333
    %2335 = vmatprep.mubr.f32.mxu0 %v1735
    %2336 = vmatmul.mubr.f32.gmra.mxu0 %v1734
    %v2337 = vpop.f32.mrf.mxu0
    %v2338 = vadd.f32 %v1859, %v2337
    %v2339 = vpop.f32.mrf.mxu0
    %v2340 = vadd.f32 %v1863, %v2339
    %2341 = vmatprep.mubr.f32.mxu0 %v1738
    %2342 = vmatmul.mubr.f32.gmra.mxu0 %v1737
    %v2343 = vpop.f32.mrf.mxu0
    %v2344 = vadd.f32 %v1859, %v2343
    %v2345 = vpop.f32.mrf.mxu0
    %v2346 = vadd.f32 %v1863, %v2345
    %2347 = vmatprep.mubr.f32.mxu0 %v1741
    %2348 = vmatmul.mubr.f32.gmra.mxu0 %v1740
    %v2349 = vpop.f32.mrf.mxu0
    %v2350 = vadd.f32 %v1859, %v2349
    %v2351 = vpop.f32.mrf.mxu0
    %v2352 = vadd.f32 %v1863, %v2351
    %2353 = vmatprep.mubr.f32.mxu0 %v1744
    %2354 = vmatmul.mubr.f32.gmra.mxu0 %v1743
    %v2355 = vpop.f32.mrf.mxu0
    %v2356 = vadd.f32 %v1859, %v2355
    %v2357 = vpop.f32.mrf.mxu0
    %v2358 = vadd.f32 %v1863, %v2357
    %2359 = vmatprep.mubr.f32.mxu0 %v1747
    %2360 = vmatmul.mubr.f32.gmra.mxu0 %v1746
    %v2361 = vpop.f32.mrf.mxu0
    %v2362 = vadd.f32 %v1859, %v2361
    %v2363 = vpop.f32.mrf.mxu0
    %v2364 = vadd.f32 %v1863, %v2363
    %2365 = vmatprep.mubr.f32.mxu0 %v1750
    %2366 = vmatmul.mubr.f32.gmra.mxu0 %v1749
    %v2367 = vpop.f32.mrf.mxu0
    %v2368 = vadd.f32 %v1859, %v2367
    %v2369 = vpop.f32.mrf.mxu0
    %v2370 = vadd.f32 %v1863, %v2369
    %2371 = vmatprep.mubr.f32.mxu0 %v1753
    %2372 = vmatmul.mubr.f32.gmra.mxu0 %v1752
    %v2373 = vpop.f32.mrf.mxu0
    %v2374 = vadd.f32 %v1859, %v2373
    %v2375 = vpop.f32.mrf.mxu0
    %v2376 = vadd.f32 %v1863, %v2375
    %2377 = vmatprep.mubr.f32.mxu0 %v1756
    %2378 = vmatmul.mubr.f32.gmra.mxu0 %v1755
    %v2379 = vpop.f32.mrf.mxu0
    %v2380 = vadd.f32 %v1859, %v2379
    %v2381 = vpop.f32.mrf.mxu0
    %v2382 = vadd.f32 %v1863, %v2381
    %2383 = vdwg.mxu0
    %2384 = vmatprep.subr.bf16.mxu0 %v2181
    %2385 = vmatpush1.bf16.msra.mxu0 %v2180
    %2386 = vmatprep.subr.bf16.mxu0 %v2178
    %2387 = vmatpush1.bf16.msra.mxu0 %v2177
    %2388 = vmatprep.subr.bf16.mxu0 %v2175
    %2389 = vmatpush1.bf16.msra.mxu0 %v2174
    %2390 = vmatprep.subr.bf16.mxu0 %v2172
    %2391 = vmatpush1.bf16.msra.mxu0 %v2171
    %2392 = vmatprep.subr.bf16.mxu0 %v2169
    %2393 = vmatpush1.bf16.msra.mxu0 %v2168
    %2394 = vmatprep.subr.bf16.mxu0 %v2166
    %2395 = vmatpush1.bf16.msra.mxu0 %v2165
    %2396 = vmatprep.subr.bf16.mxu0 %v2163
    %2397 = vmatpush1.bf16.msra.mxu0 %v2162
    %2398 = vmatprep.subr.bf16.mxu0 %v2160
    %2399 = vmatpush1.bf16.msra.mxu0 %v2159
    %2400 = vmatprep.subr.bf16.mxu0 0
    %2401 = vmatpush2.bf16.msra.mxu0 0
    %2402 = vmatprep.subr.bf16.mxu0 0
    %2403 = vmatpush2.bf16.msra.mxu0 0
    %2404 = vmatprep.subr.bf16.mxu0 0
    %2405 = vmatpush2.bf16.msra.mxu0 0
    %2406 = vmatprep.subr.bf16.mxu0 0
    %2407 = vmatpush2.bf16.msra.mxu0 0
    %2408 = vmatprep.subr.bf16.mxu0 0
    %2409 = vmatpush2.bf16.msra.mxu0 0
    %2410 = vmatprep.subr.bf16.mxu0 0
    %2411 = vmatpush2.bf16.msra.mxu0 0
    %2412 = vmatprep.subr.bf16.mxu0 0
    %2413 = vmatpush2.bf16.msra.mxu0 0
    %2414 = vmatprep.subr.bf16.mxu0 0
    %2415 = vmatpush2.bf16.msra.mxu0 0
    %2416 = vmatprep.mubr.f32.mxu0 0.0
    %2417 = vmatmul.mubr.f32.gmra.mxu0 %v1712
    %v2418 = vpop.f32.mrf.mxu0
    %v2419 = vadd.f32 %v2290, %v2418
    %v2420 = vpop.f32.mrf.mxu0
    %v2421 = vadd.f32 %v2292, %v2420
    %2422 = vmatprep.mubr.f32.mxu0 0.0
    %2423 = vmatmul.mubr.f32.gmra.mxu0 %v1715
    %v2424 = vpop.f32.mrf.mxu0
    %v2425 = vadd.f32 %v2296, %v2424
    %v2426 = vpop.f32.mrf.mxu0
    %v2427 = vadd.f32 %v2298, %v2426
    %2428 = vmatprep.mubr.f32.mxu0 0.0
    %2429 = vmatmul.mubr.f32.gmra.mxu0 %v1718
    %v2430 = vpop.f32.mrf.mxu0
    %v2431 = vadd.f32 %v2302, %v2430
    %v2432 = vpop.f32.mrf.mxu0
    %v2433 = vadd.f32 %v2304, %v2432
    %2434 = vmatprep.mubr.f32.mxu0 0.0
    %2435 = vmatmul.mubr.f32.gmra.mxu0 %v1721
    %v2436 = vpop.f32.mrf.mxu0
    %v2437 = vadd.f32 %v2308, %v2436
    %v2438 = vpop.f32.mrf.mxu0
    %v2439 = vadd.f32 %v2310, %v2438
    %2440 = vmatprep.mubr.f32.mxu0 0.0
    %2441 = vmatmul.mubr.f32.gmra.mxu0 %v1724
    %v2442 = vpop.f32.mrf.mxu0
    %v2443 = vadd.f32 %v2314, %v2442
    %v2444 = vpop.f32.mrf.mxu0
    %v2445 = vadd.f32 %v2316, %v2444
    %2446 = vmatprep.mubr.f32.mxu0 0.0
    %2447 = vmatmul.mubr.f32.gmra.mxu0 %v1727
    %v2448 = vpop.f32.mrf.mxu0
    %v2449 = vadd.f32 %v2320, %v2448
    %v2450 = vpop.f32.mrf.mxu0
    %v2451 = vadd.f32 %v2322, %v2450
    %2452 = vmatprep.mubr.f32.mxu0 0.0
    %2453 = vmatmul.mubr.f32.gmra.mxu0 %v1730
    %v2454 = vpop.f32.mrf.mxu0
    %v2455 = vadd.f32 %v2326, %v2454
    %v2456 = vpop.f32.mrf.mxu0
    %v2457 = vadd.f32 %v2328, %v2456
    %2458 = vmatprep.mubr.f32.mxu0 0.0
    %2459 = vmatmul.mubr.f32.gmra.mxu0 %v1733
    %v2460 = vpop.f32.mrf.mxu0
    %v2461 = vadd.f32 %v2332, %v2460
    %v2462 = vpop.f32.mrf.mxu0
    %v2463 = vadd.f32 %v2334, %v2462
    %2464 = vmatprep.mubr.f32.mxu0 0.0
    %2465 = vmatmul.mubr.f32.gmra.mxu0 %v1736
    %v2466 = vpop.f32.mrf.mxu0
    %v2467 = vadd.f32 %v2338, %v2466
    %v2468 = vpop.f32.mrf.mxu0
    %v2469 = vadd.f32 %v2340, %v2468
    %2470 = vmatprep.mubr.f32.mxu0 0.0
    %2471 = vmatmul.mubr.f32.gmra.mxu0 %v1739
    %v2472 = vpop.f32.mrf.mxu0
    %v2473 = vadd.f32 %v2344, %v2472
    %v2474 = vpop.f32.mrf.mxu0
    %v2475 = vadd.f32 %v2346, %v2474
    %2476 = vmatprep.mubr.f32.mxu0 0.0
    %2477 = vmatmul.mubr.f32.gmra.mxu0 %v1742
    %v2478 = vpop.f32.mrf.mxu0
    %v2479 = vadd.f32 %v2350, %v2478
    %v2480 = vpop.f32.mrf.mxu0
    %v2481 = vadd.f32 %v2352, %v2480
    %2482 = vmatprep.mubr.f32.mxu0 0.0
    %2483 = vmatmul.mubr.f32.gmra.mxu0 %v1745
    %v2484 = vpop.f32.mrf.mxu0
    %v2485 = vadd.f32 %v2356, %v2484
    %v2486 = vpop.f32.mrf.mxu0
    %v2487 = vadd.f32 %v2358, %v2486
    %2488 = vmatprep.mubr.f32.mxu0 0.0
    %2489 = vmatmul.mubr.f32.gmra.mxu0 %v1748
    %v2490 = vpop.f32.mrf.mxu0
    %v2491 = vadd.f32 %v2362, %v2490
    %v2492 = vpop.f32.mrf.mxu0
    %v2493 = vadd.f32 %v2364, %v2492
    %2494 = vmatprep.mubr.f32.mxu0 0.0
    %2495 = vmatmul.mubr.f32.gmra.mxu0 %v1751
    %v2496 = vpop.f32.mrf.mxu0
    %v2497 = vadd.f32 %v2368, %v2496
    %v2498 = vpop.f32.mrf.mxu0
    %v2499 = vadd.f32 %v2370, %v2498
    %2500 = vmatprep.mubr.f32.mxu0 0.0
    %2501 = vmatmul.mubr.f32.gmra.mxu0 %v1754
    %v2502 = vpop.f32.mrf.mxu0
    %v2503 = vadd.f32 %v2374, %v2502
    %v2504 = vpop.f32.mrf.mxu0
    %v2505 = vadd.f32 %v2376, %v2504
    %2506 = vmatprep.mubr.f32.mxu0 0.0
    %2507 = vmatmul.mubr.f32.gmra.mxu0 %v1757
    %v2508 = vpop.f32.mrf.mxu0
    %v2509 = vadd.f32 %v2380, %v2508
    %v2510 = vpop.f32.mrf.mxu0
    %v2511 = vadd.f32 %v2382, %v2510
    %2512 = vdwg.mxu0
    %2513 = vmatprep.subr.bf16.mxu0 0
    %2514 = vmatpush1.bf16.msra.mxu0 %v2134
    %2515 = vmatprep.subr.bf16.mxu0 0
    %2516 = vmatpush1.bf16.msra.mxu0 %v2131
    %2517 = vmatprep.subr.bf16.mxu0 0
    %2518 = vmatpush1.bf16.msra.mxu0 %v2128
    %2519 = vmatprep.subr.bf16.mxu0 0
    %2520 = vmatpush1.bf16.msra.mxu0 %v2125
    %2521 = vmatprep.subr.bf16.mxu0 0
    %2522 = vmatpush1.bf16.msra.mxu0 %v2122
    %2523 = vmatprep.subr.bf16.mxu0 0
    %2524 = vmatpush1.bf16.msra.mxu0 %v2119
    %2525 = vmatprep.subr.bf16.mxu0 0
    %2526 = vmatpush1.bf16.msra.mxu0 %v2116
    %2527 = vmatprep.subr.bf16.mxu0 0
    %2528 = vmatpush1.bf16.msra.mxu0 %v2113
    %2529 = vmatprep.subr.bf16.mxu0 0
    %2530 = vmatpush2.bf16.msra.mxu0 %v2158
    %2531 = vmatprep.subr.bf16.mxu0 0
    %2532 = vmatpush2.bf16.msra.mxu0 %v2155
    %2533 = vmatprep.subr.bf16.mxu0 0
    %2534 = vmatpush2.bf16.msra.mxu0 %v2152
    %2535 = vmatprep.subr.bf16.mxu0 0
    %2536 = vmatpush2.bf16.msra.mxu0 %v2149
    %2537 = vmatprep.subr.bf16.mxu0 0
    %2538 = vmatpush2.bf16.msra.mxu0 %v2146
    %2539 = vmatprep.subr.bf16.mxu0 0
    %2540 = vmatpush2.bf16.msra.mxu0 %v2143
    %2541 = vmatprep.subr.bf16.mxu0 0
    %2542 = vmatpush2.bf16.msra.mxu0 %v2140
    %2543 = vmatprep.subr.bf16.mxu0 0
    %2544 = vmatpush2.bf16.msra.mxu0 %v2137
    %2545 = vmatprep.mubr.f32.mxu0 %v1711
    %2546 = vmatmul.mubr.f32.gmra.mxu0 %v1710
    %v2547 = vpop.f32.mrf.mxu0
    %v2548 = vadd.f32 %v1867, %v2547
    %v2549 = vpop.f32.mrf.mxu0
    %2550 = vmatprep.mubr.f32.mxu0 %v1714
    %2551 = vmatmul.mubr.f32.gmra.mxu0 %v1713
    %v2552 = vpop.f32.mrf.mxu0
    %v2553 = vadd.f32 %v1867, %v2552
    %v2554 = vpop.f32.mrf.mxu0
    %2555 = vmatprep.mubr.f32.mxu0 %v1717
    %2556 = vmatmul.mubr.f32.gmra.mxu0 %v1716
    %v2557 = vpop.f32.mrf.mxu0
    %v2558 = vadd.f32 %v1867, %v2557
    %v2559 = vpop.f32.mrf.mxu0
    %2560 = vmatprep.mubr.f32.mxu0 %v1720
    %2561 = vmatmul.mubr.f32.gmra.mxu0 %v1719
    %v2562 = vpop.f32.mrf.mxu0
    %v2563 = vadd.f32 %v1867, %v2562
    %v2564 = vpop.f32.mrf.mxu0
    %2565 = vmatprep.mubr.f32.mxu0 %v1723
    %2566 = vmatmul.mubr.f32.gmra.mxu0 %v1722
    %v2567 = vpop.f32.mrf.mxu0
    %v2568 = vadd.f32 %v1867, %v2567
    %v2569 = vpop.f32.mrf.mxu0
    %2570 = vmatprep.mubr.f32.mxu0 %v1726
    %2571 = vmatmul.mubr.f32.gmra.mxu0 %v1725
    %v2572 = vpop.f32.mrf.mxu0
    %v2573 = vadd.f32 %v1867, %v2572
    %v2574 = vpop.f32.mrf.mxu0
    %2575 = vmatprep.mubr.f32.mxu0 %v1729
    %2576 = vmatmul.mubr.f32.gmra.mxu0 %v1728
    %v2577 = vpop.f32.mrf.mxu0
    %v2578 = vadd.f32 %v1867, %v2577
    %v2579 = vpop.f32.mrf.mxu0
    %2580 = vmatprep.mubr.f32.mxu0 %v1732
    %2581 = vmatmul.mubr.f32.gmra.mxu0 %v1731
    %v2582 = vpop.f32.mrf.mxu0
    %v2583 = vadd.f32 %v1867, %v2582
    %v2584 = vpop.f32.mrf.mxu0
    %2585 = vmatprep.mubr.f32.mxu0 %v1735
    %2586 = vmatmul.mubr.f32.gmra.mxu0 %v1734
    %v2587 = vpop.f32.mrf.mxu0
    %v2588 = vadd.f32 %v1867, %v2587
    %v2589 = vpop.f32.mrf.mxu0
    %2590 = vmatprep.mubr.f32.mxu0 %v1738
    %2591 = vmatmul.mubr.f32.gmra.mxu0 %v1737
    %v2592 = vpop.f32.mrf.mxu0
    %v2593 = vadd.f32 %v1867, %v2592
    %v2594 = vpop.f32.mrf.mxu0
    %2595 = vmatprep.mubr.f32.mxu0 %v1741
    %2596 = vmatmul.mubr.f32.gmra.mxu0 %v1740
    %v2597 = vpop.f32.mrf.mxu0
    %v2598 = vadd.f32 %v1867, %v2597
    %v2599 = vpop.f32.mrf.mxu0
    %2600 = vmatprep.mubr.f32.mxu0 %v1744
    %2601 = vmatmul.mubr.f32.gmra.mxu0 %v1743
    %v2602 = vpop.f32.mrf.mxu0
    %v2603 = vadd.f32 %v1867, %v2602
    %v2604 = vpop.f32.mrf.mxu0
    %2605 = vmatprep.mubr.f32.mxu0 %v1747
    %2606 = vmatmul.mubr.f32.gmra.mxu0 %v1746
    %v2607 = vpop.f32.mrf.mxu0
    %v2608 = vadd.f32 %v1867, %v2607
    %v2609 = vpop.f32.mrf.mxu0
    %2610 = vmatprep.mubr.f32.mxu0 %v1750
    %2611 = vmatmul.mubr.f32.gmra.mxu0 %v1749
    %v2612 = vpop.f32.mrf.mxu0
    %v2613 = vadd.f32 %v1867, %v2612
    %v2614 = vpop.f32.mrf.mxu0
    %2615 = vmatprep.mubr.f32.mxu0 %v1753
    %2616 = vmatmul.mubr.f32.gmra.mxu0 %v1752
    %v2617 = vpop.f32.mrf.mxu0
    %v2618 = vadd.f32 %v1867, %v2617
    %v2619 = vpop.f32.mrf.mxu0
    %2620 = vmatprep.mubr.f32.mxu0 %v1756
    %2621 = vmatmul.mubr.f32.gmra.mxu0 %v1755
    %v2622 = vpop.f32.mrf.mxu0
    %v2623 = vadd.f32 %v1867, %v2622
    %v2624 = vpop.f32.mrf.mxu0
    %2625 = vdwg.mxu0
    %2626 = vmatprep.subr.bf16.mxu0 0
    %2627 = vmatpush1.bf16.msra.mxu0 %v2182
    %2628 = vmatprep.subr.bf16.mxu0 0
    %2629 = vmatpush1.bf16.msra.mxu0 %v2179
    %2630 = vmatprep.subr.bf16.mxu0 0
    %2631 = vmatpush1.bf16.msra.mxu0 %v2176
    %2632 = vmatprep.subr.bf16.mxu0 0
    %2633 = vmatpush1.bf16.msra.mxu0 %v2173
    %2634 = vmatprep.subr.bf16.mxu0 0
    %2635 = vmatpush1.bf16.msra.mxu0 %v2170
    %2636 = vmatprep.subr.bf16.mxu0 0
    %2637 = vmatpush1.bf16.msra.mxu0 %v2167
    %2638 = vmatprep.subr.bf16.mxu0 0
    %2639 = vmatpush1.bf16.msra.mxu0 %v2164
    %2640 = vmatprep.subr.bf16.mxu0 0
    %2641 = vmatpush1.bf16.msra.mxu0 %v2161
    %2642 = vmatprep.subr.bf16.mxu0 0
    %2643 = vmatpush2.bf16.msra.mxu0 0
    %2644 = vmatprep.subr.bf16.mxu0 0
    %2645 = vmatpush2.bf16.msra.mxu0 0
    %2646 = vmatprep.subr.bf16.mxu0 0
    %2647 = vmatpush2.bf16.msra.mxu0 0
    %2648 = vmatprep.subr.bf16.mxu0 0
    %2649 = vmatpush2.bf16.msra.mxu0 0
    %2650 = vmatprep.subr.bf16.mxu0 0
    %2651 = vmatpush2.bf16.msra.mxu0 0
    %2652 = vmatprep.subr.bf16.mxu0 0
    %2653 = vmatpush2.bf16.msra.mxu0 0
    %2654 = vmatprep.subr.bf16.mxu0 0
    %2655 = vmatpush2.bf16.msra.mxu0 0
    %2656 = vmatprep.subr.bf16.mxu0 0
    %2657 = vmatpush2.bf16.msra.mxu0 0
    %2658 = vmatprep.mubr.f32.mxu0 0.0
    %2659 = vmatmul.mubr.f32.gmra.mxu0 %v1712
    %v2660 = vpop.f32.mrf.mxu0
    %v2661 = vadd.f32 %v2548, %v2660
    %v2662 = vpop.f32.mrf.mxu0
    %2663 = vmatprep.mubr.f32.mxu0 0.0
    %2664 = vmatmul.mubr.f32.gmra.mxu0 %v1715
    %v2665 = vpop.f32.mrf.mxu0
    %v2666 = vadd.f32 %v2553, %v2665
    %v2667 = vpop.f32.mrf.mxu0
    %2668 = vmatprep.mubr.f32.mxu0 0.0
    %2669 = vmatmul.mubr.f32.gmra.mxu0 %v1718
    %v2670 = vpop.f32.mrf.mxu0
    %v2671 = vadd.f32 %v2558, %v2670
    %v2672 = vpop.f32.mrf.mxu0
    %2673 = vmatprep.mubr.f32.mxu0 0.0
    %2674 = vmatmul.mubr.f32.gmra.mxu0 %v1721
    %v2675 = vpop.f32.mrf.mxu0
    %v2676 = vadd.f32 %v2563, %v2675
    %v2677 = vpop.f32.mrf.mxu0
    %2678 = vmatprep.mubr.f32.mxu0 0.0
    %2679 = vmatmul.mubr.f32.gmra.mxu0 %v1724
    %v2680 = vpop.f32.mrf.mxu0
    %v2681 = vadd.f32 %v2568, %v2680
    %v2682 = vpop.f32.mrf.mxu0
    %2683 = vmatprep.mubr.f32.mxu0 0.0
    %2684 = vmatmul.mubr.f32.gmra.mxu0 %v1727
    %v2685 = vpop.f32.mrf.mxu0
    %v2686 = vadd.f32 %v2573, %v2685
    %v2687 = vpop.f32.mrf.mxu0
    %2688 = vmatprep.mubr.f32.mxu0 0.0
    %2689 = vmatmul.mubr.f32.gmra.mxu0 %v1730
    %v2690 = vpop.f32.mrf.mxu0
    %v2691 = vadd.f32 %v2578, %v2690
    %v2692 = vpop.f32.mrf.mxu0
    %2693 = vmatprep.mubr.f32.mxu0 0.0
    %2694 = vmatmul.mubr.f32.gmra.mxu0 %v1733
    %v2695 = vpop.f32.mrf.mxu0
    %v2696 = vadd.f32 %v2583, %v2695
    %v2697 = vpop.f32.mrf.mxu0
    %2698 = vmatprep.mubr.f32.mxu0 0.0
    %2699 = vmatmul.mubr.f32.gmra.mxu0 %v1736
    %v2700 = vpop.f32.mrf.mxu0
    %v2701 = vadd.f32 %v2588, %v2700
    %v2702 = vpop.f32.mrf.mxu0
    %2703 = vmatprep.mubr.f32.mxu0 0.0
    %2704 = vmatmul.mubr.f32.gmra.mxu0 %v1739
    %v2705 = vpop.f32.mrf.mxu0
    %v2706 = vadd.f32 %v2593, %v2705
    %v2707 = vpop.f32.mrf.mxu0
    %2708 = vmatprep.mubr.f32.mxu0 0.0
    %2709 = vmatmul.mubr.f32.gmra.mxu0 %v1742
    %v2710 = vpop.f32.mrf.mxu0
    %v2711 = vadd.f32 %v2598, %v2710
    %v2712 = vpop.f32.mrf.mxu0
    %2713 = vmatprep.mubr.f32.mxu0 0.0
    %2714 = vmatmul.mubr.f32.gmra.mxu0 %v1745
    %v2715 = vpop.f32.mrf.mxu0
    %v2716 = vadd.f32 %v2603, %v2715
    %v2717 = vpop.f32.mrf.mxu0
    %2718 = vmatprep.mubr.f32.mxu0 0.0
    %2719 = vmatmul.mubr.f32.gmra.mxu0 %v1748
    %v2720 = vpop.f32.mrf.mxu0
    %v2721 = vadd.f32 %v2608, %v2720
    %v2722 = vpop.f32.mrf.mxu0
    %2723 = vmatprep.mubr.f32.mxu0 0.0
    %2724 = vmatmul.mubr.f32.gmra.mxu0 %v1751
    %v2725 = vpop.f32.mrf.mxu0
    %v2726 = vadd.f32 %v2613, %v2725
    %v2727 = vpop.f32.mrf.mxu0
    %2728 = vmatprep.mubr.f32.mxu0 0.0
    %2729 = vmatmul.mubr.f32.gmra.mxu0 %v1754
    %v2730 = vpop.f32.mrf.mxu0
    %v2731 = vadd.f32 %v2618, %v2730
    %v2732 = vpop.f32.mrf.mxu0
    %2733 = vmatprep.mubr.f32.mxu0 0.0
    %2734 = vmatmul.mubr.f32.gmra.mxu0 %v1757
    %v2735 = vpop.f32.mrf.mxu0
    %v2736 = vadd.f32 %v2623, %v2735
    %v2737 = vpop.f32.mrf.mxu0
    %2738 = vdwg.mxu0
    %v2739 = vmax.f32 %v2419, 0.0
    %v2740 = vmax.f32 %v2421, 0.0
    %v2741 = vmax.f32 %v2661, 0.0
    %v2742 = vmax.f32 %v2425, 0.0
    %v2743 = vmax.f32 %v2427, 0.0
    %v2744 = vmax.f32 %v2666, 0.0
    %v2745 = vmax.f32 %v2431, 0.0
    %v2746 = vmax.f32 %v2433, 0.0
    %v2747 = vmax.f32 %v2671, 0.0
    %v2748 = vmax.f32 %v2437, 0.0
    %v2749 = vmax.f32 %v2439, 0.0
    %v2750 = vmax.f32 %v2676, 0.0
    %v2751 = vmax.f32 %v2443, 0.0
    %v2752 = vmax.f32 %v2445, 0.0
    %v2753 = vmax.f32 %v2681, 0.0
    %v2754 = vmax.f32 %v2449, 0.0
    %v2755 = vmax.f32 %v2451, 0.0
    %v2756 = vmax.f32 %v2686, 0.0
    %v2757 = vmax.f32 %v2455, 0.0
    %v2758 = vmax.f32 %v2457, 0.0
    %v2759 = vmax.f32 %v2691, 0.0
    %v2760 = vmax.f32 %v2461, 0.0
    %v2761 = vmax.f32 %v2463, 0.0
    %v2762 = vmax.f32 %v2696, 0.0
    %v2763 = vmax.f32 %v2467, 0.0
    %v2764 = vmax.f32 %v2469, 0.0
    %v2765 = vmax.f32 %v2701, 0.0
    %v2766 = vmax.f32 %v2473, 0.0
    %v2767 = vmax.f32 %v2475, 0.0
    %v2768 = vmax.f32 %v2706, 0.0
    %v2769 = vmax.f32 %v2479, 0.0
    %v2770 = vmax.f32 %v2481, 0.0
    %v2771 = vmax.f32 %v2711, 0.0
    %v2772 = vmax.f32 %v2485, 0.0
    %v2773 = vmax.f32 %v2487, 0.0
    %v2774 = vmax.f32 %v2716, 0.0
    %v2775 = vmax.f32 %v2491, 0.0
    %v2776 = vmax.f32 %v2493, 0.0
    %v2777 = vmax.f32 %v2721, 0.0
    %v2778 = vmax.f32 %v2497, 0.0
    %v2779 = vmax.f32 %v2499, 0.0
    %v2780 = vmax.f32 %v2726, 0.0
    %v2781 = vmax.f32 %v2503, 0.0
    %v2782 = vmax.f32 %v2505, 0.0
    %v2783 = vmax.f32 %v2731, 0.0
    %v2784 = vmax.f32 %v2509, 0.0
    %v2785 = vmax.f32 %v2511, 0.0
    %v2786 = vmax.f32 %v2736, 0.0
    %v2787 = vrot.slane %v2739, 4
    %v2788 = vadd.f32 %v2739, %v2787
    %v2789 = vrot.slane %v2788, 2
    %v2790 = vadd.f32 %v2788, %v2789
    %v2791 = vrot.slane %v2790, 1
    %v2792 = vadd.f32 %v2790, %v2791
    %v2793 = vrot.slane %v2740, 4
    %v2794 = vadd.f32 %v2740, %v2793
    %v2795 = vrot.slane %v2794, 2
    %v2796 = vadd.f32 %v2794, %v2795
    %v2797 = vrot.slane %v2796, 1
    %v2798 = vadd.f32 %v2796, %v2797
    %v2799 = vrot.slane %v2741, 4
    %v2800 = vadd.f32 %v2741, %v2799
    %v2801 = vrot.slane %v2800, 2
    %v2802 = vadd.f32 %v2800, %v2801
    %v2803 = vrot.slane %v2802, 1
    %v2804 = vadd.f32 %v2802, %v2803
    %v2805 = vrot.slane %v2742, 4
    %v2806 = vadd.f32 %v2742, %v2805
    %v2807 = vrot.slane %v2806, 2
    %v2808 = vadd.f32 %v2806, %v2807
    %v2809 = vrot.slane %v2808, 1
    %v2810 = vadd.f32 %v2808, %v2809
    %v2811 = vrot.slane %v2743, 4
    %v2812 = vadd.f32 %v2743, %v2811
    %v2813 = vrot.slane %v2812, 2
    %v2814 = vadd.f32 %v2812, %v2813
    %v2815 = vrot.slane %v2814, 1
    %v2816 = vadd.f32 %v2814, %v2815
    %v2817 = vrot.slane %v2744, 4
    %v2818 = vadd.f32 %v2744, %v2817
    %v2819 = vrot.slane %v2818, 2
    %v2820 = vadd.f32 %v2818, %v2819
    %v2821 = vrot.slane %v2820, 1
    %v2822 = vadd.f32 %v2820, %v2821
    %v2823 = vrot.slane %v2745, 4
    %v2824 = vadd.f32 %v2745, %v2823
    %v2825 = vrot.slane %v2824, 2
    %v2826 = vadd.f32 %v2824, %v2825
    %v2827 = vrot.slane %v2826, 1
    %v2828 = vadd.f32 %v2826, %v2827
    %v2829 = vrot.slane %v2746, 4
    %v2830 = vadd.f32 %v2746, %v2829
    %v2831 = vrot.slane %v2830, 2
    %v2832 = vadd.f32 %v2830, %v2831
    %v2833 = vrot.slane %v2832, 1
    %v2834 = vadd.f32 %v2832, %v2833
    %v2835 = vrot.slane %v2747, 4
    %v2836 = vadd.f32 %v2747, %v2835
    %v2837 = vrot.slane %v2836, 2
    %v2838 = vadd.f32 %v2836, %v2837
    %v2839 = vrot.slane %v2838, 1
    %v2840 = vadd.f32 %v2838, %v2839
    %v2841 = vrot.slane %v2748, 4
    %v2842 = vadd.f32 %v2748, %v2841
    %v2843 = vrot.slane %v2842, 2
    %v2844 = vadd.f32 %v2842, %v2843
    %v2845 = vrot.slane %v2844, 1
    %v2846 = vadd.f32 %v2844, %v2845
    %v2847 = vrot.slane %v2749, 4
    %v2848 = vadd.f32 %v2749, %v2847
    %v2849 = vrot.slane %v2848, 2
    %v2850 = vadd.f32 %v2848, %v2849
    %v2851 = vrot.slane %v2850, 1
    %v2852 = vadd.f32 %v2850, %v2851
    %v2853 = vrot.slane %v2750, 4
    %v2854 = vadd.f32 %v2750, %v2853
    %v2855 = vrot.slane %v2854, 2
    %v2856 = vadd.f32 %v2854, %v2855
    %v2857 = vrot.slane %v2856, 1
    %v2858 = vadd.f32 %v2856, %v2857
    %v2859 = vrot.slane %v2751, 4
    %v2860 = vadd.f32 %v2751, %v2859
    %v2861 = vrot.slane %v2860, 2
    %v2862 = vadd.f32 %v2860, %v2861
    %v2863 = vrot.slane %v2862, 1
    %v2864 = vadd.f32 %v2862, %v2863
    %v2865 = vrot.slane %v2752, 4
    %v2866 = vadd.f32 %v2752, %v2865
    %v2867 = vrot.slane %v2866, 2
    %v2868 = vadd.f32 %v2866, %v2867
    %v2869 = vrot.slane %v2868, 1
    %v2870 = vadd.f32 %v2868, %v2869
    %v2871 = vrot.slane %v2753, 4
    %v2872 = vadd.f32 %v2753, %v2871
    %v2873 = vrot.slane %v2872, 2
    %v2874 = vadd.f32 %v2872, %v2873
    %v2875 = vrot.slane %v2874, 1
    %v2876 = vadd.f32 %v2874, %v2875
    %v2877 = vrot.slane %v2754, 4
    %v2878 = vadd.f32 %v2754, %v2877
    %v2879 = vrot.slane %v2878, 2
    %v2880 = vadd.f32 %v2878, %v2879
    %v2881 = vrot.slane %v2880, 1
    %v2882 = vadd.f32 %v2880, %v2881
    %v2883 = vrot.slane %v2755, 4
    %v2884 = vadd.f32 %v2755, %v2883
    %v2885 = vrot.slane %v2884, 2
    %v2886 = vadd.f32 %v2884, %v2885
    %v2887 = vrot.slane %v2886, 1
    %v2888 = vadd.f32 %v2886, %v2887
    %v2889 = vrot.slane %v2756, 4
    %v2890 = vadd.f32 %v2756, %v2889
    %v2891 = vrot.slane %v2890, 2
    %v2892 = vadd.f32 %v2890, %v2891
    %v2893 = vrot.slane %v2892, 1
    %v2894 = vadd.f32 %v2892, %v2893
    %v2895 = vrot.slane %v2757, 4
    %v2896 = vadd.f32 %v2757, %v2895
    %v2897 = vrot.slane %v2896, 2
    %v2898 = vadd.f32 %v2896, %v2897
    %v2899 = vrot.slane %v2898, 1
    %v2900 = vadd.f32 %v2898, %v2899
    %v2901 = vrot.slane %v2758, 4
    %v2902 = vadd.f32 %v2758, %v2901
    %v2903 = vrot.slane %v2902, 2
    %v2904 = vadd.f32 %v2902, %v2903
    %v2905 = vrot.slane %v2904, 1
    %v2906 = vadd.f32 %v2904, %v2905
    %v2907 = vrot.slane %v2759, 4
    %v2908 = vadd.f32 %v2759, %v2907
    %v2909 = vrot.slane %v2908, 2
    %v2910 = vadd.f32 %v2908, %v2909
    %v2911 = vrot.slane %v2910, 1
    %v2912 = vadd.f32 %v2910, %v2911
    %v2913 = vrot.slane %v2760, 4
    %v2914 = vadd.f32 %v2760, %v2913
    %v2915 = vrot.slane %v2914, 2
    %v2916 = vadd.f32 %v2914, %v2915
    %v2917 = vrot.slane %v2916, 1
    %v2918 = vadd.f32 %v2916, %v2917
    %v2919 = vrot.slane %v2761, 4
    %v2920 = vadd.f32 %v2761, %v2919
    %v2921 = vrot.slane %v2920, 2
    %v2922 = vadd.f32 %v2920, %v2921
    %v2923 = vrot.slane %v2922, 1
    %v2924 = vadd.f32 %v2922, %v2923
    %v2925 = vrot.slane %v2762, 4
    %v2926 = vadd.f32 %v2762, %v2925
    %v2927 = vrot.slane %v2926, 2
    %v2928 = vadd.f32 %v2926, %v2927
    %v2929 = vrot.slane %v2928, 1
    %v2930 = vadd.f32 %v2928, %v2929
    %v2931 = vrot.slane %v2763, 4
    %v2932 = vadd.f32 %v2763, %v2931
    %v2933 = vrot.slane %v2932, 2
    %v2934 = vadd.f32 %v2932, %v2933
    %v2935 = vrot.slane %v2934, 1
    %v2936 = vadd.f32 %v2934, %v2935
    %v2937 = vrot.slane %v2764, 4
    %v2938 = vadd.f32 %v2764, %v2937
    %v2939 = vrot.slane %v2938, 2
    %v2940 = vadd.f32 %v2938, %v2939
    %v2941 = vrot.slane %v2940, 1
    %v2942 = vadd.f32 %v2940, %v2941
    %v2943 = vrot.slane %v2765, 4
    %v2944 = vadd.f32 %v2765, %v2943
    %v2945 = vrot.slane %v2944, 2
    %v2946 = vadd.f32 %v2944, %v2945
    %v2947 = vrot.slane %v2946, 1
    %v2948 = vadd.f32 %v2946, %v2947
    %v2949 = vrot.slane %v2766, 4
    %v2950 = vadd.f32 %v2766, %v2949
    %v2951 = vrot.slane %v2950, 2
    %v2952 = vadd.f32 %v2950, %v2951
    %v2953 = vrot.slane %v2952, 1
    %v2954 = vadd.f32 %v2952, %v2953
    %v2955 = vrot.slane %v2767, 4
    %v2956 = vadd.f32 %v2767, %v2955
    %v2957 = vrot.slane %v2956, 2
    %v2958 = vadd.f32 %v2956, %v2957
    %v2959 = vrot.slane %v2958, 1
    %v2960 = vadd.f32 %v2958, %v2959
    %v2961 = vrot.slane %v2768, 4
    %v2962 = vadd.f32 %v2768, %v2961
    %v2963 = vrot.slane %v2962, 2
    %v2964 = vadd.f32 %v2962, %v2963
    %v2965 = vrot.slane %v2964, 1
    %v2966 = vadd.f32 %v2964, %v2965
    %v2967 = vrot.slane %v2769, 4
    %v2968 = vadd.f32 %v2769, %v2967
    %v2969 = vrot.slane %v2968, 2
    %v2970 = vadd.f32 %v2968, %v2969
    %v2971 = vrot.slane %v2970, 1
    %v2972 = vadd.f32 %v2970, %v2971
    %v2973 = vrot.slane %v2770, 4
    %v2974 = vadd.f32 %v2770, %v2973
    %v2975 = vrot.slane %v2974, 2
    %v2976 = vadd.f32 %v2974, %v2975
    %v2977 = vrot.slane %v2976, 1
    %v2978 = vadd.f32 %v2976, %v2977
    %v2979 = vrot.slane %v2771, 4
    %v2980 = vadd.f32 %v2771, %v2979
    %v2981 = vrot.slane %v2980, 2
    %v2982 = vadd.f32 %v2980, %v2981
    %v2983 = vrot.slane %v2982, 1
    %v2984 = vadd.f32 %v2982, %v2983
    %v2985 = vrot.slane %v2772, 4
    %v2986 = vadd.f32 %v2772, %v2985
    %v2987 = vrot.slane %v2986, 2
    %v2988 = vadd.f32 %v2986, %v2987
    %v2989 = vrot.slane %v2988, 1
    %v2990 = vadd.f32 %v2988, %v2989
    %v2991 = vrot.slane %v2773, 4
    %v2992 = vadd.f32 %v2773, %v2991
    %v2993 = vrot.slane %v2992, 2
    %v2994 = vadd.f32 %v2992, %v2993
    %v2995 = vrot.slane %v2994, 1
    %v2996 = vadd.f32 %v2994, %v2995
    %v2997 = vrot.slane %v2774, 4
    %v2998 = vadd.f32 %v2774, %v2997
    %v2999 = vrot.slane %v2998, 2
    %v3000 = vadd.f32 %v2998, %v2999
    %v3001 = vrot.slane %v3000, 1
    %v3002 = vadd.f32 %v3000, %v3001
    %v3003 = vrot.slane %v2775, 4
    %v3004 = vadd.f32 %v2775, %v3003
    %v3005 = vrot.slane %v3004, 2
    %v3006 = vadd.f32 %v3004, %v3005
    %v3007 = vrot.slane %v3006, 1
    %v3008 = vadd.f32 %v3006, %v3007
    %v3009 = vrot.slane %v2776, 4
    %v3010 = vadd.f32 %v2776, %v3009
    %v3011 = vrot.slane %v3010, 2
    %v3012 = vadd.f32 %v3010, %v3011
    %v3013 = vrot.slane %v3012, 1
    %v3014 = vadd.f32 %v3012, %v3013
    %v3015 = vrot.slane %v2777, 4
    %v3016 = vadd.f32 %v2777, %v3015
    %v3017 = vrot.slane %v3016, 2
    %v3018 = vadd.f32 %v3016, %v3017
    %v3019 = vrot.slane %v3018, 1
    %v3020 = vadd.f32 %v3018, %v3019
    %v3021 = vrot.slane %v2778, 4
    %v3022 = vadd.f32 %v2778, %v3021
    %v3023 = vrot.slane %v3022, 2
    %v3024 = vadd.f32 %v3022, %v3023
    %v3025 = vrot.slane %v3024, 1
    %v3026 = vadd.f32 %v3024, %v3025
    %v3027 = vrot.slane %v2779, 4
    %v3028 = vadd.f32 %v2779, %v3027
    %v3029 = vrot.slane %v3028, 2
    %v3030 = vadd.f32 %v3028, %v3029
    %v3031 = vrot.slane %v3030, 1
    %v3032 = vadd.f32 %v3030, %v3031
    %v3033 = vrot.slane %v2780, 4
    %v3034 = vadd.f32 %v2780, %v3033
    %v3035 = vrot.slane %v3034, 2
    %v3036 = vadd.f32 %v3034, %v3035
    %v3037 = vrot.slane %v3036, 1
    %v3038 = vadd.f32 %v3036, %v3037
    %v3039 = vrot.slane %v2781, 4
    %v3040 = vadd.f32 %v2781, %v3039
    %v3041 = vrot.slane %v3040, 2
    %v3042 = vadd.f32 %v3040, %v3041
    %v3043 = vrot.slane %v3042, 1
    %v3044 = vadd.f32 %v3042, %v3043
    %v3045 = vrot.slane %v2782, 4
    %v3046 = vadd.f32 %v2782, %v3045
    %v3047 = vrot.slane %v3046, 2
    %v3048 = vadd.f32 %v3046, %v3047
    %v3049 = vrot.slane %v3048, 1
    %v3050 = vadd.f32 %v3048, %v3049
    %v3051 = vrot.slane %v2783, 4
    %v3052 = vadd.f32 %v2783, %v3051
    %v3053 = vrot.slane %v3052, 2
    %v3054 = vadd.f32 %v3052, %v3053
    %v3055 = vrot.slane %v3054, 1
    %v3056 = vadd.f32 %v3054, %v3055
    %v3057 = vrot.slane %v2784, 4
    %v3058 = vadd.f32 %v2784, %v3057
    %v3059 = vrot.slane %v3058, 2
    %v3060 = vadd.f32 %v3058, %v3059
    %v3061 = vrot.slane %v3060, 1
    %v3062 = vadd.f32 %v3060, %v3061
    %v3063 = vrot.slane %v2785, 4
    %v3064 = vadd.f32 %v2785, %v3063
    %v3065 = vrot.slane %v3064, 2
    %v3066 = vadd.f32 %v3064, %v3065
    %v3067 = vrot.slane %v3066, 1
    %v3068 = vadd.f32 %v3066, %v3067
    %v3069 = vrot.slane %v2786, 4
    %v3070 = vadd.f32 %v2786, %v3069
    %v3071 = vrot.slane %v3070, 2
    %v3072 = vadd.f32 %v3070, %v3071
    %v3073 = vrot.slane %v3072, 1
    %v3074 = vadd.f32 %v3072, %v3073
    %v3075 = vrcp.pop 8.0
    %v3076 = vmul.f32 %v2792, %v3075
    %v3077 = vmul.f32 %v2798, %v3075
    %v3078 = vmul.f32 %v2804, %v3075
    %v3079 = vmul.f32 %v2810, %v3075
    %v3080 = vmul.f32 %v2816, %v3075
    %v3081 = vmul.f32 %v2822, %v3075
    %v3082 = vmul.f32 %v2828, %v3075
    %v3083 = vmul.f32 %v2834, %v3075
    %v3084 = vmul.f32 %v2840, %v3075
    %v3085 = vmul.f32 %v2846, %v3075
    %v3086 = vmul.f32 %v2852, %v3075
    %v3087 = vmul.f32 %v2858, %v3075
    %v3088 = vmul.f32 %v2864, %v3075
    %v3089 = vmul.f32 %v2870, %v3075
    %v3090 = vmul.f32 %v2876, %v3075
    %v3091 = vmul.f32 %v2882, %v3075
    %v3092 = vmul.f32 %v2888, %v3075
    %v3093 = vmul.f32 %v2894, %v3075
    %v3094 = vmul.f32 %v2900, %v3075
    %v3095 = vmul.f32 %v2906, %v3075
    %v3096 = vmul.f32 %v2912, %v3075
    %v3097 = vmul.f32 %v2918, %v3075
    %v3098 = vmul.f32 %v2924, %v3075
    %v3099 = vmul.f32 %v2930, %v3075
    %v3100 = vmul.f32 %v2936, %v3075
    %v3101 = vmul.f32 %v2942, %v3075
    %v3102 = vmul.f32 %v2948, %v3075
    %v3103 = vmul.f32 %v2954, %v3075
    %v3104 = vmul.f32 %v2960, %v3075
    %v3105 = vmul.f32 %v2966, %v3075
    %v3106 = vmul.f32 %v2972, %v3075
    %v3107 = vmul.f32 %v2978, %v3075
    %v3108 = vmul.f32 %v2984, %v3075
    %v3109 = vmul.f32 %v2990, %v3075
    %v3110 = vmul.f32 %v2996, %v3075
    %v3111 = vmul.f32 %v3002, %v3075
    %v3112 = vmul.f32 %v3008, %v3075
    %v3113 = vmul.f32 %v3014, %v3075
    %v3114 = vmul.f32 %v3020, %v3075
    %v3115 = vmul.f32 %v3026, %v3075
    %v3116 = vmul.f32 %v3032, %v3075
    %v3117 = vmul.f32 %v3038, %v3075
    %v3118 = vmul.f32 %v3044, %v3075
    %v3119 = vmul.f32 %v3050, %v3075
    %v3120 = vmul.f32 %v3056, %v3075
    %v3121 = vmul.f32 %v3062, %v3075
    %v3122 = vmul.f32 %v3068, %v3075
    %v3123 = vmul.f32 %v3074, %v3075
    %v3124 = vld [vmem:[#allocation15] sm:$0xff]
    %v3125 = vld [vmem:[#allocation15 + $0x8] sm:$0xf]
    %v3126 = vld [vmem:[#allocation15 + $0xc] sm:$0xff]
    %v3127 = vld [vmem:[#allocation15 + $0x14] sm:$0xf]
    %v3128 = vld [vmem:[#allocation15 + $0x18] sm:$0xff]
    %v3129 = vld [vmem:[#allocation15 + $0x20] sm:$0xf]
    %v3130 = vld [vmem:[#allocation15 + $0x24] sm:$0xff]
    %v3131 = vld [vmem:[#allocation15 + $0x2c] sm:$0xf]
    %v3132 = vld [vmem:[#allocation15 + $0x30] sm:$0xff]
    %v3133 = vld [vmem:[#allocation15 + $0x38] sm:$0xf]
    %v3134 = vld [vmem:[#allocation15 + $0x3c] sm:$0xff]
    %v3135 = vld [vmem:[#allocation15 + $0x44] sm:$0xf]
    %v3136 = vld [vmem:[#allocation15 + $0x48] sm:$0xff]
    %v3137 = vld [vmem:[#allocation15 + $0x50] sm:$0xf]
    %v3138 = vld [vmem:[#allocation15 + $0x54] sm:$0xff]
    %v3139 = vld [vmem:[#allocation15 + $0x5c] sm:$0xf]
    %v3140 = vld [vmem:[#allocation15 + $0x60] sm:$0xff]
    %v3141 = vld [vmem:[#allocation15 + $0x68] sm:$0xf]
    %v3142 = vld [vmem:[#allocation15 + $0x6c] sm:$0xff]
    %v3143 = vld [vmem:[#allocation15 + $0x74] sm:$0xf]
    %v3144 = vld [vmem:[#allocation15 + $0x78] sm:$0xff]
    %v3145 = vld [vmem:[#allocation15 + $0x80] sm:$0xf]
    %v3146 = vld [vmem:[#allocation15 + $0x84] sm:$0xff]
    %v3147 = vld [vmem:[#allocation15 + $0x8c] sm:$0xf]
    %v3148 = vld [vmem:[#allocation15 + $0x90] sm:$0xff]
    %v3149 = vld [vmem:[#allocation15 + $0x98] sm:$0xf]
    %v3150 = vld [vmem:[#allocation15 + $0x9c] sm:$0xff]
    %v3151 = vld [vmem:[#allocation15 + $0xa4] sm:$0xf]
    %v3152 = vld [vmem:[#allocation15 + $0xa8] sm:$0xff]
    %v3153 = vld [vmem:[#allocation15 + $0xb0] sm:$0xf]
    %v3154 = vld [vmem:[#allocation15 + $0xb4] sm:$0xff]
    %v3155 = vld [vmem:[#allocation15 + $0xbc] sm:$0xf]
    %v3156 = vld [vmem:[#allocation15 + $0xc0] sm:$0xff]
    %v3157 = vld [vmem:[#allocation15 + $0xc8] sm:$0xf]
    %v3158 = vld [vmem:[#allocation15 + $0xcc] sm:$0xff]
    %v3159 = vld [vmem:[#allocation15 + $0xd4] sm:$0xf]
    %v3160 = vld [vmem:[#allocation15 + $0xd8] sm:$0xff]
    %v3161 = vld [vmem:[#allocation15 + $0xe0] sm:$0xf]
    %v3162 = vld [vmem:[#allocation15 + $0xe4] sm:$0xff]
    %v3163 = vld [vmem:[#allocation15 + $0xec] sm:$0xf]
    %v3164 = vld [vmem:[#allocation15 + $0xf0] sm:$0xff]
    %v3165 = vld [vmem:[#allocation15 + $0xf8] sm:$0xf]
    %v3166 = vld [vmem:[#allocation15 + $0xfc] sm:$0xff]
    %v3167 = vld [vmem:[#allocation15 + $0x104] sm:$0xf]
    %v3168 = vld [vmem:[#allocation15 + $0x108] sm:$0xff]
    %v3169 = vld [vmem:[#allocation15 + $0x110] sm:$0xf]
    %v3170 = vld [vmem:[#allocation15 + $0x114] sm:$0xff]
    %v3171 = vld [vmem:[#allocation15 + $0x11c] sm:$0xf]
    %v3172 = vld [vmem:[#allocation15 + $0x120] sm:$0xff]
    %v3173 = vld [vmem:[#allocation15 + $0x128] sm:$0xf]
    %v3174 = vld [vmem:[#allocation15 + $0x12c] sm:$0xff]
    %v3175 = vld [vmem:[#allocation15 + $0x134] sm:$0xf]
    %v3176 = vld [vmem:[#allocation15 + $0x138] sm:$0xff]
    %v3177 = vld [vmem:[#allocation15 + $0x140] sm:$0xf]
    %v3178 = vld [vmem:[#allocation15 + $0x144] sm:$0xff]
    %v3179 = vld [vmem:[#allocation15 + $0x14c] sm:$0xf]
    %v3180 = vld [vmem:[#allocation15 + $0x150] sm:$0xff]
    %v3181 = vld [vmem:[#allocation15 + $0x158] sm:$0xf]
    %v3182 = vld [vmem:[#allocation15 + $0x15c] sm:$0xff]
    %v3183 = vld [vmem:[#allocation15 + $0x164] sm:$0xf]
    %v3184 = vld [vmem:[#allocation15 + $0x168] sm:$0xff]
    %v3185 = vld [vmem:[#allocation15 + $0x170] sm:$0xf]
    %v3186 = vld [vmem:[#allocation15 + $0x174] sm:$0xff]
    %v3187 = vld [vmem:[#allocation15 + $0x17c] sm:$0xf]
    %v3188 = vld [vmem:[#allocation15 + $0x180] sm:$0xff]
    %v3189 = vld [vmem:[#allocation15 + $0x188] sm:$0xf]
    %v3190 = vld [vmem:[#allocation15 + $0x18c] sm:$0xff]
    %v3191 = vld [vmem:[#allocation15 + $0x194] sm:$0xf]
    %v3192 = vld [vmem:[#allocation15 + $0x198] sm:$0xff]
    %v3193 = vld [vmem:[#allocation15 + $0x1a0] sm:$0xf]
    %v3194 = vld [vmem:[#allocation15 + $0x1a4] sm:$0xff]
    %v3195 = vld [vmem:[#allocation15 + $0x1ac] sm:$0xf]
    %v3196 = vld [vmem:[#allocation15 + $0x1b0] sm:$0xff]
    %v3197 = vld [vmem:[#allocation15 + $0x1b8] sm:$0xf]
    %v3198 = vld [vmem:[#allocation15 + $0x1bc] sm:$0xff]
    %v3199 = vld [vmem:[#allocation15 + $0x1c4] sm:$0xf]
    %v3200 = vld [vmem:[#allocation15 + $0x1c8] sm:$0xff]
    %v3201 = vld [vmem:[#allocation15 + $0x1d0] sm:$0xf]
    %v3202 = vld [vmem:[#allocation15 + $0x1d4] sm:$0xff]
    %v3203 = vld [vmem:[#allocation15 + $0x1dc] sm:$0xf]
    %v3204 = vld [vmem:[#allocation15 + $0x1e0] sm:$0xff]
    %v3205 = vld [vmem:[#allocation15 + $0x1e8] sm:$0xf]
    %v3206 = vld [vmem:[#allocation15 + $0x1ec] sm:$0xff]
    %v3207 = vld [vmem:[#allocation15 + $0x1f4] sm:$0xf]
    %v3208 = vld [vmem:[#allocation15 + $0x1f8] sm:$0xff]
    %v3209 = vld [vmem:[#allocation15 + $0x200] sm:$0xf]
    %v3210 = vld [vmem:[#allocation15 + $0x204] sm:$0xff]
    %v3211 = vld [vmem:[#allocation15 + $0x20c] sm:$0xf]
    %v3212 = vld [vmem:[#allocation15 + $0x210] sm:$0xff]
    %v3213 = vld [vmem:[#allocation15 + $0x218] sm:$0xf]
    %v3214 = vld [vmem:[#allocation15 + $0x21c] sm:$0xff]
    %v3215 = vld [vmem:[#allocation15 + $0x224] sm:$0xf]
    %v3216 = vld [vmem:[#allocation15 + $0x228] sm:$0xff]
    %v3217 = vld [vmem:[#allocation15 + $0x230] sm:$0xf]
    %v3218 = vld [vmem:[#allocation15 + $0x234] sm:$0xff]
    %v3219 = vld [vmem:[#allocation15 + $0x23c] sm:$0xf]
    %v3220 = vld [vmem:[#allocation25 + $0x9] sm:$0x7]
    %v3222 = vlaneseq
    %v3223 = vshrl.u32 %v3222, 7
    %v3224 = vsub.s32 0, %v3223
    %v3225 = vrot.slane %v3220, %v3224
    %v3226 = vlaneseq
    %v3227 = vshrl.u32 %v3226, 7
    %v3228 = vsub.s32 1, %v3227
    %v3229 = vrot.slane %v3220, %v3228
    %v3230 = vlaneseq
    %v3231 = vshrl.u32 %v3230, 7
    %v3232 = vsub.s32 2, %v3231
    %v3233 = vrot.slane %v3220, %v3232
    %vm3285 = vcmask 1041409
    %v3286 = vsel %vm3285, %v3079, %v3076
    %vm3287 = vcmask 1042434
    %v3288 = vsel %vm3287, %v3082, %v3286
    %vm3289 = vcmask 1043459
    %v3290 = vsel %vm3289, %v3085, %v3288
    %vm3291 = vcmask 1044484
    %v3292 = vsel %vm3291, %v3088, %v3290
    %vm3293 = vcmask 1045509
    %v3294 = vsel %vm3293, %v3091, %v3292
    %vm3295 = vcmask 1046534
    %v3296 = vsel %vm3295, %v3094, %v3294
    %vm3297 = vcmask 1047559
    %v3298 = vsel %vm3297, %v3097, %v3296
    %v3299 = vsel %vm3285, %v3080, %v3077
    %v3300 = vsel %vm3287, %v3083, %v3299
    %v3301 = vsel %vm3289, %v3086, %v3300
    %v3302 = vsel %vm3291, %v3089, %v3301
    %v3303 = vsel %vm3293, %v3092, %v3302
    %v3304 = vsel %vm3295, %v3095, %v3303
    %v3305 = vsel %vm3297, %v3098, %v3304
    %v3306 = vsel %vm3285, %v3081, %v3078
    %v3307 = vsel %vm3287, %v3084, %v3306
    %v3308 = vsel %vm3289, %v3087, %v3307
    %v3309 = vsel %vm3291, %v3090, %v3308
    %v3310 = vsel %vm3293, %v3093, %v3309
    %v3311 = vsel %vm3295, %v3096, %v3310
    %v3312 = vsel %vm3297, %v3099, %v3311
    %v3313 = vsel %vm3285, %v3103, %v3100
    %v3314 = vsel %vm3287, %v3106, %v3313
    %v3315 = vsel %vm3289, %v3109, %v3314
    %v3316 = vsel %vm3291, %v3112, %v3315
    %v3317 = vsel %vm3293, %v3115, %v3316
    %v3318 = vsel %vm3295, %v3118, %v3317
    %v3319 = vsel %vm3297, %v3121, %v3318
    %v3320 = vsel %vm3285, %v3104, %v3101
    %v3321 = vsel %vm3287, %v3107, %v3320
    %v3322 = vsel %vm3289, %v3110, %v3321
    %v3323 = vsel %vm3291, %v3113, %v3322
    %v3324 = vsel %vm3293, %v3116, %v3323
    %v3325 = vsel %vm3295, %v3119, %v3324
    %v3326 = vsel %vm3297, %v3122, %v3325
    %v3327 = vsel %vm3285, %v3105, %v3102
    %v3328 = vsel %vm3287, %v3108, %v3327
    %v3329 = vsel %vm3289, %v3111, %v3328
    %v3330 = vsel %vm3291, %v3114, %v3329
    %v3331 = vsel %vm3293, %v3117, %v3330
    %v3332 = vsel %vm3295, %v3120, %v3331
    %v3333 = vsel %vm3297, %v3123, %v3332
    %v3436 = vunpack.c.l.b16 %v3124
    %v3437 = vunpack.c.h.b16 %v3124
    %v3438 = vunpack.c.l.b16 %v3125
    %v3439 = vunpack.c.l.b16 %v3126
    %v3440 = vunpack.c.h.b16 %v3126
    %v3441 = vunpack.c.l.b16 %v3127
    %v3442 = vunpack.c.l.b16 %v3128
    %v3443 = vunpack.c.h.b16 %v3128
    %v3444 = vunpack.c.l.b16 %v3129
    %v3445 = vunpack.c.l.b16 %v3130
    %v3446 = vunpack.c.h.b16 %v3130
    %v3447 = vunpack.c.l.b16 %v3131
    %v3448 = vunpack.c.l.b16 %v3132
    %v3449 = vunpack.c.h.b16 %v3132
    %v3450 = vunpack.c.l.b16 %v3133
    %v3451 = vunpack.c.l.b16 %v3134
    %v3452 = vunpack.c.h.b16 %v3134
    %v3453 = vunpack.c.l.b16 %v3135
    %v3454 = vunpack.c.l.b16 %v3136
    %v3455 = vunpack.c.h.b16 %v3136
    %v3456 = vunpack.c.l.b16 %v3137
    %v3457 = vunpack.c.l.b16 %v3138
    %v3458 = vunpack.c.h.b16 %v3138
    %v3459 = vunpack.c.l.b16 %v3139
    %v3460 = vunpack.c.l.b16 %v3140
    %v3461 = vunpack.c.h.b16 %v3140
    %v3462 = vunpack.c.l.b16 %v3141
    %v3463 = vunpack.c.l.b16 %v3142
    %v3464 = vunpack.c.h.b16 %v3142
    %v3465 = vunpack.c.l.b16 %v3143
    %v3466 = vunpack.c.l.b16 %v3144
    %v3467 = vunpack.c.h.b16 %v3144
    %v3468 = vunpack.c.l.b16 %v3145
    %v3469 = vunpack.c.l.b16 %v3146
    %v3470 = vunpack.c.h.b16 %v3146
    %v3471 = vunpack.c.l.b16 %v3147
    %v3472 = vunpack.c.l.b16 %v3148
    %v3473 = vunpack.c.h.b16 %v3148
    %v3474 = vunpack.c.l.b16 %v3149
    %v3475 = vunpack.c.l.b16 %v3150
    %v3476 = vunpack.c.h.b16 %v3150
    %v3477 = vunpack.c.l.b16 %v3151
    %v3478 = vunpack.c.l.b16 %v3152
    %v3479 = vunpack.c.h.b16 %v3152
    %v3480 = vunpack.c.l.b16 %v3153
    %v3481 = vunpack.c.l.b16 %v3154
    %v3482 = vunpack.c.h.b16 %v3154
    %v3483 = vunpack.c.l.b16 %v3155
    %v3484 = vunpack.c.l.b16 %v3156
    %v3485 = vunpack.c.h.b16 %v3156
    %v3486 = vunpack.c.l.b16 %v3157
    %v3487 = vunpack.c.l.b16 %v3158
    %v3488 = vunpack.c.h.b16 %v3158
    %v3489 = vunpack.c.l.b16 %v3159
    %v3490 = vunpack.c.l.b16 %v3160
    %v3491 = vunpack.c.h.b16 %v3160
    %v3492 = vunpack.c.l.b16 %v3161
    %v3493 = vunpack.c.l.b16 %v3162
    %v3494 = vunpack.c.h.b16 %v3162
    %v3495 = vunpack.c.l.b16 %v3163
    %v3496 = vunpack.c.l.b16 %v3164
    %v3497 = vunpack.c.h.b16 %v3164
    %v3498 = vunpack.c.l.b16 %v3165
    %v3499 = vunpack.c.l.b16 %v3166
    %v3500 = vunpack.c.h.b16 %v3166
    %v3501 = vunpack.c.l.b16 %v3167
    %v3502 = vunpack.c.l.b16 %v3168
    %v3503 = vunpack.c.h.b16 %v3168
    %v3504 = vunpack.c.l.b16 %v3169
    %v3505 = vunpack.c.l.b16 %v3170
    %v3506 = vunpack.c.h.b16 %v3170
    %v3507 = vunpack.c.l.b16 %v3171
    %v3508 = vunpack.c.l.b16 %v3172
    %v3509 = vunpack.c.h.b16 %v3172
    %v3510 = vunpack.c.l.b16 %v3173
    %v3511 = vunpack.c.l.b16 %v3174
    %v3512 = vunpack.c.h.b16 %v3174
    %v3513 = vunpack.c.l.b16 %v3175
    %v3514 = vunpack.c.l.b16 %v3176
    %v3515 = vunpack.c.h.b16 %v3176
    %v3516 = vunpack.c.l.b16 %v3177
    %v3517 = vunpack.c.l.b16 %v3178
    %v3518 = vunpack.c.h.b16 %v3178
    %v3519 = vunpack.c.l.b16 %v3179
    %v3520 = vunpack.c.l.b16 %v3180
    %v3521 = vunpack.c.h.b16 %v3180
    %v3522 = vunpack.c.l.b16 %v3181
    %v3523 = vunpack.c.l.b16 %v3182
    %v3524 = vunpack.c.h.b16 %v3182
    %v3525 = vunpack.c.l.b16 %v3183
    %v3526 = vunpack.c.l.b16 %v3184
    %v3527 = vunpack.c.h.b16 %v3184
    %v3528 = vunpack.c.l.b16 %v3185
    %v3529 = vunpack.c.l.b16 %v3186
    %v3530 = vunpack.c.h.b16 %v3186
    %v3531 = vunpack.c.l.b16 %v3187
    %v3532 = vunpack.c.l.b16 %v3188
    %v3533 = vunpack.c.h.b16 %v3188
    %v3534 = vunpack.c.l.b16 %v3189
    %v3535 = vunpack.c.l.b16 %v3190
    %v3536 = vunpack.c.h.b16 %v3190
    %v3537 = vunpack.c.l.b16 %v3191
    %v3538 = vunpack.c.l.b16 %v3192
    %v3539 = vunpack.c.h.b16 %v3192
    %v3540 = vunpack.c.l.b16 %v3193
    %v3541 = vunpack.c.l.b16 %v3194
    %v3542 = vunpack.c.h.b16 %v3194
    %v3543 = vunpack.c.l.b16 %v3195
    %v3544 = vunpack.c.l.b16 %v3196
    %v3545 = vunpack.c.h.b16 %v3196
    %v3546 = vunpack.c.l.b16 %v3197
    %v3547 = vunpack.c.l.b16 %v3198
    %v3548 = vunpack.c.h.b16 %v3198
    %v3549 = vunpack.c.l.b16 %v3199
    %v3550 = vunpack.c.l.b16 %v3200
    %v3551 = vunpack.c.h.b16 %v3200
    %v3552 = vunpack.c.l.b16 %v3201
    %v3553 = vunpack.c.l.b16 %v3202
    %v3554 = vunpack.c.h.b16 %v3202
    %v3555 = vunpack.c.l.b16 %v3203
    %v3556 = vunpack.c.l.b16 %v3204
    %v3557 = vunpack.c.h.b16 %v3204
    %v3558 = vunpack.c.l.b16 %v3205
    %v3559 = vunpack.c.l.b16 %v3206
    %v3560 = vunpack.c.h.b16 %v3206
    %v3561 = vunpack.c.l.b16 %v3207
    %v3562 = vunpack.c.l.b16 %v3208
    %v3563 = vunpack.c.h.b16 %v3208
    %v3564 = vunpack.c.l.b16 %v3209
    %v3565 = vunpack.c.l.b16 %v3210
    %v3566 = vunpack.c.h.b16 %v3210
    %v3567 = vunpack.c.l.b16 %v3211
    %v3568 = vunpack.c.l.b16 %v3212
    %v3569 = vunpack.c.h.b16 %v3212
    %v3570 = vunpack.c.l.b16 %v3213
    %v3571 = vunpack.c.l.b16 %v3214
    %v3572 = vunpack.c.h.b16 %v3214
    %v3573 = vunpack.c.l.b16 %v3215
    %v3574 = vunpack.c.l.b16 %v3216
    %v3575 = vunpack.c.h.b16 %v3216
    %v3576 = vunpack.c.l.b16 %v3217
    %v3577 = vunpack.c.l.b16 %v3218
    %v3578 = vunpack.c.h.b16 %v3218
    %v3579 = vunpack.c.l.b16 %v3219
    %v3580 = vpack.c.b16 %v3439, %v3436
    %v3581 = vpack.c.b16 %v3440, %v3437
    %v3582 = vpack.c.b16 %v3441, %v3438
    %v3583 = vpack.c.b16 %v3445, %v3442
    %v3584 = vpack.c.b16 %v3446, %v3443
    %v3585 = vpack.c.b16 %v3447, %v3444
    %v3586 = vpack.c.b16 %v3451, %v3448
    %v3587 = vpack.c.b16 %v3452, %v3449
    %v3588 = vpack.c.b16 %v3453, %v3450
    %v3589 = vpack.c.b16 %v3457, %v3454
    %v3590 = vpack.c.b16 %v3458, %v3455
    %v3591 = vpack.c.b16 %v3459, %v3456
    %v3592 = vpack.c.b16 %v3463, %v3460
    %v3593 = vpack.c.b16 %v3464, %v3461
    %v3594 = vpack.c.b16 %v3465, %v3462
    %v3595 = vpack.c.b16 %v3469, %v3466
    %v3596 = vpack.c.b16 %v3470, %v3467
    %v3597 = vpack.c.b16 %v3471, %v3468
    %v3598 = vpack.c.b16 %v3475, %v3472
    %v3599 = vpack.c.b16 %v3476, %v3473
    %v3600 = vpack.c.b16 %v3477, %v3474
    %v3601 = vpack.c.b16 %v3481, %v3478
    %v3602 = vpack.c.b16 %v3482, %v3479
    %v3603 = vpack.c.b16 %v3483, %v3480
    %v3604 = vpack.c.b16 %v3487, %v3484
    %v3605 = vpack.c.b16 %v3488, %v3485
    %v3606 = vpack.c.b16 %v3489, %v3486
    %v3607 = vpack.c.b16 %v3493, %v3490
    %v3608 = vpack.c.b16 %v3494, %v3491
    %v3609 = vpack.c.b16 %v3495, %v3492
    %v3610 = vpack.c.b16 %v3499, %v3496
    %v3611 = vpack.c.b16 %v3500, %v3497
    %v3612 = vpack.c.b16 %v3501, %v3498
    %v3613 = vpack.c.b16 %v3505, %v3502
    %v3614 = vpack.c.b16 %v3506, %v3503
    %v3615 = vpack.c.b16 %v3507, %v3504
    %v3616 = vpack.c.b16 %v3511, %v3508
    %v3617 = vpack.c.b16 %v3512, %v3509
    %v3618 = vpack.c.b16 %v3513, %v3510
    %v3619 = vpack.c.b16 %v3517, %v3514
    %v3620 = vpack.c.b16 %v3518, %v3515
    %v3621 = vpack.c.b16 %v3519, %v3516
    %v3622 = vpack.c.b16 %v3523, %v3520
    %v3623 = vpack.c.b16 %v3524, %v3521
    %v3624 = vpack.c.b16 %v3525, %v3522
    %v3625 = vpack.c.b16 %v3529, %v3526
    %v3626 = vpack.c.b16 %v3530, %v3527
    %v3627 = vpack.c.b16 %v3531, %v3528
    %v3628 = vpack.c.b16 %v3535, %v3532
    %v3629 = vpack.c.b16 %v3536, %v3533
    %v3630 = vpack.c.b16 %v3537, %v3534
    %v3631 = vpack.c.b16 %v3541, %v3538
    %v3632 = vpack.c.b16 %v3542, %v3539
    %v3633 = vpack.c.b16 %v3543, %v3540
    %v3634 = vpack.c.b16 %v3547, %v3544
    %v3635 = vpack.c.b16 %v3548, %v3545
    %v3636 = vpack.c.b16 %v3549, %v3546
    %v3637 = vpack.c.b16 %v3553, %v3550
    %v3638 = vpack.c.b16 %v3554, %v3551
    %v3639 = vpack.c.b16 %v3555, %v3552
    %v3640 = vpack.c.b16 %v3559, %v3556
    %v3641 = vpack.c.b16 %v3560, %v3557
    %v3642 = vpack.c.b16 %v3561, %v3558
    %v3643 = vpack.c.b16 %v3565, %v3562
    %v3644 = vpack.c.b16 %v3566, %v3563
    %v3645 = vpack.c.b16 %v3567, %v3564
    %v3646 = vpack.c.b16 %v3571, %v3568
    %v3647 = vpack.c.b16 %v3572, %v3569
    %v3648 = vpack.c.b16 %v3573, %v3570
    %v3649 = vpack.c.b16 %v3577, %v3574
    %v3650 = vpack.c.b16 %v3578, %v3575
    %v3651 = vpack.c.b16 %v3579, %v3576
    %3724 = vmatprep.subr.bf16.mxu0 %v3602
    %3725 = vmatpush1.bf16.msra.mxu0 %v3601
    %3726 = vmatprep.subr.bf16.mxu0 %v3599
    %3727 = vmatpush1.bf16.msra.mxu0 %v3598
    %3728 = vmatprep.subr.bf16.mxu0 %v3596
    %3729 = vmatpush1.bf16.msra.mxu0 %v3595
    %3730 = vmatprep.subr.bf16.mxu0 %v3593
    %3731 = vmatpush1.bf16.msra.mxu0 %v3592
    %3732 = vmatprep.subr.bf16.mxu0 %v3590
    %3733 = vmatpush1.bf16.msra.mxu0 %v3589
    %3734 = vmatprep.subr.bf16.mxu0 %v3587
    %3735 = vmatpush1.bf16.msra.mxu0 %v3586
    %3736 = vmatprep.subr.bf16.mxu0 %v3584
    %3737 = vmatpush1.bf16.msra.mxu0 %v3583
    %3738 = vmatprep.subr.bf16.mxu0 %v3581
    %3739 = vmatpush1.bf16.msra.mxu0 %v3580
    %3740 = vmatprep.subr.bf16.mxu0 %v3626
    %3741 = vmatpush2.bf16.msra.mxu0 %v3625
    %3742 = vmatprep.subr.bf16.mxu0 %v3623
    %3743 = vmatpush2.bf16.msra.mxu0 %v3622
    %3744 = vmatprep.subr.bf16.mxu0 %v3620
    %3745 = vmatpush2.bf16.msra.mxu0 %v3619
    %3746 = vmatprep.subr.bf16.mxu0 %v3617
    %3747 = vmatpush2.bf16.msra.mxu0 %v3616
    %3748 = vmatprep.subr.bf16.mxu0 %v3614
    %3749 = vmatpush2.bf16.msra.mxu0 %v3613
    %3750 = vmatprep.subr.bf16.mxu0 %v3611
    %3751 = vmatpush2.bf16.msra.mxu0 %v3610
    %3752 = vmatprep.subr.bf16.mxu0 %v3608
    %3753 = vmatpush2.bf16.msra.mxu0 %v3607
    %3754 = vmatprep.subr.bf16.mxu0 %v3605
    %3755 = vmatpush2.bf16.msra.mxu0 %v3604
    %3756 = vmatprep.mubr.f32.mxu0 %v3305
    %3757 = vmatmul.mubr.f32.gmra.mxu0 %v3298
    %v3758 = vpop.f32.mrf.mxu0
    %v3759 = vadd.f32 %v3225, %v3758
    %v3760 = vpop.f32.mrf.mxu0
    %v3761 = vadd.f32 %v3229, %v3760
    %3762 = vmatprep.mubr.f32.mxu0 %v3326
    %3763 = vmatmul.mubr.f32.gmra.mxu0 %v3319
    %v3764 = vpop.f32.mrf.mxu0
    %v3765 = vadd.f32 %v3225, %v3764
    %v3766 = vpop.f32.mrf.mxu0
    %v3767 = vadd.f32 %v3229, %v3766
    %3768 = vdwg.mxu0
    %3769 = vmatprep.subr.bf16.mxu0 %v3650
    %3770 = vmatpush1.bf16.msra.mxu0 %v3649
    %3771 = vmatprep.subr.bf16.mxu0 %v3647
    %3772 = vmatpush1.bf16.msra.mxu0 %v3646
    %3773 = vmatprep.subr.bf16.mxu0 %v3644
    %3774 = vmatpush1.bf16.msra.mxu0 %v3643
    %3775 = vmatprep.subr.bf16.mxu0 %v3641
    %3776 = vmatpush1.bf16.msra.mxu0 %v3640
    %3777 = vmatprep.subr.bf16.mxu0 %v3638
    %3778 = vmatpush1.bf16.msra.mxu0 %v3637
    %3779 = vmatprep.subr.bf16.mxu0 %v3635
    %3780 = vmatpush1.bf16.msra.mxu0 %v3634
    %3781 = vmatprep.subr.bf16.mxu0 %v3632
    %3782 = vmatpush1.bf16.msra.mxu0 %v3631
    %3783 = vmatprep.subr.bf16.mxu0 %v3629
    %3784 = vmatpush1.bf16.msra.mxu0 %v3628
    %3785 = vmatprep.subr.bf16.mxu0 0
    %3786 = vmatpush2.bf16.msra.mxu0 0
    %3787 = vmatprep.subr.bf16.mxu0 0
    %3788 = vmatpush2.bf16.msra.mxu0 0
    %3789 = vmatprep.subr.bf16.mxu0 0
    %3790 = vmatpush2.bf16.msra.mxu0 0
    %3791 = vmatprep.subr.bf16.mxu0 0
    %3792 = vmatpush2.bf16.msra.mxu0 0
    %3793 = vmatprep.subr.bf16.mxu0 0
    %3794 = vmatpush2.bf16.msra.mxu0 0
    %3795 = vmatprep.subr.bf16.mxu0 0
    %3796 = vmatpush2.bf16.msra.mxu0 0
    %3797 = vmatprep.subr.bf16.mxu0 0
    %3798 = vmatpush2.bf16.msra.mxu0 0
    %3799 = vmatprep.subr.bf16.mxu0 0
    %3800 = vmatpush2.bf16.msra.mxu0 0
    %3801 = vmatprep.mubr.f32.mxu0 0.0
    %3802 = vmatmul.mubr.f32.gmra.mxu0 %v3312
    %v3803 = vpop.f32.mrf.mxu0
    %v3804 = vadd.f32 %v3759, %v3803
    %v3805 = vpop.f32.mrf.mxu0
    %v3806 = vadd.f32 %v3761, %v3805
    %3807 = vmatprep.mubr.f32.mxu0 0.0
    %3808 = vmatmul.mubr.f32.gmra.mxu0 %v3333
    %v3809 = vpop.f32.mrf.mxu0
    %v3810 = vadd.f32 %v3765, %v3809
    %v3811 = vpop.f32.mrf.mxu0
    %v3812 = vadd.f32 %v3767, %v3811
    %3813 = vdwg.mxu0
    %3814 = vmatprep.subr.bf16.mxu0 0
    %3815 = vmatpush1.bf16.msra.mxu0 %v3603
    %3816 = vmatprep.subr.bf16.mxu0 0
    %3817 = vmatpush1.bf16.msra.mxu0 %v3600
    %3818 = vmatprep.subr.bf16.mxu0 0
    %3819 = vmatpush1.bf16.msra.mxu0 %v3597
    %3820 = vmatprep.subr.bf16.mxu0 0
    %3821 = vmatpush1.bf16.msra.mxu0 %v3594
    %3822 = vmatprep.subr.bf16.mxu0 0
    %3823 = vmatpush1.bf16.msra.mxu0 %v3591
    %3824 = vmatprep.subr.bf16.mxu0 0
    %3825 = vmatpush1.bf16.msra.mxu0 %v3588
    %3826 = vmatprep.subr.bf16.mxu0 0
    %3827 = vmatpush1.bf16.msra.mxu0 %v3585
    %3828 = vmatprep.subr.bf16.mxu0 0
    %3829 = vmatpush1.bf16.msra.mxu0 %v3582
    %3830 = vmatprep.subr.bf16.mxu0 0
    %3831 = vmatpush2.bf16.msra.mxu0 %v3627
    %3832 = vmatprep.subr.bf16.mxu0 0
    %3833 = vmatpush2.bf16.msra.mxu0 %v3624
    %3834 = vmatprep.subr.bf16.mxu0 0
    %3835 = vmatpush2.bf16.msra.mxu0 %v3621
    %3836 = vmatprep.subr.bf16.mxu0 0
    %3837 = vmatpush2.bf16.msra.mxu0 %v3618
    %3838 = vmatprep.subr.bf16.mxu0 0
    %3839 = vmatpush2.bf16.msra.mxu0 %v3615
    %3840 = vmatprep.subr.bf16.mxu0 0
    %3841 = vmatpush2.bf16.msra.mxu0 %v3612
    %3842 = vmatprep.subr.bf16.mxu0 0
    %3843 = vmatpush2.bf16.msra.mxu0 %v3609
    %3844 = vmatprep.subr.bf16.mxu0 0
    %3845 = vmatpush2.bf16.msra.mxu0 %v3606
    %3846 = vmatprep.mubr.f32.mxu0 %v3305
    %3847 = vmatmul.mubr.f32.gmra.mxu0 %v3298
    %v3848 = vpop.f32.mrf.mxu0
    %v3849 = vadd.f32 %v3233, %v3848
    %v3850 = vpop.f32.mrf.mxu0
    %3851 = vmatprep.mubr.f32.mxu0 %v3326
    %3852 = vmatmul.mubr.f32.gmra.mxu0 %v3319
    %v3853 = vpop.f32.mrf.mxu0
    %v3854 = vadd.f32 %v3233, %v3853
    %v3855 = vpop.f32.mrf.mxu0
    %3856 = vdwg.mxu0
    %3857 = vmatprep.subr.bf16.mxu0 0
    %3858 = vmatpush1.bf16.msra.mxu0 %v3651
    %3859 = vmatprep.subr.bf16.mxu0 0
    %3860 = vmatpush1.bf16.msra.mxu0 %v3648
    %3861 = vmatprep.subr.bf16.mxu0 0
    %3862 = vmatpush1.bf16.msra.mxu0 %v3645
    %3863 = vmatprep.subr.bf16.mxu0 0
    %3864 = vmatpush1.bf16.msra.mxu0 %v3642
    %3865 = vmatprep.subr.bf16.mxu0 0
    %3866 = vmatpush1.bf16.msra.mxu0 %v3639
    %3867 = vmatprep.subr.bf16.mxu0 0
    %3868 = vmatpush1.bf16.msra.mxu0 %v3636
    %3869 = vmatprep.subr.bf16.mxu0 0
    %3870 = vmatpush1.bf16.msra.mxu0 %v3633
    %3871 = vmatprep.subr.bf16.mxu0 0
    %3872 = vmatpush1.bf16.msra.mxu0 %v3630
    %3873 = vmatprep.subr.bf16.mxu0 0
    %3874 = vmatpush2.bf16.msra.mxu0 0
    %3875 = vmatprep.subr.bf16.mxu0 0
    %3876 = vmatpush2.bf16.msra.mxu0 0
    %3877 = vmatprep.subr.bf16.mxu0 0
    %3878 = vmatpush2.bf16.msra.mxu0 0
    %3879 = vmatprep.subr.bf16.mxu0 0
    %3880 = vmatpush2.bf16.msra.mxu0 0
    %3881 = vmatprep.subr.bf16.mxu0 0
    %3882 = vmatpush2.bf16.msra.mxu0 0
    %3883 = vmatprep.subr.bf16.mxu0 0
    %3884 = vmatpush2.bf16.msra.mxu0 0
    %3885 = vmatprep.subr.bf16.mxu0 0
    %3886 = vmatpush2.bf16.msra.mxu0 0
    %3887 = vmatprep.subr.bf16.mxu0 0
    %3888 = vmatpush2.bf16.msra.mxu0 0
    %3889 = vmatprep.mubr.f32.mxu0 0.0
    %3890 = vmatmul.mubr.f32.gmra.mxu0 %v3312
    %v3891 = vpop.f32.mrf.mxu0
    %v3892 = vadd.f32 %v3849, %v3891
    %v3893 = vpop.f32.mrf.mxu0
    %3894 = vmatprep.mubr.f32.mxu0 0.0
    %3895 = vmatmul.mubr.f32.gmra.mxu0 %v3333
    %v3896 = vpop.f32.mrf.mxu0
    %v3897 = vadd.f32 %v3854, %v3896
    %v3898 = vpop.f32.mrf.mxu0
    %3899 = vdwg.mxu0
    %v3900 = vmax.f32 %v3804, 0.0
    %v3901 = vmax.f32 %v3806, 0.0
    %v3902 = vmax.f32 %v3892, 0.0
    %v3903 = vmax.f32 %v3810, 0.0
    %v3904 = vmax.f32 %v3812, 0.0
    %v3905 = vmax.f32 %v3897, 0.0
    %v3906 = vld [vmem:[%s9] sm:$0xff]
    %v3907 = vld [vmem:[%s9 + $0x8] sm:$0xff]
    %v3908 = vld [vmem:[%s9 + $0x10] sm:$0xff]
    %v3909 = vld [vmem:[%s9 + $0x18] sm:$0xff]
    %v3910 = vld [vmem:[%s9 + $0x20] sm:$0xff]
    %v3911 = vld [vmem:[%s9 + $0x28] sm:$0xff]
    %v3912 = vld [vmem:[%s9 + $0x30] sm:$0xff]
    %v3913 = vld [vmem:[%s9 + $0x38] sm:$0xff]
    %v3914 = vld [vmem:[%s9 + $0x40] sm:$0xff]
    %v3915 = vld [vmem:[%s9 + $0x48] sm:$0xff]
    %v3916 = vld [vmem:[%s9 + $0x50] sm:$0xff]
    %v3917 = vld [vmem:[%s9 + $0x58] sm:$0xff]
    %v3918 = vld [vmem:[%s9 + $0x60] sm:$0xff]
    %v3919 = vld [vmem:[%s9 + $0x68] sm:$0xff]
    %v3920 = vld [vmem:[%s9 + $0x70] sm:$0xff]
    %v3921 = vld [vmem:[%s9 + $0x78] sm:$0xff]
    %v3922 = vld [vmem:[%s9 + $0x80] sm:$0xff]
    %v3923 = vld [vmem:[%s9 + $0x88] sm:$0xff]
    %v3924 = vld [vmem:[%s9 + $0x90] sm:$0xff]
    %v3925 = vld [vmem:[%s9 + $0x98] sm:$0xff]
    %v3926 = vld [vmem:[%s9 + $0xa0] sm:$0xff]
    %v3927 = vld [vmem:[%s9 + $0xa8] sm:$0xff]
    %v3928 = vld [vmem:[%s9 + $0xb0] sm:$0xff]
    %v3929 = vld [vmem:[%s9 + $0xb8] sm:$0xff]
    %v3930 = vld [vmem:[%s9 + $0xc0] sm:$0xff]
    %v3931 = vld [vmem:[%s9 + $0xc8] sm:$0xff]
    %v3932 = vld [vmem:[%s9 + $0xd0] sm:$0xff]
    %v3933 = vld [vmem:[%s9 + $0xd8] sm:$0xff]
    %v3934 = vld [vmem:[%s9 + $0xe0] sm:$0xff]
    %v3935 = vld [vmem:[%s9 + $0xe8] sm:$0xff]
    %v3936 = vld [vmem:[%s9 + $0xf0] sm:$0xff]
    %v3937 = vld [vmem:[%s9 + $0xf8] sm:$0xff]
    %v3938 = vld [vmem:[%s9 + $0x100] sm:$0xff]
    %v3939 = vld [vmem:[%s9 + $0x108] sm:$0xff]
    %v3940 = vld [vmem:[%s9 + $0x110] sm:$0xff]
    %v3941 = vld [vmem:[%s9 + $0x118] sm:$0xff]
    %v3942 = vld [vmem:[%s9 + $0x120] sm:$0xff]
    %v3943 = vld [vmem:[%s9 + $0x128] sm:$0xff]
    %v3944 = vld [vmem:[%s9 + $0x130] sm:$0xff]
    %v3945 = vld [vmem:[%s9 + $0x138] sm:$0xff]
    %v3946 = vld [vmem:[%s9 + $0x140] sm:$0xff]
    %v3947 = vld [vmem:[%s9 + $0x148] sm:$0xff]
    %v3948 = vld [vmem:[%s9 + $0x150] sm:$0xff]
    %v3949 = vld [vmem:[%s9 + $0x158] sm:$0xff]
    %v3950 = vld [vmem:[%s9 + $0x160] sm:$0xff]
    %v3951 = vld [vmem:[%s9 + $0x168] sm:$0xff]
    %v3952 = vld [vmem:[%s9 + $0x170] sm:$0xff]
    %v3953 = vld [vmem:[%s9 + $0x178] sm:$0xff]
    %v3954 = vld [vmem:[%s9 + $0x180] sm:$0xff]
    %v3955 = vld [vmem:[%s9 + $0x188] sm:$0xff]
    %v3956 = vld [vmem:[%s9 + $0x190] sm:$0xff]
    %v3957 = vld [vmem:[%s9 + $0x198] sm:$0xff]
    %v3958 = vld [vmem:[%s9 + $0x1a0] sm:$0xff]
    %v3959 = vld [vmem:[%s9 + $0x1a8] sm:$0xff]
    %v3960 = vld [vmem:[%s9 + $0x1b0] sm:$0xff]
    %v3961 = vld [vmem:[%s9 + $0x1b8] sm:$0xff]
    %v3962 = vld [vmem:[%s9 + $0x1c0] sm:$0xff]
    %v3963 = vld [vmem:[%s9 + $0x1c8] sm:$0xff]
    %v3964 = vld [vmem:[%s9 + $0x1d0] sm:$0xff]
    %v3965 = vld [vmem:[%s9 + $0x1d8] sm:$0xff]
    %v3966 = vld [vmem:[%s9 + $0x1e0] sm:$0xff]
    %v3967 = vld [vmem:[%s9 + $0x1e8] sm:$0xff]
    %v3968 = vld [vmem:[%s9 + $0x1f0] sm:$0xff]
    %v3969 = vld [vmem:[%s9 + $0x1f8] sm:$0xff]
    %v3970 = vld [vmem:[%s9 + $0x200] sm:$0xff]
    %v3971 = vld [vmem:[%s9 + $0x208] sm:$0xff]
    %v3972 = vld [vmem:[%s9 + $0x210] sm:$0xff]
    %v3973 = vld [vmem:[%s9 + $0x218] sm:$0xff]
    %v3974 = vld [vmem:[%s9 + $0x220] sm:$0xff]
    %v3975 = vld [vmem:[%s9 + $0x228] sm:$0xff]
    %v3976 = vld [vmem:[%s9 + $0x230] sm:$0xff]
    %v3977 = vld [vmem:[%s9 + $0x238] sm:$0xff]
    %v3978 = vld [vmem:[%s9 + $0x240] sm:$0xff]
    %v3979 = vld [vmem:[%s9 + $0x248] sm:$0xff]
    %v3980 = vld [vmem:[%s9 + $0x250] sm:$0xff]
    %v3981 = vld [vmem:[%s9 + $0x258] sm:$0xff]
    %v3982 = vld [vmem:[%s9 + $0x260] sm:$0xff]
    %v3983 = vld [vmem:[%s9 + $0x268] sm:$0xff]
    %v3984 = vld [vmem:[%s9 + $0x270] sm:$0xff]
    %v3985 = vld [vmem:[%s9 + $0x278] sm:$0xff]
    %v3986 = vld [vmem:[%s9 + $0x280] sm:$0xff]
    %v3987 = vld [vmem:[%s9 + $0x288] sm:$0xff]
    %v3988 = vld [vmem:[%s9 + $0x290] sm:$0xff]
    %v3989 = vld [vmem:[%s9 + $0x298] sm:$0xff]
    %v3990 = vld [vmem:[%s9 + $0x2a0] sm:$0xff]
    %v3991 = vld [vmem:[%s9 + $0x2a8] sm:$0xff]
    %v3992 = vld [vmem:[%s9 + $0x2b0] sm:$0xff]
    %v3993 = vld [vmem:[%s9 + $0x2b8] sm:$0xff]
    %v3994 = vld [vmem:[%s9 + $0x2c0] sm:$0xff]
    %v3995 = vld [vmem:[%s9 + $0x2c8] sm:$0xff]
    %v3996 = vld [vmem:[%s9 + $0x2d0] sm:$0xff]
    %v3997 = vld [vmem:[%s9 + $0x2d8] sm:$0xff]
    %v3998 = vld [vmem:[%s9 + $0x2e0] sm:$0xff]
    %v3999 = vld [vmem:[%s9 + $0x2e8] sm:$0xff]
    %v4000 = vld [vmem:[%s9 + $0x2f0] sm:$0xff]
    %v4001 = vld [vmem:[%s9 + $0x2f8] sm:$0xff]
    %v4002 = vld [vmem:[%s1] sm:$0xff]
    %v4003 = vld [vmem:[%s1 + $0x8] sm:$0xff]
    %v4004 = vld [vmem:[#allocation16] sm:$0x7f]
    %v4005 = vld [vmem:[#allocation16 + $0x8] sm:$0x7f]
    %v4006 = vld [vmem:[#allocation16 + $0x10] sm:$0x7f]
    %v4007 = vld [vmem:[#allocation16 + $0x18] sm:$0x7f]
    %vm4008 = vcmask 56320
    %v4010 = vsel %vm4008, %v4002, 0
    %v4013 = vsel %vm4008, %v4003, 0
    %vm4015 = vcmask 1046528
    %v4017 = vsel %vm4015, %v4004, 0
    %v4020 = vsel %vm4015, %v4005, 0
    %v4023 = vsel %vm4015, %v4006, 0
    %v4026 = vsel %vm4015, %v4007, 0
    %4028 = vmatprep.subr.mxu0 0.0
    %4029 = vmatpush1.msra.mxu0 0.0
    %4030 = vmatprep.subr.mxu0 0.0
    %4031 = vmatpush1.msra.mxu0 0.0
    %4032 = vmatprep.subr.mxu0 0.0
    %4033 = vmatpush1.msra.mxu0 0.0
    %4034 = vmatprep.subr.mxu0 0.0
    %4035 = vmatpush1.msra.mxu0 0.0
    %4036 = vmatprep.subr.mxu0 0.0
    %4037 = vmatpush1.msra.mxu0 0.0
    %4038 = vmatprep.subr.mxu0 0.0
    %4039 = vmatpush1.msra.mxu0 0.0
    %4040 = vmatprep.subr.mxu0 0.0
    %4041 = vmatpush1.msra.mxu0 0.0
    %4042 = vmatprep.subr.mxu0 0.0
    %4043 = vmatpush1.msra.mxu0 0.0
    %4044 = vmatprep.subr.mxu0 0.0
    %4045 = vmatpush1.msra.mxu0 0.0
    %4046 = vmatprep.subr.mxu0 0.0
    %4047 = vmatpush1.msra.mxu0 0.0
    %4048 = vmatprep.subr.mxu0 0.0
    %4049 = vmatpush1.msra.mxu0 0.0
    %4050 = vmatprep.subr.mxu0 0.0
    %4051 = vmatpush1.msra.mxu0 0.0
    %4052 = vmatprep.subr.mxu0 0.0
    %4053 = vmatpush1.msra.mxu0 0.0
    %4054 = vmatprep.subr.mxu0 0.0
    %4055 = vmatpush1.msra.mxu0 0.0
    %4056 = vmatprep.subr.mxu0 0.0
    %4057 = vmatpush1.msra.mxu0 0.0
    %4058 = vmatprep.subr.mxu0 %v4020
    %4059 = vmatpush1.msra.mxu0 %v4017
    %4060 = vmatprep.subr.mxu0 0.0
    %4061 = vmatpush2.msra.mxu0 0.0
    %4062 = vmatprep.subr.mxu0 0.0
    %4063 = vmatpush2.msra.mxu0 0.0
    %4064 = vmatprep.subr.mxu0 0.0
    %4065 = vmatpush2.msra.mxu0 0.0
    %4066 = vmatprep.subr.mxu0 0.0
    %4067 = vmatpush2.msra.mxu0 0.0
    %4068 = vmatprep.subr.mxu0 0.0
    %4069 = vmatpush2.msra.mxu0 0.0
    %4070 = vmatprep.subr.mxu0 0.0
    %4071 = vmatpush2.msra.mxu0 0.0
    %4072 = vmatprep.subr.mxu0 0.0
    %4073 = vmatpush2.msra.mxu0 0.0
    %4074 = vmatprep.subr.mxu0 0.0
    %4075 = vmatpush2.msra.mxu0 0.0
    %4076 = vmatprep.subr.mxu0 0.0
    %4077 = vmatpush2.msra.mxu0 0.0
    %4078 = vmatprep.subr.mxu0 0.0
    %4079 = vmatpush2.msra.mxu0 0.0
    %4080 = vmatprep.subr.mxu0 0.0
    %4081 = vmatpush2.msra.mxu0 0.0
    %4082 = vmatprep.subr.mxu0 0.0
    %4083 = vmatpush2.msra.mxu0 0.0
    %4084 = vmatprep.subr.mxu0 0.0
    %4085 = vmatpush2.msra.mxu0 0.0
    %4086 = vmatprep.subr.mxu0 0.0
    %4087 = vmatpush2.msra.mxu0 0.0
    %4088 = vmatprep.subr.mxu0 0.0
    %4089 = vmatpush2.msra.mxu0 0.0
    %4090 = vmatprep.subr.mxu0 0.0
    %4091 = vmatpush2.msra.mxu0 0.0
    %4092 = vmatprep.mubr.f32.mxu0 0.0
    %4093 = vmatmul.mubr.f32.gmra.mxu0 %v4010
    %v4094 = vpop.f32.mrf.mxu0
    %v4095 = vadd.f32 0.0, %v4094
    %v4096 = vpop.f32.mrf.mxu0
    %v4097 = vadd.f32 0.0, %v4096
    %4098 = vmatprep.mubr.f32.mxu0 0.0
    %4099 = vmatmul.mubr.f32.gmra.mxu0 %v4013
    %v4100 = vpop.f32.mrf.mxu0
    %v4101 = vadd.f32 0.0, %v4100
    %v4102 = vpop.f32.mrf.mxu0
    %v4103 = vadd.f32 0.0, %v4102
    %4104 = vdwg.mxu0
    %4105 = vmatprep.subr.mxu0 0.0
    %4106 = vmatpush1.msra.mxu0 0.0
    %4107 = vmatprep.subr.mxu0 0.0
    %4108 = vmatpush1.msra.mxu0 0.0
    %4109 = vmatprep.subr.mxu0 0.0
    %4110 = vmatpush1.msra.mxu0 0.0
    %4111 = vmatprep.subr.mxu0 0.0
    %4112 = vmatpush1.msra.mxu0 0.0
    %4113 = vmatprep.subr.mxu0 0.0
    %4114 = vmatpush1.msra.mxu0 0.0
    %4115 = vmatprep.subr.mxu0 0.0
    %4116 = vmatpush1.msra.mxu0 0.0
    %4117 = vmatprep.subr.mxu0 0.0
    %4118 = vmatpush1.msra.mxu0 0.0
    %4119 = vmatprep.subr.mxu0 0.0
    %4120 = vmatpush1.msra.mxu0 0.0
    %4121 = vmatprep.subr.mxu0 0.0
    %4122 = vmatpush1.msra.mxu0 0.0
    %4123 = vmatprep.subr.mxu0 0.0
    %4124 = vmatpush1.msra.mxu0 0.0
    %4125 = vmatprep.subr.mxu0 0.0
    %4126 = vmatpush1.msra.mxu0 0.0
    %4127 = vmatprep.subr.mxu0 0.0
    %4128 = vmatpush1.msra.mxu0 0.0
    %4129 = vmatprep.subr.mxu0 0.0
    %4130 = vmatpush1.msra.mxu0 0.0
    %4131 = vmatprep.subr.mxu0 0.0
    %4132 = vmatpush1.msra.mxu0 0.0
    %4133 = vmatprep.subr.mxu0 0.0
    %4134 = vmatpush1.msra.mxu0 0.0
    %4135 = vmatprep.subr.mxu0 %v4026
    %4136 = vmatpush1.msra.mxu0 %v4023
    %4137 = vmatprep.subr.mxu0 0.0
    %4138 = vmatpush2.msra.mxu0 0.0
    %4139 = vmatprep.subr.mxu0 0.0
    %4140 = vmatpush2.msra.mxu0 0.0
    %4141 = vmatprep.subr.mxu0 0.0
    %4142 = vmatpush2.msra.mxu0 0.0
    %4143 = vmatprep.subr.mxu0 0.0
    %4144 = vmatpush2.msra.mxu0 0.0
    %4145 = vmatprep.subr.mxu0 0.0
    %4146 = vmatpush2.msra.mxu0 0.0
    %4147 = vmatprep.subr.mxu0 0.0
    %4148 = vmatpush2.msra.mxu0 0.0
    %4149 = vmatprep.subr.mxu0 0.0
    %4150 = vmatpush2.msra.mxu0 0.0
    %4151 = vmatprep.subr.mxu0 0.0
    %4152 = vmatpush2.msra.mxu0 0.0
    %4153 = vmatprep.subr.mxu0 0.0
    %4154 = vmatpush2.msra.mxu0 0.0
    %4155 = vmatprep.subr.mxu0 0.0
    %4156 = vmatpush2.msra.mxu0 0.0
    %4157 = vmatprep.subr.mxu0 0.0
    %4158 = vmatpush2.msra.mxu0 0.0
    %4159 = vmatprep.subr.mxu0 0.0
    %4160 = vmatpush2.msra.mxu0 0.0
    %4161 = vmatprep.subr.mxu0 0.0
    %4162 = vmatpush2.msra.mxu0 0.0
    %4163 = vmatprep.subr.mxu0 0.0
    %4164 = vmatpush2.msra.mxu0 0.0
    %4165 = vmatprep.subr.mxu0 0.0
    %4166 = vmatpush2.msra.mxu0 0.0
    %4167 = vmatprep.subr.mxu0 0.0
    %4168 = vmatpush2.msra.mxu0 0.0
    %4169 = vmatprep.mubr.f32.mxu0 0.0
    %4170 = vmatmul.mubr.f32.gmra.mxu0 %v4010
    %v4171 = vpop.f32.mrf.mxu0
    %v4172 = vadd.f32 0.0, %v4171
    %v4173 = vpop.f32.mrf.mxu0
    %v4174 = vadd.f32 0.0, %v4173
    %4175 = vmatprep.mubr.f32.mxu0 0.0
    %4176 = vmatmul.mubr.f32.gmra.mxu0 %v4013
    %v4177 = vpop.f32.mrf.mxu0
    %v4178 = vadd.f32 0.0, %v4177
    %v4179 = vpop.f32.mrf.mxu0
    %v4180 = vadd.f32 0.0, %v4179
    %4181 = vdwg.mxu0
    %v4278 = vunpack.c.l.b16 %v3906
    %v4279 = vunpack.c.h.b16 %v3906
    %v4280 = vunpack.c.l.b16 %v3907
    %v4281 = vunpack.c.h.b16 %v3907
    %v4282 = vunpack.c.l.b16 %v3908
    %v4283 = vunpack.c.h.b16 %v3908
    %v4284 = vunpack.c.l.b16 %v3909
    %v4285 = vunpack.c.h.b16 %v3909
    %v4286 = vunpack.c.l.b16 %v3910
    %v4287 = vunpack.c.h.b16 %v3910
    %v4288 = vunpack.c.l.b16 %v3911
    %v4289 = vunpack.c.h.b16 %v3911
    %v4290 = vunpack.c.l.b16 %v3912
    %v4291 = vunpack.c.h.b16 %v3912
    %v4292 = vunpack.c.l.b16 %v3913
    %v4293 = vunpack.c.h.b16 %v3913
    %v4294 = vunpack.c.l.b16 %v3914
    %v4295 = vunpack.c.h.b16 %v3914
    %v4296 = vunpack.c.l.b16 %v3915
    %v4297 = vunpack.c.h.b16 %v3915
    %v4298 = vunpack.c.l.b16 %v3916
    %v4299 = vunpack.c.h.b16 %v3916
    %v4300 = vunpack.c.l.b16 %v3917
    %v4301 = vunpack.c.h.b16 %v3917
    %v4302 = vunpack.c.l.b16 %v3918
    %v4303 = vunpack.c.h.b16 %v3918
    %v4304 = vunpack.c.l.b16 %v3919
    %v4305 = vunpack.c.h.b16 %v3919
    %v4306 = vunpack.c.l.b16 %v3920
    %v4307 = vunpack.c.h.b16 %v3920
    %v4308 = vunpack.c.l.b16 %v3921
    %v4309 = vunpack.c.h.b16 %v3921
    %v4310 = vunpack.c.l.b16 %v3922
    %v4311 = vunpack.c.h.b16 %v3922
    %v4312 = vunpack.c.l.b16 %v3923
    %v4313 = vunpack.c.h.b16 %v3923
    %v4314 = vunpack.c.l.b16 %v3924
    %v4315 = vunpack.c.h.b16 %v3924
    %v4316 = vunpack.c.l.b16 %v3925
    %v4317 = vunpack.c.h.b16 %v3925
    %v4318 = vunpack.c.l.b16 %v3926
    %v4319 = vunpack.c.h.b16 %v3926
    %v4320 = vunpack.c.l.b16 %v3927
    %v4321 = vunpack.c.h.b16 %v3927
    %v4322 = vunpack.c.l.b16 %v3928
    %v4323 = vunpack.c.h.b16 %v3928
    %v4324 = vunpack.c.l.b16 %v3929
    %v4325 = vunpack.c.h.b16 %v3929
    %v4326 = vunpack.c.l.b16 %v3930
    %v4327 = vunpack.c.h.b16 %v3930
    %v4328 = vunpack.c.l.b16 %v3931
    %v4329 = vunpack.c.h.b16 %v3931
    %v4330 = vunpack.c.l.b16 %v3932
    %v4331 = vunpack.c.h.b16 %v3932
    %v4332 = vunpack.c.l.b16 %v3933
    %v4333 = vunpack.c.h.b16 %v3933
    %v4334 = vunpack.c.l.b16 %v3934
    %v4335 = vunpack.c.h.b16 %v3934
    %v4336 = vunpack.c.l.b16 %v3935
    %v4337 = vunpack.c.h.b16 %v3935
    %v4338 = vunpack.c.l.b16 %v3936
    %v4339 = vunpack.c.h.b16 %v3936
    %v4340 = vunpack.c.l.b16 %v3937
    %v4341 = vunpack.c.h.b16 %v3937
    %v4342 = vunpack.c.l.b16 %v3938
    %v4343 = vunpack.c.h.b16 %v3938
    %v4344 = vunpack.c.l.b16 %v3939
    %v4345 = vunpack.c.h.b16 %v3939
    %v4346 = vunpack.c.l.b16 %v3940
    %v4347 = vunpack.c.h.b16 %v3940
    %v4348 = vunpack.c.l.b16 %v3941
    %v4349 = vunpack.c.h.b16 %v3941
    %v4350 = vunpack.c.l.b16 %v3942
    %v4351 = vunpack.c.h.b16 %v3942
    %v4352 = vunpack.c.l.b16 %v3943
    %v4353 = vunpack.c.h.b16 %v3943
    %v4354 = vunpack.c.l.b16 %v3944
    %v4355 = vunpack.c.h.b16 %v3944
    %v4356 = vunpack.c.l.b16 %v3945
    %v4357 = vunpack.c.h.b16 %v3945
    %v4358 = vunpack.c.l.b16 %v3946
    %v4359 = vunpack.c.h.b16 %v3946
    %v4360 = vunpack.c.l.b16 %v3947
    %v4361 = vunpack.c.h.b16 %v3947
    %v4362 = vunpack.c.l.b16 %v3948
    %v4363 = vunpack.c.h.b16 %v3948
    %v4364 = vunpack.c.l.b16 %v3949
    %v4365 = vunpack.c.h.b16 %v3949
    %v4366 = vunpack.c.l.b16 %v3950
    %v4367 = vunpack.c.h.b16 %v3950
    %v4368 = vunpack.c.l.b16 %v3951
    %v4369 = vunpack.c.h.b16 %v3951
    %v4370 = vunpack.c.l.b16 %v3952
    %v4371 = vunpack.c.h.b16 %v3952
    %v4372 = vunpack.c.l.b16 %v3953
    %v4373 = vunpack.c.h.b16 %v3953
    %v4374 = vunpack.c.l.b16 %v3954
    %v4375 = vunpack.c.h.b16 %v3954
    %v4376 = vunpack.c.l.b16 %v3955
    %v4377 = vunpack.c.h.b16 %v3955
    %v4378 = vunpack.c.l.b16 %v3956
    %v4379 = vunpack.c.h.b16 %v3956
    %v4380 = vunpack.c.l.b16 %v3957
    %v4381 = vunpack.c.h.b16 %v3957
    %v4382 = vunpack.c.l.b16 %v3958
    %v4383 = vunpack.c.h.b16 %v3958
    %v4384 = vunpack.c.l.b16 %v3959
    %v4385 = vunpack.c.h.b16 %v3959
    %v4386 = vunpack.c.l.b16 %v3960
    %v4387 = vunpack.c.h.b16 %v3960
    %v4388 = vunpack.c.l.b16 %v3961
    %v4389 = vunpack.c.h.b16 %v3961
    %v4390 = vunpack.c.l.b16 %v3962
    %v4391 = vunpack.c.h.b16 %v3962
    %v4392 = vunpack.c.l.b16 %v3963
    %v4393 = vunpack.c.h.b16 %v3963
    %v4394 = vunpack.c.l.b16 %v3964
    %v4395 = vunpack.c.h.b16 %v3964
    %v4396 = vunpack.c.l.b16 %v3965
    %v4397 = vunpack.c.h.b16 %v3965
    %v4398 = vunpack.c.l.b16 %v3966
    %v4399 = vunpack.c.h.b16 %v3966
    %v4400 = vunpack.c.l.b16 %v3967
    %v4401 = vunpack.c.h.b16 %v3967
    %v4402 = vunpack.c.l.b16 %v3968
    %v4403 = vunpack.c.h.b16 %v3968
    %v4404 = vunpack.c.l.b16 %v3969
    %v4405 = vunpack.c.h.b16 %v3969
    %v4406 = vunpack.c.l.b16 %v3970
    %v4407 = vunpack.c.h.b16 %v3970
    %v4408 = vunpack.c.l.b16 %v3971
    %v4409 = vunpack.c.h.b16 %v3971
    %v4410 = vunpack.c.l.b16 %v3972
    %v4411 = vunpack.c.h.b16 %v3972
    %v4412 = vunpack.c.l.b16 %v3973
    %v4413 = vunpack.c.h.b16 %v3973
    %v4414 = vunpack.c.l.b16 %v3974
    %v4415 = vunpack.c.h.b16 %v3974
    %v4416 = vunpack.c.l.b16 %v3975
    %v4417 = vunpack.c.h.b16 %v3975
    %v4418 = vunpack.c.l.b16 %v3976
    %v4419 = vunpack.c.h.b16 %v3976
    %v4420 = vunpack.c.l.b16 %v3977
    %v4421 = vunpack.c.h.b16 %v3977
    %v4422 = vunpack.c.l.b16 %v3978
    %v4423 = vunpack.c.h.b16 %v3978
    %v4424 = vunpack.c.l.b16 %v3979
    %v4425 = vunpack.c.h.b16 %v3979
    %v4426 = vunpack.c.l.b16 %v3980
    %v4427 = vunpack.c.h.b16 %v3980
    %v4428 = vunpack.c.l.b16 %v3981
    %v4429 = vunpack.c.h.b16 %v3981
    %v4430 = vunpack.c.l.b16 %v3982
    %v4431 = vunpack.c.h.b16 %v3982
    %v4432 = vunpack.c.l.b16 %v3983
    %v4433 = vunpack.c.h.b16 %v3983
    %v4434 = vunpack.c.l.b16 %v3984
    %v4435 = vunpack.c.h.b16 %v3984
    %v4436 = vunpack.c.l.b16 %v3985
    %v4437 = vunpack.c.h.b16 %v3985
    %v4438 = vunpack.c.l.b16 %v3986
    %v4439 = vunpack.c.h.b16 %v3986
    %v4440 = vunpack.c.l.b16 %v3987
    %v4441 = vunpack.c.h.b16 %v3987
    %v4442 = vunpack.c.l.b16 %v3988
    %v4443 = vunpack.c.h.b16 %v3988
    %v4444 = vunpack.c.l.b16 %v3989
    %v4445 = vunpack.c.h.b16 %v3989
    %v4446 = vunpack.c.l.b16 %v3990
    %v4447 = vunpack.c.h.b16 %v3990
    %v4448 = vunpack.c.l.b16 %v3991
    %v4449 = vunpack.c.h.b16 %v3991
    %v4450 = vunpack.c.l.b16 %v3992
    %v4451 = vunpack.c.h.b16 %v3992
    %v4452 = vunpack.c.l.b16 %v3993
    %v4453 = vunpack.c.h.b16 %v3993
    %v4454 = vunpack.c.l.b16 %v3994
    %v4455 = vunpack.c.h.b16 %v3994
    %v4456 = vunpack.c.l.b16 %v3995
    %v4457 = vunpack.c.h.b16 %v3995
    %v4458 = vunpack.c.l.b16 %v3996
    %v4459 = vunpack.c.h.b16 %v3996
    %v4460 = vunpack.c.l.b16 %v3997
    %v4461 = vunpack.c.h.b16 %v3997
    %v4462 = vunpack.c.l.b16 %v3998
    %v4463 = vunpack.c.h.b16 %v3998
    %v4464 = vunpack.c.l.b16 %v3999
    %v4465 = vunpack.c.h.b16 %v3999
    %v4466 = vunpack.c.l.b16 %v4000
    %v4467 = vunpack.c.h.b16 %v4000
    %v4468 = vunpack.c.l.b16 %v4001
    %v4469 = vunpack.c.h.b16 %v4001
    %v4470 = vpack.c.b16 %v4282, %v4278
    %v4471 = vpack.c.b16 %v4283, %v4279
    %v4472 = vpack.c.b16 %v4284, %v4280
    %v4473 = vpack.c.b16 %v4285, %v4281
    %v4474 = vpack.c.b16 %v4290, %v4286
    %v4475 = vpack.c.b16 %v4291, %v4287
    %v4476 = vpack.c.b16 %v4292, %v4288
    %v4477 = vpack.c.b16 %v4293, %v4289
    %v4478 = vpack.c.b16 %v4298, %v4294
    %v4479 = vpack.c.b16 %v4299, %v4295
    %v4480 = vpack.c.b16 %v4300, %v4296
    %v4481 = vpack.c.b16 %v4301, %v4297
    %v4482 = vpack.c.b16 %v4306, %v4302
    %v4483 = vpack.c.b16 %v4307, %v4303
    %v4484 = vpack.c.b16 %v4308, %v4304
    %v4485 = vpack.c.b16 %v4309, %v4305
    %v4486 = vpack.c.b16 %v4314, %v4310
    %v4487 = vpack.c.b16 %v4315, %v4311
    %v4488 = vpack.c.b16 %v4316, %v4312
    %v4489 = vpack.c.b16 %v4317, %v4313
    %v4490 = vpack.c.b16 %v4322, %v4318
    %v4491 = vpack.c.b16 %v4323, %v4319
    %v4492 = vpack.c.b16 %v4324, %v4320
    %v4493 = vpack.c.b16 %v4325, %v4321
    %v4494 = vpack.c.b16 %v4330, %v4326
    %v4495 = vpack.c.b16 %v4331, %v4327
    %v4496 = vpack.c.b16 %v4332, %v4328
    %v4497 = vpack.c.b16 %v4333, %v4329
    %v4498 = vpack.c.b16 %v4338, %v4334
    %v4499 = vpack.c.b16 %v4339, %v4335
    %v4500 = vpack.c.b16 %v4340, %v4336
    %v4501 = vpack.c.b16 %v4341, %v4337
    %v4502 = vpack.c.b16 %v4346, %v4342
    %v4503 = vpack.c.b16 %v4347, %v4343
    %v4504 = vpack.c.b16 %v4348, %v4344
    %v4505 = vpack.c.b16 %v4349, %v4345
    %v4506 = vpack.c.b16 %v4354, %v4350
    %v4507 = vpack.c.b16 %v4355, %v4351
    %v4508 = vpack.c.b16 %v4356, %v4352
    %v4509 = vpack.c.b16 %v4357, %v4353
    %v4510 = vpack.c.b16 %v4362, %v4358
    %v4511 = vpack.c.b16 %v4363, %v4359
    %v4512 = vpack.c.b16 %v4364, %v4360
    %v4513 = vpack.c.b16 %v4365, %v4361
    %v4514 = vpack.c.b16 %v4370, %v4366
    %v4515 = vpack.c.b16 %v4371, %v4367
    %v4516 = vpack.c.b16 %v4372, %v4368
    %v4517 = vpack.c.b16 %v4373, %v4369
    %v4518 = vpack.c.b16 %v4378, %v4374
    %v4519 = vpack.c.b16 %v4379, %v4375
    %v4520 = vpack.c.b16 %v4380, %v4376
    %v4521 = vpack.c.b16 %v4381, %v4377
    %v4522 = vpack.c.b16 %v4386, %v4382
    %v4523 = vpack.c.b16 %v4387, %v4383
    %v4524 = vpack.c.b16 %v4388, %v4384
    %v4525 = vpack.c.b16 %v4389, %v4385
    %v4526 = vpack.c.b16 %v4394, %v4390
    %v4527 = vpack.c.b16 %v4395, %v4391
    %v4528 = vpack.c.b16 %v4396, %v4392
    %v4529 = vpack.c.b16 %v4397, %v4393
    %v4530 = vpack.c.b16 %v4402, %v4398
    %v4531 = vpack.c.b16 %v4403, %v4399
    %v4532 = vpack.c.b16 %v4404, %v4400
    %v4533 = vpack.c.b16 %v4405, %v4401
    %v4534 = vpack.c.b16 %v4410, %v4406
    %v4535 = vpack.c.b16 %v4411, %v4407
    %v4536 = vpack.c.b16 %v4412, %v4408
    %v4537 = vpack.c.b16 %v4413, %v4409
    %v4538 = vpack.c.b16 %v4418, %v4414
    %v4539 = vpack.c.b16 %v4419, %v4415
    %v4540 = vpack.c.b16 %v4420, %v4416
    %v4541 = vpack.c.b16 %v4421, %v4417
    %v4542 = vpack.c.b16 %v4426, %v4422
    %v4543 = vpack.c.b16 %v4427, %v4423
    %v4544 = vpack.c.b16 %v4428, %v4424
    %v4545 = vpack.c.b16 %v4429, %v4425
    %v4546 = vpack.c.b16 %v4434, %v4430
    %v4547 = vpack.c.b16 %v4435, %v4431
    %v4548 = vpack.c.b16 %v4436, %v4432
    %v4549 = vpack.c.b16 %v4437, %v4433
    %v4550 = vpack.c.b16 %v4442, %v4438
    %v4551 = vpack.c.b16 %v4443, %v4439
    %v4552 = vpack.c.b16 %v4444, %v4440
    %v4553 = vpack.c.b16 %v4445, %v4441
    %v4554 = vpack.c.b16 %v4450, %v4446
    %v4555 = vpack.c.b16 %v4451, %v4447
    %v4556 = vpack.c.b16 %v4452, %v4448
    %v4557 = vpack.c.b16 %v4453, %v4449
    %v4558 = vpack.c.b16 %v4458, %v4454
    %v4559 = vpack.c.b16 %v4459, %v4455
    %v4560 = vpack.c.b16 %v4460, %v4456
    %v4561 = vpack.c.b16 %v4461, %v4457
    %v4562 = vpack.c.b16 %v4466, %v4462
    %v4563 = vpack.c.b16 %v4467, %v4463
    %v4564 = vpack.c.b16 %v4468, %v4464
    %v4565 = vpack.c.b16 %v4469, %v4465
    %4662 = vmatprep.subr.bf16.mxu0 %v4499
    %4663 = vmatpush1.bf16.msra.mxu0 %v4498
    %4664 = vmatprep.subr.bf16.mxu0 %v4495
    %4665 = vmatpush1.bf16.msra.mxu0 %v4494
    %4666 = vmatprep.subr.bf16.mxu0 %v4491
    %4667 = vmatpush1.bf16.msra.mxu0 %v4490
    %4668 = vmatprep.subr.bf16.mxu0 %v4487
    %4669 = vmatpush1.bf16.msra.mxu0 %v4486
    %4670 = vmatprep.subr.bf16.mxu0 %v4483
    %4671 = vmatpush1.bf16.msra.mxu0 %v4482
    %4672 = vmatprep.subr.bf16.mxu0 %v4479
    %4673 = vmatpush1.bf16.msra.mxu0 %v4478
    %4674 = vmatprep.subr.bf16.mxu0 %v4475
    %4675 = vmatpush1.bf16.msra.mxu0 %v4474
    %4676 = vmatprep.subr.bf16.mxu0 %v4471
    %4677 = vmatpush1.bf16.msra.mxu0 %v4470
    %4678 = vmatprep.subr.bf16.mxu0 %v4531
    %4679 = vmatpush2.bf16.msra.mxu0 %v4530
    %4680 = vmatprep.subr.bf16.mxu0 %v4527
    %4681 = vmatpush2.bf16.msra.mxu0 %v4526
    %4682 = vmatprep.subr.bf16.mxu0 %v4523
    %4683 = vmatpush2.bf16.msra.mxu0 %v4522
    %4684 = vmatprep.subr.bf16.mxu0 %v4519
    %4685 = vmatpush2.bf16.msra.mxu0 %v4518
    %4686 = vmatprep.subr.bf16.mxu0 %v4515
    %4687 = vmatpush2.bf16.msra.mxu0 %v4514
    %4688 = vmatprep.subr.bf16.mxu0 %v4511
    %4689 = vmatpush2.bf16.msra.mxu0 %v4510
    %4690 = vmatprep.subr.bf16.mxu0 %v4507
    %4691 = vmatpush2.bf16.msra.mxu0 %v4506
    %4692 = vmatprep.subr.bf16.mxu0 %v4503
    %4693 = vmatpush2.bf16.msra.mxu0 %v4502
    %4694 = vmatprep.mubr.f32.mxu0 %v3901
    %4695 = vmatmul.mubr.f32.gmra.mxu0 %v3900
    %v4696 = vpop.f32.mrf.mxu0
    %v4697 = vadd.f32 %v4095, %v4696
    %v4698 = vpop.f32.mrf.mxu0
    %v4699 = vadd.f32 %v4097, %v4698
    %4700 = vmatprep.mubr.f32.mxu0 %v3904
    %4701 = vmatmul.mubr.f32.gmra.mxu0 %v3903
    %v4702 = vpop.f32.mrf.mxu0
    %v4703 = vadd.f32 %v4101, %v4702
    %v4704 = vpop.f32.mrf.mxu0
    %v4705 = vadd.f32 %v4103, %v4704
    %4706 = vdwg.mxu0
    %4707 = vmatprep.subr.bf16.mxu0 %v4563
    %4708 = vmatpush1.bf16.msra.mxu0 %v4562
    %4709 = vmatprep.subr.bf16.mxu0 %v4559
    %4710 = vmatpush1.bf16.msra.mxu0 %v4558
    %4711 = vmatprep.subr.bf16.mxu0 %v4555
    %4712 = vmatpush1.bf16.msra.mxu0 %v4554
    %4713 = vmatprep.subr.bf16.mxu0 %v4551
    %4714 = vmatpush1.bf16.msra.mxu0 %v4550
    %4715 = vmatprep.subr.bf16.mxu0 %v4547
    %4716 = vmatpush1.bf16.msra.mxu0 %v4546
    %4717 = vmatprep.subr.bf16.mxu0 %v4543
    %4718 = vmatpush1.bf16.msra.mxu0 %v4542
    %4719 = vmatprep.subr.bf16.mxu0 %v4539
    %4720 = vmatpush1.bf16.msra.mxu0 %v4538
    %4721 = vmatprep.subr.bf16.mxu0 %v4535
    %4722 = vmatpush1.bf16.msra.mxu0 %v4534
    %4723 = vmatprep.subr.bf16.mxu0 0
    %4724 = vmatpush2.bf16.msra.mxu0 0
    %4725 = vmatprep.subr.bf16.mxu0 0
    %4726 = vmatpush2.bf16.msra.mxu0 0
    %4727 = vmatprep.subr.bf16.mxu0 0
    %4728 = vmatpush2.bf16.msra.mxu0 0
    %4729 = vmatprep.subr.bf16.mxu0 0
    %4730 = vmatpush2.bf16.msra.mxu0 0
    %4731 = vmatprep.subr.bf16.mxu0 0
    %4732 = vmatpush2.bf16.msra.mxu0 0
    %4733 = vmatprep.subr.bf16.mxu0 0
    %4734 = vmatpush2.bf16.msra.mxu0 0
    %4735 = vmatprep.subr.bf16.mxu0 0
    %4736 = vmatpush2.bf16.msra.mxu0 0
    %4737 = vmatprep.subr.bf16.mxu0 0
    %4738 = vmatpush2.bf16.msra.mxu0 0
    %4739 = vmatprep.mubr.f32.mxu0 0.0
    %4740 = vmatmul.mubr.f32.gmra.mxu0 %v3902
    %v4741 = vpop.f32.mrf.mxu0
    %v4742 = vadd.f32 %v4697, %v4741
    %v4743 = vpop.f32.mrf.mxu0
    %v4744 = vadd.f32 %v4699, %v4743
    %4745 = vmatprep.mubr.f32.mxu0 0.0
    %4746 = vmatmul.mubr.f32.gmra.mxu0 %v3905
    %v4747 = vpop.f32.mrf.mxu0
    %v4748 = vadd.f32 %v4703, %v4747
    %v4749 = vpop.f32.mrf.mxu0
    %v4750 = vadd.f32 %v4705, %v4749
    %4751 = vdwg.mxu0
    %4752 = vmatprep.subr.bf16.mxu0 %v4501
    %4753 = vmatpush1.bf16.msra.mxu0 %v4500
    %4754 = vmatprep.subr.bf16.mxu0 %v4497
    %4755 = vmatpush1.bf16.msra.mxu0 %v4496
    %4756 = vmatprep.subr.bf16.mxu0 %v4493
    %4757 = vmatpush1.bf16.msra.mxu0 %v4492
    %4758 = vmatprep.subr.bf16.mxu0 %v4489
    %4759 = vmatpush1.bf16.msra.mxu0 %v4488
    %4760 = vmatprep.subr.bf16.mxu0 %v4485
    %4761 = vmatpush1.bf16.msra.mxu0 %v4484
    %4762 = vmatprep.subr.bf16.mxu0 %v4481
    %4763 = vmatpush1.bf16.msra.mxu0 %v4480
    %4764 = vmatprep.subr.bf16.mxu0 %v4477
    %4765 = vmatpush1.bf16.msra.mxu0 %v4476
    %4766 = vmatprep.subr.bf16.mxu0 %v4473
    %4767 = vmatpush1.bf16.msra.mxu0 %v4472
    %4768 = vmatprep.subr.bf16.mxu0 %v4533
    %4769 = vmatpush2.bf16.msra.mxu0 %v4532
    %4770 = vmatprep.subr.bf16.mxu0 %v4529
    %4771 = vmatpush2.bf16.msra.mxu0 %v4528
    %4772 = vmatprep.subr.bf16.mxu0 %v4525
    %4773 = vmatpush2.bf16.msra.mxu0 %v4524
    %4774 = vmatprep.subr.bf16.mxu0 %v4521
    %4775 = vmatpush2.bf16.msra.mxu0 %v4520
    %4776 = vmatprep.subr.bf16.mxu0 %v4517
    %4777 = vmatpush2.bf16.msra.mxu0 %v4516
    %4778 = vmatprep.subr.bf16.mxu0 %v4513
    %4779 = vmatpush2.bf16.msra.mxu0 %v4512
    %4780 = vmatprep.subr.bf16.mxu0 %v4509
    %4781 = vmatpush2.bf16.msra.mxu0 %v4508
    %4782 = vmatprep.subr.bf16.mxu0 %v4505
    %4783 = vmatpush2.bf16.msra.mxu0 %v4504
    %4784 = vmatprep.mubr.f32.mxu0 %v3901
    %4785 = vmatmul.mubr.f32.gmra.mxu0 %v3900
    %v4786 = vpop.f32.mrf.mxu0
    %v4787 = vadd.f32 %v4172, %v4786
    %v4788 = vpop.f32.mrf.mxu0
    %v4789 = vadd.f32 %v4174, %v4788
    %4790 = vmatprep.mubr.f32.mxu0 %v3904
    %4791 = vmatmul.mubr.f32.gmra.mxu0 %v3903
    %v4792 = vpop.f32.mrf.mxu0
    %v4793 = vadd.f32 %v4178, %v4792
    %v4794 = vpop.f32.mrf.mxu0
    %v4795 = vadd.f32 %v4180, %v4794
    %4796 = vdwg.mxu0
    %4797 = vmatprep.subr.bf16.mxu0 %v4565
    %4798 = vmatpush1.bf16.msra.mxu0 %v4564
    %4799 = vmatprep.subr.bf16.mxu0 %v4561
    %4800 = vmatpush1.bf16.msra.mxu0 %v4560
    %4801 = vmatprep.subr.bf16.mxu0 %v4557
    %4802 = vmatpush1.bf16.msra.mxu0 %v4556
    %4803 = vmatprep.subr.bf16.mxu0 %v4553
    %4804 = vmatpush1.bf16.msra.mxu0 %v4552
    %4805 = vmatprep.subr.bf16.mxu0 %v4549
    %4806 = vmatpush1.bf16.msra.mxu0 %v4548
    %4807 = vmatprep.subr.bf16.mxu0 %v4545
    %4808 = vmatpush1.bf16.msra.mxu0 %v4544
    %4809 = vmatprep.subr.bf16.mxu0 %v4541
    %4810 = vmatpush1.bf16.msra.mxu0 %v4540
    %4811 = vmatprep.subr.bf16.mxu0 %v4537
    %4812 = vmatpush1.bf16.msra.mxu0 %v4536
    %4813 = vmatprep.subr.bf16.mxu0 0
    %4814 = vmatpush2.bf16.msra.mxu0 0
    %4815 = vmatprep.subr.bf16.mxu0 0
    %4816 = vmatpush2.bf16.msra.mxu0 0
    %4817 = vmatprep.subr.bf16.mxu0 0
    %4818 = vmatpush2.bf16.msra.mxu0 0
    %4819 = vmatprep.subr.bf16.mxu0 0
    %4820 = vmatpush2.bf16.msra.mxu0 0
    %4821 = vmatprep.subr.bf16.mxu0 0
    %4822 = vmatpush2.bf16.msra.mxu0 0
    %4823 = vmatprep.subr.bf16.mxu0 0
    %4824 = vmatpush2.bf16.msra.mxu0 0
    %4825 = vmatprep.subr.bf16.mxu0 0
    %4826 = vmatpush2.bf16.msra.mxu0 0
    %4827 = vmatprep.subr.bf16.mxu0 0
    %4828 = vmatpush2.bf16.msra.mxu0 0
    %4829 = vmatprep.mubr.f32.mxu0 0.0
    %4830 = vmatmul.mubr.f32.gmra.mxu0 %v3902
    %v4831 = vpop.f32.mrf.mxu0
    %v4832 = vadd.f32 %v4787, %v4831
    %v4833 = vpop.f32.mrf.mxu0
    %v4834 = vadd.f32 %v4789, %v4833
    %4835 = vmatprep.mubr.f32.mxu0 0.0
    %4836 = vmatmul.mubr.f32.gmra.mxu0 %v3905
    %v4837 = vpop.f32.mrf.mxu0
    %v4838 = vadd.f32 %v4793, %v4837
    %v4839 = vpop.f32.mrf.mxu0
    %v4840 = vadd.f32 %v4795, %v4839
    %4841 = vdwg.mxu0
    %v4842 = vld [vmem:[#allocation25 + $0xc] sm:$0xf]
    %v4844 = vlaneseq
    %v4845 = vshrl.u32 %v4844, 7
    %v4846 = vsub.s32 0, %v4845
    %v4847 = vrot.slane %v4842, %v4846
    %v4848 = vlaneseq
    %v4849 = vshrl.u32 %v4848, 7
    %v4850 = vsub.s32 1, %v4849
    %v4851 = vrot.slane %v4842, %v4850
    %v4852 = vlaneseq
    %v4853 = vshrl.u32 %v4852, 7
    %v4854 = vsub.s32 2, %v4853
    %v4855 = vrot.slane %v4842, %v4854
    %v4856 = vlaneseq
    %v4857 = vshrl.u32 %v4856, 7
    %v4858 = vsub.s32 3, %v4857
    %v4859 = vrot.slane %v4842, %v4858
    %v4864 = vadd.f32 %v4742, %v4847
    %v4865 = vadd.f32 %v4744, %v4851
    %v4866 = vadd.f32 %v4832, %v4855
    %v4867 = vadd.f32 %v4834, %v4859
    %v4868 = vadd.f32 %v4748, %v4847
    %v4869 = vadd.f32 %v4750, %v4851
    %v4870 = vadd.f32 %v4838, %v4855
    %v4871 = vadd.f32 %v4840, %v4859
    %v4872 = vmax.f32 %v4864, 0.0
    %v4873 = vmax.f32 %v4865, 0.0
    %v4874 = vmax.f32 %v4866, 0.0
    %v4875 = vmax.f32 %v4867, 0.0
    %v4876 = vmax.f32 %v4868, 0.0
    %v4877 = vmax.f32 %v4869, 0.0
    %v4878 = vmax.f32 %v4870, 0.0
    %v4879 = vmax.f32 %v4871, 0.0
    %v4880 = vld [vmem:[#allocation18] sm:$0xff]
    %v4881 = vld [vmem:[#allocation18 + $0x8] sm:$0xff]
    %v4882 = vld [vmem:[#allocation18 + $0x10] sm:$0xff]
    %v4883 = vld [vmem:[#allocation18 + $0x18] sm:$0xff]
    %v4884 = vld [vmem:[#allocation18 + $0x20] sm:$0xff]
    %v4885 = vld [vmem:[#allocation18 + $0x28] sm:$0xff]
    %v4886 = vld [vmem:[#allocation18 + $0x30] sm:$0xff]
    %v4887 = vld [vmem:[#allocation18 + $0x38] sm:$0xff]
    %v4888 = vld [vmem:[#allocation18 + $0x40] sm:$0xff]
    %v4889 = vld [vmem:[#allocation18 + $0x48] sm:$0xff]
    %v4890 = vld [vmem:[#allocation18 + $0x50] sm:$0xff]
    %v4891 = vld [vmem:[#allocation18 + $0x58] sm:$0xff]
    %v4892 = vld [vmem:[#allocation18 + $0x60] sm:$0xff]
    %v4893 = vld [vmem:[#allocation18 + $0x68] sm:$0xff]
    %v4894 = vld [vmem:[#allocation18 + $0x70] sm:$0xff]
    %v4895 = vld [vmem:[#allocation18 + $0x78] sm:$0xff]
    %v4896 = vld [vmem:[#allocation18 + $0x80] sm:$0xff]
    %v4897 = vld [vmem:[#allocation18 + $0x88] sm:$0xff]
    %v4898 = vld [vmem:[#allocation18 + $0x90] sm:$0xff]
    %v4899 = vld [vmem:[#allocation18 + $0x98] sm:$0xff]
    %v4900 = vld [vmem:[#allocation18 + $0xa0] sm:$0xff]
    %v4901 = vld [vmem:[#allocation18 + $0xa8] sm:$0xff]
    %v4902 = vld [vmem:[#allocation18 + $0xb0] sm:$0xff]
    %v4903 = vld [vmem:[#allocation18 + $0xb8] sm:$0xff]
    %v4904 = vld [vmem:[#allocation18 + $0xc0] sm:$0xff]
    %v4905 = vld [vmem:[#allocation18 + $0xc8] sm:$0xff]
    %v4906 = vld [vmem:[#allocation18 + $0xd0] sm:$0xff]
    %v4907 = vld [vmem:[#allocation18 + $0xd8] sm:$0xff]
    %v4908 = vld [vmem:[#allocation18 + $0xe0] sm:$0xff]
    %v4909 = vld [vmem:[#allocation18 + $0xe8] sm:$0xff]
    %v4910 = vld [vmem:[#allocation18 + $0xf0] sm:$0xff]
    %v4911 = vld [vmem:[#allocation18 + $0xf8] sm:$0xff]
    %v4912 = vld [vmem:[#allocation18 + $0x100] sm:$0xff]
    %v4913 = vld [vmem:[#allocation18 + $0x108] sm:$0xff]
    %v4914 = vld [vmem:[#allocation18 + $0x110] sm:$0xff]
    %v4915 = vld [vmem:[#allocation18 + $0x118] sm:$0xff]
    %v4916 = vld [vmem:[#allocation18 + $0x120] sm:$0xff]
    %v4917 = vld [vmem:[#allocation18 + $0x128] sm:$0xff]
    %v4918 = vld [vmem:[#allocation18 + $0x130] sm:$0xff]
    %v4919 = vld [vmem:[#allocation18 + $0x138] sm:$0xff]
    %v4920 = vld [vmem:[#allocation18 + $0x140] sm:$0xff]
    %v4921 = vld [vmem:[#allocation18 + $0x148] sm:$0xff]
    %v4922 = vld [vmem:[#allocation18 + $0x150] sm:$0xff]
    %v4923 = vld [vmem:[#allocation18 + $0x158] sm:$0xff]
    %v4924 = vld [vmem:[#allocation18 + $0x160] sm:$0xff]
    %v4925 = vld [vmem:[#allocation18 + $0x168] sm:$0xff]
    %v4926 = vld [vmem:[#allocation18 + $0x170] sm:$0xff]
    %v4927 = vld [vmem:[#allocation18 + $0x178] sm:$0xff]
    %v4928 = vld [vmem:[#allocation18 + $0x180] sm:$0xff]
    %v4929 = vld [vmem:[#allocation18 + $0x188] sm:$0xff]
    %v4930 = vld [vmem:[#allocation18 + $0x190] sm:$0xff]
    %v4931 = vld [vmem:[#allocation18 + $0x198] sm:$0xff]
    %v4932 = vld [vmem:[#allocation18 + $0x1a0] sm:$0xff]
    %v4933 = vld [vmem:[#allocation18 + $0x1a8] sm:$0xff]
    %v4934 = vld [vmem:[#allocation18 + $0x1b0] sm:$0xff]
    %v4935 = vld [vmem:[#allocation18 + $0x1b8] sm:$0xff]
    %v4936 = vld [vmem:[#allocation18 + $0x1c0] sm:$0xff]
    %v4937 = vld [vmem:[#allocation18 + $0x1c8] sm:$0xff]
    %v4938 = vld [vmem:[#allocation18 + $0x1d0] sm:$0xff]
    %v4939 = vld [vmem:[#allocation18 + $0x1d8] sm:$0xff]
    %v4940 = vld [vmem:[#allocation18 + $0x1e0] sm:$0xff]
    %v4941 = vld [vmem:[#allocation18 + $0x1e8] sm:$0xff]
    %v4942 = vld [vmem:[#allocation18 + $0x1f0] sm:$0xff]
    %v4943 = vld [vmem:[#allocation18 + $0x1f8] sm:$0xff]
    %v4944 = vld [vmem:[#allocation25 + $0x10] sm:$0x3]
    %v4946 = vlaneseq
    %v4947 = vshrl.u32 %v4946, 7
    %v4948 = vsub.s32 0, %v4947
    %v4949 = vrot.slane %v4944, %v4948
    %v4950 = vlaneseq
    %v4951 = vshrl.u32 %v4950, 7
    %v4952 = vsub.s32 1, %v4951
    %v4953 = vrot.slane %v4944, %v4952
    %v5020 = vunpack.c.l.b16 %v4880
    %v5021 = vunpack.c.h.b16 %v4880
    %v5022 = vunpack.c.l.b16 %v4881
    %v5023 = vunpack.c.h.b16 %v4881
    %v5024 = vunpack.c.l.b16 %v4882
    %v5025 = vunpack.c.h.b16 %v4882
    %v5026 = vunpack.c.l.b16 %v4883
    %v5027 = vunpack.c.h.b16 %v4883
    %v5028 = vunpack.c.l.b16 %v4884
    %v5029 = vunpack.c.h.b16 %v4884
    %v5030 = vunpack.c.l.b16 %v4885
    %v5031 = vunpack.c.h.b16 %v4885
    %v5032 = vunpack.c.l.b16 %v4886
    %v5033 = vunpack.c.h.b16 %v4886
    %v5034 = vunpack.c.l.b16 %v4887
    %v5035 = vunpack.c.h.b16 %v4887
    %v5036 = vunpack.c.l.b16 %v4888
    %v5037 = vunpack.c.h.b16 %v4888
    %v5038 = vunpack.c.l.b16 %v4889
    %v5039 = vunpack.c.h.b16 %v4889
    %v5040 = vunpack.c.l.b16 %v4890
    %v5041 = vunpack.c.h.b16 %v4890
    %v5042 = vunpack.c.l.b16 %v4891
    %v5043 = vunpack.c.h.b16 %v4891
    %v5044 = vunpack.c.l.b16 %v4892
    %v5045 = vunpack.c.h.b16 %v4892
    %v5046 = vunpack.c.l.b16 %v4893
    %v5047 = vunpack.c.h.b16 %v4893
    %v5048 = vunpack.c.l.b16 %v4894
    %v5049 = vunpack.c.h.b16 %v4894
    %v5050 = vunpack.c.l.b16 %v4895
    %v5051 = vunpack.c.h.b16 %v4895
    %v5052 = vunpack.c.l.b16 %v4896
    %v5053 = vunpack.c.h.b16 %v4896
    %v5054 = vunpack.c.l.b16 %v4897
    %v5055 = vunpack.c.h.b16 %v4897
    %v5056 = vunpack.c.l.b16 %v4898
    %v5057 = vunpack.c.h.b16 %v4898
    %v5058 = vunpack.c.l.b16 %v4899
    %v5059 = vunpack.c.h.b16 %v4899
    %v5060 = vunpack.c.l.b16 %v4900
    %v5061 = vunpack.c.h.b16 %v4900
    %v5062 = vunpack.c.l.b16 %v4901
    %v5063 = vunpack.c.h.b16 %v4901
    %v5064 = vunpack.c.l.b16 %v4902
    %v5065 = vunpack.c.h.b16 %v4902
    %v5066 = vunpack.c.l.b16 %v4903
    %v5067 = vunpack.c.h.b16 %v4903
    %v5068 = vunpack.c.l.b16 %v4904
    %v5069 = vunpack.c.h.b16 %v4904
    %v5070 = vunpack.c.l.b16 %v4905
    %v5071 = vunpack.c.h.b16 %v4905
    %v5072 = vunpack.c.l.b16 %v4906
    %v5073 = vunpack.c.h.b16 %v4906
    %v5074 = vunpack.c.l.b16 %v4907
    %v5075 = vunpack.c.h.b16 %v4907
    %v5076 = vunpack.c.l.b16 %v4908
    %v5077 = vunpack.c.h.b16 %v4908
    %v5078 = vunpack.c.l.b16 %v4909
    %v5079 = vunpack.c.h.b16 %v4909
    %v5080 = vunpack.c.l.b16 %v4910
    %v5081 = vunpack.c.h.b16 %v4910
    %v5082 = vunpack.c.l.b16 %v4911
    %v5083 = vunpack.c.h.b16 %v4911
    %v5084 = vunpack.c.l.b16 %v4912
    %v5085 = vunpack.c.h.b16 %v4912
    %v5086 = vunpack.c.l.b16 %v4913
    %v5087 = vunpack.c.h.b16 %v4913
    %v5088 = vunpack.c.l.b16 %v4914
    %v5089 = vunpack.c.h.b16 %v4914
    %v5090 = vunpack.c.l.b16 %v4915
    %v5091 = vunpack.c.h.b16 %v4915
    %v5092 = vunpack.c.l.b16 %v4916
    %v5093 = vunpack.c.h.b16 %v4916
    %v5094 = vunpack.c.l.b16 %v4917
    %v5095 = vunpack.c.h.b16 %v4917
    %v5096 = vunpack.c.l.b16 %v4918
    %v5097 = vunpack.c.h.b16 %v4918
    %v5098 = vunpack.c.l.b16 %v4919
    %v5099 = vunpack.c.h.b16 %v4919
    %v5100 = vunpack.c.l.b16 %v4920
    %v5101 = vunpack.c.h.b16 %v4920
    %v5102 = vunpack.c.l.b16 %v4921
    %v5103 = vunpack.c.h.b16 %v4921
    %v5104 = vunpack.c.l.b16 %v4922
    %v5105 = vunpack.c.h.b16 %v4922
    %v5106 = vunpack.c.l.b16 %v4923
    %v5107 = vunpack.c.h.b16 %v4923
    %v5108 = vunpack.c.l.b16 %v4924
    %v5109 = vunpack.c.h.b16 %v4924
    %v5110 = vunpack.c.l.b16 %v4925
    %v5111 = vunpack.c.h.b16 %v4925
    %v5112 = vunpack.c.l.b16 %v4926
    %v5113 = vunpack.c.h.b16 %v4926
    %v5114 = vunpack.c.l.b16 %v4927
    %v5115 = vunpack.c.h.b16 %v4927
    %v5116 = vunpack.c.l.b16 %v4928
    %v5117 = vunpack.c.h.b16 %v4928
    %v5118 = vunpack.c.l.b16 %v4929
    %v5119 = vunpack.c.h.b16 %v4929
    %v5120 = vunpack.c.l.b16 %v4930
    %v5121 = vunpack.c.h.b16 %v4930
    %v5122 = vunpack.c.l.b16 %v4931
    %v5123 = vunpack.c.h.b16 %v4931
    %v5124 = vunpack.c.l.b16 %v4932
    %v5125 = vunpack.c.h.b16 %v4932
    %v5126 = vunpack.c.l.b16 %v4933
    %v5127 = vunpack.c.h.b16 %v4933
    %v5128 = vunpack.c.l.b16 %v4934
    %v5129 = vunpack.c.h.b16 %v4934
    %v5130 = vunpack.c.l.b16 %v4935
    %v5131 = vunpack.c.h.b16 %v4935
    %v5132 = vunpack.c.l.b16 %v4936
    %v5133 = vunpack.c.h.b16 %v4936
    %v5134 = vunpack.c.l.b16 %v4937
    %v5135 = vunpack.c.h.b16 %v4937
    %v5136 = vunpack.c.l.b16 %v4938
    %v5137 = vunpack.c.h.b16 %v4938
    %v5138 = vunpack.c.l.b16 %v4939
    %v5139 = vunpack.c.h.b16 %v4939
    %v5140 = vunpack.c.l.b16 %v4940
    %v5141 = vunpack.c.h.b16 %v4940
    %v5142 = vunpack.c.l.b16 %v4941
    %v5143 = vunpack.c.h.b16 %v4941
    %v5144 = vunpack.c.l.b16 %v4942
    %v5145 = vunpack.c.h.b16 %v4942
    %v5146 = vunpack.c.l.b16 %v4943
    %v5147 = vunpack.c.h.b16 %v4943
    %v5148 = vpack.c.b16 %v5022, %v5020
    %v5149 = vpack.c.b16 %v5023, %v5021
    %v5150 = vpack.c.b16 %v5026, %v5024
    %v5151 = vpack.c.b16 %v5027, %v5025
    %v5152 = vpack.c.b16 %v5030, %v5028
    %v5153 = vpack.c.b16 %v5031, %v5029
    %v5154 = vpack.c.b16 %v5034, %v5032
    %v5155 = vpack.c.b16 %v5035, %v5033
    %v5156 = vpack.c.b16 %v5038, %v5036
    %v5157 = vpack.c.b16 %v5039, %v5037
    %v5158 = vpack.c.b16 %v5042, %v5040
    %v5159 = vpack.c.b16 %v5043, %v5041
    %v5160 = vpack.c.b16 %v5046, %v5044
    %v5161 = vpack.c.b16 %v5047, %v5045
    %v5162 = vpack.c.b16 %v5050, %v5048
    %v5163 = vpack.c.b16 %v5051, %v5049
    %v5164 = vpack.c.b16 %v5054, %v5052
    %v5165 = vpack.c.b16 %v5055, %v5053
    %v5166 = vpack.c.b16 %v5058, %v5056
    %v5167 = vpack.c.b16 %v5059, %v5057
    %v5168 = vpack.c.b16 %v5062, %v5060
    %v5169 = vpack.c.b16 %v5063, %v5061
    %v5170 = vpack.c.b16 %v5066, %v5064
    %v5171 = vpack.c.b16 %v5067, %v5065
    %v5172 = vpack.c.b16 %v5070, %v5068
    %v5173 = vpack.c.b16 %v5071, %v5069
    %v5174 = vpack.c.b16 %v5074, %v5072
    %v5175 = vpack.c.b16 %v5075, %v5073
    %v5176 = vpack.c.b16 %v5078, %v5076
    %v5177 = vpack.c.b16 %v5079, %v5077
    %v5178 = vpack.c.b16 %v5082, %v5080
    %v5179 = vpack.c.b16 %v5083, %v5081
    %v5180 = vpack.c.b16 %v5086, %v5084
    %v5181 = vpack.c.b16 %v5087, %v5085
    %v5182 = vpack.c.b16 %v5090, %v5088
    %v5183 = vpack.c.b16 %v5091, %v5089
    %v5184 = vpack.c.b16 %v5094, %v5092
    %v5185 = vpack.c.b16 %v5095, %v5093
    %v5186 = vpack.c.b16 %v5098, %v5096
    %v5187 = vpack.c.b16 %v5099, %v5097
    %v5188 = vpack.c.b16 %v5102, %v5100
    %v5189 = vpack.c.b16 %v5103, %v5101
    %v5190 = vpack.c.b16 %v5106, %v5104
    %v5191 = vpack.c.b16 %v5107, %v5105
    %v5192 = vpack.c.b16 %v5110, %v5108
    %v5193 = vpack.c.b16 %v5111, %v5109
    %v5194 = vpack.c.b16 %v5114, %v5112
    %v5195 = vpack.c.b16 %v5115, %v5113
    %v5196 = vpack.c.b16 %v5118, %v5116
    %v5197 = vpack.c.b16 %v5119, %v5117
    %v5198 = vpack.c.b16 %v5122, %v5120
    %v5199 = vpack.c.b16 %v5123, %v5121
    %v5200 = vpack.c.b16 %v5126, %v5124
    %v5201 = vpack.c.b16 %v5127, %v5125
    %v5202 = vpack.c.b16 %v5130, %v5128
    %v5203 = vpack.c.b16 %v5131, %v5129
    %v5204 = vpack.c.b16 %v5134, %v5132
    %v5205 = vpack.c.b16 %v5135, %v5133
    %v5206 = vpack.c.b16 %v5138, %v5136
    %v5207 = vpack.c.b16 %v5139, %v5137
    %v5208 = vpack.c.b16 %v5142, %v5140
    %v5209 = vpack.c.b16 %v5143, %v5141
    %v5210 = vpack.c.b16 %v5146, %v5144
    %v5211 = vpack.c.b16 %v5147, %v5145
    %5276 = vmatprep.subr.bf16.mxu0 %v5163
    %5277 = vmatpush1.bf16.msra.mxu0 %v5162
    %5278 = vmatprep.subr.bf16.mxu0 %v5161
    %5279 = vmatpush1.bf16.msra.mxu0 %v5160
    %5280 = vmatprep.subr.bf16.mxu0 %v5159
    %5281 = vmatpush1.bf16.msra.mxu0 %v5158
    %5282 = vmatprep.subr.bf16.mxu0 %v5157
    %5283 = vmatpush1.bf16.msra.mxu0 %v5156
    %5284 = vmatprep.subr.bf16.mxu0 %v5155
    %5285 = vmatpush1.bf16.msra.mxu0 %v5154
    %5286 = vmatprep.subr.bf16.mxu0 %v5153
    %5287 = vmatpush1.bf16.msra.mxu0 %v5152
    %5288 = vmatprep.subr.bf16.mxu0 %v5151
    %5289 = vmatpush1.bf16.msra.mxu0 %v5150
    %5290 = vmatprep.subr.bf16.mxu0 %v5149
    %5291 = vmatpush1.bf16.msra.mxu0 %v5148
    %5292 = vmatprep.subr.bf16.mxu0 %v5179
    %5293 = vmatpush2.bf16.msra.mxu0 %v5178
    %5294 = vmatprep.subr.bf16.mxu0 %v5177
    %5295 = vmatpush2.bf16.msra.mxu0 %v5176
    %5296 = vmatprep.subr.bf16.mxu0 %v5175
    %5297 = vmatpush2.bf16.msra.mxu0 %v5174
    %5298 = vmatprep.subr.bf16.mxu0 %v5173
    %5299 = vmatpush2.bf16.msra.mxu0 %v5172
    %5300 = vmatprep.subr.bf16.mxu0 %v5171
    %5301 = vmatpush2.bf16.msra.mxu0 %v5170
    %5302 = vmatprep.subr.bf16.mxu0 %v5169
    %5303 = vmatpush2.bf16.msra.mxu0 %v5168
    %5304 = vmatprep.subr.bf16.mxu0 %v5167
    %5305 = vmatpush2.bf16.msra.mxu0 %v5166
    %5306 = vmatprep.subr.bf16.mxu0 %v5165
    %5307 = vmatpush2.bf16.msra.mxu0 %v5164
    %5308 = vmatprep.mubr.f32.mxu0 %v4873
    %5309 = vmatmul.mubr.f32.gmra.mxu0 %v4872
    %v5310 = vpop.f32.mrf.mxu0
    %v5311 = vadd.f32 %v4949, %v5310
    %v5312 = vpop.f32.mrf.mxu0
    %v5313 = vadd.f32 %v4953, %v5312
    %5314 = vmatprep.mubr.f32.mxu0 %v4877
    %5315 = vmatmul.mubr.f32.gmra.mxu0 %v4876
    %v5316 = vpop.f32.mrf.mxu0
    %v5317 = vadd.f32 %v4949, %v5316
    %v5318 = vpop.f32.mrf.mxu0
    %v5319 = vadd.f32 %v4953, %v5318
    %5320 = vdwg.mxu0
    %5321 = vmatprep.subr.bf16.mxu0 %v5195
    %5322 = vmatpush1.bf16.msra.mxu0 %v5194
    %5323 = vmatprep.subr.bf16.mxu0 %v5193
    %5324 = vmatpush1.bf16.msra.mxu0 %v5192
    %5325 = vmatprep.subr.bf16.mxu0 %v5191
    %5326 = vmatpush1.bf16.msra.mxu0 %v5190
    %5327 = vmatprep.subr.bf16.mxu0 %v5189
    %5328 = vmatpush1.bf16.msra.mxu0 %v5188
    %5329 = vmatprep.subr.bf16.mxu0 %v5187
    %5330 = vmatpush1.bf16.msra.mxu0 %v5186
    %5331 = vmatprep.subr.bf16.mxu0 %v5185
    %5332 = vmatpush1.bf16.msra.mxu0 %v5184
    %5333 = vmatprep.subr.bf16.mxu0 %v5183
    %5334 = vmatpush1.bf16.msra.mxu0 %v5182
    %5335 = vmatprep.subr.bf16.mxu0 %v5181
    %5336 = vmatpush1.bf16.msra.mxu0 %v5180
    %5337 = vmatprep.subr.bf16.mxu0 %v5211
    %5338 = vmatpush2.bf16.msra.mxu0 %v5210
    %5339 = vmatprep.subr.bf16.mxu0 %v5209
    %5340 = vmatpush2.bf16.msra.mxu0 %v5208
    %5341 = vmatprep.subr.bf16.mxu0 %v5207
    %5342 = vmatpush2.bf16.msra.mxu0 %v5206
    %5343 = vmatprep.subr.bf16.mxu0 %v5205
    %5344 = vmatpush2.bf16.msra.mxu0 %v5204
    %5345 = vmatprep.subr.bf16.mxu0 %v5203
    %5346 = vmatpush2.bf16.msra.mxu0 %v5202
    %5347 = vmatprep.subr.bf16.mxu0 %v5201
    %5348 = vmatpush2.bf16.msra.mxu0 %v5200
    %5349 = vmatprep.subr.bf16.mxu0 %v5199
    %5350 = vmatpush2.bf16.msra.mxu0 %v5198
    %5351 = vmatprep.subr.bf16.mxu0 %v5197
    %5352 = vmatpush2.bf16.msra.mxu0 %v5196
    %5353 = vmatprep.mubr.f32.mxu0 %v4875
    %5354 = vmatmul.mubr.f32.gmra.mxu0 %v4874
    %v5355 = vpop.f32.mrf.mxu0
    %v5356 = vadd.f32 %v5311, %v5355
    %v5357 = vpop.f32.mrf.mxu0
    %v5358 = vadd.f32 %v5313, %v5357
    %5359 = vmatprep.mubr.f32.mxu0 %v4879
    %5360 = vmatmul.mubr.f32.gmra.mxu0 %v4878
    %v5361 = vpop.f32.mrf.mxu0
    %v5362 = vadd.f32 %v5317, %v5361
    %v5363 = vpop.f32.mrf.mxu0
    %v5364 = vadd.f32 %v5319, %v5363
    %5365 = vdwg.mxu0
    %v5366 = vmax.f32 %v5356, 0.0
    %v5367 = vmax.f32 %v5358, 0.0
    %v5368 = vmax.f32 %v5362, 0.0
    %v5369 = vmax.f32 %v5364, 0.0
    %v5370 = vld [vmem:[#allocation4] sm:$0xff]
    %v5371 = vld [vmem:[#allocation4 + $0x8] sm:$0xff]
    %vm5372 = vcmp.gt.f32.partialorder %v5370, 0.0
    %vm5373 = vcmp.gt.f32.partialorder %v5371, 0.0
    %v5374 = vld [vmem:[#allocation19] sm:$0xff]
    %v5375 = vld [vmem:[#allocation19 + $0x8] sm:$0xff]
    %v5376 = vld [vmem:[#allocation19 + $0x10] sm:$0xff]
    %v5377 = vld [vmem:[#allocation19 + $0x18] sm:$0xff]
    %v5378 = vld [vmem:[#allocation19 + $0x20] sm:$0xff]
    %v5379 = vld [vmem:[#allocation19 + $0x28] sm:$0xff]
    %v5380 = vld [vmem:[#allocation19 + $0x30] sm:$0xff]
    %v5381 = vld [vmem:[#allocation19 + $0x38] sm:$0xff]
    %v5382 = vld [vmem:[#allocation19 + $0x40] sm:$0xff]
    %v5383 = vld [vmem:[#allocation19 + $0x48] sm:$0xff]
    %v5384 = vld [vmem:[#allocation19 + $0x50] sm:$0xff]
    %v5385 = vld [vmem:[#allocation19 + $0x58] sm:$0xff]
    %v5386 = vld [vmem:[#allocation19 + $0x60] sm:$0xff]
    %v5387 = vld [vmem:[#allocation19 + $0x68] sm:$0xff]
    %v5388 = vld [vmem:[#allocation19 + $0x70] sm:$0xff]
    %v5389 = vld [vmem:[#allocation19 + $0x78] sm:$0xff]
    %v5390 = vld [vmem:[#allocation19 + $0x80] sm:$0xff]
    %v5391 = vld [vmem:[#allocation19 + $0x88] sm:$0xff]
    %v5392 = vld [vmem:[#allocation19 + $0x90] sm:$0xff]
    %v5393 = vld [vmem:[#allocation19 + $0x98] sm:$0xff]
    %v5394 = vld [vmem:[#allocation19 + $0xa0] sm:$0xff]
    %v5395 = vld [vmem:[#allocation19 + $0xa8] sm:$0xff]
    %v5396 = vld [vmem:[#allocation19 + $0xb0] sm:$0xff]
    %v5397 = vld [vmem:[#allocation19 + $0xb8] sm:$0xff]
    %v5398 = vld [vmem:[#allocation19 + $0xc0] sm:$0xff]
    %v5399 = vld [vmem:[#allocation19 + $0xc8] sm:$0xff]
    %v5400 = vld [vmem:[#allocation19 + $0xd0] sm:$0xff]
    %v5401 = vld [vmem:[#allocation19 + $0xd8] sm:$0xff]
    %v5402 = vld [vmem:[#allocation19 + $0xe0] sm:$0xff]
    %v5403 = vld [vmem:[#allocation19 + $0xe8] sm:$0xff]
    %v5404 = vld [vmem:[#allocation19 + $0xf0] sm:$0xff]
    %v5405 = vld [vmem:[#allocation19 + $0xf8] sm:$0xff]
    %v5438 = vunpack.c.l.b16 %v5374
    %v5439 = vunpack.c.h.b16 %v5374
    %v5440 = vunpack.c.l.b16 %v5375
    %v5441 = vunpack.c.h.b16 %v5375
    %v5442 = vunpack.c.l.b16 %v5376
    %v5443 = vunpack.c.h.b16 %v5376
    %v5444 = vunpack.c.l.b16 %v5377
    %v5445 = vunpack.c.h.b16 %v5377
    %v5446 = vunpack.c.l.b16 %v5378
    %v5447 = vunpack.c.h.b16 %v5378
    %v5448 = vunpack.c.l.b16 %v5379
    %v5449 = vunpack.c.h.b16 %v5379
    %v5450 = vunpack.c.l.b16 %v5380
    %v5451 = vunpack.c.h.b16 %v5380
    %v5452 = vunpack.c.l.b16 %v5381
    %v5453 = vunpack.c.h.b16 %v5381
    %v5454 = vunpack.c.l.b16 %v5382
    %v5455 = vunpack.c.h.b16 %v5382
    %v5456 = vunpack.c.l.b16 %v5383
    %v5457 = vunpack.c.h.b16 %v5383
    %v5458 = vunpack.c.l.b16 %v5384
    %v5459 = vunpack.c.h.b16 %v5384
    %v5460 = vunpack.c.l.b16 %v5385
    %v5461 = vunpack.c.h.b16 %v5385
    %v5462 = vunpack.c.l.b16 %v5386
    %v5463 = vunpack.c.h.b16 %v5386
    %v5464 = vunpack.c.l.b16 %v5387
    %v5465 = vunpack.c.h.b16 %v5387
    %v5466 = vunpack.c.l.b16 %v5388
    %v5467 = vunpack.c.h.b16 %v5388
    %v5468 = vunpack.c.l.b16 %v5389
    %v5469 = vunpack.c.h.b16 %v5389
    %v5470 = vunpack.c.l.b16 %v5390
    %v5471 = vunpack.c.h.b16 %v5390
    %v5472 = vunpack.c.l.b16 %v5391
    %v5473 = vunpack.c.h.b16 %v5391
    %v5474 = vunpack.c.l.b16 %v5392
    %v5475 = vunpack.c.h.b16 %v5392
    %v5476 = vunpack.c.l.b16 %v5393
    %v5477 = vunpack.c.h.b16 %v5393
    %v5478 = vunpack.c.l.b16 %v5394
    %v5479 = vunpack.c.h.b16 %v5394
    %v5480 = vunpack.c.l.b16 %v5395
    %v5481 = vunpack.c.h.b16 %v5395
    %v5482 = vunpack.c.l.b16 %v5396
    %v5483 = vunpack.c.h.b16 %v5396
    %v5484 = vunpack.c.l.b16 %v5397
    %v5485 = vunpack.c.h.b16 %v5397
    %v5486 = vunpack.c.l.b16 %v5398
    %v5487 = vunpack.c.h.b16 %v5398
    %v5488 = vunpack.c.l.b16 %v5399
    %v5489 = vunpack.c.h.b16 %v5399
    %v5490 = vunpack.c.l.b16 %v5400
    %v5491 = vunpack.c.h.b16 %v5400
    %v5492 = vunpack.c.l.b16 %v5401
    %v5493 = vunpack.c.h.b16 %v5401
    %v5494 = vunpack.c.l.b16 %v5402
    %v5495 = vunpack.c.h.b16 %v5402
    %v5496 = vunpack.c.l.b16 %v5403
    %v5497 = vunpack.c.h.b16 %v5403
    %v5498 = vunpack.c.l.b16 %v5404
    %v5499 = vunpack.c.h.b16 %v5404
    %v5500 = vunpack.c.l.b16 %v5405
    %v5501 = vunpack.c.h.b16 %v5405
    %v5502 = vpack.c.b16 %v5440, %v5438
    %v5503 = vpack.c.b16 %v5441, %v5439
    %v5504 = vpack.c.b16 %v5444, %v5442
    %v5505 = vpack.c.b16 %v5445, %v5443
    %v5506 = vpack.c.b16 %v5448, %v5446
    %v5507 = vpack.c.b16 %v5449, %v5447
    %v5508 = vpack.c.b16 %v5452, %v5450
    %v5509 = vpack.c.b16 %v5453, %v5451
    %v5510 = vpack.c.b16 %v5456, %v5454
    %v5511 = vpack.c.b16 %v5457, %v5455
    %v5512 = vpack.c.b16 %v5460, %v5458
    %v5513 = vpack.c.b16 %v5461, %v5459
    %v5514 = vpack.c.b16 %v5464, %v5462
    %v5515 = vpack.c.b16 %v5465, %v5463
    %v5516 = vpack.c.b16 %v5468, %v5466
    %v5517 = vpack.c.b16 %v5469, %v5467
    %v5518 = vpack.c.b16 %v5472, %v5470
    %v5519 = vpack.c.b16 %v5473, %v5471
    %v5520 = vpack.c.b16 %v5476, %v5474
    %v5521 = vpack.c.b16 %v5477, %v5475
    %v5522 = vpack.c.b16 %v5480, %v5478
    %v5523 = vpack.c.b16 %v5481, %v5479
    %v5524 = vpack.c.b16 %v5484, %v5482
    %v5525 = vpack.c.b16 %v5485, %v5483
    %v5526 = vpack.c.b16 %v5488, %v5486
    %v5527 = vpack.c.b16 %v5489, %v5487
    %v5528 = vpack.c.b16 %v5492, %v5490
    %v5529 = vpack.c.b16 %v5493, %v5491
    %v5530 = vpack.c.b16 %v5496, %v5494
    %v5531 = vpack.c.b16 %v5497, %v5495
    %v5532 = vpack.c.b16 %v5500, %v5498
    %v5533 = vpack.c.b16 %v5501, %v5499
    %5566 = vmatprep.subr.bf16.mxu0 %v5517
    %5567 = vmatpush1.bf16.msra.mxu0 %v5516
    %5568 = vmatprep.subr.bf16.mxu0 %v5515
    %5569 = vmatpush1.bf16.msra.mxu0 %v5514
    %5570 = vmatprep.subr.bf16.mxu0 %v5513
    %5571 = vmatpush1.bf16.msra.mxu0 %v5512
    %5572 = vmatprep.subr.bf16.mxu0 %v5511
    %5573 = vmatpush1.bf16.msra.mxu0 %v5510
    %5574 = vmatprep.subr.bf16.mxu0 %v5509
    %5575 = vmatpush1.bf16.msra.mxu0 %v5508
    %5576 = vmatprep.subr.bf16.mxu0 %v5507
    %5577 = vmatpush1.bf16.msra.mxu0 %v5506
    %5578 = vmatprep.subr.bf16.mxu0 %v5505
    %5579 = vmatpush1.bf16.msra.mxu0 %v5504
    %5580 = vmatprep.subr.bf16.mxu0 %v5503
    %5581 = vmatpush1.bf16.msra.mxu0 %v5502
    %5582 = vmatprep.subr.bf16.mxu0 %v5533
    %5583 = vmatpush2.bf16.msra.mxu0 %v5532
    %5584 = vmatprep.subr.bf16.mxu0 %v5531
    %5585 = vmatpush2.bf16.msra.mxu0 %v5530
    %5586 = vmatprep.subr.bf16.mxu0 %v5529
    %5587 = vmatpush2.bf16.msra.mxu0 %v5528
    %5588 = vmatprep.subr.bf16.mxu0 %v5527
    %5589 = vmatpush2.bf16.msra.mxu0 %v5526
    %5590 = vmatprep.subr.bf16.mxu0 %v5525
    %5591 = vmatpush2.bf16.msra.mxu0 %v5524
    %5592 = vmatprep.subr.bf16.mxu0 %v5523
    %5593 = vmatpush2.bf16.msra.mxu0 %v5522
    %5594 = vmatprep.subr.bf16.mxu0 %v5521
    %5595 = vmatpush2.bf16.msra.mxu0 %v5520
    %5596 = vmatprep.subr.bf16.mxu0 %v5519
    %5597 = vmatpush2.bf16.msra.mxu0 %v5518
    %5598 = vmatprep.mubr.f32.mxu0 %v5367
    %5599 = vmatmul.mubr.f32.gmra.mxu0 %v5366
    %v5600 = vpop.f32.mrf.mxu0
    %v5601 = vadd.f32 0.0, %v5600
    %v5602 = vpop.f32.mrf.mxu0
    %v5603 = vadd.f32 0.0, %v5602
    %5604 = vmatprep.mubr.f32.mxu0 %v5369
    %5605 = vmatmul.mubr.f32.gmra.mxu0 %v5368
    %v5606 = vpop.f32.mrf.mxu0
    %v5607 = vadd.f32 0.0, %v5606
    %v5608 = vpop.f32.mrf.mxu0
    %v5609 = vadd.f32 0.0, %v5608
    %5610 = vdwg.mxu0
    %v5611 = vld [vmem:[%s13] sm:$0xff]
    %v5612 = vld [vmem:[%s13 + $0x8] sm:$0xff]
    %v5613 = vld [vmem:[%s13 + $0x10] sm:$0xff]
    %v5614 = vld [vmem:[%s13 + $0x18] sm:$0xff]
    %v5615 = vld [vmem:[%s13 + $0x20] sm:$0xff]
    %v5616 = vld [vmem:[%s13 + $0x28] sm:$0xff]
    %v5617 = vld [vmem:[%s13 + $0x30] sm:$0xff]
    %v5618 = vld [vmem:[%s13 + $0x38] sm:$0xff]
    %v5619 = vld [vmem:[%s13 + $0x40] sm:$0xff]
    %v5620 = vld [vmem:[%s13 + $0x48] sm:$0xff]
    %v5621 = vld [vmem:[%s13 + $0x50] sm:$0xff]
    %v5622 = vld [vmem:[%s13 + $0x58] sm:$0xff]
    %v5623 = vld [vmem:[%s13 + $0x60] sm:$0xff]
    %v5624 = vld [vmem:[%s13 + $0x68] sm:$0xff]
    %v5625 = vld [vmem:[%s13 + $0x70] sm:$0xff]
    %v5626 = vld [vmem:[%s13 + $0x78] sm:$0xff]
    %v5627 = vld [vmem:[%s13 + $0x80] sm:$0xff]
    %v5628 = vld [vmem:[%s13 + $0x88] sm:$0xff]
    %v5629 = vld [vmem:[%s13 + $0x90] sm:$0xff]
    %v5630 = vld [vmem:[%s13 + $0x98] sm:$0xff]
    %v5631 = vld [vmem:[%s13 + $0xa0] sm:$0xff]
    %v5632 = vld [vmem:[%s13 + $0xa8] sm:$0xff]
    %v5633 = vld [vmem:[%s13 + $0xb0] sm:$0xff]
    %v5634 = vld [vmem:[%s13 + $0xb8] sm:$0xff]
    %v5635 = vld [vmem:[%s13 + $0xc0] sm:$0xff]
    %v5636 = vld [vmem:[%s13 + $0xc8] sm:$0xff]
    %v5637 = vld [vmem:[%s13 + $0xd0] sm:$0xff]
    %v5638 = vld [vmem:[%s13 + $0xd8] sm:$0xff]
    %v5639 = vld [vmem:[%s13 + $0xe0] sm:$0xff]
    %v5640 = vld [vmem:[%s13 + $0xe8] sm:$0xff]
    %v5641 = vld [vmem:[%s13 + $0xf0] sm:$0xff]
    %v5642 = vld [vmem:[%s13 + $0xf8] sm:$0xff]
    %5643 = vmatprep.subr.mxu0 0.0
    %5644 = vmatpush1.msra.mxu0 %v5626
    %5645 = vmatprep.subr.mxu0 0.0
    %5646 = vmatpush1.msra.mxu0 %v5625
    %5647 = vmatprep.subr.mxu0 0.0
    %5648 = vmatpush1.msra.mxu0 %v5624
    %5649 = vmatprep.subr.mxu0 0.0
    %5650 = vmatpush1.msra.mxu0 %v5623
    %5651 = vmatprep.subr.mxu0 0.0
    %5652 = vmatpush1.msra.mxu0 %v5622
    %5653 = vmatprep.subr.mxu0 0.0
    %5654 = vmatpush1.msra.mxu0 %v5621
    %5655 = vmatprep.subr.mxu0 0.0
    %5656 = vmatpush1.msra.mxu0 %v5620
    %5657 = vmatprep.subr.mxu0 0.0
    %5658 = vmatpush1.msra.mxu0 %v5619
    %5659 = vmatprep.subr.mxu0 0.0
    %5660 = vmatpush1.msra.mxu0 %v5618
    %5661 = vmatprep.subr.mxu0 0.0
    %5662 = vmatpush1.msra.mxu0 %v5617
    %5663 = vmatprep.subr.mxu0 0.0
    %5664 = vmatpush1.msra.mxu0 %v5616
    %5665 = vmatprep.subr.mxu0 0.0
    %5666 = vmatpush1.msra.mxu0 %v5615
    %5667 = vmatprep.subr.mxu0 0.0
    %5668 = vmatpush1.msra.mxu0 %v5614
    %5669 = vmatprep.subr.mxu0 0.0
    %5670 = vmatpush1.msra.mxu0 %v5613
    %5671 = vmatprep.subr.mxu0 0.0
    %5672 = vmatpush1.msra.mxu0 %v5612
    %5673 = vmatprep.subr.mxu0 0.0
    %5674 = vmatpush1.msra.mxu0 %v5611
    %5675 = vmatprep.subr.mxu0 0.0
    %5676 = vmatpush2.msra.mxu0 %v5642
    %5677 = vmatprep.subr.mxu0 0.0
    %5678 = vmatpush2.msra.mxu0 %v5641
    %5679 = vmatprep.subr.mxu0 0.0
    %5680 = vmatpush2.msra.mxu0 %v5640
    %5681 = vmatprep.subr.mxu0 0.0
    %5682 = vmatpush2.msra.mxu0 %v5639
    %5683 = vmatprep.subr.mxu0 0.0
    %5684 = vmatpush2.msra.mxu0 %v5638
    %5685 = vmatprep.subr.mxu0 0.0
    %5686 = vmatpush2.msra.mxu0 %v5637
    %5687 = vmatprep.subr.mxu0 0.0
    %5688 = vmatpush2.msra.mxu0 %v5636
    %5689 = vmatprep.subr.mxu0 0.0
    %5690 = vmatpush2.msra.mxu0 %v5635
    %5691 = vmatprep.subr.mxu0 0.0
    %5692 = vmatpush2.msra.mxu0 %v5634
    %5693 = vmatprep.subr.mxu0 0.0
    %5694 = vmatpush2.msra.mxu0 %v5633
    %5695 = vmatprep.subr.mxu0 0.0
    %5696 = vmatpush2.msra.mxu0 %v5632
    %5697 = vmatprep.subr.mxu0 0.0
    %5698 = vmatpush2.msra.mxu0 %v5631
    %5699 = vmatprep.subr.mxu0 0.0
    %5700 = vmatpush2.msra.mxu0 %v5630
    %5701 = vmatprep.subr.mxu0 0.0
    %5702 = vmatpush2.msra.mxu0 %v5629
    %5703 = vmatprep.subr.mxu0 0.0
    %5704 = vmatpush2.msra.mxu0 %v5628
    %5705 = vmatprep.subr.mxu0 0.0
    %5706 = vmatpush2.msra.mxu0 %v5627
    %5707 = vmatprep.mubr.f32.mxu0 %v5603
    %5708 = vmatmul.mubr.f32.gmra.mxu0 %v5601
    %v5709 = vpop.f32.mrf.mxu0
    %v5710 = vadd.f32 0.0, %v5709
    %v5711 = vpop.f32.mrf.mxu0
    %5712 = vmatprep.mubr.f32.mxu0 %v5609
    %5713 = vmatmul.mubr.f32.gmra.mxu0 %v5607
    %v5714 = vpop.f32.mrf.mxu0
    %v5715 = vadd.f32 0.0, %v5714
    %v5716 = vpop.f32.mrf.mxu0
    %5717 = vdwg.mxu0
    %5720 = vrot.lane.b32.xlu0 %v5710, 124
    %v5721 = vpop.permute.xlu0 %5720
    %5722 = vrot.lane.b32.xlu0 %v5715, 124
    %v5723 = vpop.permute.xlu0 %5722
    %5726 = vxpose.xlu0.b32.start [1/16] %v5721, 128
    %5727 = vxpose.xlu0.b32.cont [2/16] %v5723, 128
    %5728 = vxpose.xlu0.b32.cont [3/16] 0.0, 128
    %5729 = vxpose.xlu0.b32.cont [4/16] 0.0, 128
    %5730 = vxpose.xlu0.b32.cont [5/16] 0.0, 128
    %5731 = vxpose.xlu0.b32.cont [6/16] 0.0, 128
    %5732 = vxpose.xlu0.b32.cont [7/16] 0.0, 128
    %5733 = vxpose.xlu0.b32.cont [8/16] 0.0, 128
    %5734 = vxpose.xlu0.b32.cont [9/16] 0.0, 128
    %5735 = vxpose.xlu0.b32.cont [10/16] 0.0, 128
    %5736 = vxpose.xlu0.b32.cont [11/16] 0.0, 128
    %5737 = vxpose.xlu0.b32.cont [12/16] 0.0, 128
    %5738 = vxpose.xlu0.b32.cont [13/16] 0.0, 128
    %5739 = vxpose.xlu0.b32.cont [14/16] 0.0, 128
    %5740 = vxpose.xlu0.b32.cont [15/16] 0.0, 128
    %5741 = vxpose.xlu0.b32.end [16/16] 0.0, 128
    %v5742 = vpop.trf.xlu0
    %v5743 = vpop.trf.xlu0
    %v5744 = vpop.trf.xlu0
    %v5745 = vpop.trf.xlu0
    %v5746 = vpop.trf.xlu0
    %v5747 = vpop.trf.xlu0
    %v5748 = vpop.trf.xlu0
    %v5749 = vpop.trf.xlu0
    %v5750 = vpop.trf.xlu0
    %v5751 = vpop.trf.xlu0
    %v5752 = vpop.trf.xlu0
    %v5753 = vpop.trf.xlu0
    %v5754 = vpop.trf.xlu0
    %v5755 = vpop.trf.xlu0
    %v5756 = vpop.trf.xlu0
    %v5757 = vpop.trf.xlu0
    %5758 = vset.pattern.permute.xlu0 0
    %5759 = vperm.xlu0 %5758, %v5710
    %v5760 = vpop.permute.xlu0 %5759
    %5762 = vset.pattern.permute.xlu0 0
    %5763 = vperm.xlu0 %5762, %v5715
    %v5764 = vpop.permute.xlu0 %5763
    %v5766 = vlaneseq
    %v5767 = vshrl.u32 %v5766, 7
    %v5768 = vsub.s32 0, %v5767
    %v5769 = vrot.slane %v5742, %v5768
    %v5770 = vadd.f32 %v5760, %v5769
    %v5771 = vadd.f32 %v5764, %v5769
    %5772 = vset.pattern.permute.xlu0 1
    %5773 = vperm.xlu0 %5772, %v5710
    %v5774 = vpop.permute.xlu0 %5773
    %5776 = vset.pattern.permute.xlu0 1
    %5777 = vperm.xlu0 %5776, %v5715
    %v5778 = vpop.permute.xlu0 %5777
    %v5780 = vlaneseq
    %v5781 = vshrl.u32 %v5780, 7
    %v5782 = vsub.s32 1, %v5781
    %v5783 = vrot.slane %v5742, %v5782
    %v5784 = vadd.f32 %v5774, %v5783
    %v5785 = vadd.f32 %v5778, %v5783
    %5786 = vset.pattern.permute.xlu0 2
    %5787 = vperm.xlu0 %5786, %v5710
    %v5788 = vpop.permute.xlu0 %5787
    %5790 = vset.pattern.permute.xlu0 2
    %5791 = vperm.xlu0 %5790, %v5715
    %v5792 = vpop.permute.xlu0 %5791
    %v5794 = vlaneseq
    %v5795 = vshrl.u32 %v5794, 7
    %v5796 = vsub.s32 2, %v5795
    %v5797 = vrot.slane %v5742, %v5796
    %v5798 = vadd.f32 %v5788, %v5797
    %v5799 = vadd.f32 %v5792, %v5797
    %5800 = vset.pattern.permute.xlu0 3
    %5801 = vperm.xlu0 %5800, %v5710
    %v5802 = vpop.permute.xlu0 %5801
    %5804 = vset.pattern.permute.xlu0 3
    %5805 = vperm.xlu0 %5804, %v5715
    %v5806 = vpop.permute.xlu0 %5805
    %v5808 = vlaneseq
    %v5809 = vshrl.u32 %v5808, 7
    %v5810 = vsub.s32 3, %v5809
    %v5811 = vrot.slane %v5742, %v5810
    %v5812 = vadd.f32 %v5802, %v5811
    %v5813 = vadd.f32 %v5806, %v5811
    %vm5814 = vcmp.gt.f32.partialorder %v5770, 0.0
    %vm5815 = vcmp.gt.f32.partialorder %v5771, 0.0
    %vm5816 = vcmp.gt.f32.partialorder %v5784, 0.0
    %vm5817 = vcmp.gt.f32.partialorder %v5785, 0.0
    %vm5818 = vcmp.gt.f32.partialorder %v5798, 0.0
    %vm5819 = vcmp.gt.f32.partialorder %v5799, 0.0
    %vm5820 = vcmp.gt.f32.partialorder %v5812, 0.0
    %vm5821 = vcmp.gt.f32.partialorder %v5813, 0.0
    %v5822 = vmul.f32 %v5770, 0.2
    %v5823 = vmul.f32 %v5771, 0.2
    %v5824 = vmul.f32 %v5784, 0.2
    %v5825 = vmul.f32 %v5785, 0.2
    %v5826 = vmul.f32 %v5798, 0.2
    %v5827 = vmul.f32 %v5799, 0.2
    %v5828 = vmul.f32 %v5812, 0.2
    %v5829 = vmul.f32 %v5813, 0.2
    %v5830 = vsel %vm5814, %v5770, %v5822
    %v5831 = vsel %vm5815, %v5771, %v5823
    %v5832 = vsel %vm5816, %v5784, %v5824
    %v5833 = vsel %vm5817, %v5785, %v5825
    %v5834 = vsel %vm5818, %v5798, %v5826
    %v5835 = vsel %vm5819, %v5799, %v5827
    %v5836 = vsel %vm5820, %v5812, %v5828
    %v5837 = vsel %vm5821, %v5813, %v5829
    %v5838 = vsel %vm5372, %v5830, -1e+09
    %v5839 = vsel %vm5373, %v5831, -1e+09
    %v5840 = vsel %vm5372, %v5832, -1e+09
    %v5841 = vsel %vm5373, %v5833, -1e+09
    %v5842 = vsel %vm5372, %v5834, -1e+09
    %v5843 = vsel %vm5373, %v5835, -1e+09
    %v5844 = vsel %vm5372, %v5836, -1e+09
    %v5845 = vsel %vm5373, %v5837, -1e+09
    %vm5846 = vcmask 130048
    %v5847 = vsel %vm5846, %v5838, -inf
    %5848 = vmax.xlane.f32.xlu0 %v5847
    %v5849 = vpop.xlane.xlu0 %5848
    %v5850 = vsel %vm5846, %v5839, -inf
    %5851 = vmax.xlane.f32.xlu0 %v5850
    %v5852 = vpop.xlane.xlu0 %5851
    %v5853 = vsel %vm5846, %v5840, -inf
    %5854 = vmax.xlane.f32.xlu0 %v5853
    %v5855 = vpop.xlane.xlu0 %5854
    %v5856 = vsel %vm5846, %v5841, -inf
    %5857 = vmax.xlane.f32.xlu0 %v5856
    %v5858 = vpop.xlane.xlu0 %5857
    %v5859 = vsel %vm5846, %v5842, -inf
    %5860 = vmax.xlane.f32.xlu0 %v5859
    %v5861 = vpop.xlane.xlu0 %5860
    %v5862 = vsel %vm5846, %v5843, -inf
    %5863 = vmax.xlane.f32.xlu0 %v5862
    %v5864 = vpop.xlane.xlu0 %5863
    %v5865 = vsel %vm5846, %v5844, -inf
    %5866 = vmax.xlane.f32.xlu0 %v5865
    %v5867 = vpop.xlane.xlu0 %5866
    %v5868 = vsel %vm5846, %v5845, -inf
    %5869 = vmax.xlane.f32.xlu0 %v5868
    %v5870 = vpop.xlane.xlu0 %5869
    %v5871 = vsub.f32 %v5838, %v5849
    %v5872 = vsub.f32 %v5839, %v5852
    %v5873 = vsub.f32 %v5840, %v5855
    %v5874 = vsub.f32 %v5841, %v5858
    %v5875 = vsub.f32 %v5842, %v5861
    %v5876 = vsub.f32 %v5843, %v5864
    %v5877 = vsub.f32 %v5844, %v5867
    %v5878 = vsub.f32 %v5845, %v5870
    %v5879 = vmul.f32 %v5871, 1.442695
    %v5880 = vpow.pop %v5879
    %v5881 = vmul.f32 %v5872, 1.442695
    %v5882 = vpow.pop %v5881
    %v5883 = vmul.f32 %v5873, 1.442695
    %v5884 = vpow.pop %v5883
    %v5885 = vmul.f32 %v5874, 1.442695
    %v5886 = vpow.pop %v5885
    %v5887 = vmul.f32 %v5875, 1.442695
    %v5888 = vpow.pop %v5887
    %v5889 = vmul.f32 %v5876, 1.442695
    %v5890 = vpow.pop %v5889
    %v5891 = vmul.f32 %v5877, 1.442695
    %v5892 = vpow.pop %v5891
    %v5893 = vmul.f32 %v5878, 1.442695
    %v5894 = vpow.pop %v5893
    %v5895 = vsel %vm5846, %v5880, 0.0
    %5896 = vadd.xlane.f32.xlu0 %v5895
    %v5897 = vpop.xlane.xlu0 %5896
    %v5898 = vsel %vm5846, %v5882, 0.0
    %5899 = vadd.xlane.f32.xlu0 %v5898
    %v5900 = vpop.xlane.xlu0 %5899
    %v5901 = vsel %vm5846, %v5884, 0.0
    %5902 = vadd.xlane.f32.xlu0 %v5901
    %v5903 = vpop.xlane.xlu0 %5902
    %v5904 = vsel %vm5846, %v5886, 0.0
    %5905 = vadd.xlane.f32.xlu0 %v5904
    %v5906 = vpop.xlane.xlu0 %5905
    %v5907 = vsel %vm5846, %v5888, 0.0
    %5908 = vadd.xlane.f32.xlu0 %v5907
    %v5909 = vpop.xlane.xlu0 %5908
    %v5910 = vsel %vm5846, %v5890, 0.0
    %5911 = vadd.xlane.f32.xlu0 %v5910
    %v5912 = vpop.xlane.xlu0 %5911
    %v5913 = vsel %vm5846, %v5892, 0.0
    %5914 = vadd.xlane.f32.xlu0 %v5913
    %v5915 = vpop.xlane.xlu0 %5914
    %v5916 = vsel %vm5846, %v5894, 0.0
    %5917 = vadd.xlane.f32.xlu0 %v5916
    %v5918 = vpop.xlane.xlu0 %5917
    %v5919 = vrcp.pop %v5897
    %v5920 = vmul.f32 %v5880, %v5919
    %v5921 = vrcp.pop %v5900
    %v5922 = vmul.f32 %v5882, %v5921
    %v5923 = vrcp.pop %v5903
    %v5924 = vmul.f32 %v5884, %v5923
    %v5925 = vrcp.pop %v5906
    %v5926 = vmul.f32 %v5886, %v5925
    %v5927 = vrcp.pop %v5909
    %v5928 = vmul.f32 %v5888, %v5927
    %v5929 = vrcp.pop %v5912
    %v5930 = vmul.f32 %v5890, %v5929
    %v5931 = vrcp.pop %v5915
    %v5932 = vmul.f32 %v5892, %v5931
    %v5933 = vrcp.pop %v5918
    %v5934 = vmul.f32 %v5894, %v5933
    %v5936 = vsel %vm5846, %v5920, 0
    %v5939 = vsel %vm5846, %v5922, 0
    %5941 = vmatprep.subr.mxu0 0.0
    %5942 = vmatpush1.msra.mxu0 0.0
    %5943 = vmatprep.subr.mxu0 0.0
    %5944 = vmatpush1.msra.mxu0 0.0
    %5945 = vmatprep.subr.mxu0 0.0
    %5946 = vmatpush1.msra.mxu0 0.0
    %5947 = vmatprep.subr.mxu0 0.0
    %5948 = vmatpush1.msra.mxu0 0.0
    %5949 = vmatprep.subr.mxu0 0.0
    %5950 = vmatpush1.msra.mxu0 0.0
    %5951 = vmatprep.subr.mxu0 0.0
    %5952 = vmatpush1.msra.mxu0 0.0
    %5953 = vmatprep.subr.mxu0 0.0
    %5954 = vmatpush1.msra.mxu0 0.0
    %5955 = vmatprep.subr.mxu0 0.0
    %5956 = vmatpush1.msra.mxu0 0.0
    %5957 = vmatprep.subr.mxu0 0.0
    %5958 = vmatpush1.msra.mxu0 0.0
    %5959 = vmatprep.subr.mxu0 0.0
    %5960 = vmatpush1.msra.mxu0 0.0
    %5961 = vmatprep.subr.mxu0 0.0
    %5962 = vmatpush1.msra.mxu0 0.0
    %5963 = vmatprep.subr.mxu0 0.0
    %5964 = vmatpush1.msra.mxu0 0.0
    %5965 = vmatprep.subr.mxu0 0.0
    %5966 = vmatpush1.msra.mxu0 0.0
    %5967 = vmatprep.subr.mxu0 0.0
    %5968 = vmatpush1.msra.mxu0 0.0
    %5969 = vmatprep.subr.mxu0 0.0
    %5970 = vmatpush1.msra.mxu0 %v5607
    %5971 = vmatprep.subr.mxu0 0.0
    %5972 = vmatpush1.msra.mxu0 %v5601
    %5973 = vmatprep.subr.mxu0 0.0
    %5974 = vmatpush2.msra.mxu0 0.0
    %5975 = vmatprep.subr.mxu0 0.0
    %5976 = vmatpush2.msra.mxu0 0.0
    %5977 = vmatprep.subr.mxu0 0.0
    %5978 = vmatpush2.msra.mxu0 0.0
    %5979 = vmatprep.subr.mxu0 0.0
    %5980 = vmatpush2.msra.mxu0 0.0
    %5981 = vmatprep.subr.mxu0 0.0
    %5982 = vmatpush2.msra.mxu0 0.0
    %5983 = vmatprep.subr.mxu0 0.0
    %5984 = vmatpush2.msra.mxu0 0.0
    %5985 = vmatprep.subr.mxu0 0.0
    %5986 = vmatpush2.msra.mxu0 0.0
    %5987 = vmatprep.subr.mxu0 0.0
    %5988 = vmatpush2.msra.mxu0 0.0
    %5989 = vmatprep.subr.mxu0 0.0
    %5990 = vmatpush2.msra.mxu0 0.0
    %5991 = vmatprep.subr.mxu0 0.0
    %5992 = vmatpush2.msra.mxu0 0.0
    %5993 = vmatprep.subr.mxu0 0.0
    %5994 = vmatpush2.msra.mxu0 0.0
    %5995 = vmatprep.subr.mxu0 0.0
    %5996 = vmatpush2.msra.mxu0 0.0
    %5997 = vmatprep.subr.mxu0 0.0
    %5998 = vmatpush2.msra.mxu0 0.0
    %5999 = vmatprep.subr.mxu0 0.0
    %6000 = vmatpush2.msra.mxu0 0.0
    %6001 = vmatprep.subr.mxu0 0.0
    %6002 = vmatpush2.msra.mxu0 0.0
    %6003 = vmatprep.subr.mxu0 0.0
    %6004 = vmatpush2.msra.mxu0 0.0
    %6005 = vmatprep.mubr.f32.mxu0 0.0
    %6006 = vmatmul.mubr.f32.gmra.mxu0 %v5936
    %v6007 = vpop.f32.mrf.mxu0
    %v6008 = vadd.f32 0.0, %v6007
    %v6009 = vpop.f32.mrf.mxu0
    %6010 = vmatprep.mubr.f32.mxu0 0.0
    %6011 = vmatmul.mubr.f32.gmra.mxu0 %v5939
    %v6012 = vpop.f32.mrf.mxu0
    %v6013 = vadd.f32 0.0, %v6012
    %v6014 = vpop.f32.mrf.mxu0
    %6015 = vdwg.mxu0
    %6018 = vrot.lane.b32.xlu0 %v5601, 64
    %v6019 = vpop.permute.xlu0 %6018
    %6020 = vrot.lane.b32.xlu0 %v5607, 64
    %v6021 = vpop.permute.xlu0 %6020
    %v6025 = vsel %vm5846, %v5924, 0
    %v6028 = vsel %vm5846, %v5926, 0
    %6030 = vmatprep.subr.mxu0 0.0
    %6031 = vmatpush1.msra.mxu0 0.0
    %6032 = vmatprep.subr.mxu0 0.0
    %6033 = vmatpush1.msra.mxu0 0.0
    %6034 = vmatprep.subr.mxu0 0.0
    %6035 = vmatpush1.msra.mxu0 0.0
    %6036 = vmatprep.subr.mxu0 0.0
    %6037 = vmatpush1.msra.mxu0 0.0
    %6038 = vmatprep.subr.mxu0 0.0
    %6039 = vmatpush1.msra.mxu0 0.0
    %6040 = vmatprep.subr.mxu0 0.0
    %6041 = vmatpush1.msra.mxu0 0.0
    %6042 = vmatprep.subr.mxu0 0.0
    %6043 = vmatpush1.msra.mxu0 0.0
    %6044 = vmatprep.subr.mxu0 0.0
    %6045 = vmatpush1.msra.mxu0 0.0
    %6046 = vmatprep.subr.mxu0 0.0
    %6047 = vmatpush1.msra.mxu0 0.0
    %6048 = vmatprep.subr.mxu0 0.0
    %6049 = vmatpush1.msra.mxu0 0.0
    %6050 = vmatprep.subr.mxu0 0.0
    %6051 = vmatpush1.msra.mxu0 0.0
    %6052 = vmatprep.subr.mxu0 0.0
    %6053 = vmatpush1.msra.mxu0 0.0
    %6054 = vmatprep.subr.mxu0 0.0
    %6055 = vmatpush1.msra.mxu0 0.0
    %6056 = vmatprep.subr.mxu0 0.0
    %6057 = vmatpush1.msra.mxu0 0.0
    %6058 = vmatprep.subr.mxu0 0.0
    %6059 = vmatpush1.msra.mxu0 %v6021
    %6060 = vmatprep.subr.mxu0 0.0
    %6061 = vmatpush1.msra.mxu0 %v6019
    %6062 = vmatprep.subr.mxu0 0.0
    %6063 = vmatpush2.msra.mxu0 0.0
    %6064 = vmatprep.subr.mxu0 0.0
    %6065 = vmatpush2.msra.mxu0 0.0
    %6066 = vmatprep.subr.mxu0 0.0
    %6067 = vmatpush2.msra.mxu0 0.0
    %6068 = vmatprep.subr.mxu0 0.0
    %6069 = vmatpush2.msra.mxu0 0.0
    %6070 = vmatprep.subr.mxu0 0.0
    %6071 = vmatpush2.msra.mxu0 0.0
    %6072 = vmatprep.subr.mxu0 0.0
    %6073 = vmatpush2.msra.mxu0 0.0
    %6074 = vmatprep.subr.mxu0 0.0
    %6075 = vmatpush2.msra.mxu0 0.0
    %6076 = vmatprep.subr.mxu0 0.0
    %6077 = vmatpush2.msra.mxu0 0.0
    %6078 = vmatprep.subr.mxu0 0.0
    %6079 = vmatpush2.msra.mxu0 0.0
    %6080 = vmatprep.subr.mxu0 0.0
    %6081 = vmatpush2.msra.mxu0 0.0
    %6082 = vmatprep.subr.mxu0 0.0
    %6083 = vmatpush2.msra.mxu0 0.0
    %6084 = vmatprep.subr.mxu0 0.0
    %6085 = vmatpush2.msra.mxu0 0.0
    %6086 = vmatprep.subr.mxu0 0.0
    %6087 = vmatpush2.msra.mxu0 0.0
    %6088 = vmatprep.subr.mxu0 0.0
    %6089 = vmatpush2.msra.mxu0 0.0
    %6090 = vmatprep.subr.mxu0 0.0
    %6091 = vmatpush2.msra.mxu0 0.0
    %6092 = vmatprep.subr.mxu0 0.0
    %6093 = vmatpush2.msra.mxu0 0.0
    %6094 = vmatprep.mubr.f32.mxu0 0.0
    %6095 = vmatmul.mubr.f32.gmra.mxu0 %v6025
    %v6096 = vpop.f32.mrf.mxu0
    %v6097 = vadd.f32 0.0, %v6096
    %v6098 = vpop.f32.mrf.mxu0
    %6099 = vmatprep.mubr.f32.mxu0 0.0
    %6100 = vmatmul.mubr.f32.gmra.mxu0 %v6028
    %v6101 = vpop.f32.mrf.mxu0
    %v6102 = vadd.f32 0.0, %v6101
    %v6103 = vpop.f32.mrf.mxu0
    %6104 = vdwg.mxu0
    %v6106 = vsel %vm5846, %v5928, 0
    %v6109 = vsel %vm5846, %v5930, 0
    %6111 = vmatprep.subr.mxu0 0.0
    %6112 = vmatpush1.msra.mxu0 0.0
    %6113 = vmatprep.subr.mxu0 0.0
    %6114 = vmatpush1.msra.mxu0 0.0
    %6115 = vmatprep.subr.mxu0 0.0
    %6116 = vmatpush1.msra.mxu0 0.0
    %6117 = vmatprep.subr.mxu0 0.0
    %6118 = vmatpush1.msra.mxu0 0.0
    %6119 = vmatprep.subr.mxu0 0.0
    %6120 = vmatpush1.msra.mxu0 0.0
    %6121 = vmatprep.subr.mxu0 0.0
    %6122 = vmatpush1.msra.mxu0 0.0
    %6123 = vmatprep.subr.mxu0 0.0
    %6124 = vmatpush1.msra.mxu0 0.0
    %6125 = vmatprep.subr.mxu0 0.0
    %6126 = vmatpush1.msra.mxu0 0.0
    %6127 = vmatprep.subr.mxu0 0.0
    %6128 = vmatpush1.msra.mxu0 0.0
    %6129 = vmatprep.subr.mxu0 0.0
    %6130 = vmatpush1.msra.mxu0 0.0
    %6131 = vmatprep.subr.mxu0 0.0
    %6132 = vmatpush1.msra.mxu0 0.0
    %6133 = vmatprep.subr.mxu0 0.0
    %6134 = vmatpush1.msra.mxu0 0.0
    %6135 = vmatprep.subr.mxu0 0.0
    %6136 = vmatpush1.msra.mxu0 0.0
    %6137 = vmatprep.subr.mxu0 0.0
    %6138 = vmatpush1.msra.mxu0 0.0
    %6139 = vmatprep.subr.mxu0 0.0
    %6140 = vmatpush1.msra.mxu0 %v5609
    %6141 = vmatprep.subr.mxu0 0.0
    %6142 = vmatpush1.msra.mxu0 %v5603
    %6143 = vmatprep.subr.mxu0 0.0
    %6144 = vmatpush2.msra.mxu0 0.0
    %6145 = vmatprep.subr.mxu0 0.0
    %6146 = vmatpush2.msra.mxu0 0.0
    %6147 = vmatprep.subr.mxu0 0.0
    %6148 = vmatpush2.msra.mxu0 0.0
    %6149 = vmatprep.subr.mxu0 0.0
    %6150 = vmatpush2.msra.mxu0 0.0
    %6151 = vmatprep.subr.mxu0 0.0
    %6152 = vmatpush2.msra.mxu0 0.0
    %6153 = vmatprep.subr.mxu0 0.0
    %6154 = vmatpush2.msra.mxu0 0.0
    %6155 = vmatprep.subr.mxu0 0.0
    %6156 = vmatpush2.msra.mxu0 0.0
    %6157 = vmatprep.subr.mxu0 0.0
    %6158 = vmatpush2.msra.mxu0 0.0
    %6159 = vmatprep.subr.mxu0 0.0
    %6160 = vmatpush2.msra.mxu0 0.0
    %6161 = vmatprep.subr.mxu0 0.0
    %6162 = vmatpush2.msra.mxu0 0.0
    %6163 = vmatprep.subr.mxu0 0.0
    %6164 = vmatpush2.msra.mxu0 0.0
    %6165 = vmatprep.subr.mxu0 0.0
    %6166 = vmatpush2.msra.mxu0 0.0
    %6167 = vmatprep.subr.mxu0 0.0
    %6168 = vmatpush2.msra.mxu0 0.0
    %6169 = vmatprep.subr.mxu0 0.0
    %6170 = vmatpush2.msra.mxu0 0.0
    %6171 = vmatprep.subr.mxu0 0.0
    %6172 = vmatpush2.msra.mxu0 0.0
    %6173 = vmatprep.subr.mxu0 0.0
    %6174 = vmatpush2.msra.mxu0 0.0
    %6175 = vmatprep.mubr.f32.mxu0 0.0
    %6176 = vmatmul.mubr.f32.gmra.mxu0 %v6106
    %v6177 = vpop.f32.mrf.mxu0
    %v6178 = vadd.f32 0.0, %v6177
    %v6179 = vpop.f32.mrf.mxu0
    %6180 = vmatprep.mubr.f32.mxu0 0.0
    %6181 = vmatmul.mubr.f32.gmra.mxu0 %v6109
    %v6182 = vpop.f32.mrf.mxu0
    %v6183 = vadd.f32 0.0, %v6182
    %v6184 = vpop.f32.mrf.mxu0
    %6185 = vdwg.mxu0
    %6188 = vrot.lane.b32.xlu0 %v5603, 64
    %v6189 = vpop.permute.xlu0 %6188
    %6190 = vrot.lane.b32.xlu0 %v5609, 64
    %v6191 = vpop.permute.xlu0 %6190
    %v6195 = vsel %vm5846, %v5932, 0
    %v6198 = vsel %vm5846, %v5934, 0
    %6200 = vmatprep.subr.mxu0 0.0
    %6201 = vmatpush1.msra.mxu0 0.0
    %6202 = vmatprep.subr.mxu0 0.0
    %6203 = vmatpush1.msra.mxu0 0.0
    %6204 = vmatprep.subr.mxu0 0.0
    %6205 = vmatpush1.msra.mxu0 0.0
    %6206 = vmatprep.subr.mxu0 0.0
    %6207 = vmatpush1.msra.mxu0 0.0
    %6208 = vmatprep.subr.mxu0 0.0
    %6209 = vmatpush1.msra.mxu0 0.0
    %6210 = vmatprep.subr.mxu0 0.0
    %6211 = vmatpush1.msra.mxu0 0.0
    %6212 = vmatprep.subr.mxu0 0.0
    %6213 = vmatpush1.msra.mxu0 0.0
    %6214 = vmatprep.subr.mxu0 0.0
    %6215 = vmatpush1.msra.mxu0 0.0
    %6216 = vmatprep.subr.mxu0 0.0
    %6217 = vmatpush1.msra.mxu0 0.0
    %6218 = vmatprep.subr.mxu0 0.0
    %6219 = vmatpush1.msra.mxu0 0.0
    %6220 = vmatprep.subr.mxu0 0.0
    %6221 = vmatpush1.msra.mxu0 0.0
    %6222 = vmatprep.subr.mxu0 0.0
    %6223 = vmatpush1.msra.mxu0 0.0
    %6224 = vmatprep.subr.mxu0 0.0
    %6225 = vmatpush1.msra.mxu0 0.0
    %6226 = vmatprep.subr.mxu0 0.0
    %6227 = vmatpush1.msra.mxu0 0.0
    %6228 = vmatprep.subr.mxu0 0.0
    %6229 = vmatpush1.msra.mxu0 %v6191
    %6230 = vmatprep.subr.mxu0 0.0
    %6231 = vmatpush1.msra.mxu0 %v6189
    %6232 = vmatprep.subr.mxu0 0.0
    %6233 = vmatpush2.msra.mxu0 0.0
    %6234 = vmatprep.subr.mxu0 0.0
    %6235 = vmatpush2.msra.mxu0 0.0
    %6236 = vmatprep.subr.mxu0 0.0
    %6237 = vmatpush2.msra.mxu0 0.0
    %6238 = vmatprep.subr.mxu0 0.0
    %6239 = vmatpush2.msra.mxu0 0.0
    %6240 = vmatprep.subr.mxu0 0.0
    %6241 = vmatpush2.msra.mxu0 0.0
    %6242 = vmatprep.subr.mxu0 0.0
    %6243 = vmatpush2.msra.mxu0 0.0
    %6244 = vmatprep.subr.mxu0 0.0
    %6245 = vmatpush2.msra.mxu0 0.0
    %6246 = vmatprep.subr.mxu0 0.0
    %6247 = vmatpush2.msra.mxu0 0.0
    %6248 = vmatprep.subr.mxu0 0.0
    %6249 = vmatpush2.msra.mxu0 0.0
    %6250 = vmatprep.subr.mxu0 0.0
    %6251 = vmatpush2.msra.mxu0 0.0
    %6252 = vmatprep.subr.mxu0 0.0
    %6253 = vmatpush2.msra.mxu0 0.0
    %6254 = vmatprep.subr.mxu0 0.0
    %6255 = vmatpush2.msra.mxu0 0.0
    %6256 = vmatprep.subr.mxu0 0.0
    %6257 = vmatpush2.msra.mxu0 0.0
    %6258 = vmatprep.subr.mxu0 0.0
    %6259 = vmatpush2.msra.mxu0 0.0
    %6260 = vmatprep.subr.mxu0 0.0
    %6261 = vmatpush2.msra.mxu0 0.0
    %6262 = vmatprep.subr.mxu0 0.0
    %6263 = vmatpush2.msra.mxu0 0.0
    %6264 = vmatprep.mubr.f32.mxu0 0.0
    %6265 = vmatmul.mubr.f32.gmra.mxu0 %v6195
    %v6266 = vpop.f32.mrf.mxu0
    %v6267 = vadd.f32 0.0, %v6266
    %v6268 = vpop.f32.mrf.mxu0
    %6269 = vmatprep.mubr.f32.mxu0 0.0
    %6270 = vmatmul.mubr.f32.gmra.mxu0 %v6198
    %v6271 = vpop.f32.mrf.mxu0
    %v6272 = vadd.f32 0.0, %v6271
    %v6273 = vpop.f32.mrf.mxu0
    %6274 = vdwg.mxu0
    %6277 = vrot.lane.b32.xlu0 %v6097, 64
    %v6278 = vpop.permute.xlu0 %6277
    %6279 = vrot.lane.b32.xlu0 %v6102, 64
    %v6280 = vpop.permute.xlu0 %6279
    %6285 = vrot.lane.b32.xlu0 %v6267, 64
    %v6286 = vpop.permute.xlu0 %6285
    %6287 = vrot.lane.b32.xlu0 %v6272, 64
    %v6288 = vpop.permute.xlu0 %6287
    %vm6291 = vcmask 523264
    %v6292 = vsel %vm6291, %v6008, %v6278
    %v6293 = vsel %vm6291, %v6013, %v6280
    %v6294 = vsel %vm6291, %v6178, %v6286
    %v6295 = vsel %vm6291, %v6183, %v6288
    %vm6296 = vcmp.gt.f32.partialorder %v6292, 0.0
    %vm6297 = vcmp.gt.f32.partialorder %v6294, 0.0
    %vm6298 = vcmp.gt.f32.partialorder %v6293, 0.0
    %vm6299 = vcmp.gt.f32.partialorder %v6295, 0.0
    %v6300 = vmin.f32 %v6292, 0.0
    %v6301 = vmin.f32 %v6294, 0.0
    %v6302 = vmin.f32 %v6293, 0.0
    %v6303 = vmin.f32 %v6295, 0.0
    %v6304 = vmul.f32 %v6300, 1.442695
    %v6305 = vpow.pop %v6304
    %v6306 = vmul.f32 %v6301, 1.442695
    %v6307 = vpow.pop %v6306
    %v6308 = vmul.f32 %v6302, 1.442695
    %v6309 = vpow.pop %v6308
    %v6310 = vmul.f32 %v6303, 1.442695
    %v6311 = vpow.pop %v6310
    %v6312 = vsub.f32 %v6305, 1.0
    %v6313 = vsub.f32 %v6307, 1.0
    %v6314 = vsub.f32 %v6309, 1.0
    %v6315 = vsub.f32 %v6311, 1.0
    %v6316 = vsel %vm6296, %v6292, %v6312
    %v6317 = vsel %vm6297, %v6294, %v6313
    %v6318 = vsel %vm6298, %v6293, %v6314
    %v6319 = vsel %vm6299, %v6295, %v6315
    %v6320 = vld [vmem:[#allocation21] sm:$0xff]
    %v6321 = vld [vmem:[#allocation21 + $0x8] sm:$0xff]
    %v6322 = vld [vmem:[#allocation21 + $0x10] sm:$0xff]
    %v6323 = vld [vmem:[#allocation21 + $0x18] sm:$0xff]
    %v6324 = vld [vmem:[#allocation21 + $0x20] sm:$0xff]
    %v6325 = vld [vmem:[#allocation21 + $0x28] sm:$0xff]
    %v6326 = vld [vmem:[#allocation21 + $0x30] sm:$0xff]
    %v6327 = vld [vmem:[#allocation21 + $0x38] sm:$0xff]
    %v6328 = vld [vmem:[#allocation21 + $0x40] sm:$0xff]
    %v6329 = vld [vmem:[#allocation21 + $0x48] sm:$0xff]
    %v6330 = vld [vmem:[#allocation21 + $0x50] sm:$0xff]
    %v6331 = vld [vmem:[#allocation21 + $0x58] sm:$0xff]
    %v6332 = vld [vmem:[#allocation21 + $0x60] sm:$0xff]
    %v6333 = vld [vmem:[#allocation21 + $0x68] sm:$0xff]
    %v6334 = vld [vmem:[#allocation21 + $0x70] sm:$0xff]
    %v6335 = vld [vmem:[#allocation21 + $0x78] sm:$0xff]
    %v6336 = vld [vmem:[#allocation21 + $0x80] sm:$0xff]
    %v6337 = vld [vmem:[#allocation21 + $0x88] sm:$0xff]
    %v6338 = vld [vmem:[#allocation21 + $0x90] sm:$0xff]
    %v6339 = vld [vmem:[#allocation21 + $0x98] sm:$0xff]
    %v6340 = vld [vmem:[#allocation21 + $0xa0] sm:$0xff]
    %v6341 = vld [vmem:[#allocation21 + $0xa8] sm:$0xff]
    %v6342 = vld [vmem:[#allocation21 + $0xb0] sm:$0xff]
    %v6343 = vld [vmem:[#allocation21 + $0xb8] sm:$0xff]
    %v6344 = vld [vmem:[#allocation21 + $0xc0] sm:$0xff]
    %v6345 = vld [vmem:[#allocation21 + $0xc8] sm:$0xff]
    %v6346 = vld [vmem:[#allocation21 + $0xd0] sm:$0xff]
    %v6347 = vld [vmem:[#allocation21 + $0xd8] sm:$0xff]
    %v6348 = vld [vmem:[#allocation21 + $0xe0] sm:$0xff]
    %v6349 = vld [vmem:[#allocation21 + $0xe8] sm:$0xff]
    %v6350 = vld [vmem:[#allocation21 + $0xf0] sm:$0xff]
    %v6351 = vld [vmem:[#allocation21 + $0xf8] sm:$0xff]
    %6352 = vmatprep.subr.mxu0 0.0
    %6353 = vmatpush1.msra.mxu0 %v6335
    %6354 = vmatprep.subr.mxu0 0.0
    %6355 = vmatpush1.msra.mxu0 %v6334
    %6356 = vmatprep.subr.mxu0 0.0
    %6357 = vmatpush1.msra.mxu0 %v6333
    %6358 = vmatprep.subr.mxu0 0.0
    %6359 = vmatpush1.msra.mxu0 %v6332
    %6360 = vmatprep.subr.mxu0 0.0
    %6361 = vmatpush1.msra.mxu0 %v6331
    %6362 = vmatprep.subr.mxu0 0.0
    %6363 = vmatpush1.msra.mxu0 %v6330
    %6364 = vmatprep.subr.mxu0 0.0
    %6365 = vmatpush1.msra.mxu0 %v6329
    %6366 = vmatprep.subr.mxu0 0.0
    %6367 = vmatpush1.msra.mxu0 %v6328
    %6368 = vmatprep.subr.mxu0 0.0
    %6369 = vmatpush1.msra.mxu0 %v6327
    %6370 = vmatprep.subr.mxu0 0.0
    %6371 = vmatpush1.msra.mxu0 %v6326
    %6372 = vmatprep.subr.mxu0 0.0
    %6373 = vmatpush1.msra.mxu0 %v6325
    %6374 = vmatprep.subr.mxu0 0.0
    %6375 = vmatpush1.msra.mxu0 %v6324
    %6376 = vmatprep.subr.mxu0 0.0
    %6377 = vmatpush1.msra.mxu0 %v6323
    %6378 = vmatprep.subr.mxu0 0.0
    %6379 = vmatpush1.msra.mxu0 %v6322
    %6380 = vmatprep.subr.mxu0 0.0
    %6381 = vmatpush1.msra.mxu0 %v6321
    %6382 = vmatprep.subr.mxu0 0.0
    %6383 = vmatpush1.msra.mxu0 %v6320
    %6384 = vmatprep.subr.mxu0 0.0
    %6385 = vmatpush2.msra.mxu0 %v6351
    %6386 = vmatprep.subr.mxu0 0.0
    %6387 = vmatpush2.msra.mxu0 %v6350
    %6388 = vmatprep.subr.mxu0 0.0
    %6389 = vmatpush2.msra.mxu0 %v6349
    %6390 = vmatprep.subr.mxu0 0.0
    %6391 = vmatpush2.msra.mxu0 %v6348
    %6392 = vmatprep.subr.mxu0 0.0
    %6393 = vmatpush2.msra.mxu0 %v6347
    %6394 = vmatprep.subr.mxu0 0.0
    %6395 = vmatpush2.msra.mxu0 %v6346
    %6396 = vmatprep.subr.mxu0 0.0
    %6397 = vmatpush2.msra.mxu0 %v6345
    %6398 = vmatprep.subr.mxu0 0.0
    %6399 = vmatpush2.msra.mxu0 %v6344
    %6400 = vmatprep.subr.mxu0 0.0
    %6401 = vmatpush2.msra.mxu0 %v6343
    %6402 = vmatprep.subr.mxu0 0.0
    %6403 = vmatpush2.msra.mxu0 %v6342
    %6404 = vmatprep.subr.mxu0 0.0
    %6405 = vmatpush2.msra.mxu0 %v6341
    %6406 = vmatprep.subr.mxu0 0.0
    %6407 = vmatpush2.msra.mxu0 %v6340
    %6408 = vmatprep.subr.mxu0 0.0
    %6409 = vmatpush2.msra.mxu0 %v6339
    %6410 = vmatprep.subr.mxu0 0.0
    %6411 = vmatpush2.msra.mxu0 %v6338
    %6412 = vmatprep.subr.mxu0 0.0
    %6413 = vmatpush2.msra.mxu0 %v6337
    %6414 = vmatprep.subr.mxu0 0.0
    %6415 = vmatpush2.msra.mxu0 %v6336
    %6416 = vmatprep.mubr.f32.mxu0 %v6317
    %6417 = vmatmul.mubr.f32.gmra.mxu0 %v6316
    %v6418 = vpop.f32.mrf.mxu0
    %v6419 = vadd.f32 0.0, %v6418
    %v6420 = vpop.f32.mrf.mxu0
    %6421 = vmatprep.mubr.f32.mxu0 %v6319
    %6422 = vmatmul.mubr.f32.gmra.mxu0 %v6318
    %v6423 = vpop.f32.mrf.mxu0
    %v6424 = vadd.f32 0.0, %v6423
    %v6425 = vpop.f32.mrf.mxu0
    %6426 = vdwg.mxu0
    %v6427 = vld [vmem:[%s15] sm:$0xff]
    %v6428 = vld [vmem:[%s15 + $0x8] sm:$0xff]
    %v6429 = vld [vmem:[%s15 + $0x10] sm:$0xff]
    %v6430 = vld [vmem:[%s15 + $0x18] sm:$0xff]
    %v6431 = vld [vmem:[%s15 + $0x20] sm:$0xff]
    %v6432 = vld [vmem:[%s15 + $0x28] sm:$0xff]
    %v6433 = vld [vmem:[%s15 + $0x30] sm:$0xff]
    %v6434 = vld [vmem:[%s15 + $0x38] sm:$0xff]
    %v6435 = vld [vmem:[%s15 + $0x40] sm:$0xff]
    %v6436 = vld [vmem:[%s15 + $0x48] sm:$0xff]
    %v6437 = vld [vmem:[%s15 + $0x50] sm:$0xff]
    %v6438 = vld [vmem:[%s15 + $0x58] sm:$0xff]
    %v6439 = vld [vmem:[%s15 + $0x60] sm:$0xff]
    %v6440 = vld [vmem:[%s15 + $0x68] sm:$0xff]
    %v6441 = vld [vmem:[%s15 + $0x70] sm:$0xff]
    %v6442 = vld [vmem:[%s15 + $0x78] sm:$0xff]
    %6443 = vmatprep.subr.mxu0 0.0
    %6444 = vmatpush1.msra.mxu0 %v6442
    %6445 = vmatprep.subr.mxu0 0.0
    %6446 = vmatpush1.msra.mxu0 %v6441
    %6447 = vmatprep.subr.mxu0 0.0
    %6448 = vmatpush1.msra.mxu0 %v6440
    %6449 = vmatprep.subr.mxu0 0.0
    %6450 = vmatpush1.msra.mxu0 %v6439
    %6451 = vmatprep.subr.mxu0 0.0
    %6452 = vmatpush1.msra.mxu0 %v6438
    %6453 = vmatprep.subr.mxu0 0.0
    %6454 = vmatpush1.msra.mxu0 %v6437
    %6455 = vmatprep.subr.mxu0 0.0
    %6456 = vmatpush1.msra.mxu0 %v6436
    %6457 = vmatprep.subr.mxu0 0.0
    %6458 = vmatpush1.msra.mxu0 %v6435
    %6459 = vmatprep.subr.mxu0 0.0
    %6460 = vmatpush1.msra.mxu0 %v6434
    %6461 = vmatprep.subr.mxu0 0.0
    %6462 = vmatpush1.msra.mxu0 %v6433
    %6463 = vmatprep.subr.mxu0 0.0
    %6464 = vmatpush1.msra.mxu0 %v6432
    %6465 = vmatprep.subr.mxu0 0.0
    %6466 = vmatpush1.msra.mxu0 %v6431
    %6467 = vmatprep.subr.mxu0 0.0
    %6468 = vmatpush1.msra.mxu0 %v6430
    %6469 = vmatprep.subr.mxu0 0.0
    %6470 = vmatpush1.msra.mxu0 %v6429
    %6471 = vmatprep.subr.mxu0 0.0
    %6472 = vmatpush1.msra.mxu0 %v6428
    %6473 = vmatprep.subr.mxu0 0.0
    %6474 = vmatpush1.msra.mxu0 %v6427
    %6475 = vmatprep.subr.mxu0 0.0
    %6476 = vmatpush2.msra.mxu0 0.0
    %6477 = vmatprep.subr.mxu0 0.0
    %6478 = vmatpush2.msra.mxu0 0.0
    %6479 = vmatprep.subr.mxu0 0.0
    %6480 = vmatpush2.msra.mxu0 0.0
    %6481 = vmatprep.subr.mxu0 0.0
    %6482 = vmatpush2.msra.mxu0 0.0
    %6483 = vmatprep.subr.mxu0 0.0
    %6484 = vmatpush2.msra.mxu0 0.0
    %6485 = vmatprep.subr.mxu0 0.0
    %6486 = vmatpush2.msra.mxu0 0.0
    %6487 = vmatprep.subr.mxu0 0.0
    %6488 = vmatpush2.msra.mxu0 0.0
    %6489 = vmatprep.subr.mxu0 0.0
    %6490 = vmatpush2.msra.mxu0 0.0
    %6491 = vmatprep.subr.mxu0 0.0
    %6492 = vmatpush2.msra.mxu0 0.0
    %6493 = vmatprep.subr.mxu0 0.0
    %6494 = vmatpush2.msra.mxu0 0.0
    %6495 = vmatprep.subr.mxu0 0.0
    %6496 = vmatpush2.msra.mxu0 0.0
    %6497 = vmatprep.subr.mxu0 0.0
    %6498 = vmatpush2.msra.mxu0 0.0
    %6499 = vmatprep.subr.mxu0 0.0
    %6500 = vmatpush2.msra.mxu0 0.0
    %6501 = vmatprep.subr.mxu0 0.0
    %6502 = vmatpush2.msra.mxu0 0.0
    %6503 = vmatprep.subr.mxu0 0.0
    %6504 = vmatpush2.msra.mxu0 0.0
    %6505 = vmatprep.subr.mxu0 0.0
    %6506 = vmatpush2.msra.mxu0 0.0
    %6507 = vmatprep.mubr.f32.mxu0 0.0
    %6508 = vmatmul.mubr.f32.gmra.mxu0 %v6419
    %v6509 = vpop.f32.mrf.mxu0
    %v6510 = vadd.f32 0.0, %v6509
    %v6511 = vpop.f32.mrf.mxu0
    %6512 = vmatprep.mubr.f32.mxu0 0.0
    %6513 = vmatmul.mubr.f32.gmra.mxu0 %v6424
    %v6514 = vpop.f32.mrf.mxu0
    %v6515 = vadd.f32 0.0, %v6514
    %v6516 = vpop.f32.mrf.mxu0
    %6517 = vdwg.mxu0
    %6520 = vrot.lane.b32.xlu0 %v6510, 127
    %v6521 = vpop.permute.xlu0 %6520
    %6522 = vrot.lane.b32.xlu0 %v6515, 127
    %v6523 = vpop.permute.xlu0 %6522
    %6526 = vxpose.xlu0.b32.start [1/16] %v6521, 128
    %6527 = vxpose.xlu0.b32.cont [2/16] %v6523, 128
    %6528 = vxpose.xlu0.b32.cont [3/16] 0.0, 128
    %6529 = vxpose.xlu0.b32.cont [4/16] 0.0, 128
    %6530 = vxpose.xlu0.b32.cont [5/16] 0.0, 128
    %6531 = vxpose.xlu0.b32.cont [6/16] 0.0, 128
    %6532 = vxpose.xlu0.b32.cont [7/16] 0.0, 128
    %6533 = vxpose.xlu0.b32.cont [8/16] 0.0, 128
    %6534 = vxpose.xlu0.b32.cont [9/16] 0.0, 128
    %6535 = vxpose.xlu0.b32.cont [10/16] 0.0, 128
    %6536 = vxpose.xlu0.b32.cont [11/16] 0.0, 128
    %6537 = vxpose.xlu0.b32.cont [12/16] 0.0, 128
    %6538 = vxpose.xlu0.b32.cont [13/16] 0.0, 128
    %6539 = vxpose.xlu0.b32.cont [14/16] 0.0, 128
    %6540 = vxpose.xlu0.b32.cont [15/16] 0.0, 128
    %6541 = vxpose.xlu0.b32.end [16/16] 0.0, 128
    %v6542 = vpop.trf.xlu0
    %v6543 = vpop.trf.xlu0
    %v6544 = vpop.trf.xlu0
    %v6545 = vpop.trf.xlu0
    %v6546 = vpop.trf.xlu0
    %v6547 = vpop.trf.xlu0
    %v6548 = vpop.trf.xlu0
    %v6549 = vpop.trf.xlu0
    %v6550 = vpop.trf.xlu0
    %v6551 = vpop.trf.xlu0
    %v6552 = vpop.trf.xlu0
    %v6553 = vpop.trf.xlu0
    %v6554 = vpop.trf.xlu0
    %v6555 = vpop.trf.xlu0
    %v6556 = vpop.trf.xlu0
    %v6557 = vpop.trf.xlu0
    %6558 = vset.pattern.permute.xlu0 0
    %6559 = vperm.xlu0 %6558, %v6510
    %v6560 = vpop.permute.xlu0 %6559
    %6562 = vset.pattern.permute.xlu0 0
    %6563 = vperm.xlu0 %6562, %v6515
    %v6564 = vpop.permute.xlu0 %6563
    %v6566 = vlaneseq
    %v6567 = vshrl.u32 %v6566, 7
    %v6568 = vsub.s32 0, %v6567
    %v6569 = vrot.slane %v6542, %v6568
    %v6570 = vadd.f32 %v6560, %v6569
    %v6571 = vadd.f32 %v6564, %v6569
    %vm6572 = vcmp.gt.f32.partialorder %v6570, 0.0
    %vm6573 = vcmp.gt.f32.partialorder %v6571, 0.0
    %v6574 = vmul.f32 %v6570, 0.2
    %v6575 = vmul.f32 %v6571, 0.2
    %v6576 = vsel %vm6572, %v6570, %v6574
    %v6577 = vsel %vm6573, %v6571, %v6575
    %v6578 = vsel %vm5372, %v6576, -1e+09
    %v6579 = vsel %vm5373, %v6577, -1e+09
    %v6580 = vsel %vm5846, %v6578, -inf
    %6581 = vmax.xlane.f32.xlu0 %v6580
    %v6582 = vpop.xlane.xlu0 %6581
    %v6583 = vsel %vm5846, %v6579, -inf
    %6584 = vmax.xlane.f32.xlu0 %v6583
    %v6585 = vpop.xlane.xlu0 %6584
    %v6586 = vsub.f32 %v6578, %v6582
    %v6587 = vsub.f32 %v6579, %v6585
    %v6588 = vmul.f32 %v6586, 1.442695
    %v6589 = vpow.pop %v6588
    %v6590 = vmul.f32 %v6587, 1.442695
    %v6591 = vpow.pop %v6590
    %v6592 = vsel %vm5846, %v6589, 0.0
    %6593 = vadd.xlane.f32.xlu0 %v6592
    %v6594 = vpop.xlane.xlu0 %6593
    %v6595 = vsel %vm5846, %v6591, 0.0
    %6596 = vadd.xlane.f32.xlu0 %v6595
    %v6597 = vpop.xlane.xlu0 %6596
    %v6598 = vrcp.pop %v6594
    %v6599 = vmul.f32 %v6589, %v6598
    %v6600 = vrcp.pop %v6597
    %v6601 = vmul.f32 %v6591, %v6600
    %v6603 = vsel %vm5846, %v6599, 0
    %v6606 = vsel %vm5846, %v6601, 0
    %6608 = vmatprep.subr.mxu0 0.0
    %6609 = vmatpush1.msra.mxu0 0.0
    %6610 = vmatprep.subr.mxu0 0.0
    %6611 = vmatpush1.msra.mxu0 0.0
    %6612 = vmatprep.subr.mxu0 0.0
    %6613 = vmatpush1.msra.mxu0 0.0
    %6614 = vmatprep.subr.mxu0 0.0
    %6615 = vmatpush1.msra.mxu0 0.0
    %6616 = vmatprep.subr.mxu0 0.0
    %6617 = vmatpush1.msra.mxu0 0.0
    %6618 = vmatprep.subr.mxu0 0.0
    %6619 = vmatpush1.msra.mxu0 0.0
    %6620 = vmatprep.subr.mxu0 0.0
    %6621 = vmatpush1.msra.mxu0 0.0
    %6622 = vmatprep.subr.mxu0 0.0
    %6623 = vmatpush1.msra.mxu0 0.0
    %6624 = vmatprep.subr.mxu0 0.0
    %6625 = vmatpush1.msra.mxu0 0.0
    %6626 = vmatprep.subr.mxu0 0.0
    %6627 = vmatpush1.msra.mxu0 0.0
    %6628 = vmatprep.subr.mxu0 0.0
    %6629 = vmatpush1.msra.mxu0 0.0
    %6630 = vmatprep.subr.mxu0 0.0
    %6631 = vmatpush1.msra.mxu0 0.0
    %6632 = vmatprep.subr.mxu0 0.0
    %6633 = vmatpush1.msra.mxu0 0.0
    %6634 = vmatprep.subr.mxu0 0.0
    %6635 = vmatpush1.msra.mxu0 0.0
    %6636 = vmatprep.subr.mxu0 0.0
    %6637 = vmatpush1.msra.mxu0 %v6424
    %6638 = vmatprep.subr.mxu0 0.0
    %6639 = vmatpush1.msra.mxu0 %v6419
    %6640 = vmatprep.subr.mxu0 0.0
    %6641 = vmatpush2.msra.mxu0 0.0
    %6642 = vmatprep.subr.mxu0 0.0
    %6643 = vmatpush2.msra.mxu0 0.0
    %6644 = vmatprep.subr.mxu0 0.0
    %6645 = vmatpush2.msra.mxu0 0.0
    %6646 = vmatprep.subr.mxu0 0.0
    %6647 = vmatpush2.msra.mxu0 0.0
    %6648 = vmatprep.subr.mxu0 0.0
    %6649 = vmatpush2.msra.mxu0 0.0
    %6650 = vmatprep.subr.mxu0 0.0
    %6651 = vmatpush2.msra.mxu0 0.0
    %6652 = vmatprep.subr.mxu0 0.0
    %6653 = vmatpush2.msra.mxu0 0.0
    %6654 = vmatprep.subr.mxu0 0.0
    %6655 = vmatpush2.msra.mxu0 0.0
    %6656 = vmatprep.subr.mxu0 0.0
    %6657 = vmatpush2.msra.mxu0 0.0
    %6658 = vmatprep.subr.mxu0 0.0
    %6659 = vmatpush2.msra.mxu0 0.0
    %6660 = vmatprep.subr.mxu0 0.0
    %6661 = vmatpush2.msra.mxu0 0.0
    %6662 = vmatprep.subr.mxu0 0.0
    %6663 = vmatpush2.msra.mxu0 0.0
    %6664 = vmatprep.subr.mxu0 0.0
    %6665 = vmatpush2.msra.mxu0 0.0
    %6666 = vmatprep.subr.mxu0 0.0
    %6667 = vmatpush2.msra.mxu0 0.0
    %6668 = vmatprep.subr.mxu0 0.0
    %6669 = vmatpush2.msra.mxu0 0.0
    %6670 = vmatprep.subr.mxu0 0.0
    %6671 = vmatpush2.msra.mxu0 0.0
    %6672 = vmatprep.mubr.f32.mxu0 0.0
    %6673 = vmatmul.mubr.f32.gmra.mxu0 %v6603
    %v6674 = vpop.f32.mrf.mxu0
    %v6675 = vadd.f32 0.0, %v6674
    %v6676 = vpop.f32.mrf.mxu0
    %6677 = vmatprep.mubr.f32.mxu0 0.0
    %6678 = vmatmul.mubr.f32.gmra.mxu0 %v6606
    %v6679 = vpop.f32.mrf.mxu0
    %v6680 = vadd.f32 0.0, %v6679
    %v6681 = vpop.f32.mrf.mxu0
    %6682 = vdwg.mxu0
    %vm6683 = vcmp.gt.f32.partialorder %v6675, 0.0
    %vm6684 = vcmp.gt.f32.partialorder %v6680, 0.0
    %v6685 = vmin.f32 %v6675, 0.0
    %v6686 = vmin.f32 %v6680, 0.0
    %v6687 = vmul.f32 %v6685, 1.442695
    %v6688 = vpow.pop %v6687
    %v6689 = vmul.f32 %v6686, 1.442695
    %v6690 = vpow.pop %v6689
    %v6691 = vsub.f32 %v6688, 1.0
    %v6692 = vsub.f32 %v6690, 1.0
    %v6693 = vsel %vm6683, %v6675, %v6691
    %v6694 = vsel %vm6684, %v6680, %v6692
    %v6695 = vrot.slane %v6693, 4
    %v6696 = vadd.f32 %v6693, %v6695
    %v6697 = vrot.slane %v6696, 2
    %v6698 = vadd.f32 %v6696, %v6697
    %v6699 = vrot.slane %v6698, 1
    %v6700 = vadd.f32 %v6698, %v6699
    %v6701 = vrot.slane %v6694, 4
    %v6702 = vadd.f32 %v6694, %v6701
    %v6703 = vrot.slane %v6702, 2
    %v6704 = vadd.f32 %v6702, %v6703
    %v6705 = vrot.slane %v6704, 1
    %v6706 = vadd.f32 %v6704, %v6705
    %v6707 = vmul.f32 %v6700, %v3075
    %v6708 = vmul.f32 %v6706, %v3075
    %v6709 = vld [vmem:[%s16] sm:$0xff]
    %v6710 = vld [vmem:[%s16 + $0x8] sm:$0xff]
    %v6711 = vld [vmem:[%s16 + $0x10] sm:$0xff]
    %v6712 = vld [vmem:[%s16 + $0x18] sm:$0xff]
    %v6713 = vld [vmem:[%s16 + $0x20] sm:$0xff]
    %v6714 = vld [vmem:[%s16 + $0x28] sm:$0xff]
    %v6715 = vld [vmem:[%s16 + $0x30] sm:$0xff]
    %v6716 = vld [vmem:[%s16 + $0x38] sm:$0xff]
    %v6717 = vld [vmem:[%s16 + $0x40] sm:$0xff]
    %v6718 = vld [vmem:[%s16 + $0x48] sm:$0xff]
    %v6719 = vld [vmem:[%s16 + $0x50] sm:$0xff]
    %v6720 = vld [vmem:[%s16 + $0x58] sm:$0xff]
    %v6721 = vld [vmem:[%s16 + $0x60] sm:$0xff]
    %v6722 = vld [vmem:[%s16 + $0x68] sm:$0xff]
    %v6723 = vld [vmem:[%s16 + $0x70] sm:$0xff]
    %v6724 = vld [vmem:[%s16 + $0x78] sm:$0xff]
    %v6725 = vld [vmem:[#allocation9] sm:$0x3]
    %v6726 = vld [vmem:[#allocation22] sm:$0x3]
    %vm6727 = vcmask 15360
    %v6729 = vsel %vm6727, %v6725, 0
    %v6732 = vsel %vm365, %v6726, 0
    %6734 = vmatprep.subr.mxu0 0.0
    %6735 = vmatpush1.msra.mxu0 0.0
    %6736 = vmatprep.subr.mxu0 0.0
    %6737 = vmatpush1.msra.mxu0 0.0
    %6738 = vmatprep.subr.mxu0 0.0
    %6739 = vmatpush1.msra.mxu0 0.0
    %6740 = vmatprep.subr.mxu0 0.0
    %6741 = vmatpush1.msra.mxu0 0.0
    %6742 = vmatprep.subr.mxu0 0.0
    %6743 = vmatpush1.msra.mxu0 0.0
    %6744 = vmatprep.subr.mxu0 0.0
    %6745 = vmatpush1.msra.mxu0 0.0
    %6746 = vmatprep.subr.mxu0 0.0
    %6747 = vmatpush1.msra.mxu0 0.0
    %6748 = vmatprep.subr.mxu0 0.0
    %6749 = vmatpush1.msra.mxu0 0.0
    %6750 = vmatprep.subr.mxu0 0.0
    %6751 = vmatpush1.msra.mxu0 0.0
    %6752 = vmatprep.subr.mxu0 0.0
    %6753 = vmatpush1.msra.mxu0 0.0
    %6754 = vmatprep.subr.mxu0 0.0
    %6755 = vmatpush1.msra.mxu0 0.0
    %6756 = vmatprep.subr.mxu0 0.0
    %6757 = vmatpush1.msra.mxu0 0.0
    %6758 = vmatprep.subr.mxu0 0.0
    %6759 = vmatpush1.msra.mxu0 0.0
    %6760 = vmatprep.subr.mxu0 0.0
    %6761 = vmatpush1.msra.mxu0 0.0
    %6762 = vmatprep.subr.mxu0 0.0
    %6763 = vmatpush1.msra.mxu0 0.0
    %6764 = vmatprep.subr.mxu0 0.0
    %6765 = vmatpush1.msra.mxu0 %v6732
    %6766 = vmatprep.subr.mxu0 0.0
    %6767 = vmatpush2.msra.mxu0 0.0
    %6768 = vmatprep.subr.mxu0 0.0
    %6769 = vmatpush2.msra.mxu0 0.0
    %6770 = vmatprep.subr.mxu0 0.0
    %6771 = vmatpush2.msra.mxu0 0.0
    %6772 = vmatprep.subr.mxu0 0.0
    %6773 = vmatpush2.msra.mxu0 0.0
    %6774 = vmatprep.subr.mxu0 0.0
    %6775 = vmatpush2.msra.mxu0 0.0
    %6776 = vmatprep.subr.mxu0 0.0
    %6777 = vmatpush2.msra.mxu0 0.0
    %6778 = vmatprep.subr.mxu0 0.0
    %6779 = vmatpush2.msra.mxu0 0.0
    %6780 = vmatprep.subr.mxu0 0.0
    %6781 = vmatpush2.msra.mxu0 0.0
    %6782 = vmatprep.subr.mxu0 0.0
    %6783 = vmatpush2.msra.mxu0 0.0
    %6784 = vmatprep.subr.mxu0 0.0
    %6785 = vmatpush2.msra.mxu0 0.0
    %6786 = vmatprep.subr.mxu0 0.0
    %6787 = vmatpush2.msra.mxu0 0.0
    %6788 = vmatprep.subr.mxu0 0.0
    %6789 = vmatpush2.msra.mxu0 0.0
    %6790 = vmatprep.subr.mxu0 0.0
    %6791 = vmatpush2.msra.mxu0 0.0
    %6792 = vmatprep.subr.mxu0 0.0
    %6793 = vmatpush2.msra.mxu0 0.0
    %6794 = vmatprep.subr.mxu0 0.0
    %6795 = vmatpush2.msra.mxu0 0.0
    %6796 = vmatprep.subr.mxu0 0.0
    %6797 = vmatpush2.msra.mxu0 0.0
    %6798 = vmatprep.mubr.f32.mxu0 0.0
    %6799 = vmatmul.mubr.f32.gmra.mxu0 %v6729
    %v6800 = vpop.f32.mrf.mxu0
    %v6801 = vadd.f32 0.0, %v6800
    %v6802 = vpop.f32.mrf.mxu0
    %6803 = vdwg.mxu0
    %v6806 = vsel %vm3285, %v6708, %v6707
    %6808 = vmatprep.subr.mxu0 0.0
    %6809 = vmatpush1.msra.mxu0 %v6724
    %6810 = vmatprep.subr.mxu0 0.0
    %6811 = vmatpush1.msra.mxu0 %v6723
    %6812 = vmatprep.subr.mxu0 0.0
    %6813 = vmatpush1.msra.mxu0 %v6722
    %6814 = vmatprep.subr.mxu0 0.0
    %6815 = vmatpush1.msra.mxu0 %v6721
    %6816 = vmatprep.subr.mxu0 0.0
    %6817 = vmatpush1.msra.mxu0 %v6720
    %6818 = vmatprep.subr.mxu0 0.0
    %6819 = vmatpush1.msra.mxu0 %v6719
    %6820 = vmatprep.subr.mxu0 0.0
    %6821 = vmatpush1.msra.mxu0 %v6718
    %6822 = vmatprep.subr.mxu0 0.0
    %6823 = vmatpush1.msra.mxu0 %v6717
    %6824 = vmatprep.subr.mxu0 0.0
    %6825 = vmatpush1.msra.mxu0 %v6716
    %6826 = vmatprep.subr.mxu0 0.0
    %6827 = vmatpush1.msra.mxu0 %v6715
    %6828 = vmatprep.subr.mxu0 0.0
    %6829 = vmatpush1.msra.mxu0 %v6714
    %6830 = vmatprep.subr.mxu0 0.0
    %6831 = vmatpush1.msra.mxu0 %v6713
    %6832 = vmatprep.subr.mxu0 0.0
    %6833 = vmatpush1.msra.mxu0 %v6712
    %6834 = vmatprep.subr.mxu0 0.0
    %6835 = vmatpush1.msra.mxu0 %v6711
    %6836 = vmatprep.subr.mxu0 0.0
    %6837 = vmatpush1.msra.mxu0 %v6710
    %6838 = vmatprep.subr.mxu0 0.0
    %6839 = vmatpush1.msra.mxu0 %v6709
    %6840 = vmatprep.subr.mxu0 0.0
    %6841 = vmatpush2.msra.mxu0 0.0
    %6842 = vmatprep.subr.mxu0 0.0
    %6843 = vmatpush2.msra.mxu0 0.0
    %6844 = vmatprep.subr.mxu0 0.0
    %6845 = vmatpush2.msra.mxu0 0.0
    %6846 = vmatprep.subr.mxu0 0.0
    %6847 = vmatpush2.msra.mxu0 0.0
    %6848 = vmatprep.subr.mxu0 0.0
    %6849 = vmatpush2.msra.mxu0 0.0
    %6850 = vmatprep.subr.mxu0 0.0
    %6851 = vmatpush2.msra.mxu0 0.0
    %6852 = vmatprep.subr.mxu0 0.0
    %6853 = vmatpush2.msra.mxu0 0.0
    %6854 = vmatprep.subr.mxu0 0.0
    %6855 = vmatpush2.msra.mxu0 0.0
    %6856 = vmatprep.subr.mxu0 0.0
    %6857 = vmatpush2.msra.mxu0 0.0
    %6858 = vmatprep.subr.mxu0 0.0
    %6859 = vmatpush2.msra.mxu0 0.0
    %6860 = vmatprep.subr.mxu0 0.0
    %6861 = vmatpush2.msra.mxu0 0.0
    %6862 = vmatprep.subr.mxu0 0.0
    %6863 = vmatpush2.msra.mxu0 0.0
    %6864 = vmatprep.subr.mxu0 0.0
    %6865 = vmatpush2.msra.mxu0 0.0
    %6866 = vmatprep.subr.mxu0 0.0
    %6867 = vmatpush2.msra.mxu0 0.0
    %6868 = vmatprep.subr.mxu0 0.0
    %6869 = vmatpush2.msra.mxu0 0.0
    %6870 = vmatprep.subr.mxu0 0.0
    %6871 = vmatpush2.msra.mxu0 0.0
    %6872 = vmatprep.mubr.f32.mxu0 0.0
    %6873 = vmatmul.mubr.f32.gmra.mxu0 %v6806
    %v6874 = vpop.f32.mrf.mxu0
    %v6875 = vadd.f32 %v6801, %v6874
    %v6876 = vpop.f32.mrf.mxu0
    %6877 = vdwg.mxu0
    %v6878 = vld [vmem:[#allocation25 + $0x12] sm:$0x1]
    %v6880 = vlaneseq
    %v6881 = vshrl.u32 %v6880, 7
    %v6882 = vsub.s32 0, %v6881
    %v6883 = vrot.slane %v6878, %v6882
    %v6885 = vadd.f32 %v6875, %v6883
    %v6886 = vmax.f32 %v6885, 0.0
    %s6887 = smul.u32 4, 256
    %s6888 = smul.u32 %s6887, 2
    %s6889 = sshll.u32 %s6888, 4
    %6890 = dma.done [#allocation3], %s6889
    %v6891 = vld [vmem:[#allocation24] sm:$0xff]
    %v6892 = vld [vmem:[#allocation24 + $0x8] sm:$0xff]
    %v6893 = vld [vmem:[#allocation24 + $0x10] sm:$0xff]
    %v6894 = vld [vmem:[#allocation24 + $0x18] sm:$0xff]
    %v6895 = vld [vmem:[#allocation24 + $0x20] sm:$0xff]
    %v6896 = vld [vmem:[#allocation24 + $0x28] sm:$0xff]
    %v6897 = vld [vmem:[#allocation24 + $0x30] sm:$0xff]
    %v6898 = vld [vmem:[#allocation24 + $0x38] sm:$0xff]
    %v6899 = vld [vmem:[#allocation24 + $0x40] sm:$0xff]
    %v6900 = vld [vmem:[#allocation24 + $0x48] sm:$0xff]
    %v6901 = vld [vmem:[#allocation24 + $0x50] sm:$0xff]
    %v6902 = vld [vmem:[#allocation24 + $0x58] sm:$0xff]
    %v6903 = vld [vmem:[#allocation24 + $0x60] sm:$0xff]
    %v6904 = vld [vmem:[#allocation24 + $0x68] sm:$0xff]
    %v6905 = vld [vmem:[#allocation24 + $0x70] sm:$0xff]
    %v6906 = vld [vmem:[#allocation24 + $0x78] sm:$0xff]
    %v6907 = vld [vmem:[#allocation7] sm:$0xff]
    %v6908 = vld [vmem:[#allocation7 + $0x8] sm:$0xff]
    %v6909 = vld [vmem:[#allocation7 + $0x10] sm:$0xff]
    %v6910 = vld [vmem:[#allocation7 + $0x18] sm:$0xff]
    %v6915 = vcombine.high %v6907, %v6907
    %v6917 = vunpack.c.l.s4 1983009808
    %v6918 = vunpack.c.0.s8 %v6917
    %v6919 = vlaneseq
    %v6920 = vshrl.u32 %v6919, 7
    %v6921 = vsub.s32 %v6918, %v6920
    %v6922 = vrot.slane %v6907, %v6921
    %v6924 = vunpack.c.l.s4 1983009808
    %v6925 = vunpack.c.0.s8 %v6924
    %v6926 = vlaneseq
    %v6927 = vshrl.u32 %v6926, 7
    %v6928 = vsub.s32 %v6925, %v6927
    %v6929 = vrot.slane %v6915, %v6928
    %v6930 = vcombine.high %v6922, %v6922
    %v6931 = vcombine.high %v6929, %v6929
    %v6932 = vcombine.high %v6908, %v6908
    %v6934 = vunpack.c.l.s4 1983009808
    %v6935 = vunpack.c.0.s8 %v6934
    %v6936 = vlaneseq
    %v6937 = vshrl.u32 %v6936, 7
    %v6938 = vsub.s32 %v6935, %v6937
    %v6939 = vrot.slane %v6908, %v6938
    %v6941 = vunpack.c.l.s4 1983009808
    %v6942 = vunpack.c.0.s8 %v6941
    %v6943 = vlaneseq
    %v6944 = vshrl.u32 %v6943, 7
    %v6945 = vsub.s32 %v6942, %v6944
    %v6946 = vrot.slane %v6932, %v6945
    %v6947 = vcombine.high %v6939, %v6939
    %v6948 = vcombine.high %v6946, %v6946
    %v6949 = vcombine.high %v6909, %v6909
    %v6951 = vunpack.c.l.s4 1983009808
    %v6952 = vunpack.c.0.s8 %v6951
    %v6953 = vlaneseq
    %v6954 = vshrl.u32 %v6953, 7
    %v6955 = vsub.s32 %v6952, %v6954
    %v6956 = vrot.slane %v6909, %v6955
    %v6958 = vunpack.c.l.s4 1983009808
    %v6959 = vunpack.c.0.s8 %v6958
    %v6960 = vlaneseq
    %v6961 = vshrl.u32 %v6960, 7
    %v6962 = vsub.s32 %v6959, %v6961
    %v6963 = vrot.slane %v6949, %v6962
    %v6964 = vcombine.high %v6956, %v6956
    %v6965 = vcombine.high %v6963, %v6963
    %v6966 = vcombine.high %v6910, %v6910
    %v6968 = vunpack.c.l.s4 1983009808
    %v6969 = vunpack.c.0.s8 %v6968
    %v6970 = vlaneseq
    %v6971 = vshrl.u32 %v6970, 7
    %v6972 = vsub.s32 %v6969, %v6971
    %v6973 = vrot.slane %v6910, %v6972
    %v6975 = vunpack.c.l.s4 1983009808
    %v6976 = vunpack.c.0.s8 %v6975
    %v6977 = vlaneseq
    %v6978 = vshrl.u32 %v6977, 7
    %v6979 = vsub.s32 %v6976, %v6978
    %v6980 = vrot.slane %v6966, %v6979
    %v6981 = vcombine.high %v6973, %v6973
    %v6982 = vcombine.high %v6980, %v6980
    %v6999 = vpack.c.bf16 %v6922, %v6922
    %v7000 = vpack.c.bf16 %v6930, %v6930
    %v7001 = vpack.c.bf16 %v6929, %v6929
    %v7002 = vpack.c.bf16 %v6931, %v6931
    %v7003 = vpack.c.bf16 %v6939, %v6939
    %v7004 = vpack.c.bf16 %v6947, %v6947
    %v7005 = vpack.c.bf16 %v6946, %v6946
    %v7006 = vpack.c.bf16 %v6948, %v6948
    %v7007 = vpack.c.bf16 %v6956, %v6956
    %v7008 = vpack.c.bf16 %v6964, %v6964
    %v7009 = vpack.c.bf16 %v6963, %v6963
    %v7010 = vpack.c.bf16 %v6965, %v6965
    %v7011 = vpack.c.bf16 %v6973, %v6973
    %v7012 = vpack.c.bf16 %v6981, %v6981
    %v7013 = vpack.c.bf16 %v6980, %v6980
    %v7014 = vpack.c.bf16 %v6982, %v6982
    %v7015 = vld [vmem:[#allocation2] sm:$0xff]
    %v7016 = vld [vmem:[#allocation2 + $0x8] sm:$0xff]
    %v7017 = vld [vmem:[#allocation2 + $0x10] sm:$0xff]
    %v7018 = vld [vmem:[#allocation2 + $0x18] sm:$0xff]
    %v7019 = vld [vmem:[#allocation2 + $0x20] sm:$0xff]
    %v7020 = vld [vmem:[#allocation2 + $0x28] sm:$0xff]
    %v7021 = vld [vmem:[#allocation2 + $0x30] sm:$0xff]
    %v7022 = vld [vmem:[#allocation2 + $0x38] sm:$0xff]
    %v7023 = vld [vmem:[#allocation2 + $0x40] sm:$0xff]
    %v7024 = vld [vmem:[#allocation2 + $0x48] sm:$0xff]
    %v7025 = vld [vmem:[#allocation2 + $0x50] sm:$0xff]
    %v7026 = vld [vmem:[#allocation2 + $0x58] sm:$0xff]
    %v7027 = vld [vmem:[#allocation2 + $0x60] sm:$0xff]
    %v7028 = vld [vmem:[#allocation2 + $0x68] sm:$0xff]
    %v7029 = vld [vmem:[#allocation2 + $0x70] sm:$0xff]
    %v7030 = vld [vmem:[#allocation2 + $0x78] sm:$0xff]
    %v7031 = vld [vmem:[#allocation2 + $0x80] sm:$0xff]
    %v7032 = vld [vmem:[#allocation2 + $0x88] sm:$0xff]
    %v7033 = vld [vmem:[#allocation2 + $0x90] sm:$0xff]
    %v7034 = vld [vmem:[#allocation2 + $0x98] sm:$0xff]
    %v7035 = vld [vmem:[#allocation2 + $0xa0] sm:$0xff]
    %v7036 = vld [vmem:[#allocation2 + $0xa8] sm:$0xff]
    %v7037 = vld [vmem:[#allocation2 + $0xb0] sm:$0xff]
    %v7038 = vld [vmem:[#allocation2 + $0xb8] sm:$0xff]
    %v7039 = vld [vmem:[#allocation2 + $0xc0] sm:$0xff]
    %v7040 = vld [vmem:[#allocation2 + $0xc8] sm:$0xff]
    %v7041 = vld [vmem:[#allocation2 + $0xd0] sm:$0xff]
    %v7042 = vld [vmem:[#allocation2 + $0xd8] sm:$0xff]
    %v7043 = vld [vmem:[#allocation2 + $0xe0] sm:$0xff]
    %v7044 = vld [vmem:[#allocation2 + $0xe8] sm:$0xff]
    %v7045 = vld [vmem:[#allocation2 + $0xf0] sm:$0xff]
    %v7046 = vld [vmem:[#allocation2 + $0xf8] sm:$0xff]
    %v7047 = vld [vmem:[#allocation2 + $0x100] sm:$0xff]
    %v7048 = vld [vmem:[#allocation2 + $0x108] sm:$0xff]
    %v7049 = vld [vmem:[#allocation2 + $0x110] sm:$0xff]
    %v7050 = vld [vmem:[#allocation2 + $0x118] sm:$0xff]
    %v7051 = vld [vmem:[#allocation2 + $0x120] sm:$0xff]
    %v7052 = vld [vmem:[#allocation2 + $0x128] sm:$0xff]
    %v7053 = vld [vmem:[#allocation2 + $0x130] sm:$0xff]
    %v7054 = vld [vmem:[#allocation2 + $0x138] sm:$0xff]
    %v7055 = vld [vmem:[#allocation2 + $0x140] sm:$0xff]
    %v7056 = vld [vmem:[#allocation2 + $0x148] sm:$0xff]
    %v7057 = vld [vmem:[#allocation2 + $0x150] sm:$0xff]
    %v7058 = vld [vmem:[#allocation2 + $0x158] sm:$0xff]
    %v7059 = vld [vmem:[#allocation2 + $0x160] sm:$0xff]
    %v7060 = vld [vmem:[#allocation2 + $0x168] sm:$0xff]
    %v7061 = vld [vmem:[#allocation2 + $0x170] sm:$0xff]
    %v7062 = vld [vmem:[#allocation2 + $0x178] sm:$0xff]
    %v7063 = vld [vmem:[#allocation2 + $0x180] sm:$0xff]
    %v7064 = vld [vmem:[#allocation2 + $0x188] sm:$0xff]
    %v7065 = vld [vmem:[#allocation2 + $0x190] sm:$0xff]
    %v7066 = vld [vmem:[#allocation2 + $0x198] sm:$0xff]
    %v7067 = vld [vmem:[#allocation2 + $0x1a0] sm:$0xff]
    %v7068 = vld [vmem:[#allocation2 + $0x1a8] sm:$0xff]
    %v7069 = vld [vmem:[#allocation2 + $0x1b0] sm:$0xff]
    %v7070 = vld [vmem:[#allocation2 + $0x1b8] sm:$0xff]
    %v7071 = vld [vmem:[#allocation2 + $0x1c0] sm:$0xff]
    %v7072 = vld [vmem:[#allocation2 + $0x1c8] sm:$0xff]
    %v7073 = vld [vmem:[#allocation2 + $0x1d0] sm:$0xff]
    %v7074 = vld [vmem:[#allocation2 + $0x1d8] sm:$0xff]
    %v7075 = vld [vmem:[#allocation2 + $0x1e0] sm:$0xff]
    %v7076 = vld [vmem:[#allocation2 + $0x1e8] sm:$0xff]
    %v7077 = vld [vmem:[#allocation2 + $0x1f0] sm:$0xff]
    %v7078 = vld [vmem:[#allocation2 + $0x1f8] sm:$0xff]
    %v7079 = vld [vmem:[#allocation2 + $0x200] sm:$0xff]
    %v7080 = vld [vmem:[#allocation2 + $0x208] sm:$0xff]
    %v7081 = vld [vmem:[#allocation2 + $0x210] sm:$0xff]
    %v7082 = vld [vmem:[#allocation2 + $0x218] sm:$0xff]
    %v7083 = vld [vmem:[#allocation2 + $0x220] sm:$0xff]
    %v7084 = vld [vmem:[#allocation2 + $0x228] sm:$0xff]
    %v7085 = vld [vmem:[#allocation2 + $0x230] sm:$0xff]
    %v7086 = vld [vmem:[#allocation2 + $0x238] sm:$0xff]
    %v7087 = vld [vmem:[#allocation2 + $0x240] sm:$0xff]
    %v7088 = vld [vmem:[#allocation2 + $0x248] sm:$0xff]
    %v7089 = vld [vmem:[#allocation2 + $0x250] sm:$0xff]
    %v7090 = vld [vmem:[#allocation2 + $0x258] sm:$0xff]
    %v7091 = vld [vmem:[#allocation2 + $0x260] sm:$0xff]
    %v7092 = vld [vmem:[#allocation2 + $0x268] sm:$0xff]
    %v7093 = vld [vmem:[#allocation2 + $0x270] sm:$0xff]
    %v7094 = vld [vmem:[#allocation2 + $0x278] sm:$0xff]
    %v7095 = vld [vmem:[#allocation2 + $0x280] sm:$0xff]
    %v7096 = vld [vmem:[#allocation2 + $0x288] sm:$0xff]
    %v7097 = vld [vmem:[#allocation2 + $0x290] sm:$0xff]
    %v7098 = vld [vmem:[#allocation2 + $0x298] sm:$0xff]
    %v7099 = vld [vmem:[#allocation2 + $0x2a0] sm:$0xff]
    %v7100 = vld [vmem:[#allocation2 + $0x2a8] sm:$0xff]
    %v7101 = vld [vmem:[#allocation2 + $0x2b0] sm:$0xff]
    %v7102 = vld [vmem:[#allocation2 + $0x2b8] sm:$0xff]
    %v7103 = vld [vmem:[#allocation2 + $0x2c0] sm:$0xff]
    %v7104 = vld [vmem:[#allocation2 + $0x2c8] sm:$0xff]
    %v7105 = vld [vmem:[#allocation2 + $0x2d0] sm:$0xff]
    %v7106 = vld [vmem:[#allocation2 + $0x2d8] sm:$0xff]
    %v7107 = vld [vmem:[#allocation2 + $0x2e0] sm:$0xff]
    %v7108 = vld [vmem:[#allocation2 + $0x2e8] sm:$0xff]
    %v7109 = vld [vmem:[#allocation2 + $0x2f0] sm:$0xff]
    %v7110 = vld [vmem:[#allocation2 + $0x2f8] sm:$0xff]
    %v7111 = vld [vmem:[#allocation2 + $0x300] sm:$0xff]
    %v7112 = vld [vmem:[#allocation2 + $0x308] sm:$0xff]
    %v7113 = vld [vmem:[#allocation2 + $0x310] sm:$0xff]
    %v7114 = vld [vmem:[#allocation2 + $0x318] sm:$0xff]
    %v7115 = vld [vmem:[#allocation2 + $0x320] sm:$0xff]
    %v7116 = vld [vmem:[#allocation2 + $0x328] sm:$0xff]
    %v7117 = vld [vmem:[#allocation2 + $0x330] sm:$0xff]
    %v7118 = vld [vmem:[#allocation2 + $0x338] sm:$0xff]
    %v7119 = vld [vmem:[#allocation2 + $0x340] sm:$0xff]
    %v7120 = vld [vmem:[#allocation2 + $0x348] sm:$0xff]
    %v7121 = vld [vmem:[#allocation2 + $0x350] sm:$0xff]
    %v7122 = vld [vmem:[#allocation2 + $0x358] sm:$0xff]
    %v7123 = vld [vmem:[#allocation2 + $0x360] sm:$0xff]
    %v7124 = vld [vmem:[#allocation2 + $0x368] sm:$0xff]
    %v7125 = vld [vmem:[#allocation2 + $0x370] sm:$0xff]
    %v7126 = vld [vmem:[#allocation2 + $0x378] sm:$0xff]
    %v7127 = vld [vmem:[#allocation2 + $0x380] sm:$0xff]
    %v7128 = vld [vmem:[#allocation2 + $0x388] sm:$0xff]
    %v7129 = vld [vmem:[#allocation2 + $0x390] sm:$0xff]
    %v7130 = vld [vmem:[#allocation2 + $0x398] sm:$0xff]
    %v7131 = vld [vmem:[#allocation2 + $0x3a0] sm:$0xff]
    %v7132 = vld [vmem:[#allocation2 + $0x3a8] sm:$0xff]
    %v7133 = vld [vmem:[#allocation2 + $0x3b0] sm:$0xff]
    %v7134 = vld [vmem:[#allocation2 + $0x3b8] sm:$0xff]
    %v7135 = vld [vmem:[#allocation2 + $0x3c0] sm:$0xff]
    %v7136 = vld [vmem:[#allocation2 + $0x3c8] sm:$0xff]
    %v7137 = vld [vmem:[#allocation2 + $0x3d0] sm:$0xff]
    %v7138 = vld [vmem:[#allocation2 + $0x3d8] sm:$0xff]
    %v7139 = vld [vmem:[#allocation2 + $0x3e0] sm:$0xff]
    %v7140 = vld [vmem:[#allocation2 + $0x3e8] sm:$0xff]
    %v7141 = vld [vmem:[#allocation2 + $0x3f0] sm:$0xff]
    %v7142 = vld [vmem:[#allocation2 + $0x3f8] sm:$0xff]
    %v7143 = vld [vmem:[#allocation2 + $0x400] sm:$0xff]
    %v7144 = vld [vmem:[#allocation2 + $0x408] sm:$0xff]
    %v7145 = vld [vmem:[#allocation2 + $0x410] sm:$0xff]
    %v7146 = vld [vmem:[#allocation2 + $0x418] sm:$0xff]
    %v7147 = vld [vmem:[#allocation2 + $0x420] sm:$0xff]
    %v7148 = vld [vmem:[#allocation2 + $0x428] sm:$0xff]
    %v7149 = vld [vmem:[#allocation2 + $0x430] sm:$0xff]
    %v7150 = vld [vmem:[#allocation2 + $0x438] sm:$0xff]
    %v7151 = vld [vmem:[#allocation2 + $0x440] sm:$0xff]
    %v7152 = vld [vmem:[#allocation2 + $0x448] sm:$0xff]
    %v7153 = vld [vmem:[#allocation2 + $0x450] sm:$0xff]
    %v7154 = vld [vmem:[#allocation2 + $0x458] sm:$0xff]
    %v7155 = vld [vmem:[#allocation2 + $0x460] sm:$0xff]
    %v7156 = vld [vmem:[#allocation2 + $0x468] sm:$0xff]
    %v7157 = vld [vmem:[#allocation2 + $0x470] sm:$0xff]
    %v7158 = vld [vmem:[#allocation2 + $0x478] sm:$0xff]
    %v7159 = vld [vmem:[#allocation2 + $0x480] sm:$0xff]
    %v7160 = vld [vmem:[#allocation2 + $0x488] sm:$0xff]
    %v7161 = vld [vmem:[#allocation2 + $0x490] sm:$0xff]
    %v7162 = vld [vmem:[#allocation2 + $0x498] sm:$0xff]
    %v7163 = vld [vmem:[#allocation2 + $0x4a0] sm:$0xff]
    %v7164 = vld [vmem:[#allocation2 + $0x4a8] sm:$0xff]
    %v7165 = vld [vmem:[#allocation2 + $0x4b0] sm:$0xff]
    %v7166 = vld [vmem:[#allocation2 + $0x4b8] sm:$0xff]
    %v7167 = vld [vmem:[#allocation2 + $0x4c0] sm:$0xff]
    %v7168 = vld [vmem:[#allocation2 + $0x4c8] sm:$0xff]
    %v7169 = vld [vmem:[#allocation2 + $0x4d0] sm:$0xff]
    %v7170 = vld [vmem:[#allocation2 + $0x4d8] sm:$0xff]
    %v7171 = vld [vmem:[#allocation2 + $0x4e0] sm:$0xff]
    %v7172 = vld [vmem:[#allocation2 + $0x4e8] sm:$0xff]
    %v7173 = vld [vmem:[#allocation2 + $0x4f0] sm:$0xff]
    %v7174 = vld [vmem:[#allocation2 + $0x4f8] sm:$0xff]
    %v7175 = vld [vmem:[#allocation2 + $0x500] sm:$0xff]
    %v7176 = vld [vmem:[#allocation2 + $0x508] sm:$0xff]
    %v7177 = vld [vmem:[#allocation2 + $0x510] sm:$0xff]
    %v7178 = vld [vmem:[#allocation2 + $0x518] sm:$0xff]
    %v7179 = vld [vmem:[#allocation2 + $0x520] sm:$0xff]
    %v7180 = vld [vmem:[#allocation2 + $0x528] sm:$0xff]
    %v7181 = vld [vmem:[#allocation2 + $0x530] sm:$0xff]
    %v7182 = vld [vmem:[#allocation2 + $0x538] sm:$0xff]
    %v7183 = vld [vmem:[#allocation2 + $0x540] sm:$0xff]
    %v7184 = vld [vmem:[#allocation2 + $0x548] sm:$0xff]
    %v7185 = vld [vmem:[#allocation2 + $0x550] sm:$0xff]
    %v7186 = vld [vmem:[#allocation2 + $0x558] sm:$0xff]
    %v7187 = vld [vmem:[#allocation2 + $0x560] sm:$0xff]
    %v7188 = vld [vmem:[#allocation2 + $0x568] sm:$0xff]
    %v7189 = vld [vmem:[#allocation2 + $0x570] sm:$0xff]
    %v7190 = vld [vmem:[#allocation2 + $0x578] sm:$0xff]
    %v7191 = vld [vmem:[#allocation2 + $0x580] sm:$0xff]
    %v7192 = vld [vmem:[#allocation2 + $0x588] sm:$0xff]
    %v7193 = vld [vmem:[#allocation2 + $0x590] sm:$0xff]
    %v7194 = vld [vmem:[#allocation2 + $0x598] sm:$0xff]
    %v7195 = vld [vmem:[#allocation2 + $0x5a0] sm:$0xff]
    %v7196 = vld [vmem:[#allocation2 + $0x5a8] sm:$0xff]
    %v7197 = vld [vmem:[#allocation2 + $0x5b0] sm:$0xff]
    %v7198 = vld [vmem:[#allocation2 + $0x5b8] sm:$0xff]
    %v7199 = vld [vmem:[#allocation2 + $0x5c0] sm:$0xff]
    %v7200 = vld [vmem:[#allocation2 + $0x5c8] sm:$0xff]
    %v7201 = vld [vmem:[#allocation2 + $0x5d0] sm:$0xff]
    %v7202 = vld [vmem:[#allocation2 + $0x5d8] sm:$0xff]
    %v7203 = vld [vmem:[#allocation2 + $0x5e0] sm:$0xff]
    %v7204 = vld [vmem:[#allocation2 + $0x5e8] sm:$0xff]
    %v7205 = vld [vmem:[#allocation2 + $0x5f0] sm:$0xff]
    %v7206 = vld [vmem:[#allocation2 + $0x5f8] sm:$0xff]
    %v7207 = vld [vmem:[#allocation2 + $0x600] sm:$0xff]
    %v7208 = vld [vmem:[#allocation2 + $0x608] sm:$0xff]
    %v7209 = vld [vmem:[#allocation2 + $0x610] sm:$0xff]
    %v7210 = vld [vmem:[#allocation2 + $0x618] sm:$0xff]
    %v7211 = vld [vmem:[#allocation2 + $0x620] sm:$0xff]
    %v7212 = vld [vmem:[#allocation2 + $0x628] sm:$0xff]
    %v7213 = vld [vmem:[#allocation2 + $0x630] sm:$0xff]
    %v7214 = vld [vmem:[#allocation2 + $0x638] sm:$0xff]
    %v7215 = vld [vmem:[#allocation2 + $0x640] sm:$0xff]
    %v7216 = vld [vmem:[#allocation2 + $0x648] sm:$0xff]
    %v7217 = vld [vmem:[#allocation2 + $0x650] sm:$0xff]
    %v7218 = vld [vmem:[#allocation2 + $0x658] sm:$0xff]
    %v7219 = vld [vmem:[#allocation2 + $0x660] sm:$0xff]
    %v7220 = vld [vmem:[#allocation2 + $0x668] sm:$0xff]
    %v7221 = vld [vmem:[#allocation2 + $0x670] sm:$0xff]
    %v7222 = vld [vmem:[#allocation2 + $0x678] sm:$0xff]
    %v7223 = vld [vmem:[#allocation2 + $0x680] sm:$0xff]
    %v7224 = vld [vmem:[#allocation2 + $0x688] sm:$0xff]
    %v7225 = vld [vmem:[#allocation2 + $0x690] sm:$0xff]
    %v7226 = vld [vmem:[#allocation2 + $0x698] sm:$0xff]
    %v7227 = vld [vmem:[#allocation2 + $0x6a0] sm:$0xff]
    %v7228 = vld [vmem:[#allocation2 + $0x6a8] sm:$0xff]
    %v7229 = vld [vmem:[#allocation2 + $0x6b0] sm:$0xff]
    %v7230 = vld [vmem:[#allocation2 + $0x6b8] sm:$0xff]
    %v7231 = vld [vmem:[#allocation2 + $0x6c0] sm:$0xff]
    %v7232 = vld [vmem:[#allocation2 + $0x6c8] sm:$0xff]
    %v7233 = vld [vmem:[#allocation2 + $0x6d0] sm:$0xff]
    %v7234 = vld [vmem:[#allocation2 + $0x6d8] sm:$0xff]
    %v7235 = vld [vmem:[#allocation2 + $0x6e0] sm:$0xff]
    %v7236 = vld [vmem:[#allocation2 + $0x6e8] sm:$0xff]
    %v7237 = vld [vmem:[#allocation2 + $0x6f0] sm:$0xff]
    %v7238 = vld [vmem:[#allocation2 + $0x6f8] sm:$0xff]
    %v7239 = vld [vmem:[#allocation2 + $0x700] sm:$0xff]
    %v7240 = vld [vmem:[#allocation2 + $0x708] sm:$0xff]
    %v7241 = vld [vmem:[#allocation2 + $0x710] sm:$0xff]
    %v7242 = vld [vmem:[#allocation2 + $0x718] sm:$0xff]
    %v7243 = vld [vmem:[#allocation2 + $0x720] sm:$0xff]
    %v7244 = vld [vmem:[#allocation2 + $0x728] sm:$0xff]
    %v7245 = vld [vmem:[#allocation2 + $0x730] sm:$0xff]
    %v7246 = vld [vmem:[#allocation2 + $0x738] sm:$0xff]
    %v7247 = vld [vmem:[#allocation2 + $0x740] sm:$0xff]
    %v7248 = vld [vmem:[#allocation2 + $0x748] sm:$0xff]
    %v7249 = vld [vmem:[#allocation2 + $0x750] sm:$0xff]
    %v7250 = vld [vmem:[#allocation2 + $0x758] sm:$0xff]
    %v7251 = vld [vmem:[#allocation2 + $0x760] sm:$0xff]
    %v7252 = vld [vmem:[#allocation2 + $0x768] sm:$0xff]
    %v7253 = vld [vmem:[#allocation2 + $0x770] sm:$0xff]
    %v7254 = vld [vmem:[#allocation2 + $0x778] sm:$0xff]
    %v7255 = vld [vmem:[#allocation2 + $0x780] sm:$0xff]
    %v7256 = vld [vmem:[#allocation2 + $0x788] sm:$0xff]
    %v7257 = vld [vmem:[#allocation2 + $0x790] sm:$0xff]
    %v7258 = vld [vmem:[#allocation2 + $0x798] sm:$0xff]
    %v7259 = vld [vmem:[#allocation2 + $0x7a0] sm:$0xff]
    %v7260 = vld [vmem:[#allocation2 + $0x7a8] sm:$0xff]
    %v7261 = vld [vmem:[#allocation2 + $0x7b0] sm:$0xff]
    %v7262 = vld [vmem:[#allocation2 + $0x7b8] sm:$0xff]
    %v7263 = vld [vmem:[#allocation2 + $0x7c0] sm:$0xff]
    %v7264 = vld [vmem:[#allocation2 + $0x7c8] sm:$0xff]
    %v7265 = vld [vmem:[#allocation2 + $0x7d0] sm:$0xff]
    %v7266 = vld [vmem:[#allocation2 + $0x7d8] sm:$0xff]
    %v7267 = vld [vmem:[#allocation2 + $0x7e0] sm:$0xff]
    %v7268 = vld [vmem:[#allocation2 + $0x7e8] sm:$0xff]
    %v7269 = vld [vmem:[#allocation2 + $0x7f0] sm:$0xff]
    %v7270 = vld [vmem:[#allocation2 + $0x7f8] sm:$0xff]
    %v7527 = vunpack.c.l.b16 %v7015
    %v7528 = vunpack.c.h.b16 %v7015
    %v7529 = vunpack.c.l.b16 %v7016
    %v7530 = vunpack.c.h.b16 %v7016
    %v7531 = vunpack.c.l.b16 %v7017
    %v7532 = vunpack.c.h.b16 %v7017
    %v7533 = vunpack.c.l.b16 %v7018
    %v7534 = vunpack.c.h.b16 %v7018
    %v7535 = vunpack.c.l.b16 %v7019
    %v7536 = vunpack.c.h.b16 %v7019
    %v7537 = vunpack.c.l.b16 %v7020
    %v7538 = vunpack.c.h.b16 %v7020
    %v7539 = vunpack.c.l.b16 %v7021
    %v7540 = vunpack.c.h.b16 %v7021
    %v7541 = vunpack.c.l.b16 %v7022
    %v7542 = vunpack.c.h.b16 %v7022
    %v7543 = vunpack.c.l.b16 %v7023
    %v7544 = vunpack.c.h.b16 %v7023
    %v7545 = vunpack.c.l.b16 %v7024
    %v7546 = vunpack.c.h.b16 %v7024
    %v7547 = vunpack.c.l.b16 %v7025
    %v7548 = vunpack.c.h.b16 %v7025
    %v7549 = vunpack.c.l.b16 %v7026
    %v7550 = vunpack.c.h.b16 %v7026
    %v7551 = vunpack.c.l.b16 %v7027
    %v7552 = vunpack.c.h.b16 %v7027
    %v7553 = vunpack.c.l.b16 %v7028
    %v7554 = vunpack.c.h.b16 %v7028
    %v7555 = vunpack.c.l.b16 %v7029
    %v7556 = vunpack.c.h.b16 %v7029
    %v7557 = vunpack.c.l.b16 %v7030
    %v7558 = vunpack.c.h.b16 %v7030
    %v7559 = vunpack.c.l.b16 %v7031
    %v7560 = vunpack.c.h.b16 %v7031
    %v7561 = vunpack.c.l.b16 %v7032
    %v7562 = vunpack.c.h.b16 %v7032
    %v7563 = vunpack.c.l.b16 %v7033
    %v7564 = vunpack.c.h.b16 %v7033
    %v7565 = vunpack.c.l.b16 %v7034
    %v7566 = vunpack.c.h.b16 %v7034
    %v7567 = vunpack.c.l.b16 %v7035
    %v7568 = vunpack.c.h.b16 %v7035
    %v7569 = vunpack.c.l.b16 %v7036
    %v7570 = vunpack.c.h.b16 %v7036
    %v7571 = vunpack.c.l.b16 %v7037
    %v7572 = vunpack.c.h.b16 %v7037
    %v7573 = vunpack.c.l.b16 %v7038
    %v7574 = vunpack.c.h.b16 %v7038
    %v7575 = vunpack.c.l.b16 %v7039
    %v7576 = vunpack.c.h.b16 %v7039
    %v7577 = vunpack.c.l.b16 %v7040
    %v7578 = vunpack.c.h.b16 %v7040
    %v7579 = vunpack.c.l.b16 %v7041
    %v7580 = vunpack.c.h.b16 %v7041
    %v7581 = vunpack.c.l.b16 %v7042
    %v7582 = vunpack.c.h.b16 %v7042
    %v7583 = vunpack.c.l.b16 %v7043
    %v7584 = vunpack.c.h.b16 %v7043
    %v7585 = vunpack.c.l.b16 %v7044
    %v7586 = vunpack.c.h.b16 %v7044
    %v7587 = vunpack.c.l.b16 %v7045
    %v7588 = vunpack.c.h.b16 %v7045
    %v7589 = vunpack.c.l.b16 %v7046
    %v7590 = vunpack.c.h.b16 %v7046
    %v7591 = vunpack.c.l.b16 %v7047
    %v7592 = vunpack.c.h.b16 %v7047
    %v7593 = vunpack.c.l.b16 %v7048
    %v7594 = vunpack.c.h.b16 %v7048
    %v7595 = vunpack.c.l.b16 %v7049
    %v7596 = vunpack.c.h.b16 %v7049
    %v7597 = vunpack.c.l.b16 %v7050
    %v7598 = vunpack.c.h.b16 %v7050
    %v7599 = vunpack.c.l.b16 %v7051
    %v7600 = vunpack.c.h.b16 %v7051
    %v7601 = vunpack.c.l.b16 %v7052
    %v7602 = vunpack.c.h.b16 %v7052
    %v7603 = vunpack.c.l.b16 %v7053
    %v7604 = vunpack.c.h.b16 %v7053
    %v7605 = vunpack.c.l.b16 %v7054
    %v7606 = vunpack.c.h.b16 %v7054
    %v7607 = vunpack.c.l.b16 %v7055
    %v7608 = vunpack.c.h.b16 %v7055
    %v7609 = vunpack.c.l.b16 %v7056
    %v7610 = vunpack.c.h.b16 %v7056
    %v7611 = vunpack.c.l.b16 %v7057
    %v7612 = vunpack.c.h.b16 %v7057
    %v7613 = vunpack.c.l.b16 %v7058
    %v7614 = vunpack.c.h.b16 %v7058
    %v7615 = vunpack.c.l.b16 %v7059
    %v7616 = vunpack.c.h.b16 %v7059
    %v7617 = vunpack.c.l.b16 %v7060
    %v7618 = vunpack.c.h.b16 %v7060
    %v7619 = vunpack.c.l.b16 %v7061
    %v7620 = vunpack.c.h.b16 %v7061
    %v7621 = vunpack.c.l.b16 %v7062
    %v7622 = vunpack.c.h.b16 %v7062
    %v7623 = vunpack.c.l.b16 %v7063
    %v7624 = vunpack.c.h.b16 %v7063
    %v7625 = vunpack.c.l.b16 %v7064
    %v7626 = vunpack.c.h.b16 %v7064
    %v7627 = vunpack.c.l.b16 %v7065
    %v7628 = vunpack.c.h.b16 %v7065
    %v7629 = vunpack.c.l.b16 %v7066
    %v7630 = vunpack.c.h.b16 %v7066
    %v7631 = vunpack.c.l.b16 %v7067
    %v7632 = vunpack.c.h.b16 %v7067
    %v7633 = vunpack.c.l.b16 %v7068
    %v7634 = vunpack.c.h.b16 %v7068
    %v7635 = vunpack.c.l.b16 %v7069
    %v7636 = vunpack.c.h.b16 %v7069
    %v7637 = vunpack.c.l.b16 %v7070
    %v7638 = vunpack.c.h.b16 %v7070
    %v7639 = vunpack.c.l.b16 %v7071
    %v7640 = vunpack.c.h.b16 %v7071
    %v7641 = vunpack.c.l.b16 %v7072
    %v7642 = vunpack.c.h.b16 %v7072
    %v7643 = vunpack.c.l.b16 %v7073
    %v7644 = vunpack.c.h.b16 %v7073
    %v7645 = vunpack.c.l.b16 %v7074
    %v7646 = vunpack.c.h.b16 %v7074
    %v7647 = vunpack.c.l.b16 %v7075
    %v7648 = vunpack.c.h.b16 %v7075
    %v7649 = vunpack.c.l.b16 %v7076
    %v7650 = vunpack.c.h.b16 %v7076
    %v7651 = vunpack.c.l.b16 %v7077
    %v7652 = vunpack.c.h.b16 %v7077
    %v7653 = vunpack.c.l.b16 %v7078
    %v7654 = vunpack.c.h.b16 %v7078
    %v7655 = vunpack.c.l.b16 %v7079
    %v7656 = vunpack.c.h.b16 %v7079
    %v7657 = vunpack.c.l.b16 %v7080
    %v7658 = vunpack.c.h.b16 %v7080
    %v7659 = vunpack.c.l.b16 %v7081
    %v7660 = vunpack.c.h.b16 %v7081
    %v7661 = vunpack.c.l.b16 %v7082
    %v7662 = vunpack.c.h.b16 %v7082
    %v7663 = vunpack.c.l.b16 %v7083
    %v7664 = vunpack.c.h.b16 %v7083
    %v7665 = vunpack.c.l.b16 %v7084
    %v7666 = vunpack.c.h.b16 %v7084
    %v7667 = vunpack.c.l.b16 %v7085
    %v7668 = vunpack.c.h.b16 %v7085
    %v7669 = vunpack.c.l.b16 %v7086
    %v7670 = vunpack.c.h.b16 %v7086
    %v7671 = vunpack.c.l.b16 %v7087
    %v7672 = vunpack.c.h.b16 %v7087
    %v7673 = vunpack.c.l.b16 %v7088
    %v7674 = vunpack.c.h.b16 %v7088
    %v7675 = vunpack.c.l.b16 %v7089
    %v7676 = vunpack.c.h.b16 %v7089
    %v7677 = vunpack.c.l.b16 %v7090
    %v7678 = vunpack.c.h.b16 %v7090
    %v7679 = vunpack.c.l.b16 %v7091
    %v7680 = vunpack.c.h.b16 %v7091
    %v7681 = vunpack.c.l.b16 %v7092
    %v7682 = vunpack.c.h.b16 %v7092
    %v7683 = vunpack.c.l.b16 %v7093
    %v7684 = vunpack.c.h.b16 %v7093
    %v7685 = vunpack.c.l.b16 %v7094
    %v7686 = vunpack.c.h.b16 %v7094
    %v7687 = vunpack.c.l.b16 %v7095
    %v7688 = vunpack.c.h.b16 %v7095
    %v7689 = vunpack.c.l.b16 %v7096
    %v7690 = vunpack.c.h.b16 %v7096
    %v7691 = vunpack.c.l.b16 %v7097
    %v7692 = vunpack.c.h.b16 %v7097
    %v7693 = vunpack.c.l.b16 %v7098
    %v7694 = vunpack.c.h.b16 %v7098
    %v7695 = vunpack.c.l.b16 %v7099
    %v7696 = vunpack.c.h.b16 %v7099
    %v7697 = vunpack.c.l.b16 %v7100
    %v7698 = vunpack.c.h.b16 %v7100
    %v7699 = vunpack.c.l.b16 %v7101
    %v7700 = vunpack.c.h.b16 %v7101
    %v7701 = vunpack.c.l.b16 %v7102
    %v7702 = vunpack.c.h.b16 %v7102
    %v7703 = vunpack.c.l.b16 %v7103
    %v7704 = vunpack.c.h.b16 %v7103
    %v7705 = vunpack.c.l.b16 %v7104
    %v7706 = vunpack.c.h.b16 %v7104
    %v7707 = vunpack.c.l.b16 %v7105
    %v7708 = vunpack.c.h.b16 %v7105
    %v7709 = vunpack.c.l.b16 %v7106
    %v7710 = vunpack.c.h.b16 %v7106
    %v7711 = vunpack.c.l.b16 %v7107
    %v7712 = vunpack.c.h.b16 %v7107
    %v7713 = vunpack.c.l.b16 %v7108
    %v7714 = vunpack.c.h.b16 %v7108
    %v7715 = vunpack.c.l.b16 %v7109
    %v7716 = vunpack.c.h.b16 %v7109
    %v7717 = vunpack.c.l.b16 %v7110
    %v7718 = vunpack.c.h.b16 %v7110
    %v7719 = vunpack.c.l.b16 %v7111
    %v7720 = vunpack.c.h.b16 %v7111
    %v7721 = vunpack.c.l.b16 %v7112
    %v7722 = vunpack.c.h.b16 %v7112
    %v7723 = vunpack.c.l.b16 %v7113
    %v7724 = vunpack.c.h.b16 %v7113
    %v7725 = vunpack.c.l.b16 %v7114
    %v7726 = vunpack.c.h.b16 %v7114
    %v7727 = vunpack.c.l.b16 %v7115
    %v7728 = vunpack.c.h.b16 %v7115
    %v7729 = vunpack.c.l.b16 %v7116
    %v7730 = vunpack.c.h.b16 %v7116
    %v7731 = vunpack.c.l.b16 %v7117
    %v7732 = vunpack.c.h.b16 %v7117
    %v7733 = vunpack.c.l.b16 %v7118
    %v7734 = vunpack.c.h.b16 %v7118
    %v7735 = vunpack.c.l.b16 %v7119
    %v7736 = vunpack.c.h.b16 %v7119
    %v7737 = vunpack.c.l.b16 %v7120
    %v7738 = vunpack.c.h.b16 %v7120
    %v7739 = vunpack.c.l.b16 %v7121
    %v7740 = vunpack.c.h.b16 %v7121
    %v7741 = vunpack.c.l.b16 %v7122
    %v7742 = vunpack.c.h.b16 %v7122
    %v7743 = vunpack.c.l.b16 %v7123
    %v7744 = vunpack.c.h.b16 %v7123
    %v7745 = vunpack.c.l.b16 %v7124
    %v7746 = vunpack.c.h.b16 %v7124
    %v7747 = vunpack.c.l.b16 %v7125
    %v7748 = vunpack.c.h.b16 %v7125
    %v7749 = vunpack.c.l.b16 %v7126
    %v7750 = vunpack.c.h.b16 %v7126
    %v7751 = vunpack.c.l.b16 %v7127
    %v7752 = vunpack.c.h.b16 %v7127
    %v7753 = vunpack.c.l.b16 %v7128
    %v7754 = vunpack.c.h.b16 %v7128
    %v7755 = vunpack.c.l.b16 %v7129
    %v7756 = vunpack.c.h.b16 %v7129
    %v7757 = vunpack.c.l.b16 %v7130
    %v7758 = vunpack.c.h.b16 %v7130
    %v7759 = vunpack.c.l.b16 %v7131
    %v7760 = vunpack.c.h.b16 %v7131
    %v7761 = vunpack.c.l.b16 %v7132
    %v7762 = vunpack.c.h.b16 %v7132
    %v7763 = vunpack.c.l.b16 %v7133
    %v7764 = vunpack.c.h.b16 %v7133
    %v7765 = vunpack.c.l.b16 %v7134
    %v7766 = vunpack.c.h.b16 %v7134
    %v7767 = vunpack.c.l.b16 %v7135
    %v7768 = vunpack.c.h.b16 %v7135
    %v7769 = vunpack.c.l.b16 %v7136
    %v7770 = vunpack.c.h.b16 %v7136
    %v7771 = vunpack.c.l.b16 %v7137
    %v7772 = vunpack.c.h.b16 %v7137
    %v7773 = vunpack.c.l.b16 %v7138
    %v7774 = vunpack.c.h.b16 %v7138
    %v7775 = vunpack.c.l.b16 %v7139
    %v7776 = vunpack.c.h.b16 %v7139
    %v7777 = vunpack.c.l.b16 %v7140
    %v7778 = vunpack.c.h.b16 %v7140
    %v7779 = vunpack.c.l.b16 %v7141
    %v7780 = vunpack.c.h.b16 %v7141
    %v7781 = vunpack.c.l.b16 %v7142
    %v7782 = vunpack.c.h.b16 %v7142
    %v7783 = vunpack.c.l.b16 %v7143
    %v7784 = vunpack.c.h.b16 %v7143
    %v7785 = vunpack.c.l.b16 %v7144
    %v7786 = vunpack.c.h.b16 %v7144
    %v7787 = vunpack.c.l.b16 %v7145
    %v7788 = vunpack.c.h.b16 %v7145
    %v7789 = vunpack.c.l.b16 %v7146
    %v7790 = vunpack.c.h.b16 %v7146
    %v7791 = vunpack.c.l.b16 %v7147
    %v7792 = vunpack.c.h.b16 %v7147
    %v7793 = vunpack.c.l.b16 %v7148
    %v7794 = vunpack.c.h.b16 %v7148
    %v7795 = vunpack.c.l.b16 %v7149
    %v7796 = vunpack.c.h.b16 %v7149
    %v7797 = vunpack.c.l.b16 %v7150
    %v7798 = vunpack.c.h.b16 %v7150
    %v7799 = vunpack.c.l.b16 %v7151
    %v7800 = vunpack.c.h.b16 %v7151
    %v7801 = vunpack.c.l.b16 %v7152
    %v7802 = vunpack.c.h.b16 %v7152
    %v7803 = vunpack.c.l.b16 %v7153
    %v7804 = vunpack.c.h.b16 %v7153
    %v7805 = vunpack.c.l.b16 %v7154
    %v7806 = vunpack.c.h.b16 %v7154
    %v7807 = vunpack.c.l.b16 %v7155
    %v7808 = vunpack.c.h.b16 %v7155
    %v7809 = vunpack.c.l.b16 %v7156
    %v7810 = vunpack.c.h.b16 %v7156
    %v7811 = vunpack.c.l.b16 %v7157
    %v7812 = vunpack.c.h.b16 %v7157
    %v7813 = vunpack.c.l.b16 %v7158
    %v7814 = vunpack.c.h.b16 %v7158
    %v7815 = vunpack.c.l.b16 %v7159
    %v7816 = vunpack.c.h.b16 %v7159
    %v7817 = vunpack.c.l.b16 %v7160
    %v7818 = vunpack.c.h.b16 %v7160
    %v7819 = vunpack.c.l.b16 %v7161
    %v7820 = vunpack.c.h.b16 %v7161
    %v7821 = vunpack.c.l.b16 %v7162
    %v7822 = vunpack.c.h.b16 %v7162
    %v7823 = vunpack.c.l.b16 %v7163
    %v7824 = vunpack.c.h.b16 %v7163
    %v7825 = vunpack.c.l.b16 %v7164
    %v7826 = vunpack.c.h.b16 %v7164
    %v7827 = vunpack.c.l.b16 %v7165
    %v7828 = vunpack.c.h.b16 %v7165
    %v7829 = vunpack.c.l.b16 %v7166
    %v7830 = vunpack.c.h.b16 %v7166
    %v7831 = vunpack.c.l.b16 %v7167
    %v7832 = vunpack.c.h.b16 %v7167
    %v7833 = vunpack.c.l.b16 %v7168
    %v7834 = vunpack.c.h.b16 %v7168
    %v7835 = vunpack.c.l.b16 %v7169
    %v7836 = vunpack.c.h.b16 %v7169
    %v7837 = vunpack.c.l.b16 %v7170
    %v7838 = vunpack.c.h.b16 %v7170
    %v7839 = vunpack.c.l.b16 %v7171
    %v7840 = vunpack.c.h.b16 %v7171
    %v7841 = vunpack.c.l.b16 %v7172
    %v7842 = vunpack.c.h.b16 %v7172
    %v7843 = vunpack.c.l.b16 %v7173
    %v7844 = vunpack.c.h.b16 %v7173
    %v7845 = vunpack.c.l.b16 %v7174
    %v7846 = vunpack.c.h.b16 %v7174
    %v7847 = vunpack.c.l.b16 %v7175
    %v7848 = vunpack.c.h.b16 %v7175
    %v7849 = vunpack.c.l.b16 %v7176
    %v7850 = vunpack.c.h.b16 %v7176
    %v7851 = vunpack.c.l.b16 %v7177
    %v7852 = vunpack.c.h.b16 %v7177
    %v7853 = vunpack.c.l.b16 %v7178
    %v7854 = vunpack.c.h.b16 %v7178
    %v7855 = vunpack.c.l.b16 %v7179
    %v7856 = vunpack.c.h.b16 %v7179
    %v7857 = vunpack.c.l.b16 %v7180
    %v7858 = vunpack.c.h.b16 %v7180
    %v7859 = vunpack.c.l.b16 %v7181
    %v7860 = vunpack.c.h.b16 %v7181
    %v7861 = vunpack.c.l.b16 %v7182
    %v7862 = vunpack.c.h.b16 %v7182
    %v7863 = vunpack.c.l.b16 %v7183
    %v7864 = vunpack.c.h.b16 %v7183
    %v7865 = vunpack.c.l.b16 %v7184
    %v7866 = vunpack.c.h.b16 %v7184
    %v7867 = vunpack.c.l.b16 %v7185
    %v7868 = vunpack.c.h.b16 %v7185
    %v7869 = vunpack.c.l.b16 %v7186
    %v7870 = vunpack.c.h.b16 %v7186
    %v7871 = vunpack.c.l.b16 %v7187
    %v7872 = vunpack.c.h.b16 %v7187
    %v7873 = vunpack.c.l.b16 %v7188
    %v7874 = vunpack.c.h.b16 %v7188
    %v7875 = vunpack.c.l.b16 %v7189
    %v7876 = vunpack.c.h.b16 %v7189
    %v7877 = vunpack.c.l.b16 %v7190
    %v7878 = vunpack.c.h.b16 %v7190
    %v7879 = vunpack.c.l.b16 %v7191
    %v7880 = vunpack.c.h.b16 %v7191
    %v7881 = vunpack.c.l.b16 %v7192
    %v7882 = vunpack.c.h.b16 %v7192
    %v7883 = vunpack.c.l.b16 %v7193
    %v7884 = vunpack.c.h.b16 %v7193
    %v7885 = vunpack.c.l.b16 %v7194
    %v7886 = vunpack.c.h.b16 %v7194
    %v7887 = vunpack.c.l.b16 %v7195
    %v7888 = vunpack.c.h.b16 %v7195
    %v7889 = vunpack.c.l.b16 %v7196
    %v7890 = vunpack.c.h.b16 %v7196
    %v7891 = vunpack.c.l.b16 %v7197
    %v7892 = vunpack.c.h.b16 %v7197
    %v7893 = vunpack.c.l.b16 %v7198
    %v7894 = vunpack.c.h.b16 %v7198
    %v7895 = vunpack.c.l.b16 %v7199
    %v7896 = vunpack.c.h.b16 %v7199
    %v7897 = vunpack.c.l.b16 %v7200
    %v7898 = vunpack.c.h.b16 %v7200
    %v7899 = vunpack.c.l.b16 %v7201
    %v7900 = vunpack.c.h.b16 %v7201
    %v7901 = vunpack.c.l.b16 %v7202
    %v7902 = vunpack.c.h.b16 %v7202
    %v7903 = vunpack.c.l.b16 %v7203
    %v7904 = vunpack.c.h.b16 %v7203
    %v7905 = vunpack.c.l.b16 %v7204
    %v7906 = vunpack.c.h.b16 %v7204
    %v7907 = vunpack.c.l.b16 %v7205
    %v7908 = vunpack.c.h.b16 %v7205
    %v7909 = vunpack.c.l.b16 %v7206
    %v7910 = vunpack.c.h.b16 %v7206
    %v7911 = vunpack.c.l.b16 %v7207
    %v7912 = vunpack.c.h.b16 %v7207
    %v7913 = vunpack.c.l.b16 %v7208
    %v7914 = vunpack.c.h.b16 %v7208
    %v7915 = vunpack.c.l.b16 %v7209
    %v7916 = vunpack.c.h.b16 %v7209
    %v7917 = vunpack.c.l.b16 %v7210
    %v7918 = vunpack.c.h.b16 %v7210
    %v7919 = vunpack.c.l.b16 %v7211
    %v7920 = vunpack.c.h.b16 %v7211
    %v7921 = vunpack.c.l.b16 %v7212
    %v7922 = vunpack.c.h.b16 %v7212
    %v7923 = vunpack.c.l.b16 %v7213
    %v7924 = vunpack.c.h.b16 %v7213
    %v7925 = vunpack.c.l.b16 %v7214
    %v7926 = vunpack.c.h.b16 %v7214
    %v7927 = vunpack.c.l.b16 %v7215
    %v7928 = vunpack.c.h.b16 %v7215
    %v7929 = vunpack.c.l.b16 %v7216
    %v7930 = vunpack.c.h.b16 %v7216
    %v7931 = vunpack.c.l.b16 %v7217
    %v7932 = vunpack.c.h.b16 %v7217
    %v7933 = vunpack.c.l.b16 %v7218
    %v7934 = vunpack.c.h.b16 %v7218
    %v7935 = vunpack.c.l.b16 %v7219
    %v7936 = vunpack.c.h.b16 %v7219
    %v7937 = vunpack.c.l.b16 %v7220
    %v7938 = vunpack.c.h.b16 %v7220
    %v7939 = vunpack.c.l.b16 %v7221
    %v7940 = vunpack.c.h.b16 %v7221
    %v7941 = vunpack.c.l.b16 %v7222
    %v7942 = vunpack.c.h.b16 %v7222
    %v7943 = vunpack.c.l.b16 %v7223
    %v7944 = vunpack.c.h.b16 %v7223
    %v7945 = vunpack.c.l.b16 %v7224
    %v7946 = vunpack.c.h.b16 %v7224
    %v7947 = vunpack.c.l.b16 %v7225
    %v7948 = vunpack.c.h.b16 %v7225
    %v7949 = vunpack.c.l.b16 %v7226
    %v7950 = vunpack.c.h.b16 %v7226
    %v7951 = vunpack.c.l.b16 %v7227
    %v7952 = vunpack.c.h.b16 %v7227
    %v7953 = vunpack.c.l.b16 %v7228
    %v7954 = vunpack.c.h.b16 %v7228
    %v7955 = vunpack.c.l.b16 %v7229
    %v7956 = vunpack.c.h.b16 %v7229
    %v7957 = vunpack.c.l.b16 %v7230
    %v7958 = vunpack.c.h.b16 %v7230
    %v7959 = vunpack.c.l.b16 %v7231
    %v7960 = vunpack.c.h.b16 %v7231
    %v7961 = vunpack.c.l.b16 %v7232
    %v7962 = vunpack.c.h.b16 %v7232
    %v7963 = vunpack.c.l.b16 %v7233
    %v7964 = vunpack.c.h.b16 %v7233
    %v7965 = vunpack.c.l.b16 %v7234
    %v7966 = vunpack.c.h.b16 %v7234
    %v7967 = vunpack.c.l.b16 %v7235
    %v7968 = vunpack.c.h.b16 %v7235
    %v7969 = vunpack.c.l.b16 %v7236
    %v7970 = vunpack.c.h.b16 %v7236
    %v7971 = vunpack.c.l.b16 %v7237
    %v7972 = vunpack.c.h.b16 %v7237
    %v7973 = vunpack.c.l.b16 %v7238
    %v7974 = vunpack.c.h.b16 %v7238
    %v7975 = vunpack.c.l.b16 %v7239
    %v7976 = vunpack.c.h.b16 %v7239
    %v7977 = vunpack.c.l.b16 %v7240
    %v7978 = vunpack.c.h.b16 %v7240
    %v7979 = vunpack.c.l.b16 %v7241
    %v7980 = vunpack.c.h.b16 %v7241
    %v7981 = vunpack.c.l.b16 %v7242
    %v7982 = vunpack.c.h.b16 %v7242
    %v7983 = vunpack.c.l.b16 %v7243
    %v7984 = vunpack.c.h.b16 %v7243
    %v7985 = vunpack.c.l.b16 %v7244
    %v7986 = vunpack.c.h.b16 %v7244
    %v7987 = vunpack.c.l.b16 %v7245
    %v7988 = vunpack.c.h.b16 %v7245
    %v7989 = vunpack.c.l.b16 %v7246
    %v7990 = vunpack.c.h.b16 %v7246
    %v7991 = vunpack.c.l.b16 %v7247
    %v7992 = vunpack.c.h.b16 %v7247
    %v7993 = vunpack.c.l.b16 %v7248
    %v7994 = vunpack.c.h.b16 %v7248
    %v7995 = vunpack.c.l.b16 %v7249
    %v7996 = vunpack.c.h.b16 %v7249
    %v7997 = vunpack.c.l.b16 %v7250
    %v7998 = vunpack.c.h.b16 %v7250
    %v7999 = vunpack.c.l.b16 %v7251
    %v8000 = vunpack.c.h.b16 %v7251
    %v8001 = vunpack.c.l.b16 %v7252
    %v8002 = vunpack.c.h.b16 %v7252
    %v8003 = vunpack.c.l.b16 %v7253
    %v8004 = vunpack.c.h.b16 %v7253
    %v8005 = vunpack.c.l.b16 %v7254
    %v8006 = vunpack.c.h.b16 %v7254
    %v8007 = vunpack.c.l.b16 %v7255
    %v8008 = vunpack.c.h.b16 %v7255
    %v8009 = vunpack.c.l.b16 %v7256
    %v8010 = vunpack.c.h.b16 %v7256
    %v8011 = vunpack.c.l.b16 %v7257
    %v8012 = vunpack.c.h.b16 %v7257
    %v8013 = vunpack.c.l.b16 %v7258
    %v8014 = vunpack.c.h.b16 %v7258
    %v8015 = vunpack.c.l.b16 %v7259
    %v8016 = vunpack.c.h.b16 %v7259
    %v8017 = vunpack.c.l.b16 %v7260
    %v8018 = vunpack.c.h.b16 %v7260
    %v8019 = vunpack.c.l.b16 %v7261
    %v8020 = vunpack.c.h.b16 %v7261
    %v8021 = vunpack.c.l.b16 %v7262
    %v8022 = vunpack.c.h.b16 %v7262
    %v8023 = vunpack.c.l.b16 %v7263
    %v8024 = vunpack.c.h.b16 %v7263
    %v8025 = vunpack.c.l.b16 %v7264
    %v8026 = vunpack.c.h.b16 %v7264
    %v8027 = vunpack.c.l.b16 %v7265
    %v8028 = vunpack.c.h.b16 %v7265
    %v8029 = vunpack.c.l.b16 %v7266
    %v8030 = vunpack.c.h.b16 %v7266
    %v8031 = vunpack.c.l.b16 %v7267
    %v8032 = vunpack.c.h.b16 %v7267
    %v8033 = vunpack.c.l.b16 %v7268
    %v8034 = vunpack.c.h.b16 %v7268
    %v8035 = vunpack.c.l.b16 %v7269
    %v8036 = vunpack.c.h.b16 %v7269
    %v8037 = vunpack.c.l.b16 %v7270
    %v8038 = vunpack.c.h.b16 %v7270
    %v8039 = vpack.c.b16 %v7529, %v7527
    %v8040 = vpack.c.b16 %v7530, %v7528
    %v8041 = vpack.c.b16 %v7533, %v7531
    %v8042 = vpack.c.b16 %v7534, %v7532
    %v8043 = vpack.c.b16 %v7537, %v7535
    %v8044 = vpack.c.b16 %v7538, %v7536
    %v8045 = vpack.c.b16 %v7541, %v7539
    %v8046 = vpack.c.b16 %v7542, %v7540
    %v8047 = vpack.c.b16 %v7545, %v7543
    %v8048 = vpack.c.b16 %v7546, %v7544
    %v8049 = vpack.c.b16 %v7549, %v7547
    %v8050 = vpack.c.b16 %v7550, %v7548
    %v8051 = vpack.c.b16 %v7553, %v7551
    %v8052 = vpack.c.b16 %v7554, %v7552
    %v8053 = vpack.c.b16 %v7557, %v7555
    %v8054 = vpack.c.b16 %v7558, %v7556
    %v8055 = vpack.c.b16 %v7561, %v7559
    %v8056 = vpack.c.b16 %v7562, %v7560
    %v8057 = vpack.c.b16 %v7565, %v7563
    %v8058 = vpack.c.b16 %v7566, %v7564
    %v8059 = vpack.c.b16 %v7569, %v7567
    %v8060 = vpack.c.b16 %v7570, %v7568
    %v8061 = vpack.c.b16 %v7573, %v7571
    %v8062 = vpack.c.b16 %v7574, %v7572
    %v8063 = vpack.c.b16 %v7577, %v7575
    %v8064 = vpack.c.b16 %v7578, %v7576
    %v8065 = vpack.c.b16 %v7581, %v7579
    %v8066 = vpack.c.b16 %v7582, %v7580
    %v8067 = vpack.c.b16 %v7585, %v7583
    %v8068 = vpack.c.b16 %v7586, %v7584
    %v8069 = vpack.c.b16 %v7589, %v7587
    %v8070 = vpack.c.b16 %v7590, %v7588
    %v8071 = vpack.c.b16 %v7593, %v7591
    %v8072 = vpack.c.b16 %v7594, %v7592
    %v8073 = vpack.c.b16 %v7597, %v7595
    %v8074 = vpack.c.b16 %v7598, %v7596
    %v8075 = vpack.c.b16 %v7601, %v7599
    %v8076 = vpack.c.b16 %v7602, %v7600
    %v8077 = vpack.c.b16 %v7605, %v7603
    %v8078 = vpack.c.b16 %v7606, %v7604
    %v8079 = vpack.c.b16 %v7609, %v7607
    %v8080 = vpack.c.b16 %v7610, %v7608
    %v8081 = vpack.c.b16 %v7613, %v7611
    %v8082 = vpack.c.b16 %v7614, %v7612
    %v8083 = vpack.c.b16 %v7617, %v7615
    %v8084 = vpack.c.b16 %v7618, %v7616
    %v8085 = vpack.c.b16 %v7621, %v7619
    %v8086 = vpack.c.b16 %v7622, %v7620
    %v8087 = vpack.c.b16 %v7625, %v7623
    %v8088 = vpack.c.b16 %v7626, %v7624
    %v8089 = vpack.c.b16 %v7629, %v7627
    %v8090 = vpack.c.b16 %v7630, %v7628
    %v8091 = vpack.c.b16 %v7633, %v7631
    %v8092 = vpack.c.b16 %v7634, %v7632
    %v8093 = vpack.c.b16 %v7637, %v7635
    %v8094 = vpack.c.b16 %v7638, %v7636
    %v8095 = vpack.c.b16 %v7641, %v7639
    %v8096 = vpack.c.b16 %v7642, %v7640
    %v8097 = vpack.c.b16 %v7645, %v7643
    %v8098 = vpack.c.b16 %v7646, %v7644
    %v8099 = vpack.c.b16 %v7649, %v7647
    %v8100 = vpack.c.b16 %v7650, %v7648
    %v8101 = vpack.c.b16 %v7653, %v7651
    %v8102 = vpack.c.b16 %v7654, %v7652
    %v8103 = vpack.c.b16 %v7657, %v7655
    %v8104 = vpack.c.b16 %v7658, %v7656
    %v8105 = vpack.c.b16 %v7661, %v7659
    %v8106 = vpack.c.b16 %v7662, %v7660
    %v8107 = vpack.c.b16 %v7665, %v7663
    %v8108 = vpack.c.b16 %v7666, %v7664
    %v8109 = vpack.c.b16 %v7669, %v7667
    %v8110 = vpack.c.b16 %v7670, %v7668
    %v8111 = vpack.c.b16 %v7673, %v7671
    %v8112 = vpack.c.b16 %v7674, %v7672
    %v8113 = vpack.c.b16 %v7677, %v7675
    %v8114 = vpack.c.b16 %v7678, %v7676
    %v8115 = vpack.c.b16 %v7681, %v7679
    %v8116 = vpack.c.b16 %v7682, %v7680
    %v8117 = vpack.c.b16 %v7685, %v7683
    %v8118 = vpack.c.b16 %v7686, %v7684
    %v8119 = vpack.c.b16 %v7689, %v7687
    %v8120 = vpack.c.b16 %v7690, %v7688
    %v8121 = vpack.c.b16 %v7693, %v7691
    %v8122 = vpack.c.b16 %v7694, %v7692
    %v8123 = vpack.c.b16 %v7697, %v7695
    %v8124 = vpack.c.b16 %v7698, %v7696
    %v8125 = vpack.c.b16 %v7701, %v7699
    %v8126 = vpack.c.b16 %v7702, %v7700
    %v8127 = vpack.c.b16 %v7705, %v7703
    %v8128 = vpack.c.b16 %v7706, %v7704
    %v8129 = vpack.c.b16 %v7709, %v7707
    %v8130 = vpack.c.b16 %v7710, %v7708
    %v8131 = vpack.c.b16 %v7713, %v7711
    %v8132 = vpack.c.b16 %v7714, %v7712
    %v8133 = vpack.c.b16 %v7717, %v7715
    %v8134 = vpack.c.b16 %v7718, %v7716
    %v8135 = vpack.c.b16 %v7721, %v7719
    %v8136 = vpack.c.b16 %v7722, %v7720
    %v8137 = vpack.c.b16 %v7725, %v7723
    %v8138 = vpack.c.b16 %v7726, %v7724
    %v8139 = vpack.c.b16 %v7729, %v7727
    %v8140 = vpack.c.b16 %v7730, %v7728
    %v8141 = vpack.c.b16 %v7733, %v7731
    %v8142 = vpack.c.b16 %v7734, %v7732
    %v8143 = vpack.c.b16 %v7737, %v7735
    %v8144 = vpack.c.b16 %v7738, %v7736
    %v8145 = vpack.c.b16 %v7741, %v7739
    %v8146 = vpack.c.b16 %v7742, %v7740
    %v8147 = vpack.c.b16 %v7745, %v7743
    %v8148 = vpack.c.b16 %v7746, %v7744
    %v8149 = vpack.c.b16 %v7749, %v7747
    %v8150 = vpack.c.b16 %v7750, %v7748
    %v8151 = vpack.c.b16 %v7753, %v7751
    %v8152 = vpack.c.b16 %v7754, %v7752
    %v8153 = vpack.c.b16 %v7757, %v7755
    %v8154 = vpack.c.b16 %v7758, %v7756
    %v8155 = vpack.c.b16 %v7761, %v7759
    %v8156 = vpack.c.b16 %v7762, %v7760
    %v8157 = vpack.c.b16 %v7765, %v7763
    %v8158 = vpack.c.b16 %v7766, %v7764
    %v8159 = vpack.c.b16 %v7769, %v7767
    %v8160 = vpack.c.b16 %v7770, %v7768
    %v8161 = vpack.c.b16 %v7773, %v7771
    %v8162 = vpack.c.b16 %v7774, %v7772
    %v8163 = vpack.c.b16 %v7777, %v7775
    %v8164 = vpack.c.b16 %v7778, %v7776
    %v8165 = vpack.c.b16 %v7781, %v7779
    %v8166 = vpack.c.b16 %v7782, %v7780
    %v8167 = vpack.c.b16 %v7785, %v7783
    %v8168 = vpack.c.b16 %v7786, %v7784
    %v8169 = vpack.c.b16 %v7789, %v7787
    %v8170 = vpack.c.b16 %v7790, %v7788
    %v8171 = vpack.c.b16 %v7793, %v7791
    %v8172 = vpack.c.b16 %v7794, %v7792
    %v8173 = vpack.c.b16 %v7797, %v7795
    %v8174 = vpack.c.b16 %v7798, %v7796
    %v8175 = vpack.c.b16 %v7801, %v7799
    %v8176 = vpack.c.b16 %v7802, %v7800
    %v8177 = vpack.c.b16 %v7805, %v7803
    %v8178 = vpack.c.b16 %v7806, %v7804
    %v8179 = vpack.c.b16 %v7809, %v7807
    %v8180 = vpack.c.b16 %v7810, %v7808
    %v8181 = vpack.c.b16 %v7813, %v7811
    %v8182 = vpack.c.b16 %v7814, %v7812
    %v8183 = vpack.c.b16 %v7817, %v7815
    %v8184 = vpack.c.b16 %v7818, %v7816
    %v8185 = vpack.c.b16 %v7821, %v7819
    %v8186 = vpack.c.b16 %v7822, %v7820
    %v8187 = vpack.c.b16 %v7825, %v7823
    %v8188 = vpack.c.b16 %v7826, %v7824
    %v8189 = vpack.c.b16 %v7829, %v7827
    %v8190 = vpack.c.b16 %v7830, %v7828
    %v8191 = vpack.c.b16 %v7833, %v7831
    %v8192 = vpack.c.b16 %v7834, %v7832
    %v8193 = vpack.c.b16 %v7837, %v7835
    %v8194 = vpack.c.b16 %v7838, %v7836
    %v8195 = vpack.c.b16 %v7841, %v7839
    %v8196 = vpack.c.b16 %v7842, %v7840
    %v8197 = vpack.c.b16 %v7845, %v7843
    %v8198 = vpack.c.b16 %v7846, %v7844
    %v8199 = vpack.c.b16 %v7849, %v7847
    %v8200 = vpack.c.b16 %v7850, %v7848
    %v8201 = vpack.c.b16 %v7853, %v7851
    %v8202 = vpack.c.b16 %v7854, %v7852
    %v8203 = vpack.c.b16 %v7857, %v7855
    %v8204 = vpack.c.b16 %v7858, %v7856
    %v8205 = vpack.c.b16 %v7861, %v7859
    %v8206 = vpack.c.b16 %v7862, %v7860
    %v8207 = vpack.c.b16 %v7865, %v7863
    %v8208 = vpack.c.b16 %v7866, %v7864
    %v8209 = vpack.c.b16 %v7869, %v7867
    %v8210 = vpack.c.b16 %v7870, %v7868
    %v8211 = vpack.c.b16 %v7873, %v7871
    %v8212 = vpack.c.b16 %v7874, %v7872
    %v8213 = vpack.c.b16 %v7877, %v7875
    %v8214 = vpack.c.b16 %v7878, %v7876
    %v8215 = vpack.c.b16 %v7881, %v7879
    %v8216 = vpack.c.b16 %v7882, %v7880
    %v8217 = vpack.c.b16 %v7885, %v7883
    %v8218 = vpack.c.b16 %v7886, %v7884
    %v8219 = vpack.c.b16 %v7889, %v7887
    %v8220 = vpack.c.b16 %v7890, %v7888
    %v8221 = vpack.c.b16 %v7893, %v7891
    %v8222 = vpack.c.b16 %v7894, %v7892
    %v8223 = vpack.c.b16 %v7897, %v7895
    %v8224 = vpack.c.b16 %v7898, %v7896
    %v8225 = vpack.c.b16 %v7901, %v7899
    %v8226 = vpack.c.b16 %v7902, %v7900
    %v8227 = vpack.c.b16 %v7905, %v7903
    %v8228 = vpack.c.b16 %v7906, %v7904
    %v8229 = vpack.c.b16 %v7909, %v7907
    %v8230 = vpack.c.b16 %v7910, %v7908
    %v8231 = vpack.c.b16 %v7913, %v7911
    %v8232 = vpack.c.b16 %v7914, %v7912
    %v8233 = vpack.c.b16 %v7917, %v7915
    %v8234 = vpack.c.b16 %v7918, %v7916
    %v8235 = vpack.c.b16 %v7921, %v7919
    %v8236 = vpack.c.b16 %v7922, %v7920
    %v8237 = vpack.c.b16 %v7925, %v7923
    %v8238 = vpack.c.b16 %v7926, %v7924
    %v8239 = vpack.c.b16 %v7929, %v7927
    %v8240 = vpack.c.b16 %v7930, %v7928
    %v8241 = vpack.c.b16 %v7933, %v7931
    %v8242 = vpack.c.b16 %v7934, %v7932
    %v8243 = vpack.c.b16 %v7937, %v7935
    %v8244 = vpack.c.b16 %v7938, %v7936
    %v8245 = vpack.c.b16 %v7941, %v7939
    %v8246 = vpack.c.b16 %v7942, %v7940
    %v8247 = vpack.c.b16 %v7945, %v7943
    %v8248 = vpack.c.b16 %v7946, %v7944
    %v8249 = vpack.c.b16 %v7949, %v7947
    %v8250 = vpack.c.b16 %v7950, %v7948
    %v8251 = vpack.c.b16 %v7953, %v7951
    %v8252 = vpack.c.b16 %v7954, %v7952
    %v8253 = vpack.c.b16 %v7957, %v7955
    %v8254 = vpack.c.b16 %v7958, %v7956
    %v8255 = vpack.c.b16 %v7961, %v7959
    %v8256 = vpack.c.b16 %v7962, %v7960
    %v8257 = vpack.c.b16 %v7965, %v7963
    %v8258 = vpack.c.b16 %v7966, %v7964
    %v8259 = vpack.c.b16 %v7969, %v7967
    %v8260 = vpack.c.b16 %v7970, %v7968
    %v8261 = vpack.c.b16 %v7973, %v7971
    %v8262 = vpack.c.b16 %v7974, %v7972
    %v8263 = vpack.c.b16 %v7977, %v7975
    %v8264 = vpack.c.b16 %v7978, %v7976
    %v8265 = vpack.c.b16 %v7981, %v7979
    %v8266 = vpack.c.b16 %v7982, %v7980
    %v8267 = vpack.c.b16 %v7985, %v7983
    %v8268 = vpack.c.b16 %v7986, %v7984
    %v8269 = vpack.c.b16 %v7989, %v7987
    %v8270 = vpack.c.b16 %v7990, %v7988
    %v8271 = vpack.c.b16 %v7993, %v7991
    %v8272 = vpack.c.b16 %v7994, %v7992
    %v8273 = vpack.c.b16 %v7997, %v7995
    %v8274 = vpack.c.b16 %v7998, %v7996
    %v8275 = vpack.c.b16 %v8001, %v7999
    %v8276 = vpack.c.b16 %v8002, %v8000
    %v8277 = vpack.c.b16 %v8005, %v8003
    %v8278 = vpack.c.b16 %v8006, %v8004
    %v8279 = vpack.c.b16 %v8009, %v8007
    %v8280 = vpack.c.b16 %v8010, %v8008
    %v8281 = vpack.c.b16 %v8013, %v8011
    %v8282 = vpack.c.b16 %v8014, %v8012
    %v8283 = vpack.c.b16 %v8017, %v8015
    %v8284 = vpack.c.b16 %v8018, %v8016
    %v8285 = vpack.c.b16 %v8021, %v8019
    %v8286 = vpack.c.b16 %v8022, %v8020
    %v8287 = vpack.c.b16 %v8025, %v8023
    %v8288 = vpack.c.b16 %v8026, %v8024
    %v8289 = vpack.c.b16 %v8029, %v8027
    %v8290 = vpack.c.b16 %v8030, %v8028
    %v8291 = vpack.c.b16 %v8033, %v8031
    %v8292 = vpack.c.b16 %v8034, %v8032
    %v8293 = vpack.c.b16 %v8037, %v8035
    %v8294 = vpack.c.b16 %v8038, %v8036
    %8551 = vmatprep.subr.bf16.mxu0 %v8054
    %8552 = vmatpush1.bf16.msra.mxu0 %v8053
    %8553 = vmatprep.subr.bf16.mxu0 %v8052
    %8554 = vmatpush1.bf16.msra.mxu0 %v8051
    %8555 = vmatprep.subr.bf16.mxu0 %v8050
    %8556 = vmatpush1.bf16.msra.mxu0 %v8049
    %8557 = vmatprep.subr.bf16.mxu0 %v8048
    %8558 = vmatpush1.bf16.msra.mxu0 %v8047
    %8559 = vmatprep.subr.bf16.mxu0 %v8046
    %8560 = vmatpush1.bf16.msra.mxu0 %v8045
    %8561 = vmatprep.subr.bf16.mxu0 %v8044
    %8562 = vmatpush1.bf16.msra.mxu0 %v8043
    %8563 = vmatprep.subr.bf16.mxu0 %v8042
    %8564 = vmatpush1.bf16.msra.mxu0 %v8041
    %8565 = vmatprep.subr.bf16.mxu0 %v8040
    %8566 = vmatpush1.bf16.msra.mxu0 %v8039
    %8567 = vmatprep.subr.bf16.mxu0 %v8070
    %8568 = vmatpush2.bf16.msra.mxu0 %v8069
    %8569 = vmatprep.subr.bf16.mxu0 %v8068
    %8570 = vmatpush2.bf16.msra.mxu0 %v8067
    %8571 = vmatprep.subr.bf16.mxu0 %v8066
    %8572 = vmatpush2.bf16.msra.mxu0 %v8065
    %8573 = vmatprep.subr.bf16.mxu0 %v8064
    %8574 = vmatpush2.bf16.msra.mxu0 %v8063
    %8575 = vmatprep.subr.bf16.mxu0 %v8062
    %8576 = vmatpush2.bf16.msra.mxu0 %v8061
    %8577 = vmatprep.subr.bf16.mxu0 %v8060
    %8578 = vmatpush2.bf16.msra.mxu0 %v8059
    %8579 = vmatprep.subr.bf16.mxu0 %v8058
    %8580 = vmatpush2.bf16.msra.mxu0 %v8057
    %8581 = vmatprep.subr.bf16.mxu0 %v8056
    %8582 = vmatpush2.bf16.msra.mxu0 %v8055
    %8583 = vmatprep.mubr.bf16.mxu0 %v7000
    %8584 = vmatmul.mubr.bf16.gmra.mxu0 %v6999
    %v8585 = vpop.f32.mrf.mxu0
    %v8586 = vadd.f32 0.0, %v8585
    %v8587 = vpop.f32.mrf.mxu0
    %v8588 = vadd.f32 0.0, %v8587
    %v8589 = vpop.f32.mrf.mxu0
    %v8590 = vpop.f32.mrf.mxu0
    %8591 = vdwg.mxu0
    %8592 = vmatprep.subr.bf16.mxu0 %v8086
    %8593 = vmatpush1.bf16.msra.mxu0 %v8085
    %8594 = vmatprep.subr.bf16.mxu0 %v8084
    %8595 = vmatpush1.bf16.msra.mxu0 %v8083
    %8596 = vmatprep.subr.bf16.mxu0 %v8082
    %8597 = vmatpush1.bf16.msra.mxu0 %v8081
    %8598 = vmatprep.subr.bf16.mxu0 %v8080
    %8599 = vmatpush1.bf16.msra.mxu0 %v8079
    %8600 = vmatprep.subr.bf16.mxu0 %v8078
    %8601 = vmatpush1.bf16.msra.mxu0 %v8077
    %8602 = vmatprep.subr.bf16.mxu0 %v8076
    %8603 = vmatpush1.bf16.msra.mxu0 %v8075
    %8604 = vmatprep.subr.bf16.mxu0 %v8074
    %8605 = vmatpush1.bf16.msra.mxu0 %v8073
    %8606 = vmatprep.subr.bf16.mxu0 %v8072
    %8607 = vmatpush1.bf16.msra.mxu0 %v8071
    %8608 = vmatprep.subr.bf16.mxu0 %v8102
    %8609 = vmatpush2.bf16.msra.mxu0 %v8101
    %8610 = vmatprep.subr.bf16.mxu0 %v8100
    %8611 = vmatpush2.bf16.msra.mxu0 %v8099
    %8612 = vmatprep.subr.bf16.mxu0 %v8098
    %8613 = vmatpush2.bf16.msra.mxu0 %v8097
    %8614 = vmatprep.subr.bf16.mxu0 %v8096
    %8615 = vmatpush2.bf16.msra.mxu0 %v8095
    %8616 = vmatprep.subr.bf16.mxu0 %v8094
    %8617 = vmatpush2.bf16.msra.mxu0 %v8093
    %8618 = vmatprep.subr.bf16.mxu0 %v8092
    %8619 = vmatpush2.bf16.msra.mxu0 %v8091
    %8620 = vmatprep.subr.bf16.mxu0 %v8090
    %8621 = vmatpush2.bf16.msra.mxu0 %v8089
    %8622 = vmatprep.subr.bf16.mxu0 %v8088
    %8623 = vmatpush2.bf16.msra.mxu0 %v8087
    %8624 = vmatprep.mubr.bf16.mxu0 %v7002
    %8625 = vmatmul.mubr.bf16.gmra.mxu0 %v7001
    %v8626 = vpop.f32.mrf.mxu0
    %v8627 = vadd.f32 %v8586, %v8626
    %v8628 = vpop.f32.mrf.mxu0
    %v8629 = vadd.f32 %v8588, %v8628
    %v8630 = vpop.f32.mrf.mxu0
    %v8631 = vpop.f32.mrf.mxu0
    %8632 = vdwg.mxu0
    %8633 = vmatprep.subr.bf16.mxu0 %v8118
    %8634 = vmatpush1.bf16.msra.mxu0 %v8117
    %8635 = vmatprep.subr.bf16.mxu0 %v8116
    %8636 = vmatpush1.bf16.msra.mxu0 %v8115
    %8637 = vmatprep.subr.bf16.mxu0 %v8114
    %8638 = vmatpush1.bf16.msra.mxu0 %v8113
    %8639 = vmatprep.subr.bf16.mxu0 %v8112
    %8640 = vmatpush1.bf16.msra.mxu0 %v8111
    %8641 = vmatprep.subr.bf16.mxu0 %v8110
    %8642 = vmatpush1.bf16.msra.mxu0 %v8109
    %8643 = vmatprep.subr.bf16.mxu0 %v8108
    %8644 = vmatpush1.bf16.msra.mxu0 %v8107
    %8645 = vmatprep.subr.bf16.mxu0 %v8106
    %8646 = vmatpush1.bf16.msra.mxu0 %v8105
    %8647 = vmatprep.subr.bf16.mxu0 %v8104
    %8648 = vmatpush1.bf16.msra.mxu0 %v8103
    %8649 = vmatprep.subr.bf16.mxu0 %v8134
    %8650 = vmatpush2.bf16.msra.mxu0 %v8133
    %8651 = vmatprep.subr.bf16.mxu0 %v8132
    %8652 = vmatpush2.bf16.msra.mxu0 %v8131
    %8653 = vmatprep.subr.bf16.mxu0 %v8130
    %8654 = vmatpush2.bf16.msra.mxu0 %v8129
    %8655 = vmatprep.subr.bf16.mxu0 %v8128
    %8656 = vmatpush2.bf16.msra.mxu0 %v8127
    %8657 = vmatprep.subr.bf16.mxu0 %v8126
    %8658 = vmatpush2.bf16.msra.mxu0 %v8125
    %8659 = vmatprep.subr.bf16.mxu0 %v8124
    %8660 = vmatpush2.bf16.msra.mxu0 %v8123
    %8661 = vmatprep.subr.bf16.mxu0 %v8122
    %8662 = vmatpush2.bf16.msra.mxu0 %v8121
    %8663 = vmatprep.subr.bf16.mxu0 %v8120
    %8664 = vmatpush2.bf16.msra.mxu0 %v8119
    %8665 = vmatprep.mubr.bf16.mxu0 %v7004
    %8666 = vmatmul.mubr.bf16.gmra.mxu0 %v7003
    %v8667 = vpop.f32.mrf.mxu0
    %v8668 = vadd.f32 %v8627, %v8667
    %v8669 = vpop.f32.mrf.mxu0
    %v8670 = vadd.f32 %v8629, %v8669
    %v8671 = vpop.f32.mrf.mxu0
    %v8672 = vpop.f32.mrf.mxu0
    %8673 = vdwg.mxu0
    %8674 = vmatprep.subr.bf16.mxu0 %v8150
    %8675 = vmatpush1.bf16.msra.mxu0 %v8149
    %8676 = vmatprep.subr.bf16.mxu0 %v8148
    %8677 = vmatpush1.bf16.msra.mxu0 %v8147
    %8678 = vmatprep.subr.bf16.mxu0 %v8146
    %8679 = vmatpush1.bf16.msra.mxu0 %v8145
    %8680 = vmatprep.subr.bf16.mxu0 %v8144
    %8681 = vmatpush1.bf16.msra.mxu0 %v8143
    %8682 = vmatprep.subr.bf16.mxu0 %v8142
    %8683 = vmatpush1.bf16.msra.mxu0 %v8141
    %8684 = vmatprep.subr.bf16.mxu0 %v8140
    %8685 = vmatpush1.bf16.msra.mxu0 %v8139
    %8686 = vmatprep.subr.bf16.mxu0 %v8138
    %8687 = vmatpush1.bf16.msra.mxu0 %v8137
    %8688 = vmatprep.subr.bf16.mxu0 %v8136
    %8689 = vmatpush1.bf16.msra.mxu0 %v8135
    %8690 = vmatprep.subr.bf16.mxu0 %v8166
    %8691 = vmatpush2.bf16.msra.mxu0 %v8165
    %8692 = vmatprep.subr.bf16.mxu0 %v8164
    %8693 = vmatpush2.bf16.msra.mxu0 %v8163
    %8694 = vmatprep.subr.bf16.mxu0 %v8162
    %8695 = vmatpush2.bf16.msra.mxu0 %v8161
    %8696 = vmatprep.subr.bf16.mxu0 %v8160
    %8697 = vmatpush2.bf16.msra.mxu0 %v8159
    %8698 = vmatprep.subr.bf16.mxu0 %v8158
    %8699 = vmatpush2.bf16.msra.mxu0 %v8157
    %8700 = vmatprep.subr.bf16.mxu0 %v8156
    %8701 = vmatpush2.bf16.msra.mxu0 %v8155
    %8702 = vmatprep.subr.bf16.mxu0 %v8154
    %8703 = vmatpush2.bf16.msra.mxu0 %v8153
    %8704 = vmatprep.subr.bf16.mxu0 %v8152
    %8705 = vmatpush2.bf16.msra.mxu0 %v8151
    %8706 = vmatprep.mubr.bf16.mxu0 %v7006
    %8707 = vmatmul.mubr.bf16.gmra.mxu0 %v7005
    %v8708 = vpop.f32.mrf.mxu0
    %v8709 = vadd.f32 %v8668, %v8708
    %v8710 = vpop.f32.mrf.mxu0
    %v8711 = vadd.f32 %v8670, %v8710
    %v8712 = vpop.f32.mrf.mxu0
    %v8713 = vpop.f32.mrf.mxu0
    %8714 = vdwg.mxu0
    %8715 = vmatprep.subr.bf16.mxu0 %v8182
    %8716 = vmatpush1.bf16.msra.mxu0 %v8181
    %8717 = vmatprep.subr.bf16.mxu0 %v8180
    %8718 = vmatpush1.bf16.msra.mxu0 %v8179
    %8719 = vmatprep.subr.bf16.mxu0 %v8178
    %8720 = vmatpush1.bf16.msra.mxu0 %v8177
    %8721 = vmatprep.subr.bf16.mxu0 %v8176
    %8722 = vmatpush1.bf16.msra.mxu0 %v8175
    %8723 = vmatprep.subr.bf16.mxu0 %v8174
    %8724 = vmatpush1.bf16.msra.mxu0 %v8173
    %8725 = vmatprep.subr.bf16.mxu0 %v8172
    %8726 = vmatpush1.bf16.msra.mxu0 %v8171
    %8727 = vmatprep.subr.bf16.mxu0 %v8170
    %8728 = vmatpush1.bf16.msra.mxu0 %v8169
    %8729 = vmatprep.subr.bf16.mxu0 %v8168
    %8730 = vmatpush1.bf16.msra.mxu0 %v8167
    %8731 = vmatprep.subr.bf16.mxu0 %v8198
    %8732 = vmatpush2.bf16.msra.mxu0 %v8197
    %8733 = vmatprep.subr.bf16.mxu0 %v8196
    %8734 = vmatpush2.bf16.msra.mxu0 %v8195
    %8735 = vmatprep.subr.bf16.mxu0 %v8194
    %8736 = vmatpush2.bf16.msra.mxu0 %v8193
    %8737 = vmatprep.subr.bf16.mxu0 %v8192
    %8738 = vmatpush2.bf16.msra.mxu0 %v8191
    %8739 = vmatprep.subr.bf16.mxu0 %v8190
    %8740 = vmatpush2.bf16.msra.mxu0 %v8189
    %8741 = vmatprep.subr.bf16.mxu0 %v8188
    %8742 = vmatpush2.bf16.msra.mxu0 %v8187
    %8743 = vmatprep.subr.bf16.mxu0 %v8186
    %8744 = vmatpush2.bf16.msra.mxu0 %v8185
    %8745 = vmatprep.subr.bf16.mxu0 %v8184
    %8746 = vmatpush2.bf16.msra.mxu0 %v8183
    %8747 = vmatprep.mubr.bf16.mxu0 %v7008
    %8748 = vmatmul.mubr.bf16.gmra.mxu0 %v7007
    %v8749 = vpop.f32.mrf.mxu0
    %v8750 = vadd.f32 %v8709, %v8749
    %v8751 = vpop.f32.mrf.mxu0
    %v8752 = vadd.f32 %v8711, %v8751
    %v8753 = vpop.f32.mrf.mxu0
    %v8754 = vpop.f32.mrf.mxu0
    %8755 = vdwg.mxu0
    %8756 = vmatprep.subr.bf16.mxu0 %v8214
    %8757 = vmatpush1.bf16.msra.mxu0 %v8213
    %8758 = vmatprep.subr.bf16.mxu0 %v8212
    %8759 = vmatpush1.bf16.msra.mxu0 %v8211
    %8760 = vmatprep.subr.bf16.mxu0 %v8210
    %8761 = vmatpush1.bf16.msra.mxu0 %v8209
    %8762 = vmatprep.subr.bf16.mxu0 %v8208
    %8763 = vmatpush1.bf16.msra.mxu0 %v8207
    %8764 = vmatprep.subr.bf16.mxu0 %v8206
    %8765 = vmatpush1.bf16.msra.mxu0 %v8205
    %8766 = vmatprep.subr.bf16.mxu0 %v8204
    %8767 = vmatpush1.bf16.msra.mxu0 %v8203
    %8768 = vmatprep.subr.bf16.mxu0 %v8202
    %8769 = vmatpush1.bf16.msra.mxu0 %v8201
    %8770 = vmatprep.subr.bf16.mxu0 %v8200
    %8771 = vmatpush1.bf16.msra.mxu0 %v8199
    %8772 = vmatprep.subr.bf16.mxu0 %v8230
    %8773 = vmatpush2.bf16.msra.mxu0 %v8229
    %8774 = vmatprep.subr.bf16.mxu0 %v8228
    %8775 = vmatpush2.bf16.msra.mxu0 %v8227
    %8776 = vmatprep.subr.bf16.mxu0 %v8226
    %8777 = vmatpush2.bf16.msra.mxu0 %v8225
    %8778 = vmatprep.subr.bf16.mxu0 %v8224
    %8779 = vmatpush2.bf16.msra.mxu0 %v8223
    %8780 = vmatprep.subr.bf16.mxu0 %v8222
    %8781 = vmatpush2.bf16.msra.mxu0 %v8221
    %8782 = vmatprep.subr.bf16.mxu0 %v8220
    %8783 = vmatpush2.bf16.msra.mxu0 %v8219
    %8784 = vmatprep.subr.bf16.mxu0 %v8218
    %8785 = vmatpush2.bf16.msra.mxu0 %v8217
    %8786 = vmatprep.subr.bf16.mxu0 %v8216
    %8787 = vmatpush2.bf16.msra.mxu0 %v8215
    %8788 = vmatprep.mubr.bf16.mxu0 %v7010
    %8789 = vmatmul.mubr.bf16.gmra.mxu0 %v7009
    %v8790 = vpop.f32.mrf.mxu0
    %v8791 = vadd.f32 %v8750, %v8790
    %v8792 = vpop.f32.mrf.mxu0
    %v8793 = vadd.f32 %v8752, %v8792
    %v8794 = vpop.f32.mrf.mxu0
    %v8795 = vpop.f32.mrf.mxu0
    %8796 = vdwg.mxu0
    %8797 = vmatprep.subr.bf16.mxu0 %v8246
    %8798 = vmatpush1.bf16.msra.mxu0 %v8245
    %8799 = vmatprep.subr.bf16.mxu0 %v8244
    %8800 = vmatpush1.bf16.msra.mxu0 %v8243
    %8801 = vmatprep.subr.bf16.mxu0 %v8242
    %8802 = vmatpush1.bf16.msra.mxu0 %v8241
    %8803 = vmatprep.subr.bf16.mxu0 %v8240
    %8804 = vmatpush1.bf16.msra.mxu0 %v8239
    %8805 = vmatprep.subr.bf16.mxu0 %v8238
    %8806 = vmatpush1.bf16.msra.mxu0 %v8237
    %8807 = vmatprep.subr.bf16.mxu0 %v8236
    %8808 = vmatpush1.bf16.msra.mxu0 %v8235
    %8809 = vmatprep.subr.bf16.mxu0 %v8234
    %8810 = vmatpush1.bf16.msra.mxu0 %v8233
    %8811 = vmatprep.subr.bf16.mxu0 %v8232
    %8812 = vmatpush1.bf16.msra.mxu0 %v8231
    %8813 = vmatprep.subr.bf16.mxu0 %v8262
    %8814 = vmatpush2.bf16.msra.mxu0 %v8261
    %8815 = vmatprep.subr.bf16.mxu0 %v8260
    %8816 = vmatpush2.bf16.msra.mxu0 %v8259
    %8817 = vmatprep.subr.bf16.mxu0 %v8258
    %8818 = vmatpush2.bf16.msra.mxu0 %v8257
    %8819 = vmatprep.subr.bf16.mxu0 %v8256
    %8820 = vmatpush2.bf16.msra.mxu0 %v8255
    %8821 = vmatprep.subr.bf16.mxu0 %v8254
    %8822 = vmatpush2.bf16.msra.mxu0 %v8253
    %8823 = vmatprep.subr.bf16.mxu0 %v8252
    %8824 = vmatpush2.bf16.msra.mxu0 %v8251
    %8825 = vmatprep.subr.bf16.mxu0 %v8250
    %8826 = vmatpush2.bf16.msra.mxu0 %v8249
    %8827 = vmatprep.subr.bf16.mxu0 %v8248
    %8828 = vmatpush2.bf16.msra.mxu0 %v8247
    %8829 = vmatprep.mubr.bf16.mxu0 %v7012
    %8830 = vmatmul.mubr.bf16.gmra.mxu0 %v7011
    %v8831 = vpop.f32.mrf.mxu0
    %v8832 = vadd.f32 %v8791, %v8831
    %v8833 = vpop.f32.mrf.mxu0
    %v8834 = vadd.f32 %v8793, %v8833
    %v8835 = vpop.f32.mrf.mxu0
    %v8836 = vpop.f32.mrf.mxu0
    %8837 = vdwg.mxu0
    %8838 = vmatprep.subr.bf16.mxu0 %v8278
    %8839 = vmatpush1.bf16.msra.mxu0 %v8277
    %8840 = vmatprep.subr.bf16.mxu0 %v8276
    %8841 = vmatpush1.bf16.msra.mxu0 %v8275
    %8842 = vmatprep.subr.bf16.mxu0 %v8274
    %8843 = vmatpush1.bf16.msra.mxu0 %v8273
    %8844 = vmatprep.subr.bf16.mxu0 %v8272
    %8845 = vmatpush1.bf16.msra.mxu0 %v8271
    %8846 = vmatprep.subr.bf16.mxu0 %v8270
    %8847 = vmatpush1.bf16.msra.mxu0 %v8269
    %8848 = vmatprep.subr.bf16.mxu0 %v8268
    %8849 = vmatpush1.bf16.msra.mxu0 %v8267
    %8850 = vmatprep.subr.bf16.mxu0 %v8266
    %8851 = vmatpush1.bf16.msra.mxu0 %v8265
    %8852 = vmatprep.subr.bf16.mxu0 %v8264
    %8853 = vmatpush1.bf16.msra.mxu0 %v8263
    %8854 = vmatprep.subr.bf16.mxu0 %v8294
    %8855 = vmatpush2.bf16.msra.mxu0 %v8293
    %8856 = vmatprep.subr.bf16.mxu0 %v8292
    %8857 = vmatpush2.bf16.msra.mxu0 %v8291
    %8858 = vmatprep.subr.bf16.mxu0 %v8290
    %8859 = vmatpush2.bf16.msra.mxu0 %v8289
    %8860 = vmatprep.subr.bf16.mxu0 %v8288
    %8861 = vmatpush2.bf16.msra.mxu0 %v8287
    %8862 = vmatprep.subr.bf16.mxu0 %v8286
    %8863 = vmatpush2.bf16.msra.mxu0 %v8285
    %8864 = vmatprep.subr.bf16.mxu0 %v8284
    %8865 = vmatpush2.bf16.msra.mxu0 %v8283
    %8866 = vmatprep.subr.bf16.mxu0 %v8282
    %8867 = vmatpush2.bf16.msra.mxu0 %v8281
    %8868 = vmatprep.subr.bf16.mxu0 %v8280
    %8869 = vmatpush2.bf16.msra.mxu0 %v8279
    %8870 = vmatprep.mubr.bf16.mxu0 %v7014
    %8871 = vmatmul.mubr.bf16.gmra.mxu0 %v7013
    %v8872 = vpop.f32.mrf.mxu0
    %v8873 = vadd.f32 %v8832, %v8872
    %v8874 = vpop.f32.mrf.mxu0
    %v8875 = vadd.f32 %v8834, %v8874
    %v8876 = vpop.f32.mrf.mxu0
    %v8877 = vpop.f32.mrf.mxu0
    %8878 = vdwg.mxu0
    %v8895 = vunpack.c.l.b16 %v6891
    %v8896 = vunpack.c.h.b16 %v6891
    %v8897 = vunpack.c.l.b16 %v6892
    %v8898 = vunpack.c.h.b16 %v6892
    %v8899 = vunpack.c.l.b16 %v6893
    %v8900 = vunpack.c.h.b16 %v6893
    %v8901 = vunpack.c.l.b16 %v6894
    %v8902 = vunpack.c.h.b16 %v6894
    %v8903 = vunpack.c.l.b16 %v6895
    %v8904 = vunpack.c.h.b16 %v6895
    %v8905 = vunpack.c.l.b16 %v6896
    %v8906 = vunpack.c.h.b16 %v6896
    %v8907 = vunpack.c.l.b16 %v6897
    %v8908 = vunpack.c.h.b16 %v6897
    %v8909 = vunpack.c.l.b16 %v6898
    %v8910 = vunpack.c.h.b16 %v6898
    %v8911 = vunpack.c.l.b16 %v6899
    %v8912 = vunpack.c.h.b16 %v6899
    %v8913 = vunpack.c.l.b16 %v6900
    %v8914 = vunpack.c.h.b16 %v6900
    %v8915 = vunpack.c.l.b16 %v6901
    %v8916 = vunpack.c.h.b16 %v6901
    %v8917 = vunpack.c.l.b16 %v6902
    %v8918 = vunpack.c.h.b16 %v6902
    %v8919 = vunpack.c.l.b16 %v6903
    %v8920 = vunpack.c.h.b16 %v6903
    %v8921 = vunpack.c.l.b16 %v6904
    %v8922 = vunpack.c.h.b16 %v6904
    %v8923 = vunpack.c.l.b16 %v6905
    %v8924 = vunpack.c.h.b16 %v6905
    %v8925 = vunpack.c.l.b16 %v6906
    %v8926 = vunpack.c.h.b16 %v6906
    %v8927 = vpack.c.b16 %v8897, %v8895
    %v8928 = vpack.c.b16 %v8898, %v8896
    %v8929 = vpack.c.b16 %v8901, %v8899
    %v8930 = vpack.c.b16 %v8902, %v8900
    %v8931 = vpack.c.b16 %v8905, %v8903
    %v8932 = vpack.c.b16 %v8906, %v8904
    %v8933 = vpack.c.b16 %v8909, %v8907
    %v8934 = vpack.c.b16 %v8910, %v8908
    %v8935 = vpack.c.b16 %v8913, %v8911
    %v8936 = vpack.c.b16 %v8914, %v8912
    %v8937 = vpack.c.b16 %v8917, %v8915
    %v8938 = vpack.c.b16 %v8918, %v8916
    %v8939 = vpack.c.b16 %v8921, %v8919
    %v8940 = vpack.c.b16 %v8922, %v8920
    %v8941 = vpack.c.b16 %v8925, %v8923
    %v8942 = vpack.c.b16 %v8926, %v8924
    %8959 = vmatprep.subr.bf16.mxu0 %v8942
    %8960 = vmatpush1.bf16.msra.mxu0 %v8941
    %8961 = vmatprep.subr.bf16.mxu0 %v8940
    %8962 = vmatpush1.bf16.msra.mxu0 %v8939
    %8963 = vmatprep.subr.bf16.mxu0 %v8938
    %8964 = vmatpush1.bf16.msra.mxu0 %v8937
    %8965 = vmatprep.subr.bf16.mxu0 %v8936
    %8966 = vmatpush1.bf16.msra.mxu0 %v8935
    %8967 = vmatprep.subr.bf16.mxu0 %v8934
    %8968 = vmatpush1.bf16.msra.mxu0 %v8933
    %8969 = vmatprep.subr.bf16.mxu0 %v8932
    %8970 = vmatpush1.bf16.msra.mxu0 %v8931
    %8971 = vmatprep.subr.bf16.mxu0 %v8930
    %8972 = vmatpush1.bf16.msra.mxu0 %v8929
    %8973 = vmatprep.subr.bf16.mxu0 %v8928
    %8974 = vmatpush1.bf16.msra.mxu0 %v8927
    %8975 = vmatprep.subr.bf16.mxu0 0
    %8976 = vmatpush2.bf16.msra.mxu0 0
    %8977 = vmatprep.subr.bf16.mxu0 0
    %8978 = vmatpush2.bf16.msra.mxu0 0
    %8979 = vmatprep.subr.bf16.mxu0 0
    %8980 = vmatpush2.bf16.msra.mxu0 0
    %8981 = vmatprep.subr.bf16.mxu0 0
    %8982 = vmatpush2.bf16.msra.mxu0 0
    %8983 = vmatprep.subr.bf16.mxu0 0
    %8984 = vmatpush2.bf16.msra.mxu0 0
    %8985 = vmatprep.subr.bf16.mxu0 0
    %8986 = vmatpush2.bf16.msra.mxu0 0
    %8987 = vmatprep.subr.bf16.mxu0 0
    %8988 = vmatpush2.bf16.msra.mxu0 0
    %8989 = vmatprep.subr.bf16.mxu0 0
    %8990 = vmatpush2.bf16.msra.mxu0 0
    %8991 = vmatprep.mubr.f32.mxu0 0.0
    %8992 = vmatmul.mubr.f32.gmra.mxu0 %v6886
    %v8993 = vpop.f32.mrf.mxu0
    %v8994 = vadd.f32 %v8873, %v8993
    %v8995 = vpop.f32.mrf.mxu0
    %v8996 = vadd.f32 %v8875, %v8995
    %8997 = vdwg.mxu0
    %v8998 = vld [vmem:[#allocation25 + $0x13] sm:$0x3]
    %v9000 = vlaneseq
    %v9001 = vshrl.u32 %v9000, 7
    %v9002 = vsub.s32 0, %v9001
    %v9003 = vrot.slane %v8998, %v9002
    %v9004 = vlaneseq
    %v9005 = vshrl.u32 %v9004, 7
    %v9006 = vsub.s32 1, %v9005
    %v9007 = vrot.slane %v8998, %v9006
    %v9010 = vadd.f32 %v8994, %v9003
    %v9011 = vadd.f32 %v8996, %v9007
    %v9012 = vmax.f32 %v9010, 0.0
    %v9013 = vmax.f32 %v9011, 0.0
    %v9014 = vld [vmem:[%s20] sm:$0xff]
    %v9015 = vld [vmem:[%s20 + $0x8] sm:$0xff]
    %v9016 = vld [vmem:[%s20 + $0x10] sm:$0xff]
    %v9017 = vld [vmem:[%s20 + $0x18] sm:$0xff]
    %v9018 = vld [vmem:[%s20 + $0x20] sm:$0xff]
    %v9019 = vld [vmem:[%s20 + $0x28] sm:$0xff]
    %v9020 = vld [vmem:[%s20 + $0x30] sm:$0xff]
    %v9021 = vld [vmem:[%s20 + $0x38] sm:$0xff]
    %v9022 = vld [vmem:[%s20 + $0x40] sm:$0xff]
    %v9023 = vld [vmem:[%s20 + $0x48] sm:$0xff]
    %v9024 = vld [vmem:[%s20 + $0x50] sm:$0xff]
    %v9025 = vld [vmem:[%s20 + $0x58] sm:$0xff]
    %v9026 = vld [vmem:[%s20 + $0x60] sm:$0xff]
    %v9027 = vld [vmem:[%s20 + $0x68] sm:$0xff]
    %v9028 = vld [vmem:[%s20 + $0x70] sm:$0xff]
    %v9029 = vld [vmem:[%s20 + $0x78] sm:$0xff]
    %v9030 = vld [vmem:[%s20 + $0x80] sm:$0xff]
    %v9031 = vld [vmem:[%s20 + $0x88] sm:$0xff]
    %v9032 = vld [vmem:[%s20 + $0x90] sm:$0xff]
    %v9033 = vld [vmem:[%s20 + $0x98] sm:$0xff]
    %v9034 = vld [vmem:[%s20 + $0xa0] sm:$0xff]
    %v9035 = vld [vmem:[%s20 + $0xa8] sm:$0xff]
    %v9036 = vld [vmem:[%s20 + $0xb0] sm:$0xff]
    %v9037 = vld [vmem:[%s20 + $0xb8] sm:$0xff]
    %v9038 = vld [vmem:[%s20 + $0xc0] sm:$0xff]
    %v9039 = vld [vmem:[%s20 + $0xc8] sm:$0xff]
    %v9040 = vld [vmem:[%s20 + $0xd0] sm:$0xff]
    %v9041 = vld [vmem:[%s20 + $0xd8] sm:$0xff]
    %v9042 = vld [vmem:[%s20 + $0xe0] sm:$0xff]
    %v9043 = vld [vmem:[%s20 + $0xe8] sm:$0xff]
    %v9044 = vld [vmem:[%s20 + $0xf0] sm:$0xff]
    %v9045 = vld [vmem:[%s20 + $0xf8] sm:$0xff]
    %v9046 = vld [vmem:[#allocation25 + $0x15] sm:$0x1]
    %v9048 = vlaneseq
    %v9049 = vshrl.u32 %v9048, 7
    %v9050 = vsub.s32 0, %v9049
    %v9051 = vrot.slane %v9046, %v9050
    %9053 = vmatprep.subr.mxu0 0.0
    %9054 = vmatpush1.msra.mxu0 %v9029
    %9055 = vmatprep.subr.mxu0 0.0
    %9056 = vmatpush1.msra.mxu0 %v9028
    %9057 = vmatprep.subr.mxu0 0.0
    %9058 = vmatpush1.msra.mxu0 %v9027
    %9059 = vmatprep.subr.mxu0 0.0
    %9060 = vmatpush1.msra.mxu0 %v9026
    %9061 = vmatprep.subr.mxu0 0.0
    %9062 = vmatpush1.msra.mxu0 %v9025
    %9063 = vmatprep.subr.mxu0 0.0
    %9064 = vmatpush1.msra.mxu0 %v9024
    %9065 = vmatprep.subr.mxu0 0.0
    %9066 = vmatpush1.msra.mxu0 %v9023
    %9067 = vmatprep.subr.mxu0 0.0
    %9068 = vmatpush1.msra.mxu0 %v9022
    %9069 = vmatprep.subr.mxu0 0.0
    %9070 = vmatpush1.msra.mxu0 %v9021
    %9071 = vmatprep.subr.mxu0 0.0
    %9072 = vmatpush1.msra.mxu0 %v9020
    %9073 = vmatprep.subr.mxu0 0.0
    %9074 = vmatpush1.msra.mxu0 %v9019
    %9075 = vmatprep.subr.mxu0 0.0
    %9076 = vmatpush1.msra.mxu0 %v9018
    %9077 = vmatprep.subr.mxu0 0.0
    %9078 = vmatpush1.msra.mxu0 %v9017
    %9079 = vmatprep.subr.mxu0 0.0
    %9080 = vmatpush1.msra.mxu0 %v9016
    %9081 = vmatprep.subr.mxu0 0.0
    %9082 = vmatpush1.msra.mxu0 %v9015
    %9083 = vmatprep.subr.mxu0 0.0
    %9084 = vmatpush1.msra.mxu0 %v9014
    %9085 = vmatprep.subr.mxu0 0.0
    %9086 = vmatpush2.msra.mxu0 %v9045
    %9087 = vmatprep.subr.mxu0 0.0
    %9088 = vmatpush2.msra.mxu0 %v9044
    %9089 = vmatprep.subr.mxu0 0.0
    %9090 = vmatpush2.msra.mxu0 %v9043
    %9091 = vmatprep.subr.mxu0 0.0
    %9092 = vmatpush2.msra.mxu0 %v9042
    %9093 = vmatprep.subr.mxu0 0.0
    %9094 = vmatpush2.msra.mxu0 %v9041
    %9095 = vmatprep.subr.mxu0 0.0
    %9096 = vmatpush2.msra.mxu0 %v9040
    %9097 = vmatprep.subr.mxu0 0.0
    %9098 = vmatpush2.msra.mxu0 %v9039
    %9099 = vmatprep.subr.mxu0 0.0
    %9100 = vmatpush2.msra.mxu0 %v9038
    %9101 = vmatprep.subr.mxu0 0.0
    %9102 = vmatpush2.msra.mxu0 %v9037
    %9103 = vmatprep.subr.mxu0 0.0
    %9104 = vmatpush2.msra.mxu0 %v9036
    %9105 = vmatprep.subr.mxu0 0.0
    %9106 = vmatpush2.msra.mxu0 %v9035
    %9107 = vmatprep.subr.mxu0 0.0
    %9108 = vmatpush2.msra.mxu0 %v9034
    %9109 = vmatprep.subr.mxu0 0.0
    %9110 = vmatpush2.msra.mxu0 %v9033
    %9111 = vmatprep.subr.mxu0 0.0
    %9112 = vmatpush2.msra.mxu0 %v9032
    %9113 = vmatprep.subr.mxu0 0.0
    %9114 = vmatpush2.msra.mxu0 %v9031
    %9115 = vmatprep.subr.mxu0 0.0
    %9116 = vmatpush2.msra.mxu0 %v9030
    %9117 = vmatprep.mubr.f32.mxu0 %v9013
    %9118 = vmatmul.mubr.f32.gmra.mxu0 %v9012
    %v9119 = vpop.f32.mrf.mxu0
    %v9120 = vadd.f32 %v9051, %v9119
    %v9121 = vpop.f32.mrf.mxu0
    %9122 = vdwg.mxu0
    %vm9123 = vcmask 9216
    %9124 = vst.msk [vmem:[#allocation27] sm:$0x3] %vm9123, %v9120
    // Predicated region
    $region146: #{tpu_custom_call.1} parent=1 // pred_check
      _
    $region147: #{tpu_custom_call.1} parent=1 // pred_check_branch
      %9126 = sbr.rel (0) target = $region149
    $region148: #{tpu_custom_call.1} parent=1 // pred_region
      %s9128 = ssub.s32 32, 32
      %9129 = vsyncadd [#allocation6], %s9128
      %s9131 = sshll.u32 [#allocation27], 4
      %s9132 = int_to_ptr.vmem [resolvable:$true] %s9131
      %9134 = dma.vmem_to_hbm [thread:$0]  %s9132, 32, %s22, [#allocation6]
    $region149: #{tpu_custom_call.1} parent=1 // pred_fallthru
      _
    // Predicated region
    $region150: #{tpu_custom_call.1} parent=1 // pred_check
      _
    $region151: #{tpu_custom_call.1} parent=1 // pred_check_branch
      %9136 = sbr.rel (0) target = $region153
    $region152: #{tpu_custom_call.1} parent=1 // pred_region
      %9137 = dma.done [#allocation6], 32
    $region153: #{tpu_custom_call.1} parent=1 // pred_fallthru
      _
    %9138 = vsyncpa [#allocation5], 1
    %9139 = vsyncpa [#allocation8], 1
    %9140 = vsyncpa [#allocation11], 1
    %9141 = vsyncpa [#allocation14], 1
    %9142 = vsyncpa [#allocation17], 1
    %9143 = vsyncpa [#allocation20], 1
    %9144 = vsyncpa [#allocation23], 1
    %9145 = vsyncpa [#allocation26], 1
    %9146 = vsyncpa [#allocation6], 1
  %9147 = vsyncmov [#allocation3]
  %s9148 = vpop.sfrf %9147
  %p9149 = scmp.eq.s32.totalorder %s9148, 0
  %p9150 = pneg %p9149
  %9152 = shalt.err (%p9150)

</llo_original>
